<compile_context>
chip_gen: v7x
topology: tpu7x:2x2x1
jax: 0.10.0
libtpu: 0.0.40
codegen_flags: <defaults>
</compile_context>

<pallas_src>
import jax
import jax.numpy as jnp
from jax.experimental import pallas as pl
from jax.experimental.pallas import tpu as pltpu

IN_DIM = 12000
H1 = 256
H2 = 128
OUT_DIM = 71

# Lane-dense padded sizes.
K_PAD = 12288   # 96 * 128 (fc1 reduction dim, zero-padded)
OUT_PAD = 128   # fc3 output padded to a full lane group


def mlp_kernel(x_ref, w1_ref, b1_ref, w2_ref, b2_ref, w3_ref, b3_ref, o_ref):
    # fc1: full 12288-wide reduction on the MXU (bf16 inputs, f32 accumulate).
    h = jnp.dot(x_ref[...], w1_ref[...], preferred_element_type=jnp.float32)
    h = jnp.maximum(h + b1_ref[...], 0.0)
    # fc2 + ReLU.
    h = jnp.dot(h.astype(jnp.bfloat16), w2_ref[...],
                preferred_element_type=jnp.float32)
    h = jnp.maximum(h + b2_ref[...], 0.0)
    # fc3 (output padded to 128 lanes; padded cols are exactly zero).
    h = jnp.dot(h.astype(jnp.bfloat16), w3_ref[...],
                preferred_element_type=jnp.float32)
    o_ref[...] = (h + b3_ref[...]).astype(o_ref.dtype)


def mlp_forward(x, params):
    """x: [B, 12000] f32; params: prepared (padded / bf16) weights."""
    w1, b1, w2, b2, w3, b3 = params
    B = x.shape[0]

    # Batch tile: multiple of 8 sublanes, capped at 128 MXU rows.
    bm = min(128, ((B + 7) // 8) * 8)
    b_pad = pl.cdiv(B, bm) * bm

    # Zero-pad x and pre-cast to bf16 (fused by XLA); zero rows/cols are inert.
    x_p = jnp.pad(x, ((0, b_pad - B), (0, K_PAD - IN_DIM))).astype(jnp.bfloat16)

    grid = (b_pad // bm,)

    flops = 2 * B * (IN_DIM * H1 + H1 * H2 + H2 * OUT_DIM)
    bytes_accessed = (x_p.size * 2 + w1.size * 2 + w2.size * 2 + w3.size * 2
                      + (b1.size + b2.size + b3.size) * 4
                      + b_pad * OUT_PAD * 4)

    out = pl.pallas_call(
        mlp_kernel,
        out_shape=jax.ShapeDtypeStruct((b_pad, OUT_PAD), jnp.float32),
        grid_spec=pltpu.PrefetchScalarGridSpec(
            num_scalar_prefetch=0,
            grid=grid,
            in_specs=[
                pl.BlockSpec((bm, K_PAD), lambda b: (b, 0)),     # x  (streamed)
                pl.BlockSpec((K_PAD, H1), lambda b: (0, 0)),     # w1 (resident)
                pl.BlockSpec((1, H1), lambda b: (0, 0)),         # b1 (resident)
                pl.BlockSpec((H1, H2), lambda b: (0, 0)),        # w2 (resident)
                pl.BlockSpec((1, H2), lambda b: (0, 0)),         # b2 (resident)
                pl.BlockSpec((H2, OUT_PAD), lambda b: (0, 0)),   # w3 (resident)
                pl.BlockSpec((1, OUT_PAD), lambda b: (0, 0)),    # b3 (resident)
            ],
            out_specs=pl.BlockSpec((bm, OUT_PAD), lambda b: (b, 0)),
        ),
        compiler_params=pltpu.CompilerParams(
            dimension_semantics=("parallel",),
            vmem_limit_bytes=32 << 20,  # footprint ~18 MB worst case; legal on v5e/v6e/v7x
        ),
        cost_estimate=pl.CostEstimate(
            flops=flops, transcendentals=0, bytes_accessed=bytes_accessed),
    )(x_p, w1, b1, w2, b2, w3, b3)

    return out[:B, :OUT_DIM]


def init_params(key):
    # Deterministic synthetic init (uniform, ~PyTorch 1/sqrt(fan_in) scale).
    ks = jax.random.split(key, 6)

    def lin(kw, kb, fan_in, fan_out):
        bound = 1.0 / jnp.sqrt(fan_in)
        # stored as [in, out] (transposed vs. PyTorch's [out, in])
        w = jax.random.uniform(kw, (fan_in, fan_out), jnp.float32, -bound, bound)
        b = jax.random.uniform(kb, (1, fan_out), jnp.float32, -bound, bound)
        return w, b

    w1, b1 = lin(ks[0], ks[1], IN_DIM, H1)
    w2, b2 = lin(ks[2], ks[3], H1, H2)
    w3, b3 = lin(ks[4], ks[5], H2, OUT_DIM)
    return w1, b1, w2, b2, w3, b3


def prepare_params(w1, b1, w2, b2, w3, b3):
    """Pad to lane-dense shapes and cast weights to bf16 (HBM traffic /2)."""
    w1p = jnp.pad(w1, ((0, K_PAD - IN_DIM), (0, 0))).astype(jnp.bfloat16)
    w2p = w2.astype(jnp.bfloat16)
    w3p = jnp.pad(w3, ((0, 0), (0, OUT_PAD - OUT_DIM))).astype(jnp.bfloat16)
    b3p = jnp.pad(b3, ((0, 0), (0, OUT_PAD - OUT_DIM)))
    return w1p, b1, w2p, b2, w3p, b3p


if __name__ == "__main__":
    key = jax.random.PRNGKey(0)
    k_x, k_p = jax.random.split(key)

    B = 8
    x = jax.random.normal(k_x, (B, IN_DIM), jnp.float32)
    raw = init_params(k_p)
    params = prepare_params(*raw)

    out = jax.block_until_ready(mlp_forward(x, params))

    # Reference at the same precision (bf16 inputs/weights, f32 accumulation).
    w1, b1, w2, b2, w3, b3 = raw
    ref = jnp.dot(x.astype(jnp.bfloat16), w1.astype(jnp.bfloat16),
                  preferred_element_type=jnp.float32) + b1
    ref = jnp.maximum(ref, 0.0)
    ref = jnp.dot(ref.astype(jnp.bfloat16), w2.astype(jnp.bfloat16),
                  preferred_element_type=jnp.float32) + b2
    ref = jnp.maximum(ref, 0.0)
    ref = jnp.dot(ref.astype(jnp.bfloat16), w3.astype(jnp.bfloat16),
                  preferred_element_type=jnp.float32) + b3

    assert out.shape == (B, OUT_DIM)
    assert jnp.allclose(out, ref, atol=5e-3, rtol=5e-3), (
        float(jnp.max(jnp.abs(out - ref))))
    print("KERNEL_OK")
</pallas_src>

<mosaic_0001>
module attributes {stable_mosaic.version = 11 : i64} {
  func.func @mlp_kernel(%arg0: i32, %arg1: memref<8x12288xbf16, #tpu.memory_space<vmem>>, %arg2: memref<12288x256xbf16, #tpu.memory_space<vmem>>, %arg3: memref<1x256xf32, #tpu.memory_space<vmem>>, %arg4: memref<256x128xbf16, #tpu.memory_space<vmem>>, %arg5: memref<1x128xf32, #tpu.memory_space<vmem>>, %arg6: memref<128x128xbf16, #tpu.memory_space<vmem>>, %arg7: memref<1x128xf32, #tpu.memory_space<vmem>>, %arg8: memref<8x128xf32, #tpu.memory_space<vmem>>) attributes {dimension_semantics = [#tpu.dimension_semantics<parallel>], iteration_bounds = array<i64: 1>, scalar_prefetch = 0 : i64, scratch_operands = 0 : i64, tpu.core_type = #tpu.core_type<tc>, window_params = [{transform_indices = @transform_0, window_bounds = array<i64: 8, 12288>}, {pipeline_mode = #tpu.pipeline_mode<synchronous>, transform_indices = @transform_1, window_bounds = array<i64: 12288, 256>}, {pipeline_mode = #tpu.pipeline_mode<synchronous>, transform_indices = @transform_2, window_bounds = array<i64: 1, 256>}, {pipeline_mode = #tpu.pipeline_mode<synchronous>, transform_indices = @transform_3, window_bounds = array<i64: 256, 128>}, {pipeline_mode = #tpu.pipeline_mode<synchronous>, transform_indices = @transform_4, window_bounds = array<i64: 1, 128>}, {pipeline_mode = #tpu.pipeline_mode<synchronous>, transform_indices = @transform_5, window_bounds = array<i64: 128, 128>}, {pipeline_mode = #tpu.pipeline_mode<synchronous>, transform_indices = @transform_6, window_bounds = array<i64: 1, 128>}, {transform_indices = @transform_7, window_bounds = array<i64: 8, 128>}]} {
    %c0 = arith.constant 0 : index
    %c0_0 = arith.constant 0 : index
    %0 = vector.load %arg1[%c0, %c0_0] : memref<8x12288xbf16, #tpu.memory_space<vmem>>, vector<8x12288xbf16>
    %c0_1 = arith.constant 0 : index
    %c0_2 = arith.constant 0 : index
    %1 = vector.load %arg2[%c0_1, %c0_2] : memref<12288x256xbf16, #tpu.memory_space<vmem>>, vector<12288x256xbf16>
    %cst = arith.constant dense<0.000000e+00> : vector<8x256xf32>
    %2 = tpu.matmul %0, %1, %cst {dimension_numbers = #tpu.dot_dimension_numbers<[1], [0], [0], [1], [0, 0, 1, 1], [], []>} : vector<8x12288xbf16>, vector<12288x256xbf16>, vector<8x256xf32> -> vector<8x256xf32>
    %c0_3 = arith.constant 0 : index
    %c0_4 = arith.constant 0 : index
    %3 = vector.load %arg3[%c0_3, %c0_4] : memref<1x256xf32, #tpu.memory_space<vmem>>, vector<1x256xf32>
    %4 = vector.broadcast %3 : vector<1x256xf32> to vector<8x256xf32>
    %5 = arith.addf %2, %4 : vector<8x256xf32>
    %cst_5 = arith.constant 0.000000e+00 : f32
    %6 = vector.broadcast %cst_5 : f32 to vector<8x256xf32>
    %7 = arith.maximumf %5, %6 : vector<8x256xf32>
    %8 = arith.truncf %7 : vector<8x256xf32> to vector<8x256xbf16>
    %c0_6 = arith.constant 0 : index
    %c0_7 = arith.constant 0 : index
    %9 = vector.load %arg4[%c0_6, %c0_7] : memref<256x128xbf16, #tpu.memory_space<vmem>>, vector<256x128xbf16>
    %cst_8 = arith.constant dense<0.000000e+00> : vector<8x128xf32>
    %10 = tpu.matmul %8, %9, %cst_8 {dimension_numbers = #tpu.dot_dimension_numbers<[1], [0], [0], [1], [0, 0, 1, 1], [], []>} : vector<8x256xbf16>, vector<256x128xbf16>, vector<8x128xf32> -> vector<8x128xf32>
    %c0_9 = arith.constant 0 : index
    %c0_10 = arith.constant 0 : index
    %11 = vector.load %arg5[%c0_9, %c0_10] : memref<1x128xf32, #tpu.memory_space<vmem>>, vector<1x128xf32>
    %12 = vector.broadcast %11 : vector<1x128xf32> to vector<8x128xf32>
    %13 = arith.addf %10, %12 : vector<8x128xf32>
    %cst_11 = arith.constant 0.000000e+00 : f32
    %14 = vector.broadcast %cst_11 : f32 to vector<8x128xf32>
    %15 = arith.maximumf %13, %14 : vector<8x128xf32>
    %16 = arith.truncf %15 : vector<8x128xf32> to vector<8x128xbf16>
    %c0_12 = arith.constant 0 : index
    %c0_13 = arith.constant 0 : index
    %17 = vector.load %arg6[%c0_12, %c0_13] : memref<128x128xbf16, #tpu.memory_space<vmem>>, vector<128x128xbf16>
    %cst_14 = arith.constant dense<0.000000e+00> : vector<8x128xf32>
    %18 = tpu.matmul %16, %17, %cst_14 {dimension_numbers = #tpu.dot_dimension_numbers<[1], [0], [0], [1], [0, 0, 1, 1], [], []>} : vector<8x128xbf16>, vector<128x128xbf16>, vector<8x128xf32> -> vector<8x128xf32>
    %c0_15 = arith.constant 0 : index
    %c0_16 = arith.constant 0 : index
    %19 = vector.load %arg7[%c0_15, %c0_16] : memref<1x128xf32, #tpu.memory_space<vmem>>, vector<1x128xf32>
    %20 = vector.broadcast %19 : vector<1x128xf32> to vector<8x128xf32>
    %21 = arith.addf %18, %20 : vector<8x128xf32>
    %c0_17 = arith.constant 0 : index
    %c0_18 = arith.constant 0 : index
    %22 = vector.load %arg8[%c0_17, %c0_18] : memref<8x128xf32, #tpu.memory_space<vmem>>, vector<8x128xf32>
    tpu.vector_store %arg8[%c0_17, %c0_18], %21 {strides = array<i32>} : memref<8x128xf32, #tpu.memory_space<vmem>>, vector<8x128xf32>,
    return
  }
  func.func @transform_0(%arg0: i32) -> (i32, i32) {
    %c0_i32 = arith.constant 0 : i32
    %c0_i32_0 = arith.constant 0 : i32
    return %arg0, %c0_i32 : i32, i32
  }
  func.func @transform_1(%arg0: i32) -> (i32, i32) {
    %c0_i32 = arith.constant 0 : i32
    %c0_i32_0 = arith.constant 0 : i32
    %c0_i32_1 = arith.constant 0 : i32
    return %c0_i32, %c0_i32_0 : i32, i32
  }
  func.func @transform_2(%arg0: i32) -> (i32, i32) {
    %c0_i32 = arith.constant 0 : i32
    %c0_i32_0 = arith.constant 0 : i32
    %c0_i32_1 = arith.constant 0 : i32
    return %c0_i32, %c0_i32_0 : i32, i32
  }
  func.func @transform_3(%arg0: i32) -> (i32, i32) {
    %c0_i32 = arith.constant 0 : i32
    %c0_i32_0 = arith.constant 0 : i32
    %c0_i32_1 = arith.constant 0 : i32
    return %c0_i32, %c0_i32_0 : i32, i32
  }
  func.func @transform_4(%arg0: i32) -> (i32, i32) {
    %c0_i32 = arith.constant 0 : i32
    %c0_i32_0 = arith.constant 0 : i32
    %c0_i32_1 = arith.constant 0 : i32
    return %c0_i32, %c0_i32_0 : i32, i32
  }
  func.func @transform_5(%arg0: i32) -> (i32, i32) {
    %c0_i32 = arith.constant 0 : i32
    %c0_i32_0 = arith.constant 0 : i32
    %c0_i32_1 = arith.constant 0 : i32
    return %c0_i32, %c0_i32_0 : i32, i32
  }
  func.func @transform_6(%arg0: i32) -> (i32, i32) {
    %c0_i32 = arith.constant 0 : i32
    %c0_i32_0 = arith.constant 0 : i32
    %c0_i32_1 = arith.constant 0 : i32
    return %c0_i32, %c0_i32_0 : i32, i32
  }
  func.func @transform_7(%arg0: i32) -> (i32, i32) {
    %c0_i32 = arith.constant 0 : i32
    %c0_i32_0 = arith.constant 0 : i32
    return %arg0, %c0_i32 : i32, i32
  }
}

</mosaic_0001>

<llo_original>
// kernel: tpu_custom_call.1
$region0: #{tpu_custom_call.1}
  #allocation0 [shape = 'u32[]', space=smem, size = 0x4, offset = 0x4, fixed_abs, tag = 'smem constant byte address 0x4 - core index']
  #allocation1 [shape = 'u32[144,128]{1,0:T(1,128)}', space=vmem, size = 0x12000, scoped, tag = 'internal scratch']
  %s0 = inlined_call_operand.hbm [shape: bf16[8,12288], index: 0, kind: input, shape index: {}]
  %s1 = inlined_call_operand.hbm [shape: bf16[12288,256], index: 1, kind: input, shape index: {}]
  %s2 = inlined_call_operand.hbm [shape: f32[1,256], index: 2, kind: input, shape index: {}]
  %s3 = inlined_call_operand.hbm [shape: bf16[256,128], index: 3, kind: input, shape index: {}]
  %s4 = inlined_call_operand.hbm [shape: f32[1,128], index: 4, kind: input, shape index: {}]
  %s5 = inlined_call_operand.hbm [shape: bf16[128,128], index: 5, kind: input, shape index: {}]
  %s6 = inlined_call_operand.hbm [shape: f32[1,128], index: 6, kind: input, shape index: {}]
  %s7 = inlined_call_operand.hbm [shape: f32[8,128], index: 7, kind: output, shape index: {}]
  %s8 = sld [smem:[#allocation0]]
  $region66: #{tpu_custom_call.1} parent=0
    _
  %s10 = ssub.s32 1, %s8
  %s11 = scalar_select 0, %s10, %s8
  $region1: #{tpu_custom_call.1} parent=0
    #allocation2 [shape = 'u8[196608]{0}', space=vmem, size = 0x30000, scoped, tag = 'input window, operand 0, single buffered']
    #allocation3 [shape = 's32[1]{0}', space=sflag, size = 0x4, scoped, tag = 'scoped memory for tpu_custom_call.1']
    #allocation4 [shape = 's32[1]{0}', space=sflag, size = 0x4, scoped, tag = 'scoped memory for tpu_custom_call.1']
    #allocation5 [shape = 'u8[6291456]{0}', space=vmem, size = 0x600000, scoped, tag = 'input window, operand 1, single buffered']
    #allocation6 [shape = 's32[1]{0}', space=sflag, size = 0x4, scoped, tag = 'scoped memory for tpu_custom_call.1']
    #allocation7 [shape = 'u8[1024]{0}', space=vmem, size = 0x400, scoped, tag = 'input window, operand 2, single buffered']
    #allocation8 [shape = 'u8[65536]{0}', space=vmem, size = 0x10000, scoped, tag = 'input window, operand 3, single buffered']
    #allocation9 [shape = 's32[1]{0}', space=sflag, size = 0x4, scoped, tag = 'scoped memory for tpu_custom_call.1']
    #allocation10 [shape = 'u8[512]{0}', space=vmem, size = 0x400, scoped, tag = 'input window, operand 4, single buffered']
    #allocation11 [shape = 'u8[32768]{0}', space=vmem, size = 0x8000, scoped, tag = 'input window, operand 5, single buffered']
    #allocation12 [shape = 's32[1]{0}', space=sflag, size = 0x4, scoped, tag = 'scoped memory for tpu_custom_call.1']
    #allocation13 [shape = 'u8[512]{0}', space=vmem, size = 0x400, scoped, tag = 'input window, operand 6, single buffered']
    #allocation14 [shape = 'u8[4096]{0}', space=vmem, size = 0x1000, scoped, tag = 'output window, operand 0, single buffered']
    %12 = vsyncpa [#allocation3], 0
    %13 = vsyncpa [#allocation6], 0
    %14 = vsyncpa [#allocation9], 0
    %15 = vsyncpa [#allocation12], 0
    %16 = vsyncpa [#allocation4], 0
    // Predicated region
    $region2: #{tpu_custom_call.1} parent=1 // pred_check
      _
    $region3: #{tpu_custom_call.1} parent=1 // pred_check_branch
      %18 = sbr.rel (0) target = $region5
    $region4: #{tpu_custom_call.1} parent=1 // pred_region
      %s20 = ssub.s32 6144, 6144
      %21 = vsyncadd [#allocation3], %s20
      %s23 = sshll.u32 [#allocation2], 4
      %s24 = int_to_ptr.vmem [resolvable:$true] %s23
      %26 = dma.hbm_to_vmem [thread:$0]  %s0, 6144, %s24, [#allocation3]
    $region5: #{tpu_custom_call.1} parent=1 // pred_fallthru
      _
    // Predicated region
    $region6: #{tpu_custom_call.1} parent=1 // pred_check
      _
    $region7: #{tpu_custom_call.1} parent=1 // pred_check_branch
      %28 = sbr.rel (0) target = $region9
    $region8: #{tpu_custom_call.1} parent=1 // pred_region
      %s30 = ssub.s32 196608, 196608
      %31 = vsyncadd [#allocation6], %s30
      %s32 = sshll.u32 [#allocation5], 4
      %s33 = int_to_ptr.vmem [resolvable:$true] %s32
      %38 = dma.hbm_to_vmem [thread:$0]  %s1, 196608, %s33, [#allocation6], 128, 128, 8
    $region9: #{tpu_custom_call.1} parent=1 // pred_fallthru
      _
    // Predicated region
    $region10: #{tpu_custom_call.1} parent=1 // pred_check
      _
    $region11: #{tpu_custom_call.1} parent=1 // pred_check_branch
      %40 = sbr.rel (0) target = $region13
    $region12: #{tpu_custom_call.1} parent=1 // pred_region
      %s42 = ssub.s32 32, 32
      %43 = vsyncadd [#allocation6], %s42
      %s45 = sshll.u32 [#allocation7], 4
      %s46 = int_to_ptr.vmem [resolvable:$true] %s45
      %48 = dma.hbm_to_vmem [thread:$0]  %s2, 32, %s46, [#allocation6]
    $region13: #{tpu_custom_call.1} parent=1 // pred_fallthru
      _
    // Predicated region
    $region14: #{tpu_custom_call.1} parent=1 // pred_check
      _
    $region15: #{tpu_custom_call.1} parent=1 // pred_check_branch
      %50 = sbr.rel (0) target = $region17
    $region16: #{tpu_custom_call.1} parent=1 // pred_region
      %s52 = ssub.s32 2048, 2048
      %53 = vsyncadd [#allocation9], %s52
      %s54 = sshll.u32 [#allocation8], 4
      %s55 = int_to_ptr.vmem [resolvable:$true] %s54
      %60 = dma.hbm_to_vmem [thread:$0]  %s3, 2048, %s55, [#allocation9], 64, 64, 4
    $region17: #{tpu_custom_call.1} parent=1 // pred_fallthru
      _
    // Predicated region
    $region18: #{tpu_custom_call.1} parent=1 // pred_check
      _
    $region19: #{tpu_custom_call.1} parent=1 // pred_check_branch
      %62 = sbr.rel (0) target = $region21
    $region20: #{tpu_custom_call.1} parent=1 // pred_region
      %s64 = ssub.s32 16, 16
      %65 = vsyncadd [#allocation9], %s64
      %s67 = sshll.u32 [#allocation10], 4
      %s68 = int_to_ptr.vmem [resolvable:$true] %s67
      %70 = dma.hbm_to_vmem [thread:$0]  %s4, 16, %s68, [#allocation9]
    $region21: #{tpu_custom_call.1} parent=1 // pred_fallthru
      _
    // Predicated region
    $region22: #{tpu_custom_call.1} parent=1 // pred_check
      _
    $region23: #{tpu_custom_call.1} parent=1 // pred_check_branch
      %72 = sbr.rel (0) target = $region25
    $region24: #{tpu_custom_call.1} parent=1 // pred_region
      %s74 = ssub.s32 1024, 1024
      %75 = vsyncadd [#allocation12], %s74
      %s76 = sshll.u32 [#allocation11], 4
      %s77 = int_to_ptr.vmem [resolvable:$true] %s76
      %82 = dma.hbm_to_vmem [thread:$0]  %s5, 1024, %s77, [#allocation12], 64, 64, 4
    $region25: #{tpu_custom_call.1} parent=1 // pred_fallthru
      _
    // Predicated region
    $region26: #{tpu_custom_call.1} parent=1 // pred_check
      _
    $region27: #{tpu_custom_call.1} parent=1 // pred_check_branch
      %84 = sbr.rel (0) target = $region29
    $region28: #{tpu_custom_call.1} parent=1 // pred_region
      %s86 = ssub.s32 16, 16
      %87 = vsyncadd [#allocation12], %s86
      %s89 = sshll.u32 [#allocation13], 4
      %s90 = int_to_ptr.vmem [resolvable:$true] %s89
      %92 = dma.hbm_to_vmem [thread:$0]  %s6, 16, %s90, [#allocation12]
    $region29: #{tpu_custom_call.1} parent=1 // pred_fallthru
      _
    // Predicated region
    $region30: #{tpu_custom_call.1} parent=1 // pred_check
      _
    $region31: #{tpu_custom_call.1} parent=1 // pred_check_branch
      %94 = sbr.rel (0) target = $region33
    $region32: #{tpu_custom_call.1} parent=1 // pred_region
      %95 = dma.done [#allocation3], 6144
    $region33: #{tpu_custom_call.1} parent=1 // pred_fallthru
      _
    // Predicated region
    $region34: #{tpu_custom_call.1} parent=1 // pred_check
      _
    $region35: #{tpu_custom_call.1} parent=1 // pred_check_branch
      %97 = sbr.rel (0) target = $region37
    $region36: #{tpu_custom_call.1} parent=1 // pred_region
      %98 = dma.done [#allocation6], 196608
    $region37: #{tpu_custom_call.1} parent=1 // pred_fallthru
      _
    // Predicated region
    $region38: #{tpu_custom_call.1} parent=1 // pred_check
      _
    $region39: #{tpu_custom_call.1} parent=1 // pred_check_branch
      %100 = sbr.rel (0) target = $region41
    $region40: #{tpu_custom_call.1} parent=1 // pred_region
      %101 = dma.done [#allocation6], 32
    $region41: #{tpu_custom_call.1} parent=1 // pred_fallthru
      _
    // Predicated region
    $region42: #{tpu_custom_call.1} parent=1 // pred_check
      _
    $region43: #{tpu_custom_call.1} parent=1 // pred_check_branch
      %103 = sbr.rel (0) target = $region45
    $region44: #{tpu_custom_call.1} parent=1 // pred_region
      %104 = dma.done [#allocation9], 2048
    $region45: #{tpu_custom_call.1} parent=1 // pred_fallthru
      _
    // Predicated region
    $region46: #{tpu_custom_call.1} parent=1 // pred_check
      _
    $region47: #{tpu_custom_call.1} parent=1 // pred_check_branch
      %106 = sbr.rel (0) target = $region49
    $region48: #{tpu_custom_call.1} parent=1 // pred_region
      %107 = dma.done [#allocation9], 16
    $region49: #{tpu_custom_call.1} parent=1 // pred_fallthru
      _
    // Predicated region
    $region50: #{tpu_custom_call.1} parent=1 // pred_check
      _
    $region51: #{tpu_custom_call.1} parent=1 // pred_check_branch
      %109 = sbr.rel (0) target = $region53
    $region52: #{tpu_custom_call.1} parent=1 // pred_region
      %110 = dma.done [#allocation12], 1024
    $region53: #{tpu_custom_call.1} parent=1 // pred_fallthru
      _
    // Predicated region
    $region54: #{tpu_custom_call.1} parent=1 // pred_check
      _
    $region55: #{tpu_custom_call.1} parent=1 // pred_check_branch
      %112 = sbr.rel (0) target = $region57
    $region56: #{tpu_custom_call.1} parent=1 // pred_region
      %113 = dma.done [#allocation12], 16
    $region57: #{tpu_custom_call.1} parent=1 // pred_fallthru
      _
    %v115 = vld [vmem:[#allocation2] sm:$0xff]
    %v116 = vld [vmem:[#allocation2 + $0x8] sm:$0xff]
    %v117 = vld [vmem:[#allocation2 + $0x10] sm:$0xff]
    %v118 = vld [vmem:[#allocation2 + $0x18] sm:$0xff]
    %v119 = vld [vmem:[#allocation2 + $0x20] sm:$0xff]
    %v120 = vld [vmem:[#allocation2 + $0x28] sm:$0xff]
    %v121 = vld [vmem:[#allocation2 + $0x30] sm:$0xff]
    %v122 = vld [vmem:[#allocation2 + $0x38] sm:$0xff]
    %v123 = vld [vmem:[#allocation2 + $0x40] sm:$0xff]
    %v124 = vld [vmem:[#allocation2 + $0x48] sm:$0xff]
    %v125 = vld [vmem:[#allocation2 + $0x50] sm:$0xff]
    %v126 = vld [vmem:[#allocation2 + $0x58] sm:$0xff]
    %v127 = vld [vmem:[#allocation2 + $0x60] sm:$0xff]
    %v128 = vld [vmem:[#allocation2 + $0x68] sm:$0xff]
    %v129 = vld [vmem:[#allocation2 + $0x70] sm:$0xff]
    %v130 = vld [vmem:[#allocation2 + $0x78] sm:$0xff]
    %v131 = vld [vmem:[#allocation2 + $0x80] sm:$0xff]
    %v132 = vld [vmem:[#allocation2 + $0x88] sm:$0xff]
    %v133 = vld [vmem:[#allocation2 + $0x90] sm:$0xff]
    %v134 = vld [vmem:[#allocation2 + $0x98] sm:$0xff]
    %v135 = vld [vmem:[#allocation2 + $0xa0] sm:$0xff]
    %v136 = vld [vmem:[#allocation2 + $0xa8] sm:$0xff]
    %v137 = vld [vmem:[#allocation2 + $0xb0] sm:$0xff]
    %v138 = vld [vmem:[#allocation2 + $0xb8] sm:$0xff]
    %v139 = vld [vmem:[#allocation2 + $0xc0] sm:$0xff]
    %v140 = vld [vmem:[#allocation2 + $0xc8] sm:$0xff]
    %v141 = vld [vmem:[#allocation2 + $0xd0] sm:$0xff]
    %v142 = vld [vmem:[#allocation2 + $0xd8] sm:$0xff]
    %v143 = vld [vmem:[#allocation2 + $0xe0] sm:$0xff]
    %v144 = vld [vmem:[#allocation2 + $0xe8] sm:$0xff]
    %v145 = vld [vmem:[#allocation2 + $0xf0] sm:$0xff]
    %v146 = vld [vmem:[#allocation2 + $0xf8] sm:$0xff]
    %v147 = vld [vmem:[#allocation2 + $0x100] sm:$0xff]
    %v148 = vld [vmem:[#allocation2 + $0x108] sm:$0xff]
    %v149 = vld [vmem:[#allocation2 + $0x110] sm:$0xff]
    %v150 = vld [vmem:[#allocation2 + $0x118] sm:$0xff]
    %v151 = vld [vmem:[#allocation2 + $0x120] sm:$0xff]
    %v152 = vld [vmem:[#allocation2 + $0x128] sm:$0xff]
    %v153 = vld [vmem:[#allocation2 + $0x130] sm:$0xff]
    %v154 = vld [vmem:[#allocation2 + $0x138] sm:$0xff]
    %v155 = vld [vmem:[#allocation2 + $0x140] sm:$0xff]
    %v156 = vld [vmem:[#allocation2 + $0x148] sm:$0xff]
    %v157 = vld [vmem:[#allocation2 + $0x150] sm:$0xff]
    %v158 = vld [vmem:[#allocation2 + $0x158] sm:$0xff]
    %v159 = vld [vmem:[#allocation2 + $0x160] sm:$0xff]
    %v160 = vld [vmem:[#allocation2 + $0x168] sm:$0xff]
    %v161 = vld [vmem:[#allocation2 + $0x170] sm:$0xff]
    %v162 = vld [vmem:[#allocation2 + $0x178] sm:$0xff]
    %v163 = vld [vmem:[#allocation5] sm:$0xff]
    %v164 = vld [vmem:[#allocation5 + $0x8] sm:$0xff]
    %v165 = vld [vmem:[#allocation5 + $0x10] sm:$0xff]
    %v166 = vld [vmem:[#allocation5 + $0x18] sm:$0xff]
    %v167 = vld [vmem:[#allocation5 + $0x20] sm:$0xff]
    %v168 = vld [vmem:[#allocation5 + $0x28] sm:$0xff]
    %v169 = vld [vmem:[#allocation5 + $0x30] sm:$0xff]
    %v170 = vld [vmem:[#allocation5 + $0x38] sm:$0xff]
    %v171 = vld [vmem:[#allocation5 + $0x40] sm:$0xff]
    %v172 = vld [vmem:[#allocation5 + $0x48] sm:$0xff]
    %v173 = vld [vmem:[#allocation5 + $0x50] sm:$0xff]
    %v174 = vld [vmem:[#allocation5 + $0x58] sm:$0xff]
    %v175 = vld [vmem:[#allocation5 + $0x60] sm:$0xff]
    %v176 = vld [vmem:[#allocation5 + $0x68] sm:$0xff]
    %v177 = vld [vmem:[#allocation5 + $0x70] sm:$0xff]
    %v178 = vld [vmem:[#allocation5 + $0x78] sm:$0xff]
    %v179 = vld [vmem:[#allocation5 + $0x80] sm:$0xff]
    %v180 = vld [vmem:[#allocation5 + $0x88] sm:$0xff]
    %v181 = vld [vmem:[#allocation5 + $0x90] sm:$0xff]
    %v182 = vld [vmem:[#allocation5 + $0x98] sm:$0xff]
    %v183 = vld [vmem:[#allocation5 + $0xa0] sm:$0xff]
    %v184 = vld [vmem:[#allocation5 + $0xa8] sm:$0xff]
    %v185 = vld [vmem:[#allocation5 + $0xb0] sm:$0xff]
    %v186 = vld [vmem:[#allocation5 + $0xb8] sm:$0xff]
    %v187 = vld [vmem:[#allocation5 + $0xc0] sm:$0xff]
    %v188 = vld [vmem:[#allocation5 + $0xc8] sm:$0xff]
    %v189 = vld [vmem:[#allocation5 + $0xd0] sm:$0xff]
    %v190 = vld [vmem:[#allocation5 + $0xd8] sm:$0xff]
    %v191 = vld [vmem:[#allocation5 + $0xe0] sm:$0xff]
    %v192 = vld [vmem:[#allocation5 + $0xe8] sm:$0xff]
    %v193 = vld [vmem:[#allocation5 + $0xf0] sm:$0xff]
    %v194 = vld [vmem:[#allocation5 + $0xf8] sm:$0xff]
    %v195 = vld [vmem:[#allocation5 + $0x100] sm:$0xff]
    %v196 = vld [vmem:[#allocation5 + $0x108] sm:$0xff]
    %v197 = vld [vmem:[#allocation5 + $0x110] sm:$0xff]
    %v198 = vld [vmem:[#allocation5 + $0x118] sm:$0xff]
    %v199 = vld [vmem:[#allocation5 + $0x120] sm:$0xff]
    %v200 = vld [vmem:[#allocation5 + $0x128] sm:$0xff]
    %v201 = vld [vmem:[#allocation5 + $0x130] sm:$0xff]
    %v202 = vld [vmem:[#allocation5 + $0x138] sm:$0xff]
    %v203 = vld [vmem:[#allocation5 + $0x140] sm:$0xff]
    %v204 = vld [vmem:[#allocation5 + $0x148] sm:$0xff]
    %v205 = vld [vmem:[#allocation5 + $0x150] sm:$0xff]
    %v206 = vld [vmem:[#allocation5 + $0x158] sm:$0xff]
    %v207 = vld [vmem:[#allocation5 + $0x160] sm:$0xff]
    %v208 = vld [vmem:[#allocation5 + $0x168] sm:$0xff]
    %v209 = vld [vmem:[#allocation5 + $0x170] sm:$0xff]
    %v210 = vld [vmem:[#allocation5 + $0x178] sm:$0xff]
    %v211 = vld [vmem:[#allocation5 + $0x180] sm:$0xff]
    %v212 = vld [vmem:[#allocation5 + $0x188] sm:$0xff]
    %v213 = vld [vmem:[#allocation5 + $0x190] sm:$0xff]
    %v214 = vld [vmem:[#allocation5 + $0x198] sm:$0xff]
    %v215 = vld [vmem:[#allocation5 + $0x1a0] sm:$0xff]
    %v216 = vld [vmem:[#allocation5 + $0x1a8] sm:$0xff]
    %v217 = vld [vmem:[#allocation5 + $0x1b0] sm:$0xff]
    %v218 = vld [vmem:[#allocation5 + $0x1b8] sm:$0xff]
    %v219 = vld [vmem:[#allocation5 + $0x1c0] sm:$0xff]
    %v220 = vld [vmem:[#allocation5 + $0x1c8] sm:$0xff]
    %v221 = vld [vmem:[#allocation5 + $0x1d0] sm:$0xff]
    %v222 = vld [vmem:[#allocation5 + $0x1d8] sm:$0xff]
    %v223 = vld [vmem:[#allocation5 + $0x1e0] sm:$0xff]
    %v224 = vld [vmem:[#allocation5 + $0x1e8] sm:$0xff]
    %v225 = vld [vmem:[#allocation5 + $0x1f0] sm:$0xff]
    %v226 = vld [vmem:[#allocation5 + $0x1f8] sm:$0xff]
    %v227 = vld [vmem:[#allocation5 + $0x200] sm:$0xff]
    %v228 = vld [vmem:[#allocation5 + $0x208] sm:$0xff]
    %v229 = vld [vmem:[#allocation5 + $0x210] sm:$0xff]
    %v230 = vld [vmem:[#allocation5 + $0x218] sm:$0xff]
    %v231 = vld [vmem:[#allocation5 + $0x220] sm:$0xff]
    %v232 = vld [vmem:[#allocation5 + $0x228] sm:$0xff]
    %v233 = vld [vmem:[#allocation5 + $0x230] sm:$0xff]
    %v234 = vld [vmem:[#allocation5 + $0x238] sm:$0xff]
    %v235 = vld [vmem:[#allocation5 + $0x240] sm:$0xff]
    %v236 = vld [vmem:[#allocation5 + $0x248] sm:$0xff]
    %v237 = vld [vmem:[#allocation5 + $0x250] sm:$0xff]
    %v238 = vld [vmem:[#allocation5 + $0x258] sm:$0xff]
    %v239 = vld [vmem:[#allocation5 + $0x260] sm:$0xff]
    %v240 = vld [vmem:[#allocation5 + $0x268] sm:$0xff]
    %v241 = vld [vmem:[#allocation5 + $0x270] sm:$0xff]
    %v242 = vld [vmem:[#allocation5 + $0x278] sm:$0xff]
    %v243 = vld [vmem:[#allocation5 + $0x280] sm:$0xff]
    %v244 = vld [vmem:[#allocation5 + $0x288] sm:$0xff]
    %v245 = vld [vmem:[#allocation5 + $0x290] sm:$0xff]
    %v246 = vld [vmem:[#allocation5 + $0x298] sm:$0xff]
    %v247 = vld [vmem:[#allocation5 + $0x2a0] sm:$0xff]
    %v248 = vld [vmem:[#allocation5 + $0x2a8] sm:$0xff]
    %v249 = vld [vmem:[#allocation5 + $0x2b0] sm:$0xff]
    %v250 = vld [vmem:[#allocation5 + $0x2b8] sm:$0xff]
    %v251 = vld [vmem:[#allocation5 + $0x2c0] sm:$0xff]
    %v252 = vld [vmem:[#allocation5 + $0x2c8] sm:$0xff]
    %v253 = vld [vmem:[#allocation5 + $0x2d0] sm:$0xff]
    %v254 = vld [vmem:[#allocation5 + $0x2d8] sm:$0xff]
    %v255 = vld [vmem:[#allocation5 + $0x2e0] sm:$0xff]
    %v256 = vld [vmem:[#allocation5 + $0x2e8] sm:$0xff]
    %v257 = vld [vmem:[#allocation5 + $0x2f0] sm:$0xff]
    %v258 = vld [vmem:[#allocation5 + $0x2f8] sm:$0xff]
    %v259 = vld [vmem:[#allocation5 + $0x300] sm:$0xff]
    %v260 = vld [vmem:[#allocation5 + $0x308] sm:$0xff]
    %v261 = vld [vmem:[#allocation5 + $0x310] sm:$0xff]
    %v262 = vld [vmem:[#allocation5 + $0x318] sm:$0xff]
    %v263 = vld [vmem:[#allocation5 + $0x320] sm:$0xff]
    %v264 = vld [vmem:[#allocation5 + $0x328] sm:$0xff]
    %v265 = vld [vmem:[#allocation5 + $0x330] sm:$0xff]
    %v266 = vld [vmem:[#allocation5 + $0x338] sm:$0xff]
    %v267 = vld [vmem:[#allocation5 + $0x340] sm:$0xff]
    %v268 = vld [vmem:[#allocation5 + $0x348] sm:$0xff]
    %v269 = vld [vmem:[#allocation5 + $0x350] sm:$0xff]
    %v270 = vld [vmem:[#allocation5 + $0x358] sm:$0xff]
    %v271 = vld [vmem:[#allocation5 + $0x360] sm:$0xff]
    %v272 = vld [vmem:[#allocation5 + $0x368] sm:$0xff]
    %v273 = vld [vmem:[#allocation5 + $0x370] sm:$0xff]
    %v274 = vld [vmem:[#allocation5 + $0x378] sm:$0xff]
    %v275 = vld [vmem:[#allocation5 + $0x380] sm:$0xff]
    %v276 = vld [vmem:[#allocation5 + $0x388] sm:$0xff]
    %v277 = vld [vmem:[#allocation5 + $0x390] sm:$0xff]
    %v278 = vld [vmem:[#allocation5 + $0x398] sm:$0xff]
    %v279 = vld [vmem:[#allocation5 + $0x3a0] sm:$0xff]
    %v280 = vld [vmem:[#allocation5 + $0x3a8] sm:$0xff]
    %v281 = vld [vmem:[#allocation5 + $0x3b0] sm:$0xff]
    %v282 = vld [vmem:[#allocation5 + $0x3b8] sm:$0xff]
    %v283 = vld [vmem:[#allocation5 + $0x3c0] sm:$0xff]
    %v284 = vld [vmem:[#allocation5 + $0x3c8] sm:$0xff]
    %v285 = vld [vmem:[#allocation5 + $0x3d0] sm:$0xff]
    %v286 = vld [vmem:[#allocation5 + $0x3d8] sm:$0xff]
    %v287 = vld [vmem:[#allocation5 + $0x3e0] sm:$0xff]
    %v288 = vld [vmem:[#allocation5 + $0x3e8] sm:$0xff]
    %v289 = vld [vmem:[#allocation5 + $0x3f0] sm:$0xff]
    %v290 = vld [vmem:[#allocation5 + $0x3f8] sm:$0xff]
    %v291 = vld [vmem:[#allocation5 + $0x400] sm:$0xff]
    %v292 = vld [vmem:[#allocation5 + $0x408] sm:$0xff]
    %v293 = vld [vmem:[#allocation5 + $0x410] sm:$0xff]
    %v294 = vld [vmem:[#allocation5 + $0x418] sm:$0xff]
    %v295 = vld [vmem:[#allocation5 + $0x420] sm:$0xff]
    %v296 = vld [vmem:[#allocation5 + $0x428] sm:$0xff]
    %v297 = vld [vmem:[#allocation5 + $0x430] sm:$0xff]
    %v298 = vld [vmem:[#allocation5 + $0x438] sm:$0xff]
    %v299 = vld [vmem:[#allocation5 + $0x440] sm:$0xff]
    %v300 = vld [vmem:[#allocation5 + $0x448] sm:$0xff]
    %v301 = vld [vmem:[#allocation5 + $0x450] sm:$0xff]
    %v302 = vld [vmem:[#allocation5 + $0x458] sm:$0xff]
    %v303 = vld [vmem:[#allocation5 + $0x460] sm:$0xff]
    %v304 = vld [vmem:[#allocation5 + $0x468] sm:$0xff]
    %v305 = vld [vmem:[#allocation5 + $0x470] sm:$0xff]
    %v306 = vld [vmem:[#allocation5 + $0x478] sm:$0xff]
    %v307 = vld [vmem:[#allocation5 + $0x480] sm:$0xff]
    %v308 = vld [vmem:[#allocation5 + $0x488] sm:$0xff]
    %v309 = vld [vmem:[#allocation5 + $0x490] sm:$0xff]
    %v310 = vld [vmem:[#allocation5 + $0x498] sm:$0xff]
    %v311 = vld [vmem:[#allocation5 + $0x4a0] sm:$0xff]
    %v312 = vld [vmem:[#allocation5 + $0x4a8] sm:$0xff]
    %v313 = vld [vmem:[#allocation5 + $0x4b0] sm:$0xff]
    %v314 = vld [vmem:[#allocation5 + $0x4b8] sm:$0xff]
    %v315 = vld [vmem:[#allocation5 + $0x4c0] sm:$0xff]
    %v316 = vld [vmem:[#allocation5 + $0x4c8] sm:$0xff]
    %v317 = vld [vmem:[#allocation5 + $0x4d0] sm:$0xff]
    %v318 = vld [vmem:[#allocation5 + $0x4d8] sm:$0xff]
    %v319 = vld [vmem:[#allocation5 + $0x4e0] sm:$0xff]
    %v320 = vld [vmem:[#allocation5 + $0x4e8] sm:$0xff]
    %v321 = vld [vmem:[#allocation5 + $0x4f0] sm:$0xff]
    %v322 = vld [vmem:[#allocation5 + $0x4f8] sm:$0xff]
    %v323 = vld [vmem:[#allocation5 + $0x500] sm:$0xff]
    %v324 = vld [vmem:[#allocation5 + $0x508] sm:$0xff]
    %v325 = vld [vmem:[#allocation5 + $0x510] sm:$0xff]
    %v326 = vld [vmem:[#allocation5 + $0x518] sm:$0xff]
    %v327 = vld [vmem:[#allocation5 + $0x520] sm:$0xff]
    %v328 = vld [vmem:[#allocation5 + $0x528] sm:$0xff]
    %v329 = vld [vmem:[#allocation5 + $0x530] sm:$0xff]
    %v330 = vld [vmem:[#allocation5 + $0x538] sm:$0xff]
    %v331 = vld [vmem:[#allocation5 + $0x540] sm:$0xff]
    %v332 = vld [vmem:[#allocation5 + $0x548] sm:$0xff]
    %v333 = vld [vmem:[#allocation5 + $0x550] sm:$0xff]
    %v334 = vld [vmem:[#allocation5 + $0x558] sm:$0xff]
    %v335 = vld [vmem:[#allocation5 + $0x560] sm:$0xff]
    %v336 = vld [vmem:[#allocation5 + $0x568] sm:$0xff]
    %v337 = vld [vmem:[#allocation5 + $0x570] sm:$0xff]
    %v338 = vld [vmem:[#allocation5 + $0x578] sm:$0xff]
    %v339 = vld [vmem:[#allocation5 + $0x580] sm:$0xff]
    %v340 = vld [vmem:[#allocation5 + $0x588] sm:$0xff]
    %v341 = vld [vmem:[#allocation5 + $0x590] sm:$0xff]
    %v342 = vld [vmem:[#allocation5 + $0x598] sm:$0xff]
    %v343 = vld [vmem:[#allocation5 + $0x5a0] sm:$0xff]
    %v344 = vld [vmem:[#allocation5 + $0x5a8] sm:$0xff]
    %v345 = vld [vmem:[#allocation5 + $0x5b0] sm:$0xff]
    %v346 = vld [vmem:[#allocation5 + $0x5b8] sm:$0xff]
    %v347 = vld [vmem:[#allocation5 + $0x5c0] sm:$0xff]
    %v348 = vld [vmem:[#allocation5 + $0x5c8] sm:$0xff]
    %v349 = vld [vmem:[#allocation5 + $0x5d0] sm:$0xff]
    %v350 = vld [vmem:[#allocation5 + $0x5d8] sm:$0xff]
    %v351 = vld [vmem:[#allocation5 + $0x5e0] sm:$0xff]
    %v352 = vld [vmem:[#allocation5 + $0x5e8] sm:$0xff]
    %v353 = vld [vmem:[#allocation5 + $0x5f0] sm:$0xff]
    %v354 = vld [vmem:[#allocation5 + $0x5f8] sm:$0xff]
    %v355 = vld [vmem:[#allocation5 + $0x600] sm:$0xff]
    %v356 = vld [vmem:[#allocation5 + $0x608] sm:$0xff]
    %v357 = vld [vmem:[#allocation5 + $0x610] sm:$0xff]
    %v358 = vld [vmem:[#allocation5 + $0x618] sm:$0xff]
    %v359 = vld [vmem:[#allocation5 + $0x620] sm:$0xff]
    %v360 = vld [vmem:[#allocation5 + $0x628] sm:$0xff]
    %v361 = vld [vmem:[#allocation5 + $0x630] sm:$0xff]
    %v362 = vld [vmem:[#allocation5 + $0x638] sm:$0xff]
    %v363 = vld [vmem:[#allocation5 + $0x640] sm:$0xff]
    %v364 = vld [vmem:[#allocation5 + $0x648] sm:$0xff]
    %v365 = vld [vmem:[#allocation5 + $0x650] sm:$0xff]
    %v366 = vld [vmem:[#allocation5 + $0x658] sm:$0xff]
    %v367 = vld [vmem:[#allocation5 + $0x660] sm:$0xff]
    %v368 = vld [vmem:[#allocation5 + $0x668] sm:$0xff]
    %v369 = vld [vmem:[#allocation5 + $0x670] sm:$0xff]
    %v370 = vld [vmem:[#allocation5 + $0x678] sm:$0xff]
    %v371 = vld [vmem:[#allocation5 + $0x680] sm:$0xff]
    %v372 = vld [vmem:[#allocation5 + $0x688] sm:$0xff]
    %v373 = vld [vmem:[#allocation5 + $0x690] sm:$0xff]
    %v374 = vld [vmem:[#allocation5 + $0x698] sm:$0xff]
    %v375 = vld [vmem:[#allocation5 + $0x6a0] sm:$0xff]
    %v376 = vld [vmem:[#allocation5 + $0x6a8] sm:$0xff]
    %v377 = vld [vmem:[#allocation5 + $0x6b0] sm:$0xff]
    %v378 = vld [vmem:[#allocation5 + $0x6b8] sm:$0xff]
    %v379 = vld [vmem:[#allocation5 + $0x6c0] sm:$0xff]
    %v380 = vld [vmem:[#allocation5 + $0x6c8] sm:$0xff]
    %v381 = vld [vmem:[#allocation5 + $0x6d0] sm:$0xff]
    %v382 = vld [vmem:[#allocation5 + $0x6d8] sm:$0xff]
    %v383 = vld [vmem:[#allocation5 + $0x6e0] sm:$0xff]
    %v384 = vld [vmem:[#allocation5 + $0x6e8] sm:$0xff]
    %v385 = vld [vmem:[#allocation5 + $0x6f0] sm:$0xff]
    %v386 = vld [vmem:[#allocation5 + $0x6f8] sm:$0xff]
    %v387 = vld [vmem:[#allocation5 + $0x700] sm:$0xff]
    %v388 = vld [vmem:[#allocation5 + $0x708] sm:$0xff]
    %v389 = vld [vmem:[#allocation5 + $0x710] sm:$0xff]
    %v390 = vld [vmem:[#allocation5 + $0x718] sm:$0xff]
    %v391 = vld [vmem:[#allocation5 + $0x720] sm:$0xff]
    %v392 = vld [vmem:[#allocation5 + $0x728] sm:$0xff]
    %v393 = vld [vmem:[#allocation5 + $0x730] sm:$0xff]
    %v394 = vld [vmem:[#allocation5 + $0x738] sm:$0xff]
    %v395 = vld [vmem:[#allocation5 + $0x740] sm:$0xff]
    %v396 = vld [vmem:[#allocation5 + $0x748] sm:$0xff]
    %v397 = vld [vmem:[#allocation5 + $0x750] sm:$0xff]
    %v398 = vld [vmem:[#allocation5 + $0x758] sm:$0xff]
    %v399 = vld [vmem:[#allocation5 + $0x760] sm:$0xff]
    %v400 = vld [vmem:[#allocation5 + $0x768] sm:$0xff]
    %v401 = vld [vmem:[#allocation5 + $0x770] sm:$0xff]
    %v402 = vld [vmem:[#allocation5 + $0x778] sm:$0xff]
    %v403 = vld [vmem:[#allocation5 + $0x780] sm:$0xff]
    %v404 = vld [vmem:[#allocation5 + $0x788] sm:$0xff]
    %v405 = vld [vmem:[#allocation5 + $0x790] sm:$0xff]
    %v406 = vld [vmem:[#allocation5 + $0x798] sm:$0xff]
    %v407 = vld [vmem:[#allocation5 + $0x7a0] sm:$0xff]
    %v408 = vld [vmem:[#allocation5 + $0x7a8] sm:$0xff]
    %v409 = vld [vmem:[#allocation5 + $0x7b0] sm:$0xff]
    %v410 = vld [vmem:[#allocation5 + $0x7b8] sm:$0xff]
    %v411 = vld [vmem:[#allocation5 + $0x7c0] sm:$0xff]
    %v412 = vld [vmem:[#allocation5 + $0x7c8] sm:$0xff]
    %v413 = vld [vmem:[#allocation5 + $0x7d0] sm:$0xff]
    %v414 = vld [vmem:[#allocation5 + $0x7d8] sm:$0xff]
    %v415 = vld [vmem:[#allocation5 + $0x7e0] sm:$0xff]
    %v416 = vld [vmem:[#allocation5 + $0x7e8] sm:$0xff]
    %v417 = vld [vmem:[#allocation5 + $0x7f0] sm:$0xff]
    %v418 = vld [vmem:[#allocation5 + $0x7f8] sm:$0xff]
    %v419 = vld [vmem:[#allocation5 + $0x800] sm:$0xff]
    %v420 = vld [vmem:[#allocation5 + $0x808] sm:$0xff]
    %v421 = vld [vmem:[#allocation5 + $0x810] sm:$0xff]
    %v422 = vld [vmem:[#allocation5 + $0x818] sm:$0xff]
    %v423 = vld [vmem:[#allocation5 + $0x820] sm:$0xff]
    %v424 = vld [vmem:[#allocation5 + $0x828] sm:$0xff]
    %v425 = vld [vmem:[#allocation5 + $0x830] sm:$0xff]
    %v426 = vld [vmem:[#allocation5 + $0x838] sm:$0xff]
    %v427 = vld [vmem:[#allocation5 + $0x840] sm:$0xff]
    %v428 = vld [vmem:[#allocation5 + $0x848] sm:$0xff]
    %v429 = vld [vmem:[#allocation5 + $0x850] sm:$0xff]
    %v430 = vld [vmem:[#allocation5 + $0x858] sm:$0xff]
    %v431 = vld [vmem:[#allocation5 + $0x860] sm:$0xff]
    %v432 = vld [vmem:[#allocation5 + $0x868] sm:$0xff]
    %v433 = vld [vmem:[#allocation5 + $0x870] sm:$0xff]
    %v434 = vld [vmem:[#allocation5 + $0x878] sm:$0xff]
    %v435 = vld [vmem:[#allocation5 + $0x880] sm:$0xff]
    %v436 = vld [vmem:[#allocation5 + $0x888] sm:$0xff]
    %v437 = vld [vmem:[#allocation5 + $0x890] sm:$0xff]
    %v438 = vld [vmem:[#allocation5 + $0x898] sm:$0xff]
    %v439 = vld [vmem:[#allocation5 + $0x8a0] sm:$0xff]
    %v440 = vld [vmem:[#allocation5 + $0x8a8] sm:$0xff]
    %v441 = vld [vmem:[#allocation5 + $0x8b0] sm:$0xff]
    %v442 = vld [vmem:[#allocation5 + $0x8b8] sm:$0xff]
    %v443 = vld [vmem:[#allocation5 + $0x8c0] sm:$0xff]
    %v444 = vld [vmem:[#allocation5 + $0x8c8] sm:$0xff]
    %v445 = vld [vmem:[#allocation5 + $0x8d0] sm:$0xff]
    %v446 = vld [vmem:[#allocation5 + $0x8d8] sm:$0xff]
    %v447 = vld [vmem:[#allocation5 + $0x8e0] sm:$0xff]
    %v448 = vld [vmem:[#allocation5 + $0x8e8] sm:$0xff]
    %v449 = vld [vmem:[#allocation5 + $0x8f0] sm:$0xff]
    %v450 = vld [vmem:[#allocation5 + $0x8f8] sm:$0xff]
    %v451 = vld [vmem:[#allocation5 + $0x900] sm:$0xff]
    %v452 = vld [vmem:[#allocation5 + $0x908] sm:$0xff]
    %v453 = vld [vmem:[#allocation5 + $0x910] sm:$0xff]
    %v454 = vld [vmem:[#allocation5 + $0x918] sm:$0xff]
    %v455 = vld [vmem:[#allocation5 + $0x920] sm:$0xff]
    %v456 = vld [vmem:[#allocation5 + $0x928] sm:$0xff]
    %v457 = vld [vmem:[#allocation5 + $0x930] sm:$0xff]
    %v458 = vld [vmem:[#allocation5 + $0x938] sm:$0xff]
    %v459 = vld [vmem:[#allocation5 + $0x940] sm:$0xff]
    %v460 = vld [vmem:[#allocation5 + $0x948] sm:$0xff]
    %v461 = vld [vmem:[#allocation5 + $0x950] sm:$0xff]
    %v462 = vld [vmem:[#allocation5 + $0x958] sm:$0xff]
    %v463 = vld [vmem:[#allocation5 + $0x960] sm:$0xff]
    %v464 = vld [vmem:[#allocation5 + $0x968] sm:$0xff]
    %v465 = vld [vmem:[#allocation5 + $0x970] sm:$0xff]
    %v466 = vld [vmem:[#allocation5 + $0x978] sm:$0xff]
    %v467 = vld [vmem:[#allocation5 + $0x980] sm:$0xff]
    %v468 = vld [vmem:[#allocation5 + $0x988] sm:$0xff]
    %v469 = vld [vmem:[#allocation5 + $0x990] sm:$0xff]
    %v470 = vld [vmem:[#allocation5 + $0x998] sm:$0xff]
    %v471 = vld [vmem:[#allocation5 + $0x9a0] sm:$0xff]
    %v472 = vld [vmem:[#allocation5 + $0x9a8] sm:$0xff]
    %v473 = vld [vmem:[#allocation5 + $0x9b0] sm:$0xff]
    %v474 = vld [vmem:[#allocation5 + $0x9b8] sm:$0xff]
    %v475 = vld [vmem:[#allocation5 + $0x9c0] sm:$0xff]
    %v476 = vld [vmem:[#allocation5 + $0x9c8] sm:$0xff]
    %v477 = vld [vmem:[#allocation5 + $0x9d0] sm:$0xff]
    %v478 = vld [vmem:[#allocation5 + $0x9d8] sm:$0xff]
    %v479 = vld [vmem:[#allocation5 + $0x9e0] sm:$0xff]
    %v480 = vld [vmem:[#allocation5 + $0x9e8] sm:$0xff]
    %v481 = vld [vmem:[#allocation5 + $0x9f0] sm:$0xff]
    %v482 = vld [vmem:[#allocation5 + $0x9f8] sm:$0xff]
    %v483 = vld [vmem:[#allocation5 + $0xa00] sm:$0xff]
    %v484 = vld [vmem:[#allocation5 + $0xa08] sm:$0xff]
    %v485 = vld [vmem:[#allocation5 + $0xa10] sm:$0xff]
    %v486 = vld [vmem:[#allocation5 + $0xa18] sm:$0xff]
    %v487 = vld [vmem:[#allocation5 + $0xa20] sm:$0xff]
    %v488 = vld [vmem:[#allocation5 + $0xa28] sm:$0xff]
    %v489 = vld [vmem:[#allocation5 + $0xa30] sm:$0xff]
    %v490 = vld [vmem:[#allocation5 + $0xa38] sm:$0xff]
    %v491 = vld [vmem:[#allocation5 + $0xa40] sm:$0xff]
    %v492 = vld [vmem:[#allocation5 + $0xa48] sm:$0xff]
    %v493 = vld [vmem:[#allocation5 + $0xa50] sm:$0xff]
    %v494 = vld [vmem:[#allocation5 + $0xa58] sm:$0xff]
    %v495 = vld [vmem:[#allocation5 + $0xa60] sm:$0xff]
    %v496 = vld [vmem:[#allocation5 + $0xa68] sm:$0xff]
    %v497 = vld [vmem:[#allocation5 + $0xa70] sm:$0xff]
    %v498 = vld [vmem:[#allocation5 + $0xa78] sm:$0xff]
    %v499 = vld [vmem:[#allocation5 + $0xa80] sm:$0xff]
    %v500 = vld [vmem:[#allocation5 + $0xa88] sm:$0xff]
    %v501 = vld [vmem:[#allocation5 + $0xa90] sm:$0xff]
    %v502 = vld [vmem:[#allocation5 + $0xa98] sm:$0xff]
    %v503 = vld [vmem:[#allocation5 + $0xaa0] sm:$0xff]
    %v504 = vld [vmem:[#allocation5 + $0xaa8] sm:$0xff]
    %v505 = vld [vmem:[#allocation5 + $0xab0] sm:$0xff]
    %v506 = vld [vmem:[#allocation5 + $0xab8] sm:$0xff]
    %v507 = vld [vmem:[#allocation5 + $0xac0] sm:$0xff]
    %v508 = vld [vmem:[#allocation5 + $0xac8] sm:$0xff]
    %v509 = vld [vmem:[#allocation5 + $0xad0] sm:$0xff]
    %v510 = vld [vmem:[#allocation5 + $0xad8] sm:$0xff]
    %v511 = vld [vmem:[#allocation5 + $0xae0] sm:$0xff]
    %v512 = vld [vmem:[#allocation5 + $0xae8] sm:$0xff]
    %v513 = vld [vmem:[#allocation5 + $0xaf0] sm:$0xff]
    %v514 = vld [vmem:[#allocation5 + $0xaf8] sm:$0xff]
    %v515 = vld [vmem:[#allocation5 + $0xb00] sm:$0xff]
    %v516 = vld [vmem:[#allocation5 + $0xb08] sm:$0xff]
    %v517 = vld [vmem:[#allocation5 + $0xb10] sm:$0xff]
    %v518 = vld [vmem:[#allocation5 + $0xb18] sm:$0xff]
    %v519 = vld [vmem:[#allocation5 + $0xb20] sm:$0xff]
    %v520 = vld [vmem:[#allocation5 + $0xb28] sm:$0xff]
    %v521 = vld [vmem:[#allocation5 + $0xb30] sm:$0xff]
    %v522 = vld [vmem:[#allocation5 + $0xb38] sm:$0xff]
    %v523 = vld [vmem:[#allocation5 + $0xb40] sm:$0xff]
    %v524 = vld [vmem:[#allocation5 + $0xb48] sm:$0xff]
    %v525 = vld [vmem:[#allocation5 + $0xb50] sm:$0xff]
    %v526 = vld [vmem:[#allocation5 + $0xb58] sm:$0xff]
    %v527 = vld [vmem:[#allocation5 + $0xb60] sm:$0xff]
    %v528 = vld [vmem:[#allocation5 + $0xb68] sm:$0xff]
    %v529 = vld [vmem:[#allocation5 + $0xb70] sm:$0xff]
    %v530 = vld [vmem:[#allocation5 + $0xb78] sm:$0xff]
    %v531 = vld [vmem:[#allocation5 + $0xb80] sm:$0xff]
    %v532 = vld [vmem:[#allocation5 + $0xb88] sm:$0xff]
    %v533 = vld [vmem:[#allocation5 + $0xb90] sm:$0xff]
    %v534 = vld [vmem:[#allocation5 + $0xb98] sm:$0xff]
    %v535 = vld [vmem:[#allocation5 + $0xba0] sm:$0xff]
    %v536 = vld [vmem:[#allocation5 + $0xba8] sm:$0xff]
    %v537 = vld [vmem:[#allocation5 + $0xbb0] sm:$0xff]
    %v538 = vld [vmem:[#allocation5 + $0xbb8] sm:$0xff]
    %v539 = vld [vmem:[#allocation5 + $0xbc0] sm:$0xff]
    %v540 = vld [vmem:[#allocation5 + $0xbc8] sm:$0xff]
    %v541 = vld [vmem:[#allocation5 + $0xbd0] sm:$0xff]
    %v542 = vld [vmem:[#allocation5 + $0xbd8] sm:$0xff]
    %v543 = vld [vmem:[#allocation5 + $0xbe0] sm:$0xff]
    %v544 = vld [vmem:[#allocation5 + $0xbe8] sm:$0xff]
    %v545 = vld [vmem:[#allocation5 + $0xbf0] sm:$0xff]
    %v546 = vld [vmem:[#allocation5 + $0xbf8] sm:$0xff]
    %v547 = vld [vmem:[#allocation5 + $0xc00] sm:$0xff]
    %v548 = vld [vmem:[#allocation5 + $0xc08] sm:$0xff]
    %v549 = vld [vmem:[#allocation5 + $0xc10] sm:$0xff]
    %v550 = vld [vmem:[#allocation5 + $0xc18] sm:$0xff]
    %v551 = vld [vmem:[#allocation5 + $0xc20] sm:$0xff]
    %v552 = vld [vmem:[#allocation5 + $0xc28] sm:$0xff]
    %v553 = vld [vmem:[#allocation5 + $0xc30] sm:$0xff]
    %v554 = vld [vmem:[#allocation5 + $0xc38] sm:$0xff]
    %v555 = vld [vmem:[#allocation5 + $0xc40] sm:$0xff]
    %v556 = vld [vmem:[#allocation5 + $0xc48] sm:$0xff]
    %v557 = vld [vmem:[#allocation5 + $0xc50] sm:$0xff]
    %v558 = vld [vmem:[#allocation5 + $0xc58] sm:$0xff]
    %v559 = vld [vmem:[#allocation5 + $0xc60] sm:$0xff]
    %v560 = vld [vmem:[#allocation5 + $0xc68] sm:$0xff]
    %v561 = vld [vmem:[#allocation5 + $0xc70] sm:$0xff]
    %v562 = vld [vmem:[#allocation5 + $0xc78] sm:$0xff]
    %v563 = vld [vmem:[#allocation5 + $0xc80] sm:$0xff]
    %v564 = vld [vmem:[#allocation5 + $0xc88] sm:$0xff]
    %v565 = vld [vmem:[#allocation5 + $0xc90] sm:$0xff]
    %v566 = vld [vmem:[#allocation5 + $0xc98] sm:$0xff]
    %v567 = vld [vmem:[#allocation5 + $0xca0] sm:$0xff]
    %v568 = vld [vmem:[#allocation5 + $0xca8] sm:$0xff]
    %v569 = vld [vmem:[#allocation5 + $0xcb0] sm:$0xff]
    %v570 = vld [vmem:[#allocation5 + $0xcb8] sm:$0xff]
    %v571 = vld [vmem:[#allocation5 + $0xcc0] sm:$0xff]
    %v572 = vld [vmem:[#allocation5 + $0xcc8] sm:$0xff]
    %v573 = vld [vmem:[#allocation5 + $0xcd0] sm:$0xff]
    %v574 = vld [vmem:[#allocation5 + $0xcd8] sm:$0xff]
    %v575 = vld [vmem:[#allocation5 + $0xce0] sm:$0xff]
    %v576 = vld [vmem:[#allocation5 + $0xce8] sm:$0xff]
    %v577 = vld [vmem:[#allocation5 + $0xcf0] sm:$0xff]
    %v578 = vld [vmem:[#allocation5 + $0xcf8] sm:$0xff]
    %v579 = vld [vmem:[#allocation5 + $0xd00] sm:$0xff]
    %v580 = vld [vmem:[#allocation5 + $0xd08] sm:$0xff]
    %v581 = vld [vmem:[#allocation5 + $0xd10] sm:$0xff]
    %v582 = vld [vmem:[#allocation5 + $0xd18] sm:$0xff]
    %v583 = vld [vmem:[#allocation5 + $0xd20] sm:$0xff]
    %v584 = vld [vmem:[#allocation5 + $0xd28] sm:$0xff]
    %v585 = vld [vmem:[#allocation5 + $0xd30] sm:$0xff]
    %v586 = vld [vmem:[#allocation5 + $0xd38] sm:$0xff]
    %v587 = vld [vmem:[#allocation5 + $0xd40] sm:$0xff]
    %v588 = vld [vmem:[#allocation5 + $0xd48] sm:$0xff]
    %v589 = vld [vmem:[#allocation5 + $0xd50] sm:$0xff]
    %v590 = vld [vmem:[#allocation5 + $0xd58] sm:$0xff]
    %v591 = vld [vmem:[#allocation5 + $0xd60] sm:$0xff]
    %v592 = vld [vmem:[#allocation5 + $0xd68] sm:$0xff]
    %v593 = vld [vmem:[#allocation5 + $0xd70] sm:$0xff]
    %v594 = vld [vmem:[#allocation5 + $0xd78] sm:$0xff]
    %v595 = vld [vmem:[#allocation5 + $0xd80] sm:$0xff]
    %v596 = vld [vmem:[#allocation5 + $0xd88] sm:$0xff]
    %v597 = vld [vmem:[#allocation5 + $0xd90] sm:$0xff]
    %v598 = vld [vmem:[#allocation5 + $0xd98] sm:$0xff]
    %v599 = vld [vmem:[#allocation5 + $0xda0] sm:$0xff]
    %v600 = vld [vmem:[#allocation5 + $0xda8] sm:$0xff]
    %v601 = vld [vmem:[#allocation5 + $0xdb0] sm:$0xff]
    %v602 = vld [vmem:[#allocation5 + $0xdb8] sm:$0xff]
    %v603 = vld [vmem:[#allocation5 + $0xdc0] sm:$0xff]
    %v604 = vld [vmem:[#allocation5 + $0xdc8] sm:$0xff]
    %v605 = vld [vmem:[#allocation5 + $0xdd0] sm:$0xff]
    %v606 = vld [vmem:[#allocation5 + $0xdd8] sm:$0xff]
    %v607 = vld [vmem:[#allocation5 + $0xde0] sm:$0xff]
    %v608 = vld [vmem:[#allocation5 + $0xde8] sm:$0xff]
    %v609 = vld [vmem:[#allocation5 + $0xdf0] sm:$0xff]
    %v610 = vld [vmem:[#allocation5 + $0xdf8] sm:$0xff]
    %v611 = vld [vmem:[#allocation5 + $0xe00] sm:$0xff]
    %v612 = vld [vmem:[#allocation5 + $0xe08] sm:$0xff]
    %v613 = vld [vmem:[#allocation5 + $0xe10] sm:$0xff]
    %v614 = vld [vmem:[#allocation5 + $0xe18] sm:$0xff]
    %v615 = vld [vmem:[#allocation5 + $0xe20] sm:$0xff]
    %v616 = vld [vmem:[#allocation5 + $0xe28] sm:$0xff]
    %v617 = vld [vmem:[#allocation5 + $0xe30] sm:$0xff]
    %v618 = vld [vmem:[#allocation5 + $0xe38] sm:$0xff]
    %v619 = vld [vmem:[#allocation5 + $0xe40] sm:$0xff]
    %v620 = vld [vmem:[#allocation5 + $0xe48] sm:$0xff]
    %v621 = vld [vmem:[#allocation5 + $0xe50] sm:$0xff]
    %v622 = vld [vmem:[#allocation5 + $0xe58] sm:$0xff]
    %v623 = vld [vmem:[#allocation5 + $0xe60] sm:$0xff]
    %v624 = vld [vmem:[#allocation5 + $0xe68] sm:$0xff]
    %v625 = vld [vmem:[#allocation5 + $0xe70] sm:$0xff]
    %v626 = vld [vmem:[#allocation5 + $0xe78] sm:$0xff]
    %v627 = vld [vmem:[#allocation5 + $0xe80] sm:$0xff]
    %v628 = vld [vmem:[#allocation5 + $0xe88] sm:$0xff]
    %v629 = vld [vmem:[#allocation5 + $0xe90] sm:$0xff]
    %v630 = vld [vmem:[#allocation5 + $0xe98] sm:$0xff]
    %v631 = vld [vmem:[#allocation5 + $0xea0] sm:$0xff]
    %v632 = vld [vmem:[#allocation5 + $0xea8] sm:$0xff]
    %v633 = vld [vmem:[#allocation5 + $0xeb0] sm:$0xff]
    %v634 = vld [vmem:[#allocation5 + $0xeb8] sm:$0xff]
    %v635 = vld [vmem:[#allocation5 + $0xec0] sm:$0xff]
    %v636 = vld [vmem:[#allocation5 + $0xec8] sm:$0xff]
    %v637 = vld [vmem:[#allocation5 + $0xed0] sm:$0xff]
    %v638 = vld [vmem:[#allocation5 + $0xed8] sm:$0xff]
    %v639 = vld [vmem:[#allocation5 + $0xee0] sm:$0xff]
    %v640 = vld [vmem:[#allocation5 + $0xee8] sm:$0xff]
    %v641 = vld [vmem:[#allocation5 + $0xef0] sm:$0xff]
    %v642 = vld [vmem:[#allocation5 + $0xef8] sm:$0xff]
    %v643 = vld [vmem:[#allocation5 + $0xf00] sm:$0xff]
    %v644 = vld [vmem:[#allocation5 + $0xf08] sm:$0xff]
    %v645 = vld [vmem:[#allocation5 + $0xf10] sm:$0xff]
    %v646 = vld [vmem:[#allocation5 + $0xf18] sm:$0xff]
    %v647 = vld [vmem:[#allocation5 + $0xf20] sm:$0xff]
    %v648 = vld [vmem:[#allocation5 + $0xf28] sm:$0xff]
    %v649 = vld [vmem:[#allocation5 + $0xf30] sm:$0xff]
    %v650 = vld [vmem:[#allocation5 + $0xf38] sm:$0xff]
    %v651 = vld [vmem:[#allocation5 + $0xf40] sm:$0xff]
    %v652 = vld [vmem:[#allocation5 + $0xf48] sm:$0xff]
    %v653 = vld [vmem:[#allocation5 + $0xf50] sm:$0xff]
    %v654 = vld [vmem:[#allocation5 + $0xf58] sm:$0xff]
    %v655 = vld [vmem:[#allocation5 + $0xf60] sm:$0xff]
    %v656 = vld [vmem:[#allocation5 + $0xf68] sm:$0xff]
    %v657 = vld [vmem:[#allocation5 + $0xf70] sm:$0xff]
    %v658 = vld [vmem:[#allocation5 + $0xf78] sm:$0xff]
    %v659 = vld [vmem:[#allocation5 + $0xf80] sm:$0xff]
    %v660 = vld [vmem:[#allocation5 + $0xf88] sm:$0xff]
    %v661 = vld [vmem:[#allocation5 + $0xf90] sm:$0xff]
    %v662 = vld [vmem:[#allocation5 + $0xf98] sm:$0xff]
    %v663 = vld [vmem:[#allocation5 + $0xfa0] sm:$0xff]
    %v664 = vld [vmem:[#allocation5 + $0xfa8] sm:$0xff]
    %v665 = vld [vmem:[#allocation5 + $0xfb0] sm:$0xff]
    %v666 = vld [vmem:[#allocation5 + $0xfb8] sm:$0xff]
    %v667 = vld [vmem:[#allocation5 + $0xfc0] sm:$0xff]
    %v668 = vld [vmem:[#allocation5 + $0xfc8] sm:$0xff]
    %v669 = vld [vmem:[#allocation5 + $0xfd0] sm:$0xff]
    %v670 = vld [vmem:[#allocation5 + $0xfd8] sm:$0xff]
    %v671 = vld [vmem:[#allocation5 + $0xfe0] sm:$0xff]
    %v672 = vld [vmem:[#allocation5 + $0xfe8] sm:$0xff]
    %v673 = vld [vmem:[#allocation5 + $0xff0] sm:$0xff]
    %v674 = vld [vmem:[#allocation5 + $0xff8] sm:$0xff]
    %v675 = vld [vmem:[#allocation5 + $0x1000] sm:$0xff]
    %v676 = vld [vmem:[#allocation5 + $0x1008] sm:$0xff]
    %v677 = vld [vmem:[#allocation5 + $0x1010] sm:$0xff]
    %v678 = vld [vmem:[#allocation5 + $0x1018] sm:$0xff]
    %v679 = vld [vmem:[#allocation5 + $0x1020] sm:$0xff]
    %v680 = vld [vmem:[#allocation5 + $0x1028] sm:$0xff]
    %v681 = vld [vmem:[#allocation5 + $0x1030] sm:$0xff]
    %v682 = vld [vmem:[#allocation5 + $0x1038] sm:$0xff]
    %v683 = vld [vmem:[#allocation5 + $0x1040] sm:$0xff]
    %v684 = vld [vmem:[#allocation5 + $0x1048] sm:$0xff]
    %v685 = vld [vmem:[#allocation5 + $0x1050] sm:$0xff]
    %v686 = vld [vmem:[#allocation5 + $0x1058] sm:$0xff]
    %v687 = vld [vmem:[#allocation5 + $0x1060] sm:$0xff]
    %v688 = vld [vmem:[#allocation5 + $0x1068] sm:$0xff]
    %v689 = vld [vmem:[#allocation5 + $0x1070] sm:$0xff]
    %v690 = vld [vmem:[#allocation5 + $0x1078] sm:$0xff]
    %v691 = vld [vmem:[#allocation5 + $0x1080] sm:$0xff]
    %v692 = vld [vmem:[#allocation5 + $0x1088] sm:$0xff]
    %v693 = vld [vmem:[#allocation5 + $0x1090] sm:$0xff]
    %v694 = vld [vmem:[#allocation5 + $0x1098] sm:$0xff]
    %v695 = vld [vmem:[#allocation5 + $0x10a0] sm:$0xff]
    %v696 = vld [vmem:[#allocation5 + $0x10a8] sm:$0xff]
    %v697 = vld [vmem:[#allocation5 + $0x10b0] sm:$0xff]
    %v698 = vld [vmem:[#allocation5 + $0x10b8] sm:$0xff]
    %v699 = vld [vmem:[#allocation5 + $0x10c0] sm:$0xff]
    %v700 = vld [vmem:[#allocation5 + $0x10c8] sm:$0xff]
    %v701 = vld [vmem:[#allocation5 + $0x10d0] sm:$0xff]
    %v702 = vld [vmem:[#allocation5 + $0x10d8] sm:$0xff]
    %v703 = vld [vmem:[#allocation5 + $0x10e0] sm:$0xff]
    %v704 = vld [vmem:[#allocation5 + $0x10e8] sm:$0xff]
    %v705 = vld [vmem:[#allocation5 + $0x10f0] sm:$0xff]
    %v706 = vld [vmem:[#allocation5 + $0x10f8] sm:$0xff]
    %v707 = vld [vmem:[#allocation5 + $0x1100] sm:$0xff]
    %v708 = vld [vmem:[#allocation5 + $0x1108] sm:$0xff]
    %v709 = vld [vmem:[#allocation5 + $0x1110] sm:$0xff]
    %v710 = vld [vmem:[#allocation5 + $0x1118] sm:$0xff]
    %v711 = vld [vmem:[#allocation5 + $0x1120] sm:$0xff]
    %v712 = vld [vmem:[#allocation5 + $0x1128] sm:$0xff]
    %v713 = vld [vmem:[#allocation5 + $0x1130] sm:$0xff]
    %v714 = vld [vmem:[#allocation5 + $0x1138] sm:$0xff]
    %v715 = vld [vmem:[#allocation5 + $0x1140] sm:$0xff]
    %v716 = vld [vmem:[#allocation5 + $0x1148] sm:$0xff]
    %v717 = vld [vmem:[#allocation5 + $0x1150] sm:$0xff]
    %v718 = vld [vmem:[#allocation5 + $0x1158] sm:$0xff]
    %v719 = vld [vmem:[#allocation5 + $0x1160] sm:$0xff]
    %v720 = vld [vmem:[#allocation5 + $0x1168] sm:$0xff]
    %v721 = vld [vmem:[#allocation5 + $0x1170] sm:$0xff]
    %v722 = vld [vmem:[#allocation5 + $0x1178] sm:$0xff]
    %v723 = vld [vmem:[#allocation5 + $0x1180] sm:$0xff]
    %v724 = vld [vmem:[#allocation5 + $0x1188] sm:$0xff]
    %v725 = vld [vmem:[#allocation5 + $0x1190] sm:$0xff]
    %v726 = vld [vmem:[#allocation5 + $0x1198] sm:$0xff]
    %v727 = vld [vmem:[#allocation5 + $0x11a0] sm:$0xff]
    %v728 = vld [vmem:[#allocation5 + $0x11a8] sm:$0xff]
    %v729 = vld [vmem:[#allocation5 + $0x11b0] sm:$0xff]
    %v730 = vld [vmem:[#allocation5 + $0x11b8] sm:$0xff]
    %v731 = vld [vmem:[#allocation5 + $0x11c0] sm:$0xff]
    %v732 = vld [vmem:[#allocation5 + $0x11c8] sm:$0xff]
    %v733 = vld [vmem:[#allocation5 + $0x11d0] sm:$0xff]
    %v734 = vld [vmem:[#allocation5 + $0x11d8] sm:$0xff]
    %v735 = vld [vmem:[#allocation5 + $0x11e0] sm:$0xff]
    %v736 = vld [vmem:[#allocation5 + $0x11e8] sm:$0xff]
    %v737 = vld [vmem:[#allocation5 + $0x11f0] sm:$0xff]
    %v738 = vld [vmem:[#allocation5 + $0x11f8] sm:$0xff]
    %v739 = vld [vmem:[#allocation5 + $0x1200] sm:$0xff]
    %v740 = vld [vmem:[#allocation5 + $0x1208] sm:$0xff]
    %v741 = vld [vmem:[#allocation5 + $0x1210] sm:$0xff]
    %v742 = vld [vmem:[#allocation5 + $0x1218] sm:$0xff]
    %v743 = vld [vmem:[#allocation5 + $0x1220] sm:$0xff]
    %v744 = vld [vmem:[#allocation5 + $0x1228] sm:$0xff]
    %v745 = vld [vmem:[#allocation5 + $0x1230] sm:$0xff]
    %v746 = vld [vmem:[#allocation5 + $0x1238] sm:$0xff]
    %v747 = vld [vmem:[#allocation5 + $0x1240] sm:$0xff]
    %v748 = vld [vmem:[#allocation5 + $0x1248] sm:$0xff]
    %v749 = vld [vmem:[#allocation5 + $0x1250] sm:$0xff]
    %v750 = vld [vmem:[#allocation5 + $0x1258] sm:$0xff]
    %v751 = vld [vmem:[#allocation5 + $0x1260] sm:$0xff]
    %v752 = vld [vmem:[#allocation5 + $0x1268] sm:$0xff]
    %v753 = vld [vmem:[#allocation5 + $0x1270] sm:$0xff]
    %v754 = vld [vmem:[#allocation5 + $0x1278] sm:$0xff]
    %v755 = vld [vmem:[#allocation5 + $0x1280] sm:$0xff]
    %v756 = vld [vmem:[#allocation5 + $0x1288] sm:$0xff]
    %v757 = vld [vmem:[#allocation5 + $0x1290] sm:$0xff]
    %v758 = vld [vmem:[#allocation5 + $0x1298] sm:$0xff]
    %v759 = vld [vmem:[#allocation5 + $0x12a0] sm:$0xff]
    %v760 = vld [vmem:[#allocation5 + $0x12a8] sm:$0xff]
    %v761 = vld [vmem:[#allocation5 + $0x12b0] sm:$0xff]
    %v762 = vld [vmem:[#allocation5 + $0x12b8] sm:$0xff]
    %v763 = vld [vmem:[#allocation5 + $0x12c0] sm:$0xff]
    %v764 = vld [vmem:[#allocation5 + $0x12c8] sm:$0xff]
    %v765 = vld [vmem:[#allocation5 + $0x12d0] sm:$0xff]
    %v766 = vld [vmem:[#allocation5 + $0x12d8] sm:$0xff]
    %v767 = vld [vmem:[#allocation5 + $0x12e0] sm:$0xff]
    %v768 = vld [vmem:[#allocation5 + $0x12e8] sm:$0xff]
    %v769 = vld [vmem:[#allocation5 + $0x12f0] sm:$0xff]
    %v770 = vld [vmem:[#allocation5 + $0x12f8] sm:$0xff]
    %v771 = vld [vmem:[#allocation5 + $0x1300] sm:$0xff]
    %v772 = vld [vmem:[#allocation5 + $0x1308] sm:$0xff]
    %v773 = vld [vmem:[#allocation5 + $0x1310] sm:$0xff]
    %v774 = vld [vmem:[#allocation5 + $0x1318] sm:$0xff]
    %v775 = vld [vmem:[#allocation5 + $0x1320] sm:$0xff]
    %v776 = vld [vmem:[#allocation5 + $0x1328] sm:$0xff]
    %v777 = vld [vmem:[#allocation5 + $0x1330] sm:$0xff]
    %v778 = vld [vmem:[#allocation5 + $0x1338] sm:$0xff]
    %v779 = vld [vmem:[#allocation5 + $0x1340] sm:$0xff]
    %v780 = vld [vmem:[#allocation5 + $0x1348] sm:$0xff]
    %v781 = vld [vmem:[#allocation5 + $0x1350] sm:$0xff]
    %v782 = vld [vmem:[#allocation5 + $0x1358] sm:$0xff]
    %v783 = vld [vmem:[#allocation5 + $0x1360] sm:$0xff]
    %v784 = vld [vmem:[#allocation5 + $0x1368] sm:$0xff]
    %v785 = vld [vmem:[#allocation5 + $0x1370] sm:$0xff]
    %v786 = vld [vmem:[#allocation5 + $0x1378] sm:$0xff]
    %v787 = vld [vmem:[#allocation5 + $0x1380] sm:$0xff]
    %v788 = vld [vmem:[#allocation5 + $0x1388] sm:$0xff]
    %v789 = vld [vmem:[#allocation5 + $0x1390] sm:$0xff]
    %v790 = vld [vmem:[#allocation5 + $0x1398] sm:$0xff]
    %v791 = vld [vmem:[#allocation5 + $0x13a0] sm:$0xff]
    %v792 = vld [vmem:[#allocation5 + $0x13a8] sm:$0xff]
    %v793 = vld [vmem:[#allocation5 + $0x13b0] sm:$0xff]
    %v794 = vld [vmem:[#allocation5 + $0x13b8] sm:$0xff]
    %v795 = vld [vmem:[#allocation5 + $0x13c0] sm:$0xff]
    %v796 = vld [vmem:[#allocation5 + $0x13c8] sm:$0xff]
    %v797 = vld [vmem:[#allocation5 + $0x13d0] sm:$0xff]
    %v798 = vld [vmem:[#allocation5 + $0x13d8] sm:$0xff]
    %v799 = vld [vmem:[#allocation5 + $0x13e0] sm:$0xff]
    %v800 = vld [vmem:[#allocation5 + $0x13e8] sm:$0xff]
    %v801 = vld [vmem:[#allocation5 + $0x13f0] sm:$0xff]
    %v802 = vld [vmem:[#allocation5 + $0x13f8] sm:$0xff]
    %v803 = vld [vmem:[#allocation5 + $0x1400] sm:$0xff]
    %v804 = vld [vmem:[#allocation5 + $0x1408] sm:$0xff]
    %v805 = vld [vmem:[#allocation5 + $0x1410] sm:$0xff]
    %v806 = vld [vmem:[#allocation5 + $0x1418] sm:$0xff]
    %v807 = vld [vmem:[#allocation5 + $0x1420] sm:$0xff]
    %v808 = vld [vmem:[#allocation5 + $0x1428] sm:$0xff]
    %v809 = vld [vmem:[#allocation5 + $0x1430] sm:$0xff]
    %v810 = vld [vmem:[#allocation5 + $0x1438] sm:$0xff]
    %v811 = vld [vmem:[#allocation5 + $0x1440] sm:$0xff]
    %v812 = vld [vmem:[#allocation5 + $0x1448] sm:$0xff]
    %v813 = vld [vmem:[#allocation5 + $0x1450] sm:$0xff]
    %v814 = vld [vmem:[#allocation5 + $0x1458] sm:$0xff]
    %v815 = vld [vmem:[#allocation5 + $0x1460] sm:$0xff]
    %v816 = vld [vmem:[#allocation5 + $0x1468] sm:$0xff]
    %v817 = vld [vmem:[#allocation5 + $0x1470] sm:$0xff]
    %v818 = vld [vmem:[#allocation5 + $0x1478] sm:$0xff]
    %v819 = vld [vmem:[#allocation5 + $0x1480] sm:$0xff]
    %v820 = vld [vmem:[#allocation5 + $0x1488] sm:$0xff]
    %v821 = vld [vmem:[#allocation5 + $0x1490] sm:$0xff]
    %v822 = vld [vmem:[#allocation5 + $0x1498] sm:$0xff]
    %v823 = vld [vmem:[#allocation5 + $0x14a0] sm:$0xff]
    %v824 = vld [vmem:[#allocation5 + $0x14a8] sm:$0xff]
    %v825 = vld [vmem:[#allocation5 + $0x14b0] sm:$0xff]
    %v826 = vld [vmem:[#allocation5 + $0x14b8] sm:$0xff]
    %v827 = vld [vmem:[#allocation5 + $0x14c0] sm:$0xff]
    %v828 = vld [vmem:[#allocation5 + $0x14c8] sm:$0xff]
    %v829 = vld [vmem:[#allocation5 + $0x14d0] sm:$0xff]
    %v830 = vld [vmem:[#allocation5 + $0x14d8] sm:$0xff]
    %v831 = vld [vmem:[#allocation5 + $0x14e0] sm:$0xff]
    %v832 = vld [vmem:[#allocation5 + $0x14e8] sm:$0xff]
    %v833 = vld [vmem:[#allocation5 + $0x14f0] sm:$0xff]
    %v834 = vld [vmem:[#allocation5 + $0x14f8] sm:$0xff]
    %v835 = vld [vmem:[#allocation5 + $0x1500] sm:$0xff]
    %v836 = vld [vmem:[#allocation5 + $0x1508] sm:$0xff]
    %v837 = vld [vmem:[#allocation5 + $0x1510] sm:$0xff]
    %v838 = vld [vmem:[#allocation5 + $0x1518] sm:$0xff]
    %v839 = vld [vmem:[#allocation5 + $0x1520] sm:$0xff]
    %v840 = vld [vmem:[#allocation5 + $0x1528] sm:$0xff]
    %v841 = vld [vmem:[#allocation5 + $0x1530] sm:$0xff]
    %v842 = vld [vmem:[#allocation5 + $0x1538] sm:$0xff]
    %v843 = vld [vmem:[#allocation5 + $0x1540] sm:$0xff]
    %v844 = vld [vmem:[#allocation5 + $0x1548] sm:$0xff]
    %v845 = vld [vmem:[#allocation5 + $0x1550] sm:$0xff]
    %v846 = vld [vmem:[#allocation5 + $0x1558] sm:$0xff]
    %v847 = vld [vmem:[#allocation5 + $0x1560] sm:$0xff]
    %v848 = vld [vmem:[#allocation5 + $0x1568] sm:$0xff]
    %v849 = vld [vmem:[#allocation5 + $0x1570] sm:$0xff]
    %v850 = vld [vmem:[#allocation5 + $0x1578] sm:$0xff]
    %v851 = vld [vmem:[#allocation5 + $0x1580] sm:$0xff]
    %v852 = vld [vmem:[#allocation5 + $0x1588] sm:$0xff]
    %v853 = vld [vmem:[#allocation5 + $0x1590] sm:$0xff]
    %v854 = vld [vmem:[#allocation5 + $0x1598] sm:$0xff]
    %v855 = vld [vmem:[#allocation5 + $0x15a0] sm:$0xff]
    %v856 = vld [vmem:[#allocation5 + $0x15a8] sm:$0xff]
    %v857 = vld [vmem:[#allocation5 + $0x15b0] sm:$0xff]
    %v858 = vld [vmem:[#allocation5 + $0x15b8] sm:$0xff]
    %v859 = vld [vmem:[#allocation5 + $0x15c0] sm:$0xff]
    %v860 = vld [vmem:[#allocation5 + $0x15c8] sm:$0xff]
    %v861 = vld [vmem:[#allocation5 + $0x15d0] sm:$0xff]
    %v862 = vld [vmem:[#allocation5 + $0x15d8] sm:$0xff]
    %v863 = vld [vmem:[#allocation5 + $0x15e0] sm:$0xff]
    %v864 = vld [vmem:[#allocation5 + $0x15e8] sm:$0xff]
    %v865 = vld [vmem:[#allocation5 + $0x15f0] sm:$0xff]
    %v866 = vld [vmem:[#allocation5 + $0x15f8] sm:$0xff]
    %v867 = vld [vmem:[#allocation5 + $0x1600] sm:$0xff]
    %v868 = vld [vmem:[#allocation5 + $0x1608] sm:$0xff]
    %v869 = vld [vmem:[#allocation5 + $0x1610] sm:$0xff]
    %v870 = vld [vmem:[#allocation5 + $0x1618] sm:$0xff]
    %v871 = vld [vmem:[#allocation5 + $0x1620] sm:$0xff]
    %v872 = vld [vmem:[#allocation5 + $0x1628] sm:$0xff]
    %v873 = vld [vmem:[#allocation5 + $0x1630] sm:$0xff]
    %v874 = vld [vmem:[#allocation5 + $0x1638] sm:$0xff]
    %v875 = vld [vmem:[#allocation5 + $0x1640] sm:$0xff]
    %v876 = vld [vmem:[#allocation5 + $0x1648] sm:$0xff]
    %v877 = vld [vmem:[#allocation5 + $0x1650] sm:$0xff]
    %v878 = vld [vmem:[#allocation5 + $0x1658] sm:$0xff]
    %v879 = vld [vmem:[#allocation5 + $0x1660] sm:$0xff]
    %v880 = vld [vmem:[#allocation5 + $0x1668] sm:$0xff]
    %v881 = vld [vmem:[#allocation5 + $0x1670] sm:$0xff]
    %v882 = vld [vmem:[#allocation5 + $0x1678] sm:$0xff]
    %v883 = vld [vmem:[#allocation5 + $0x1680] sm:$0xff]
    %v884 = vld [vmem:[#allocation5 + $0x1688] sm:$0xff]
    %v885 = vld [vmem:[#allocation5 + $0x1690] sm:$0xff]
    %v886 = vld [vmem:[#allocation5 + $0x1698] sm:$0xff]
    %v887 = vld [vmem:[#allocation5 + $0x16a0] sm:$0xff]
    %v888 = vld [vmem:[#allocation5 + $0x16a8] sm:$0xff]
    %v889 = vld [vmem:[#allocation5 + $0x16b0] sm:$0xff]
    %v890 = vld [vmem:[#allocation5 + $0x16b8] sm:$0xff]
    %v891 = vld [vmem:[#allocation5 + $0x16c0] sm:$0xff]
    %v892 = vld [vmem:[#allocation5 + $0x16c8] sm:$0xff]
    %v893 = vld [vmem:[#allocation5 + $0x16d0] sm:$0xff]
    %v894 = vld [vmem:[#allocation5 + $0x16d8] sm:$0xff]
    %v895 = vld [vmem:[#allocation5 + $0x16e0] sm:$0xff]
    %v896 = vld [vmem:[#allocation5 + $0x16e8] sm:$0xff]
    %v897 = vld [vmem:[#allocation5 + $0x16f0] sm:$0xff]
    %v898 = vld [vmem:[#allocation5 + $0x16f8] sm:$0xff]
    %v899 = vld [vmem:[#allocation5 + $0x1700] sm:$0xff]
    %v900 = vld [vmem:[#allocation5 + $0x1708] sm:$0xff]
    %v901 = vld [vmem:[#allocation5 + $0x1710] sm:$0xff]
    %v902 = vld [vmem:[#allocation5 + $0x1718] sm:$0xff]
    %v903 = vld [vmem:[#allocation5 + $0x1720] sm:$0xff]
    %v904 = vld [vmem:[#allocation5 + $0x1728] sm:$0xff]
    %v905 = vld [vmem:[#allocation5 + $0x1730] sm:$0xff]
    %v906 = vld [vmem:[#allocation5 + $0x1738] sm:$0xff]
    %v907 = vld [vmem:[#allocation5 + $0x1740] sm:$0xff]
    %v908 = vld [vmem:[#allocation5 + $0x1748] sm:$0xff]
    %v909 = vld [vmem:[#allocation5 + $0x1750] sm:$0xff]
    %v910 = vld [vmem:[#allocation5 + $0x1758] sm:$0xff]
    %v911 = vld [vmem:[#allocation5 + $0x1760] sm:$0xff]
    %v912 = vld [vmem:[#allocation5 + $0x1768] sm:$0xff]
    %v913 = vld [vmem:[#allocation5 + $0x1770] sm:$0xff]
    %v914 = vld [vmem:[#allocation5 + $0x1778] sm:$0xff]
    %v915 = vld [vmem:[#allocation5 + $0x1780] sm:$0xff]
    %v916 = vld [vmem:[#allocation5 + $0x1788] sm:$0xff]
    %v917 = vld [vmem:[#allocation5 + $0x1790] sm:$0xff]
    %v918 = vld [vmem:[#allocation5 + $0x1798] sm:$0xff]
    %v919 = vld [vmem:[#allocation5 + $0x17a0] sm:$0xff]
    %v920 = vld [vmem:[#allocation5 + $0x17a8] sm:$0xff]
    %v921 = vld [vmem:[#allocation5 + $0x17b0] sm:$0xff]
    %v922 = vld [vmem:[#allocation5 + $0x17b8] sm:$0xff]
    %v923 = vld [vmem:[#allocation5 + $0x17c0] sm:$0xff]
    %v924 = vld [vmem:[#allocation5 + $0x17c8] sm:$0xff]
    %v925 = vld [vmem:[#allocation5 + $0x17d0] sm:$0xff]
    %v926 = vld [vmem:[#allocation5 + $0x17d8] sm:$0xff]
    %v927 = vld [vmem:[#allocation5 + $0x17e0] sm:$0xff]
    %v928 = vld [vmem:[#allocation5 + $0x17e8] sm:$0xff]
    %v929 = vld [vmem:[#allocation5 + $0x17f0] sm:$0xff]
    %v930 = vld [vmem:[#allocation5 + $0x17f8] sm:$0xff]
    %v931 = vld [vmem:[#allocation5 + $0x1800] sm:$0xff]
    %v932 = vld [vmem:[#allocation5 + $0x1808] sm:$0xff]
    %v933 = vld [vmem:[#allocation5 + $0x1810] sm:$0xff]
    %v934 = vld [vmem:[#allocation5 + $0x1818] sm:$0xff]
    %v935 = vld [vmem:[#allocation5 + $0x1820] sm:$0xff]
    %v936 = vld [vmem:[#allocation5 + $0x1828] sm:$0xff]
    %v937 = vld [vmem:[#allocation5 + $0x1830] sm:$0xff]
    %v938 = vld [vmem:[#allocation5 + $0x1838] sm:$0xff]
    %v939 = vld [vmem:[#allocation5 + $0x1840] sm:$0xff]
    %v940 = vld [vmem:[#allocation5 + $0x1848] sm:$0xff]
    %v941 = vld [vmem:[#allocation5 + $0x1850] sm:$0xff]
    %v942 = vld [vmem:[#allocation5 + $0x1858] sm:$0xff]
    %v943 = vld [vmem:[#allocation5 + $0x1860] sm:$0xff]
    %v944 = vld [vmem:[#allocation5 + $0x1868] sm:$0xff]
    %v945 = vld [vmem:[#allocation5 + $0x1870] sm:$0xff]
    %v946 = vld [vmem:[#allocation5 + $0x1878] sm:$0xff]
    %v947 = vld [vmem:[#allocation5 + $0x1880] sm:$0xff]
    %v948 = vld [vmem:[#allocation5 + $0x1888] sm:$0xff]
    %v949 = vld [vmem:[#allocation5 + $0x1890] sm:$0xff]
    %v950 = vld [vmem:[#allocation5 + $0x1898] sm:$0xff]
    %v951 = vld [vmem:[#allocation5 + $0x18a0] sm:$0xff]
    %v952 = vld [vmem:[#allocation5 + $0x18a8] sm:$0xff]
    %v953 = vld [vmem:[#allocation5 + $0x18b0] sm:$0xff]
    %v954 = vld [vmem:[#allocation5 + $0x18b8] sm:$0xff]
    %v955 = vld [vmem:[#allocation5 + $0x18c0] sm:$0xff]
    %v956 = vld [vmem:[#allocation5 + $0x18c8] sm:$0xff]
    %v957 = vld [vmem:[#allocation5 + $0x18d0] sm:$0xff]
    %v958 = vld [vmem:[#allocation5 + $0x18d8] sm:$0xff]
    %v959 = vld [vmem:[#allocation5 + $0x18e0] sm:$0xff]
    %v960 = vld [vmem:[#allocation5 + $0x18e8] sm:$0xff]
    %v961 = vld [vmem:[#allocation5 + $0x18f0] sm:$0xff]
    %v962 = vld [vmem:[#allocation5 + $0x18f8] sm:$0xff]
    %v963 = vld [vmem:[#allocation5 + $0x1900] sm:$0xff]
    %v964 = vld [vmem:[#allocation5 + $0x1908] sm:$0xff]
    %v965 = vld [vmem:[#allocation5 + $0x1910] sm:$0xff]
    %v966 = vld [vmem:[#allocation5 + $0x1918] sm:$0xff]
    %v967 = vld [vmem:[#allocation5 + $0x1920] sm:$0xff]
    %v968 = vld [vmem:[#allocation5 + $0x1928] sm:$0xff]
    %v969 = vld [vmem:[#allocation5 + $0x1930] sm:$0xff]
    %v970 = vld [vmem:[#allocation5 + $0x1938] sm:$0xff]
    %v971 = vld [vmem:[#allocation5 + $0x1940] sm:$0xff]
    %v972 = vld [vmem:[#allocation5 + $0x1948] sm:$0xff]
    %v973 = vld [vmem:[#allocation5 + $0x1950] sm:$0xff]
    %v974 = vld [vmem:[#allocation5 + $0x1958] sm:$0xff]
    %v975 = vld [vmem:[#allocation5 + $0x1960] sm:$0xff]
    %v976 = vld [vmem:[#allocation5 + $0x1968] sm:$0xff]
    %v977 = vld [vmem:[#allocation5 + $0x1970] sm:$0xff]
    %v978 = vld [vmem:[#allocation5 + $0x1978] sm:$0xff]
    %v979 = vld [vmem:[#allocation5 + $0x1980] sm:$0xff]
    %v980 = vld [vmem:[#allocation5 + $0x1988] sm:$0xff]
    %v981 = vld [vmem:[#allocation5 + $0x1990] sm:$0xff]
    %v982 = vld [vmem:[#allocation5 + $0x1998] sm:$0xff]
    %v983 = vld [vmem:[#allocation5 + $0x19a0] sm:$0xff]
    %v984 = vld [vmem:[#allocation5 + $0x19a8] sm:$0xff]
    %v985 = vld [vmem:[#allocation5 + $0x19b0] sm:$0xff]
    %v986 = vld [vmem:[#allocation5 + $0x19b8] sm:$0xff]
    %v987 = vld [vmem:[#allocation5 + $0x19c0] sm:$0xff]
    %v988 = vld [vmem:[#allocation5 + $0x19c8] sm:$0xff]
    %v989 = vld [vmem:[#allocation5 + $0x19d0] sm:$0xff]
    %v990 = vld [vmem:[#allocation5 + $0x19d8] sm:$0xff]
    %v991 = vld [vmem:[#allocation5 + $0x19e0] sm:$0xff]
    %v992 = vld [vmem:[#allocation5 + $0x19e8] sm:$0xff]
    %v993 = vld [vmem:[#allocation5 + $0x19f0] sm:$0xff]
    %v994 = vld [vmem:[#allocation5 + $0x19f8] sm:$0xff]
    %v995 = vld [vmem:[#allocation5 + $0x1a00] sm:$0xff]
    %v996 = vld [vmem:[#allocation5 + $0x1a08] sm:$0xff]
    %v997 = vld [vmem:[#allocation5 + $0x1a10] sm:$0xff]
    %v998 = vld [vmem:[#allocation5 + $0x1a18] sm:$0xff]
    %v999 = vld [vmem:[#allocation5 + $0x1a20] sm:$0xff]
    %v1000 = vld [vmem:[#allocation5 + $0x1a28] sm:$0xff]
    %v1001 = vld [vmem:[#allocation5 + $0x1a30] sm:$0xff]
    %v1002 = vld [vmem:[#allocation5 + $0x1a38] sm:$0xff]
    %v1003 = vld [vmem:[#allocation5 + $0x1a40] sm:$0xff]
    %v1004 = vld [vmem:[#allocation5 + $0x1a48] sm:$0xff]
    %v1005 = vld [vmem:[#allocation5 + $0x1a50] sm:$0xff]
    %v1006 = vld [vmem:[#allocation5 + $0x1a58] sm:$0xff]
    %v1007 = vld [vmem:[#allocation5 + $0x1a60] sm:$0xff]
    %v1008 = vld [vmem:[#allocation5 + $0x1a68] sm:$0xff]
    %v1009 = vld [vmem:[#allocation5 + $0x1a70] sm:$0xff]
    %v1010 = vld [vmem:[#allocation5 + $0x1a78] sm:$0xff]
    %v1011 = vld [vmem:[#allocation5 + $0x1a80] sm:$0xff]
    %v1012 = vld [vmem:[#allocation5 + $0x1a88] sm:$0xff]
    %v1013 = vld [vmem:[#allocation5 + $0x1a90] sm:$0xff]
    %v1014 = vld [vmem:[#allocation5 + $0x1a98] sm:$0xff]
    %v1015 = vld [vmem:[#allocation5 + $0x1aa0] sm:$0xff]
    %v1016 = vld [vmem:[#allocation5 + $0x1aa8] sm:$0xff]
    %v1017 = vld [vmem:[#allocation5 + $0x1ab0] sm:$0xff]
    %v1018 = vld [vmem:[#allocation5 + $0x1ab8] sm:$0xff]
    %v1019 = vld [vmem:[#allocation5 + $0x1ac0] sm:$0xff]
    %v1020 = vld [vmem:[#allocation5 + $0x1ac8] sm:$0xff]
    %v1021 = vld [vmem:[#allocation5 + $0x1ad0] sm:$0xff]
    %v1022 = vld [vmem:[#allocation5 + $0x1ad8] sm:$0xff]
    %v1023 = vld [vmem:[#allocation5 + $0x1ae0] sm:$0xff]
    %v1024 = vld [vmem:[#allocation5 + $0x1ae8] sm:$0xff]
    %v1025 = vld [vmem:[#allocation5 + $0x1af0] sm:$0xff]
    %v1026 = vld [vmem:[#allocation5 + $0x1af8] sm:$0xff]
    %v1027 = vld [vmem:[#allocation5 + $0x1b00] sm:$0xff]
    %v1028 = vld [vmem:[#allocation5 + $0x1b08] sm:$0xff]
    %v1029 = vld [vmem:[#allocation5 + $0x1b10] sm:$0xff]
    %v1030 = vld [vmem:[#allocation5 + $0x1b18] sm:$0xff]
    %v1031 = vld [vmem:[#allocation5 + $0x1b20] sm:$0xff]
    %v1032 = vld [vmem:[#allocation5 + $0x1b28] sm:$0xff]
    %v1033 = vld [vmem:[#allocation5 + $0x1b30] sm:$0xff]
    %v1034 = vld [vmem:[#allocation5 + $0x1b38] sm:$0xff]
    %v1035 = vld [vmem:[#allocation5 + $0x1b40] sm:$0xff]
    %v1036 = vld [vmem:[#allocation5 + $0x1b48] sm:$0xff]
    %v1037 = vld [vmem:[#allocation5 + $0x1b50] sm:$0xff]
    %v1038 = vld [vmem:[#allocation5 + $0x1b58] sm:$0xff]
    %v1039 = vld [vmem:[#allocation5 + $0x1b60] sm:$0xff]
    %v1040 = vld [vmem:[#allocation5 + $0x1b68] sm:$0xff]
    %v1041 = vld [vmem:[#allocation5 + $0x1b70] sm:$0xff]
    %v1042 = vld [vmem:[#allocation5 + $0x1b78] sm:$0xff]
    %v1043 = vld [vmem:[#allocation5 + $0x1b80] sm:$0xff]
    %v1044 = vld [vmem:[#allocation5 + $0x1b88] sm:$0xff]
    %v1045 = vld [vmem:[#allocation5 + $0x1b90] sm:$0xff]
    %v1046 = vld [vmem:[#allocation5 + $0x1b98] sm:$0xff]
    %v1047 = vld [vmem:[#allocation5 + $0x1ba0] sm:$0xff]
    %v1048 = vld [vmem:[#allocation5 + $0x1ba8] sm:$0xff]
    %v1049 = vld [vmem:[#allocation5 + $0x1bb0] sm:$0xff]
    %v1050 = vld [vmem:[#allocation5 + $0x1bb8] sm:$0xff]
    %v1051 = vld [vmem:[#allocation5 + $0x1bc0] sm:$0xff]
    %v1052 = vld [vmem:[#allocation5 + $0x1bc8] sm:$0xff]
    %v1053 = vld [vmem:[#allocation5 + $0x1bd0] sm:$0xff]
    %v1054 = vld [vmem:[#allocation5 + $0x1bd8] sm:$0xff]
    %v1055 = vld [vmem:[#allocation5 + $0x1be0] sm:$0xff]
    %v1056 = vld [vmem:[#allocation5 + $0x1be8] sm:$0xff]
    %v1057 = vld [vmem:[#allocation5 + $0x1bf0] sm:$0xff]
    %v1058 = vld [vmem:[#allocation5 + $0x1bf8] sm:$0xff]
    %v1059 = vld [vmem:[#allocation5 + $0x1c00] sm:$0xff]
    %v1060 = vld [vmem:[#allocation5 + $0x1c08] sm:$0xff]
    %v1061 = vld [vmem:[#allocation5 + $0x1c10] sm:$0xff]
    %v1062 = vld [vmem:[#allocation5 + $0x1c18] sm:$0xff]
    %v1063 = vld [vmem:[#allocation5 + $0x1c20] sm:$0xff]
    %v1064 = vld [vmem:[#allocation5 + $0x1c28] sm:$0xff]
    %v1065 = vld [vmem:[#allocation5 + $0x1c30] sm:$0xff]
    %v1066 = vld [vmem:[#allocation5 + $0x1c38] sm:$0xff]
    %v1067 = vld [vmem:[#allocation5 + $0x1c40] sm:$0xff]
    %v1068 = vld [vmem:[#allocation5 + $0x1c48] sm:$0xff]
    %v1069 = vld [vmem:[#allocation5 + $0x1c50] sm:$0xff]
    %v1070 = vld [vmem:[#allocation5 + $0x1c58] sm:$0xff]
    %v1071 = vld [vmem:[#allocation5 + $0x1c60] sm:$0xff]
    %v1072 = vld [vmem:[#allocation5 + $0x1c68] sm:$0xff]
    %v1073 = vld [vmem:[#allocation5 + $0x1c70] sm:$0xff]
    %v1074 = vld [vmem:[#allocation5 + $0x1c78] sm:$0xff]
    %v1075 = vld [vmem:[#allocation5 + $0x1c80] sm:$0xff]
    %v1076 = vld [vmem:[#allocation5 + $0x1c88] sm:$0xff]
    %v1077 = vld [vmem:[#allocation5 + $0x1c90] sm:$0xff]
    %v1078 = vld [vmem:[#allocation5 + $0x1c98] sm:$0xff]
    %v1079 = vld [vmem:[#allocation5 + $0x1ca0] sm:$0xff]
    %v1080 = vld [vmem:[#allocation5 + $0x1ca8] sm:$0xff]
    %v1081 = vld [vmem:[#allocation5 + $0x1cb0] sm:$0xff]
    %v1082 = vld [vmem:[#allocation5 + $0x1cb8] sm:$0xff]
    %v1083 = vld [vmem:[#allocation5 + $0x1cc0] sm:$0xff]
    %v1084 = vld [vmem:[#allocation5 + $0x1cc8] sm:$0xff]
    %v1085 = vld [vmem:[#allocation5 + $0x1cd0] sm:$0xff]
    %v1086 = vld [vmem:[#allocation5 + $0x1cd8] sm:$0xff]
    %v1087 = vld [vmem:[#allocation5 + $0x1ce0] sm:$0xff]
    %v1088 = vld [vmem:[#allocation5 + $0x1ce8] sm:$0xff]
    %v1089 = vld [vmem:[#allocation5 + $0x1cf0] sm:$0xff]
    %v1090 = vld [vmem:[#allocation5 + $0x1cf8] sm:$0xff]
    %v1091 = vld [vmem:[#allocation5 + $0x1d00] sm:$0xff]
    %v1092 = vld [vmem:[#allocation5 + $0x1d08] sm:$0xff]
    %v1093 = vld [vmem:[#allocation5 + $0x1d10] sm:$0xff]
    %v1094 = vld [vmem:[#allocation5 + $0x1d18] sm:$0xff]
    %v1095 = vld [vmem:[#allocation5 + $0x1d20] sm:$0xff]
    %v1096 = vld [vmem:[#allocation5 + $0x1d28] sm:$0xff]
    %v1097 = vld [vmem:[#allocation5 + $0x1d30] sm:$0xff]
    %v1098 = vld [vmem:[#allocation5 + $0x1d38] sm:$0xff]
    %v1099 = vld [vmem:[#allocation5 + $0x1d40] sm:$0xff]
    %v1100 = vld [vmem:[#allocation5 + $0x1d48] sm:$0xff]
    %v1101 = vld [vmem:[#allocation5 + $0x1d50] sm:$0xff]
    %v1102 = vld [vmem:[#allocation5 + $0x1d58] sm:$0xff]
    %v1103 = vld [vmem:[#allocation5 + $0x1d60] sm:$0xff]
    %v1104 = vld [vmem:[#allocation5 + $0x1d68] sm:$0xff]
    %v1105 = vld [vmem:[#allocation5 + $0x1d70] sm:$0xff]
    %v1106 = vld [vmem:[#allocation5 + $0x1d78] sm:$0xff]
    %v1107 = vld [vmem:[#allocation5 + $0x1d80] sm:$0xff]
    %v1108 = vld [vmem:[#allocation5 + $0x1d88] sm:$0xff]
    %v1109 = vld [vmem:[#allocation5 + $0x1d90] sm:$0xff]
    %v1110 = vld [vmem:[#allocation5 + $0x1d98] sm:$0xff]
    %v1111 = vld [vmem:[#allocation5 + $0x1da0] sm:$0xff]
    %v1112 = vld [vmem:[#allocation5 + $0x1da8] sm:$0xff]
    %v1113 = vld [vmem:[#allocation5 + $0x1db0] sm:$0xff]
    %v1114 = vld [vmem:[#allocation5 + $0x1db8] sm:$0xff]
    %v1115 = vld [vmem:[#allocation5 + $0x1dc0] sm:$0xff]
    %v1116 = vld [vmem:[#allocation5 + $0x1dc8] sm:$0xff]
    %v1117 = vld [vmem:[#allocation5 + $0x1dd0] sm:$0xff]
    %v1118 = vld [vmem:[#allocation5 + $0x1dd8] sm:$0xff]
    %v1119 = vld [vmem:[#allocation5 + $0x1de0] sm:$0xff]
    %v1120 = vld [vmem:[#allocation5 + $0x1de8] sm:$0xff]
    %v1121 = vld [vmem:[#allocation5 + $0x1df0] sm:$0xff]
    %v1122 = vld [vmem:[#allocation5 + $0x1df8] sm:$0xff]
    %v1123 = vld [vmem:[#allocation5 + $0x1e00] sm:$0xff]
    %v1124 = vld [vmem:[#allocation5 + $0x1e08] sm:$0xff]
    %v1125 = vld [vmem:[#allocation5 + $0x1e10] sm:$0xff]
    %v1126 = vld [vmem:[#allocation5 + $0x1e18] sm:$0xff]
    %v1127 = vld [vmem:[#allocation5 + $0x1e20] sm:$0xff]
    %v1128 = vld [vmem:[#allocation5 + $0x1e28] sm:$0xff]
    %v1129 = vld [vmem:[#allocation5 + $0x1e30] sm:$0xff]
    %v1130 = vld [vmem:[#allocation5 + $0x1e38] sm:$0xff]
    %v1131 = vld [vmem:[#allocation5 + $0x1e40] sm:$0xff]
    %v1132 = vld [vmem:[#allocation5 + $0x1e48] sm:$0xff]
    %v1133 = vld [vmem:[#allocation5 + $0x1e50] sm:$0xff]
    %v1134 = vld [vmem:[#allocation5 + $0x1e58] sm:$0xff]
    %v1135 = vld [vmem:[#allocation5 + $0x1e60] sm:$0xff]
    %v1136 = vld [vmem:[#allocation5 + $0x1e68] sm:$0xff]
    %v1137 = vld [vmem:[#allocation5 + $0x1e70] sm:$0xff]
    %v1138 = vld [vmem:[#allocation5 + $0x1e78] sm:$0xff]
    %v1139 = vld [vmem:[#allocation5 + $0x1e80] sm:$0xff]
    %v1140 = vld [vmem:[#allocation5 + $0x1e88] sm:$0xff]
    %v1141 = vld [vmem:[#allocation5 + $0x1e90] sm:$0xff]
    %v1142 = vld [vmem:[#allocation5 + $0x1e98] sm:$0xff]
    %v1143 = vld [vmem:[#allocation5 + $0x1ea0] sm:$0xff]
    %v1144 = vld [vmem:[#allocation5 + $0x1ea8] sm:$0xff]
    %v1145 = vld [vmem:[#allocation5 + $0x1eb0] sm:$0xff]
    %v1146 = vld [vmem:[#allocation5 + $0x1eb8] sm:$0xff]
    %v1147 = vld [vmem:[#allocation5 + $0x1ec0] sm:$0xff]
    %v1148 = vld [vmem:[#allocation5 + $0x1ec8] sm:$0xff]
    %v1149 = vld [vmem:[#allocation5 + $0x1ed0] sm:$0xff]
    %v1150 = vld [vmem:[#allocation5 + $0x1ed8] sm:$0xff]
    %v1151 = vld [vmem:[#allocation5 + $0x1ee0] sm:$0xff]
    %v1152 = vld [vmem:[#allocation5 + $0x1ee8] sm:$0xff]
    %v1153 = vld [vmem:[#allocation5 + $0x1ef0] sm:$0xff]
    %v1154 = vld [vmem:[#allocation5 + $0x1ef8] sm:$0xff]
    %v1155 = vld [vmem:[#allocation5 + $0x1f00] sm:$0xff]
    %v1156 = vld [vmem:[#allocation5 + $0x1f08] sm:$0xff]
    %v1157 = vld [vmem:[#allocation5 + $0x1f10] sm:$0xff]
    %v1158 = vld [vmem:[#allocation5 + $0x1f18] sm:$0xff]
    %v1159 = vld [vmem:[#allocation5 + $0x1f20] sm:$0xff]
    %v1160 = vld [vmem:[#allocation5 + $0x1f28] sm:$0xff]
    %v1161 = vld [vmem:[#allocation5 + $0x1f30] sm:$0xff]
    %v1162 = vld [vmem:[#allocation5 + $0x1f38] sm:$0xff]
    %v1163 = vld [vmem:[#allocation5 + $0x1f40] sm:$0xff]
    %v1164 = vld [vmem:[#allocation5 + $0x1f48] sm:$0xff]
    %v1165 = vld [vmem:[#allocation5 + $0x1f50] sm:$0xff]
    %v1166 = vld [vmem:[#allocation5 + $0x1f58] sm:$0xff]
    %v1167 = vld [vmem:[#allocation5 + $0x1f60] sm:$0xff]
    %v1168 = vld [vmem:[#allocation5 + $0x1f68] sm:$0xff]
    %v1169 = vld [vmem:[#allocation5 + $0x1f70] sm:$0xff]
    %v1170 = vld [vmem:[#allocation5 + $0x1f78] sm:$0xff]
    %v1171 = vld [vmem:[#allocation5 + $0x1f80] sm:$0xff]
    %v1172 = vld [vmem:[#allocation5 + $0x1f88] sm:$0xff]
    %v1173 = vld [vmem:[#allocation5 + $0x1f90] sm:$0xff]
    %v1174 = vld [vmem:[#allocation5 + $0x1f98] sm:$0xff]
    %v1175 = vld [vmem:[#allocation5 + $0x1fa0] sm:$0xff]
    %v1176 = vld [vmem:[#allocation5 + $0x1fa8] sm:$0xff]
    %v1177 = vld [vmem:[#allocation5 + $0x1fb0] sm:$0xff]
    %v1178 = vld [vmem:[#allocation5 + $0x1fb8] sm:$0xff]
    %v1179 = vld [vmem:[#allocation5 + $0x1fc0] sm:$0xff]
    %v1180 = vld [vmem:[#allocation5 + $0x1fc8] sm:$0xff]
    %v1181 = vld [vmem:[#allocation5 + $0x1fd0] sm:$0xff]
    %v1182 = vld [vmem:[#allocation5 + $0x1fd8] sm:$0xff]
    %v1183 = vld [vmem:[#allocation5 + $0x1fe0] sm:$0xff]
    %v1184 = vld [vmem:[#allocation5 + $0x1fe8] sm:$0xff]
    %v1185 = vld [vmem:[#allocation5 + $0x1ff0] sm:$0xff]
    %v1186 = vld [vmem:[#allocation5 + $0x1ff8] sm:$0xff]
    %v1187 = vld [vmem:[#allocation5 + $0x2000] sm:$0xff]
    %v1188 = vld [vmem:[#allocation5 + $0x2008] sm:$0xff]
    %v1189 = vld [vmem:[#allocation5 + $0x2010] sm:$0xff]
    %v1190 = vld [vmem:[#allocation5 + $0x2018] sm:$0xff]
    %v1191 = vld [vmem:[#allocation5 + $0x2020] sm:$0xff]
    %v1192 = vld [vmem:[#allocation5 + $0x2028] sm:$0xff]
    %v1193 = vld [vmem:[#allocation5 + $0x2030] sm:$0xff]
    %v1194 = vld [vmem:[#allocation5 + $0x2038] sm:$0xff]
    %v1195 = vld [vmem:[#allocation5 + $0x2040] sm:$0xff]
    %v1196 = vld [vmem:[#allocation5 + $0x2048] sm:$0xff]
    %v1197 = vld [vmem:[#allocation5 + $0x2050] sm:$0xff]
    %v1198 = vld [vmem:[#allocation5 + $0x2058] sm:$0xff]
    %v1199 = vld [vmem:[#allocation5 + $0x2060] sm:$0xff]
    %v1200 = vld [vmem:[#allocation5 + $0x2068] sm:$0xff]
    %v1201 = vld [vmem:[#allocation5 + $0x2070] sm:$0xff]
    %v1202 = vld [vmem:[#allocation5 + $0x2078] sm:$0xff]
    %v1203 = vld [vmem:[#allocation5 + $0x2080] sm:$0xff]
    %v1204 = vld [vmem:[#allocation5 + $0x2088] sm:$0xff]
    %v1205 = vld [vmem:[#allocation5 + $0x2090] sm:$0xff]
    %v1206 = vld [vmem:[#allocation5 + $0x2098] sm:$0xff]
    %v1207 = vld [vmem:[#allocation5 + $0x20a0] sm:$0xff]
    %v1208 = vld [vmem:[#allocation5 + $0x20a8] sm:$0xff]
    %v1209 = vld [vmem:[#allocation5 + $0x20b0] sm:$0xff]
    %v1210 = vld [vmem:[#allocation5 + $0x20b8] sm:$0xff]
    %v1211 = vld [vmem:[#allocation5 + $0x20c0] sm:$0xff]
    %v1212 = vld [vmem:[#allocation5 + $0x20c8] sm:$0xff]
    %v1213 = vld [vmem:[#allocation5 + $0x20d0] sm:$0xff]
    %v1214 = vld [vmem:[#allocation5 + $0x20d8] sm:$0xff]
    %v1215 = vld [vmem:[#allocation5 + $0x20e0] sm:$0xff]
    %v1216 = vld [vmem:[#allocation5 + $0x20e8] sm:$0xff]
    %v1217 = vld [vmem:[#allocation5 + $0x20f0] sm:$0xff]
    %v1218 = vld [vmem:[#allocation5 + $0x20f8] sm:$0xff]
    %v1219 = vld [vmem:[#allocation5 + $0x2100] sm:$0xff]
    %v1220 = vld [vmem:[#allocation5 + $0x2108] sm:$0xff]
    %v1221 = vld [vmem:[#allocation5 + $0x2110] sm:$0xff]
    %v1222 = vld [vmem:[#allocation5 + $0x2118] sm:$0xff]
    %v1223 = vld [vmem:[#allocation5 + $0x2120] sm:$0xff]
    %v1224 = vld [vmem:[#allocation5 + $0x2128] sm:$0xff]
    %v1225 = vld [vmem:[#allocation5 + $0x2130] sm:$0xff]
    %v1226 = vld [vmem:[#allocation5 + $0x2138] sm:$0xff]
    %v1227 = vld [vmem:[#allocation5 + $0x2140] sm:$0xff]
    %v1228 = vld [vmem:[#allocation5 + $0x2148] sm:$0xff]
    %v1229 = vld [vmem:[#allocation5 + $0x2150] sm:$0xff]
    %v1230 = vld [vmem:[#allocation5 + $0x2158] sm:$0xff]
    %v1231 = vld [vmem:[#allocation5 + $0x2160] sm:$0xff]
    %v1232 = vld [vmem:[#allocation5 + $0x2168] sm:$0xff]
    %v1233 = vld [vmem:[#allocation5 + $0x2170] sm:$0xff]
    %v1234 = vld [vmem:[#allocation5 + $0x2178] sm:$0xff]
    %v1235 = vld [vmem:[#allocation5 + $0x2180] sm:$0xff]
    %v1236 = vld [vmem:[#allocation5 + $0x2188] sm:$0xff]
    %v1237 = vld [vmem:[#allocation5 + $0x2190] sm:$0xff]
    %v1238 = vld [vmem:[#allocation5 + $0x2198] sm:$0xff]
    %v1239 = vld [vmem:[#allocation5 + $0x21a0] sm:$0xff]
    %v1240 = vld [vmem:[#allocation5 + $0x21a8] sm:$0xff]
    %v1241 = vld [vmem:[#allocation5 + $0x21b0] sm:$0xff]
    %v1242 = vld [vmem:[#allocation5 + $0x21b8] sm:$0xff]
    %v1243 = vld [vmem:[#allocation5 + $0x21c0] sm:$0xff]
    %v1244 = vld [vmem:[#allocation5 + $0x21c8] sm:$0xff]
    %v1245 = vld [vmem:[#allocation5 + $0x21d0] sm:$0xff]
    %v1246 = vld [vmem:[#allocation5 + $0x21d8] sm:$0xff]
    %v1247 = vld [vmem:[#allocation5 + $0x21e0] sm:$0xff]
    %v1248 = vld [vmem:[#allocation5 + $0x21e8] sm:$0xff]
    %v1249 = vld [vmem:[#allocation5 + $0x21f0] sm:$0xff]
    %v1250 = vld [vmem:[#allocation5 + $0x21f8] sm:$0xff]
    %v1251 = vld [vmem:[#allocation5 + $0x2200] sm:$0xff]
    %v1252 = vld [vmem:[#allocation5 + $0x2208] sm:$0xff]
    %v1253 = vld [vmem:[#allocation5 + $0x2210] sm:$0xff]
    %v1254 = vld [vmem:[#allocation5 + $0x2218] sm:$0xff]
    %v1255 = vld [vmem:[#allocation5 + $0x2220] sm:$0xff]
    %v1256 = vld [vmem:[#allocation5 + $0x2228] sm:$0xff]
    %v1257 = vld [vmem:[#allocation5 + $0x2230] sm:$0xff]
    %v1258 = vld [vmem:[#allocation5 + $0x2238] sm:$0xff]
    %v1259 = vld [vmem:[#allocation5 + $0x2240] sm:$0xff]
    %v1260 = vld [vmem:[#allocation5 + $0x2248] sm:$0xff]
    %v1261 = vld [vmem:[#allocation5 + $0x2250] sm:$0xff]
    %v1262 = vld [vmem:[#allocation5 + $0x2258] sm:$0xff]
    %v1263 = vld [vmem:[#allocation5 + $0x2260] sm:$0xff]
    %v1264 = vld [vmem:[#allocation5 + $0x2268] sm:$0xff]
    %v1265 = vld [vmem:[#allocation5 + $0x2270] sm:$0xff]
    %v1266 = vld [vmem:[#allocation5 + $0x2278] sm:$0xff]
    %v1267 = vld [vmem:[#allocation5 + $0x2280] sm:$0xff]
    %v1268 = vld [vmem:[#allocation5 + $0x2288] sm:$0xff]
    %v1269 = vld [vmem:[#allocation5 + $0x2290] sm:$0xff]
    %v1270 = vld [vmem:[#allocation5 + $0x2298] sm:$0xff]
    %v1271 = vld [vmem:[#allocation5 + $0x22a0] sm:$0xff]
    %v1272 = vld [vmem:[#allocation5 + $0x22a8] sm:$0xff]
    %v1273 = vld [vmem:[#allocation5 + $0x22b0] sm:$0xff]
    %v1274 = vld [vmem:[#allocation5 + $0x22b8] sm:$0xff]
    %v1275 = vld [vmem:[#allocation5 + $0x22c0] sm:$0xff]
    %v1276 = vld [vmem:[#allocation5 + $0x22c8] sm:$0xff]
    %v1277 = vld [vmem:[#allocation5 + $0x22d0] sm:$0xff]
    %v1278 = vld [vmem:[#allocation5 + $0x22d8] sm:$0xff]
    %v1279 = vld [vmem:[#allocation5 + $0x22e0] sm:$0xff]
    %v1280 = vld [vmem:[#allocation5 + $0x22e8] sm:$0xff]
    %v1281 = vld [vmem:[#allocation5 + $0x22f0] sm:$0xff]
    %v1282 = vld [vmem:[#allocation5 + $0x22f8] sm:$0xff]
    %v1283 = vld [vmem:[#allocation5 + $0x2300] sm:$0xff]
    %v1284 = vld [vmem:[#allocation5 + $0x2308] sm:$0xff]
    %v1285 = vld [vmem:[#allocation5 + $0x2310] sm:$0xff]
    %v1286 = vld [vmem:[#allocation5 + $0x2318] sm:$0xff]
    %v1287 = vld [vmem:[#allocation5 + $0x2320] sm:$0xff]
    %v1288 = vld [vmem:[#allocation5 + $0x2328] sm:$0xff]
    %v1289 = vld [vmem:[#allocation5 + $0x2330] sm:$0xff]
    %v1290 = vld [vmem:[#allocation5 + $0x2338] sm:$0xff]
    %v1291 = vld [vmem:[#allocation5 + $0x2340] sm:$0xff]
    %v1292 = vld [vmem:[#allocation5 + $0x2348] sm:$0xff]
    %v1293 = vld [vmem:[#allocation5 + $0x2350] sm:$0xff]
    %v1294 = vld [vmem:[#allocation5 + $0x2358] sm:$0xff]
    %v1295 = vld [vmem:[#allocation5 + $0x2360] sm:$0xff]
    %v1296 = vld [vmem:[#allocation5 + $0x2368] sm:$0xff]
    %v1297 = vld [vmem:[#allocation5 + $0x2370] sm:$0xff]
    %v1298 = vld [vmem:[#allocation5 + $0x2378] sm:$0xff]
    %v1299 = vld [vmem:[#allocation5 + $0x2380] sm:$0xff]
    %v1300 = vld [vmem:[#allocation5 + $0x2388] sm:$0xff]
    %v1301 = vld [vmem:[#allocation5 + $0x2390] sm:$0xff]
    %v1302 = vld [vmem:[#allocation5 + $0x2398] sm:$0xff]
    %v1303 = vld [vmem:[#allocation5 + $0x23a0] sm:$0xff]
    %v1304 = vld [vmem:[#allocation5 + $0x23a8] sm:$0xff]
    %v1305 = vld [vmem:[#allocation5 + $0x23b0] sm:$0xff]
    %v1306 = vld [vmem:[#allocation5 + $0x23b8] sm:$0xff]
    %v1307 = vld [vmem:[#allocation5 + $0x23c0] sm:$0xff]
    %v1308 = vld [vmem:[#allocation5 + $0x23c8] sm:$0xff]
    %v1309 = vld [vmem:[#allocation5 + $0x23d0] sm:$0xff]
    %v1310 = vld [vmem:[#allocation5 + $0x23d8] sm:$0xff]
    %v1311 = vld [vmem:[#allocation5 + $0x23e0] sm:$0xff]
    %v1312 = vld [vmem:[#allocation5 + $0x23e8] sm:$0xff]
    %v1313 = vld [vmem:[#allocation5 + $0x23f0] sm:$0xff]
    %v1314 = vld [vmem:[#allocation5 + $0x23f8] sm:$0xff]
    %v1315 = vld [vmem:[#allocation5 + $0x2400] sm:$0xff]
    %v1316 = vld [vmem:[#allocation5 + $0x2408] sm:$0xff]
    %v1317 = vld [vmem:[#allocation5 + $0x2410] sm:$0xff]
    %v1318 = vld [vmem:[#allocation5 + $0x2418] sm:$0xff]
    %v1319 = vld [vmem:[#allocation5 + $0x2420] sm:$0xff]
    %v1320 = vld [vmem:[#allocation5 + $0x2428] sm:$0xff]
    %v1321 = vld [vmem:[#allocation5 + $0x2430] sm:$0xff]
    %v1322 = vld [vmem:[#allocation5 + $0x2438] sm:$0xff]
    %v1323 = vld [vmem:[#allocation5 + $0x2440] sm:$0xff]
    %v1324 = vld [vmem:[#allocation5 + $0x2448] sm:$0xff]
    %v1325 = vld [vmem:[#allocation5 + $0x2450] sm:$0xff]
    %v1326 = vld [vmem:[#allocation5 + $0x2458] sm:$0xff]
    %v1327 = vld [vmem:[#allocation5 + $0x2460] sm:$0xff]
    %v1328 = vld [vmem:[#allocation5 + $0x2468] sm:$0xff]
    %v1329 = vld [vmem:[#allocation5 + $0x2470] sm:$0xff]
    %v1330 = vld [vmem:[#allocation5 + $0x2478] sm:$0xff]
    %v1331 = vld [vmem:[#allocation5 + $0x2480] sm:$0xff]
    %v1332 = vld [vmem:[#allocation5 + $0x2488] sm:$0xff]
    %v1333 = vld [vmem:[#allocation5 + $0x2490] sm:$0xff]
    %v1334 = vld [vmem:[#allocation5 + $0x2498] sm:$0xff]
    %v1335 = vld [vmem:[#allocation5 + $0x24a0] sm:$0xff]
    %v1336 = vld [vmem:[#allocation5 + $0x24a8] sm:$0xff]
    %v1337 = vld [vmem:[#allocation5 + $0x24b0] sm:$0xff]
    %v1338 = vld [vmem:[#allocation5 + $0x24b8] sm:$0xff]
    %v1339 = vld [vmem:[#allocation5 + $0x24c0] sm:$0xff]
    %v1340 = vld [vmem:[#allocation5 + $0x24c8] sm:$0xff]
    %v1341 = vld [vmem:[#allocation5 + $0x24d0] sm:$0xff]
    %v1342 = vld [vmem:[#allocation5 + $0x24d8] sm:$0xff]
    %v1343 = vld [vmem:[#allocation5 + $0x24e0] sm:$0xff]
    %v1344 = vld [vmem:[#allocation5 + $0x24e8] sm:$0xff]
    %v1345 = vld [vmem:[#allocation5 + $0x24f0] sm:$0xff]
    %v1346 = vld [vmem:[#allocation5 + $0x24f8] sm:$0xff]
    %v1347 = vld [vmem:[#allocation5 + $0x2500] sm:$0xff]
    %v1348 = vld [vmem:[#allocation5 + $0x2508] sm:$0xff]
    %v1349 = vld [vmem:[#allocation5 + $0x2510] sm:$0xff]
    %v1350 = vld [vmem:[#allocation5 + $0x2518] sm:$0xff]
    %v1351 = vld [vmem:[#allocation5 + $0x2520] sm:$0xff]
    %v1352 = vld [vmem:[#allocation5 + $0x2528] sm:$0xff]
    %v1353 = vld [vmem:[#allocation5 + $0x2530] sm:$0xff]
    %v1354 = vld [vmem:[#allocation5 + $0x2538] sm:$0xff]
    %v1355 = vld [vmem:[#allocation5 + $0x2540] sm:$0xff]
    %v1356 = vld [vmem:[#allocation5 + $0x2548] sm:$0xff]
    %v1357 = vld [vmem:[#allocation5 + $0x2550] sm:$0xff]
    %v1358 = vld [vmem:[#allocation5 + $0x2558] sm:$0xff]
    %v1359 = vld [vmem:[#allocation5 + $0x2560] sm:$0xff]
    %v1360 = vld [vmem:[#allocation5 + $0x2568] sm:$0xff]
    %v1361 = vld [vmem:[#allocation5 + $0x2570] sm:$0xff]
    %v1362 = vld [vmem:[#allocation5 + $0x2578] sm:$0xff]
    %v1363 = vld [vmem:[#allocation5 + $0x2580] sm:$0xff]
    %v1364 = vld [vmem:[#allocation5 + $0x2588] sm:$0xff]
    %v1365 = vld [vmem:[#allocation5 + $0x2590] sm:$0xff]
    %v1366 = vld [vmem:[#allocation5 + $0x2598] sm:$0xff]
    %v1367 = vld [vmem:[#allocation5 + $0x25a0] sm:$0xff]
    %v1368 = vld [vmem:[#allocation5 + $0x25a8] sm:$0xff]
    %v1369 = vld [vmem:[#allocation5 + $0x25b0] sm:$0xff]
    %v1370 = vld [vmem:[#allocation5 + $0x25b8] sm:$0xff]
    %v1371 = vld [vmem:[#allocation5 + $0x25c0] sm:$0xff]
    %v1372 = vld [vmem:[#allocation5 + $0x25c8] sm:$0xff]
    %v1373 = vld [vmem:[#allocation5 + $0x25d0] sm:$0xff]
    %v1374 = vld [vmem:[#allocation5 + $0x25d8] sm:$0xff]
    %v1375 = vld [vmem:[#allocation5 + $0x25e0] sm:$0xff]
    %v1376 = vld [vmem:[#allocation5 + $0x25e8] sm:$0xff]
    %v1377 = vld [vmem:[#allocation5 + $0x25f0] sm:$0xff]
    %v1378 = vld [vmem:[#allocation5 + $0x25f8] sm:$0xff]
    %v1379 = vld [vmem:[#allocation5 + $0x2600] sm:$0xff]
    %v1380 = vld [vmem:[#allocation5 + $0x2608] sm:$0xff]
    %v1381 = vld [vmem:[#allocation5 + $0x2610] sm:$0xff]
    %v1382 = vld [vmem:[#allocation5 + $0x2618] sm:$0xff]
    %v1383 = vld [vmem:[#allocation5 + $0x2620] sm:$0xff]
    %v1384 = vld [vmem:[#allocation5 + $0x2628] sm:$0xff]
    %v1385 = vld [vmem:[#allocation5 + $0x2630] sm:$0xff]
    %v1386 = vld [vmem:[#allocation5 + $0x2638] sm:$0xff]
    %v1387 = vld [vmem:[#allocation5 + $0x2640] sm:$0xff]
    %v1388 = vld [vmem:[#allocation5 + $0x2648] sm:$0xff]
    %v1389 = vld [vmem:[#allocation5 + $0x2650] sm:$0xff]
    %v1390 = vld [vmem:[#allocation5 + $0x2658] sm:$0xff]
    %v1391 = vld [vmem:[#allocation5 + $0x2660] sm:$0xff]
    %v1392 = vld [vmem:[#allocation5 + $0x2668] sm:$0xff]
    %v1393 = vld [vmem:[#allocation5 + $0x2670] sm:$0xff]
    %v1394 = vld [vmem:[#allocation5 + $0x2678] sm:$0xff]
    %v1395 = vld [vmem:[#allocation5 + $0x2680] sm:$0xff]
    %v1396 = vld [vmem:[#allocation5 + $0x2688] sm:$0xff]
    %v1397 = vld [vmem:[#allocation5 + $0x2690] sm:$0xff]
    %v1398 = vld [vmem:[#allocation5 + $0x2698] sm:$0xff]
    %v1399 = vld [vmem:[#allocation5 + $0x26a0] sm:$0xff]
    %v1400 = vld [vmem:[#allocation5 + $0x26a8] sm:$0xff]
    %v1401 = vld [vmem:[#allocation5 + $0x26b0] sm:$0xff]
    %v1402 = vld [vmem:[#allocation5 + $0x26b8] sm:$0xff]
    %v1403 = vld [vmem:[#allocation5 + $0x26c0] sm:$0xff]
    %v1404 = vld [vmem:[#allocation5 + $0x26c8] sm:$0xff]
    %v1405 = vld [vmem:[#allocation5 + $0x26d0] sm:$0xff]
    %v1406 = vld [vmem:[#allocation5 + $0x26d8] sm:$0xff]
    %v1407 = vld [vmem:[#allocation5 + $0x26e0] sm:$0xff]
    %v1408 = vld [vmem:[#allocation5 + $0x26e8] sm:$0xff]
    %v1409 = vld [vmem:[#allocation5 + $0x26f0] sm:$0xff]
    %v1410 = vld [vmem:[#allocation5 + $0x26f8] sm:$0xff]
    %v1411 = vld [vmem:[#allocation5 + $0x2700] sm:$0xff]
    %v1412 = vld [vmem:[#allocation5 + $0x2708] sm:$0xff]
    %v1413 = vld [vmem:[#allocation5 + $0x2710] sm:$0xff]
    %v1414 = vld [vmem:[#allocation5 + $0x2718] sm:$0xff]
    %v1415 = vld [vmem:[#allocation5 + $0x2720] sm:$0xff]
    %v1416 = vld [vmem:[#allocation5 + $0x2728] sm:$0xff]
    %v1417 = vld [vmem:[#allocation5 + $0x2730] sm:$0xff]
    %v1418 = vld [vmem:[#allocation5 + $0x2738] sm:$0xff]
    %v1419 = vld [vmem:[#allocation5 + $0x2740] sm:$0xff]
    %v1420 = vld [vmem:[#allocation5 + $0x2748] sm:$0xff]
    %v1421 = vld [vmem:[#allocation5 + $0x2750] sm:$0xff]
    %v1422 = vld [vmem:[#allocation5 + $0x2758] sm:$0xff]
    %v1423 = vld [vmem:[#allocation5 + $0x2760] sm:$0xff]
    %v1424 = vld [vmem:[#allocation5 + $0x2768] sm:$0xff]
    %v1425 = vld [vmem:[#allocation5 + $0x2770] sm:$0xff]
    %v1426 = vld [vmem:[#allocation5 + $0x2778] sm:$0xff]
    %v1427 = vld [vmem:[#allocation5 + $0x2780] sm:$0xff]
    %v1428 = vld [vmem:[#allocation5 + $0x2788] sm:$0xff]
    %v1429 = vld [vmem:[#allocation5 + $0x2790] sm:$0xff]
    %v1430 = vld [vmem:[#allocation5 + $0x2798] sm:$0xff]
    %v1431 = vld [vmem:[#allocation5 + $0x27a0] sm:$0xff]
    %v1432 = vld [vmem:[#allocation5 + $0x27a8] sm:$0xff]
    %v1433 = vld [vmem:[#allocation5 + $0x27b0] sm:$0xff]
    %v1434 = vld [vmem:[#allocation5 + $0x27b8] sm:$0xff]
    %v1435 = vld [vmem:[#allocation5 + $0x27c0] sm:$0xff]
    %v1436 = vld [vmem:[#allocation5 + $0x27c8] sm:$0xff]
    %v1437 = vld [vmem:[#allocation5 + $0x27d0] sm:$0xff]
    %v1438 = vld [vmem:[#allocation5 + $0x27d8] sm:$0xff]
    %v1439 = vld [vmem:[#allocation5 + $0x27e0] sm:$0xff]
    %v1440 = vld [vmem:[#allocation5 + $0x27e8] sm:$0xff]
    %v1441 = vld [vmem:[#allocation5 + $0x27f0] sm:$0xff]
    %v1442 = vld [vmem:[#allocation5 + $0x27f8] sm:$0xff]
    %v1443 = vld [vmem:[#allocation5 + $0x2800] sm:$0xff]
    %v1444 = vld [vmem:[#allocation5 + $0x2808] sm:$0xff]
    %v1445 = vld [vmem:[#allocation5 + $0x2810] sm:$0xff]
    %v1446 = vld [vmem:[#allocation5 + $0x2818] sm:$0xff]
    %v1447 = vld [vmem:[#allocation5 + $0x2820] sm:$0xff]
    %v1448 = vld [vmem:[#allocation5 + $0x2828] sm:$0xff]
    %v1449 = vld [vmem:[#allocation5 + $0x2830] sm:$0xff]
    %v1450 = vld [vmem:[#allocation5 + $0x2838] sm:$0xff]
    %v1451 = vld [vmem:[#allocation5 + $0x2840] sm:$0xff]
    %v1452 = vld [vmem:[#allocation5 + $0x2848] sm:$0xff]
    %v1453 = vld [vmem:[#allocation5 + $0x2850] sm:$0xff]
    %v1454 = vld [vmem:[#allocation5 + $0x2858] sm:$0xff]
    %v1455 = vld [vmem:[#allocation5 + $0x2860] sm:$0xff]
    %v1456 = vld [vmem:[#allocation5 + $0x2868] sm:$0xff]
    %v1457 = vld [vmem:[#allocation5 + $0x2870] sm:$0xff]
    %v1458 = vld [vmem:[#allocation5 + $0x2878] sm:$0xff]
    %v1459 = vld [vmem:[#allocation5 + $0x2880] sm:$0xff]
    %v1460 = vld [vmem:[#allocation5 + $0x2888] sm:$0xff]
    %v1461 = vld [vmem:[#allocation5 + $0x2890] sm:$0xff]
    %v1462 = vld [vmem:[#allocation5 + $0x2898] sm:$0xff]
    %v1463 = vld [vmem:[#allocation5 + $0x28a0] sm:$0xff]
    %v1464 = vld [vmem:[#allocation5 + $0x28a8] sm:$0xff]
    %v1465 = vld [vmem:[#allocation5 + $0x28b0] sm:$0xff]
    %v1466 = vld [vmem:[#allocation5 + $0x28b8] sm:$0xff]
    %v1467 = vld [vmem:[#allocation5 + $0x28c0] sm:$0xff]
    %v1468 = vld [vmem:[#allocation5 + $0x28c8] sm:$0xff]
    %v1469 = vld [vmem:[#allocation5 + $0x28d0] sm:$0xff]
    %v1470 = vld [vmem:[#allocation5 + $0x28d8] sm:$0xff]
    %v1471 = vld [vmem:[#allocation5 + $0x28e0] sm:$0xff]
    %v1472 = vld [vmem:[#allocation5 + $0x28e8] sm:$0xff]
    %v1473 = vld [vmem:[#allocation5 + $0x28f0] sm:$0xff]
    %v1474 = vld [vmem:[#allocation5 + $0x28f8] sm:$0xff]
    %v1475 = vld [vmem:[#allocation5 + $0x2900] sm:$0xff]
    %v1476 = vld [vmem:[#allocation5 + $0x2908] sm:$0xff]
    %v1477 = vld [vmem:[#allocation5 + $0x2910] sm:$0xff]
    %v1478 = vld [vmem:[#allocation5 + $0x2918] sm:$0xff]
    %v1479 = vld [vmem:[#allocation5 + $0x2920] sm:$0xff]
    %v1480 = vld [vmem:[#allocation5 + $0x2928] sm:$0xff]
    %v1481 = vld [vmem:[#allocation5 + $0x2930] sm:$0xff]
    %v1482 = vld [vmem:[#allocation5 + $0x2938] sm:$0xff]
    %v1483 = vld [vmem:[#allocation5 + $0x2940] sm:$0xff]
    %v1484 = vld [vmem:[#allocation5 + $0x2948] sm:$0xff]
    %v1485 = vld [vmem:[#allocation5 + $0x2950] sm:$0xff]
    %v1486 = vld [vmem:[#allocation5 + $0x2958] sm:$0xff]
    %v1487 = vld [vmem:[#allocation5 + $0x2960] sm:$0xff]
    %v1488 = vld [vmem:[#allocation5 + $0x2968] sm:$0xff]
    %v1489 = vld [vmem:[#allocation5 + $0x2970] sm:$0xff]
    %v1490 = vld [vmem:[#allocation5 + $0x2978] sm:$0xff]
    %v1491 = vld [vmem:[#allocation5 + $0x2980] sm:$0xff]
    %v1492 = vld [vmem:[#allocation5 + $0x2988] sm:$0xff]
    %v1493 = vld [vmem:[#allocation5 + $0x2990] sm:$0xff]
    %v1494 = vld [vmem:[#allocation5 + $0x2998] sm:$0xff]
    %v1495 = vld [vmem:[#allocation5 + $0x29a0] sm:$0xff]
    %v1496 = vld [vmem:[#allocation5 + $0x29a8] sm:$0xff]
    %v1497 = vld [vmem:[#allocation5 + $0x29b0] sm:$0xff]
    %v1498 = vld [vmem:[#allocation5 + $0x29b8] sm:$0xff]
    %v1499 = vld [vmem:[#allocation5 + $0x29c0] sm:$0xff]
    %v1500 = vld [vmem:[#allocation5 + $0x29c8] sm:$0xff]
    %v1501 = vld [vmem:[#allocation5 + $0x29d0] sm:$0xff]
    %v1502 = vld [vmem:[#allocation5 + $0x29d8] sm:$0xff]
    %v1503 = vld [vmem:[#allocation5 + $0x29e0] sm:$0xff]
    %v1504 = vld [vmem:[#allocation5 + $0x29e8] sm:$0xff]
    %v1505 = vld [vmem:[#allocation5 + $0x29f0] sm:$0xff]
    %v1506 = vld [vmem:[#allocation5 + $0x29f8] sm:$0xff]
    %v1507 = vld [vmem:[#allocation5 + $0x2a00] sm:$0xff]
    %v1508 = vld [vmem:[#allocation5 + $0x2a08] sm:$0xff]
    %v1509 = vld [vmem:[#allocation5 + $0x2a10] sm:$0xff]
    %v1510 = vld [vmem:[#allocation5 + $0x2a18] sm:$0xff]
    %v1511 = vld [vmem:[#allocation5 + $0x2a20] sm:$0xff]
    %v1512 = vld [vmem:[#allocation5 + $0x2a28] sm:$0xff]
    %v1513 = vld [vmem:[#allocation5 + $0x2a30] sm:$0xff]
    %v1514 = vld [vmem:[#allocation5 + $0x2a38] sm:$0xff]
    %v1515 = vld [vmem:[#allocation5 + $0x2a40] sm:$0xff]
    %v1516 = vld [vmem:[#allocation5 + $0x2a48] sm:$0xff]
    %v1517 = vld [vmem:[#allocation5 + $0x2a50] sm:$0xff]
    %v1518 = vld [vmem:[#allocation5 + $0x2a58] sm:$0xff]
    %v1519 = vld [vmem:[#allocation5 + $0x2a60] sm:$0xff]
    %v1520 = vld [vmem:[#allocation5 + $0x2a68] sm:$0xff]
    %v1521 = vld [vmem:[#allocation5 + $0x2a70] sm:$0xff]
    %v1522 = vld [vmem:[#allocation5 + $0x2a78] sm:$0xff]
    %v1523 = vld [vmem:[#allocation5 + $0x2a80] sm:$0xff]
    %v1524 = vld [vmem:[#allocation5 + $0x2a88] sm:$0xff]
    %v1525 = vld [vmem:[#allocation5 + $0x2a90] sm:$0xff]
    %v1526 = vld [vmem:[#allocation5 + $0x2a98] sm:$0xff]
    %v1527 = vld [vmem:[#allocation5 + $0x2aa0] sm:$0xff]
    %v1528 = vld [vmem:[#allocation5 + $0x2aa8] sm:$0xff]
    %v1529 = vld [vmem:[#allocation5 + $0x2ab0] sm:$0xff]
    %v1530 = vld [vmem:[#allocation5 + $0x2ab8] sm:$0xff]
    %v1531 = vld [vmem:[#allocation5 + $0x2ac0] sm:$0xff]
    %v1532 = vld [vmem:[#allocation5 + $0x2ac8] sm:$0xff]
    %v1533 = vld [vmem:[#allocation5 + $0x2ad0] sm:$0xff]
    %v1534 = vld [vmem:[#allocation5 + $0x2ad8] sm:$0xff]
    %v1535 = vld [vmem:[#allocation5 + $0x2ae0] sm:$0xff]
    %v1536 = vld [vmem:[#allocation5 + $0x2ae8] sm:$0xff]
    %v1537 = vld [vmem:[#allocation5 + $0x2af0] sm:$0xff]
    %v1538 = vld [vmem:[#allocation5 + $0x2af8] sm:$0xff]
    %v1539 = vld [vmem:[#allocation5 + $0x2b00] sm:$0xff]
    %v1540 = vld [vmem:[#allocation5 + $0x2b08] sm:$0xff]
    %v1541 = vld [vmem:[#allocation5 + $0x2b10] sm:$0xff]
    %v1542 = vld [vmem:[#allocation5 + $0x2b18] sm:$0xff]
    %v1543 = vld [vmem:[#allocation5 + $0x2b20] sm:$0xff]
    %v1544 = vld [vmem:[#allocation5 + $0x2b28] sm:$0xff]
    %v1545 = vld [vmem:[#allocation5 + $0x2b30] sm:$0xff]
    %v1546 = vld [vmem:[#allocation5 + $0x2b38] sm:$0xff]
    %v1547 = vld [vmem:[#allocation5 + $0x2b40] sm:$0xff]
    %v1548 = vld [vmem:[#allocation5 + $0x2b48] sm:$0xff]
    %v1549 = vld [vmem:[#allocation5 + $0x2b50] sm:$0xff]
    %v1550 = vld [vmem:[#allocation5 + $0x2b58] sm:$0xff]
    %v1551 = vld [vmem:[#allocation5 + $0x2b60] sm:$0xff]
    %v1552 = vld [vmem:[#allocation5 + $0x2b68] sm:$0xff]
    %v1553 = vld [vmem:[#allocation5 + $0x2b70] sm:$0xff]
    %v1554 = vld [vmem:[#allocation5 + $0x2b78] sm:$0xff]
    %v1555 = vld [vmem:[#allocation5 + $0x2b80] sm:$0xff]
    %v1556 = vld [vmem:[#allocation5 + $0x2b88] sm:$0xff]
    %v1557 = vld [vmem:[#allocation5 + $0x2b90] sm:$0xff]
    %v1558 = vld [vmem:[#allocation5 + $0x2b98] sm:$0xff]
    %v1559 = vld [vmem:[#allocation5 + $0x2ba0] sm:$0xff]
    %v1560 = vld [vmem:[#allocation5 + $0x2ba8] sm:$0xff]
    %v1561 = vld [vmem:[#allocation5 + $0x2bb0] sm:$0xff]
    %v1562 = vld [vmem:[#allocation5 + $0x2bb8] sm:$0xff]
    %v1563 = vld [vmem:[#allocation5 + $0x2bc0] sm:$0xff]
    %v1564 = vld [vmem:[#allocation5 + $0x2bc8] sm:$0xff]
    %v1565 = vld [vmem:[#allocation5 + $0x2bd0] sm:$0xff]
    %v1566 = vld [vmem:[#allocation5 + $0x2bd8] sm:$0xff]
    %v1567 = vld [vmem:[#allocation5 + $0x2be0] sm:$0xff]
    %v1568 = vld [vmem:[#allocation5 + $0x2be8] sm:$0xff]
    %v1569 = vld [vmem:[#allocation5 + $0x2bf0] sm:$0xff]
    %v1570 = vld [vmem:[#allocation5 + $0x2bf8] sm:$0xff]
    %v1571 = vld [vmem:[#allocation5 + $0x2c00] sm:$0xff]
    %v1572 = vld [vmem:[#allocation5 + $0x2c08] sm:$0xff]
    %v1573 = vld [vmem:[#allocation5 + $0x2c10] sm:$0xff]
    %v1574 = vld [vmem:[#allocation5 + $0x2c18] sm:$0xff]
    %v1575 = vld [vmem:[#allocation5 + $0x2c20] sm:$0xff]
    %v1576 = vld [vmem:[#allocation5 + $0x2c28] sm:$0xff]
    %v1577 = vld [vmem:[#allocation5 + $0x2c30] sm:$0xff]
    %v1578 = vld [vmem:[#allocation5 + $0x2c38] sm:$0xff]
    %v1579 = vld [vmem:[#allocation5 + $0x2c40] sm:$0xff]
    %v1580 = vld [vmem:[#allocation5 + $0x2c48] sm:$0xff]
    %v1581 = vld [vmem:[#allocation5 + $0x2c50] sm:$0xff]
    %v1582 = vld [vmem:[#allocation5 + $0x2c58] sm:$0xff]
    %v1583 = vld [vmem:[#allocation5 + $0x2c60] sm:$0xff]
    %v1584 = vld [vmem:[#allocation5 + $0x2c68] sm:$0xff]
    %v1585 = vld [vmem:[#allocation5 + $0x2c70] sm:$0xff]
    %v1586 = vld [vmem:[#allocation5 + $0x2c78] sm:$0xff]
    %v1587 = vld [vmem:[#allocation5 + $0x2c80] sm:$0xff]
    %v1588 = vld [vmem:[#allocation5 + $0x2c88] sm:$0xff]
    %v1589 = vld [vmem:[#allocation5 + $0x2c90] sm:$0xff]
    %v1590 = vld [vmem:[#allocation5 + $0x2c98] sm:$0xff]
    %v1591 = vld [vmem:[#allocation5 + $0x2ca0] sm:$0xff]
    %v1592 = vld [vmem:[#allocation5 + $0x2ca8] sm:$0xff]
    %v1593 = vld [vmem:[#allocation5 + $0x2cb0] sm:$0xff]
    %v1594 = vld [vmem:[#allocation5 + $0x2cb8] sm:$0xff]
    %v1595 = vld [vmem:[#allocation5 + $0x2cc0] sm:$0xff]
    %v1596 = vld [vmem:[#allocation5 + $0x2cc8] sm:$0xff]
    %v1597 = vld [vmem:[#allocation5 + $0x2cd0] sm:$0xff]
    %v1598 = vld [vmem:[#allocation5 + $0x2cd8] sm:$0xff]
    %v1599 = vld [vmem:[#allocation5 + $0x2ce0] sm:$0xff]
    %v1600 = vld [vmem:[#allocation5 + $0x2ce8] sm:$0xff]
    %v1601 = vld [vmem:[#allocation5 + $0x2cf0] sm:$0xff]
    %v1602 = vld [vmem:[#allocation5 + $0x2cf8] sm:$0xff]
    %v1603 = vld [vmem:[#allocation5 + $0x2d00] sm:$0xff]
    %v1604 = vld [vmem:[#allocation5 + $0x2d08] sm:$0xff]
    %v1605 = vld [vmem:[#allocation5 + $0x2d10] sm:$0xff]
    %v1606 = vld [vmem:[#allocation5 + $0x2d18] sm:$0xff]
    %v1607 = vld [vmem:[#allocation5 + $0x2d20] sm:$0xff]
    %v1608 = vld [vmem:[#allocation5 + $0x2d28] sm:$0xff]
    %v1609 = vld [vmem:[#allocation5 + $0x2d30] sm:$0xff]
    %v1610 = vld [vmem:[#allocation5 + $0x2d38] sm:$0xff]
    %v1611 = vld [vmem:[#allocation5 + $0x2d40] sm:$0xff]
    %v1612 = vld [vmem:[#allocation5 + $0x2d48] sm:$0xff]
    %v1613 = vld [vmem:[#allocation5 + $0x2d50] sm:$0xff]
    %v1614 = vld [vmem:[#allocation5 + $0x2d58] sm:$0xff]
    %v1615 = vld [vmem:[#allocation5 + $0x2d60] sm:$0xff]
    %v1616 = vld [vmem:[#allocation5 + $0x2d68] sm:$0xff]
    %v1617 = vld [vmem:[#allocation5 + $0x2d70] sm:$0xff]
    %v1618 = vld [vmem:[#allocation5 + $0x2d78] sm:$0xff]
    %v1619 = vld [vmem:[#allocation5 + $0x2d80] sm:$0xff]
    %v1620 = vld [vmem:[#allocation5 + $0x2d88] sm:$0xff]
    %v1621 = vld [vmem:[#allocation5 + $0x2d90] sm:$0xff]
    %v1622 = vld [vmem:[#allocation5 + $0x2d98] sm:$0xff]
    %v1623 = vld [vmem:[#allocation5 + $0x2da0] sm:$0xff]
    %v1624 = vld [vmem:[#allocation5 + $0x2da8] sm:$0xff]
    %v1625 = vld [vmem:[#allocation5 + $0x2db0] sm:$0xff]
    %v1626 = vld [vmem:[#allocation5 + $0x2db8] sm:$0xff]
    %v1627 = vld [vmem:[#allocation5 + $0x2dc0] sm:$0xff]
    %v1628 = vld [vmem:[#allocation5 + $0x2dc8] sm:$0xff]
    %v1629 = vld [vmem:[#allocation5 + $0x2dd0] sm:$0xff]
    %v1630 = vld [vmem:[#allocation5 + $0x2dd8] sm:$0xff]
    %v1631 = vld [vmem:[#allocation5 + $0x2de0] sm:$0xff]
    %v1632 = vld [vmem:[#allocation5 + $0x2de8] sm:$0xff]
    %v1633 = vld [vmem:[#allocation5 + $0x2df0] sm:$0xff]
    %v1634 = vld [vmem:[#allocation5 + $0x2df8] sm:$0xff]
    %v1635 = vld [vmem:[#allocation5 + $0x2e00] sm:$0xff]
    %v1636 = vld [vmem:[#allocation5 + $0x2e08] sm:$0xff]
    %v1637 = vld [vmem:[#allocation5 + $0x2e10] sm:$0xff]
    %v1638 = vld [vmem:[#allocation5 + $0x2e18] sm:$0xff]
    %v1639 = vld [vmem:[#allocation5 + $0x2e20] sm:$0xff]
    %v1640 = vld [vmem:[#allocation5 + $0x2e28] sm:$0xff]
    %v1641 = vld [vmem:[#allocation5 + $0x2e30] sm:$0xff]
    %v1642 = vld [vmem:[#allocation5 + $0x2e38] sm:$0xff]
    %v1643 = vld [vmem:[#allocation5 + $0x2e40] sm:$0xff]
    %v1644 = vld [vmem:[#allocation5 + $0x2e48] sm:$0xff]
    %v1645 = vld [vmem:[#allocation5 + $0x2e50] sm:$0xff]
    %v1646 = vld [vmem:[#allocation5 + $0x2e58] sm:$0xff]
    %v1647 = vld [vmem:[#allocation5 + $0x2e60] sm:$0xff]
    %v1648 = vld [vmem:[#allocation5 + $0x2e68] sm:$0xff]
    %v1649 = vld [vmem:[#allocation5 + $0x2e70] sm:$0xff]
    %v1650 = vld [vmem:[#allocation5 + $0x2e78] sm:$0xff]
    %v1651 = vld [vmem:[#allocation5 + $0x2e80] sm:$0xff]
    %v1652 = vld [vmem:[#allocation5 + $0x2e88] sm:$0xff]
    %v1653 = vld [vmem:[#allocation5 + $0x2e90] sm:$0xff]
    %v1654 = vld [vmem:[#allocation5 + $0x2e98] sm:$0xff]
    %v1655 = vld [vmem:[#allocation5 + $0x2ea0] sm:$0xff]
    %v1656 = vld [vmem:[#allocation5 + $0x2ea8] sm:$0xff]
    %v1657 = vld [vmem:[#allocation5 + $0x2eb0] sm:$0xff]
    %v1658 = vld [vmem:[#allocation5 + $0x2eb8] sm:$0xff]
    %v1659 = vld [vmem:[#allocation5 + $0x2ec0] sm:$0xff]
    %v1660 = vld [vmem:[#allocation5 + $0x2ec8] sm:$0xff]
    %v1661 = vld [vmem:[#allocation5 + $0x2ed0] sm:$0xff]
    %v1662 = vld [vmem:[#allocation5 + $0x2ed8] sm:$0xff]
    %v1663 = vld [vmem:[#allocation5 + $0x2ee0] sm:$0xff]
    %v1664 = vld [vmem:[#allocation5 + $0x2ee8] sm:$0xff]
    %v1665 = vld [vmem:[#allocation5 + $0x2ef0] sm:$0xff]
    %v1666 = vld [vmem:[#allocation5 + $0x2ef8] sm:$0xff]
    %v1667 = vld [vmem:[#allocation5 + $0x2f00] sm:$0xff]
    %v1668 = vld [vmem:[#allocation5 + $0x2f08] sm:$0xff]
    %v1669 = vld [vmem:[#allocation5 + $0x2f10] sm:$0xff]
    %v1670 = vld [vmem:[#allocation5 + $0x2f18] sm:$0xff]
    %v1671 = vld [vmem:[#allocation5 + $0x2f20] sm:$0xff]
    %v1672 = vld [vmem:[#allocation5 + $0x2f28] sm:$0xff]
    %v1673 = vld [vmem:[#allocation5 + $0x2f30] sm:$0xff]
    %v1674 = vld [vmem:[#allocation5 + $0x2f38] sm:$0xff]
    %v1675 = vld [vmem:[#allocation5 + $0x2f40] sm:$0xff]
    %v1676 = vld [vmem:[#allocation5 + $0x2f48] sm:$0xff]
    %v1677 = vld [vmem:[#allocation5 + $0x2f50] sm:$0xff]
    %v1678 = vld [vmem:[#allocation5 + $0x2f58] sm:$0xff]
    %v1679 = vld [vmem:[#allocation5 + $0x2f60] sm:$0xff]
    %v1680 = vld [vmem:[#allocation5 + $0x2f68] sm:$0xff]
    %v1681 = vld [vmem:[#allocation5 + $0x2f70] sm:$0xff]
    %v1682 = vld [vmem:[#allocation5 + $0x2f78] sm:$0xff]
    %v1683 = vld [vmem:[#allocation5 + $0x2f80] sm:$0xff]
    %v1684 = vld [vmem:[#allocation5 + $0x2f88] sm:$0xff]
    %v1685 = vld [vmem:[#allocation5 + $0x2f90] sm:$0xff]
    %v1686 = vld [vmem:[#allocation5 + $0x2f98] sm:$0xff]
    %v1687 = vld [vmem:[#allocation5 + $0x2fa0] sm:$0xff]
    %v1688 = vld [vmem:[#allocation5 + $0x2fa8] sm:$0xff]
    %v1689 = vld [vmem:[#allocation5 + $0x2fb0] sm:$0xff]
    %v1690 = vld [vmem:[#allocation5 + $0x2fb8] sm:$0xff]
    %v1691 = vld [vmem:[#allocation5 + $0x2fc0] sm:$0xff]
    %v1692 = vld [vmem:[#allocation5 + $0x2fc8] sm:$0xff]
    %v1693 = vld [vmem:[#allocation5 + $0x2fd0] sm:$0xff]
    %v1694 = vld [vmem:[#allocation5 + $0x2fd8] sm:$0xff]
    %v1695 = vld [vmem:[#allocation5 + $0x2fe0] sm:$0xff]
    %v1696 = vld [vmem:[#allocation5 + $0x2fe8] sm:$0xff]
    %v1697 = vld [vmem:[#allocation5 + $0x2ff0] sm:$0xff]
    %v1698 = vld [vmem:[#allocation5 + $0x2ff8] sm:$0xff]
    %v1699 = vld [vmem:[#allocation7] sm:$0x3]
    %v1701 = vlaneseq
    %v1702 = vshrl.u32 %v1701, 7
    %v1703 = vsub.s32 0, %v1702
    %v1704 = vrot.slane %v1699, %v1703
    %v1705 = vlaneseq
    %v1706 = vshrl.u32 %v1705, 7
    %v1707 = vsub.s32 1, %v1706
    %v1708 = vrot.slane %v1699, %v1707
    %v1759 = vunpack.c.l.b16 %v115
    %v1760 = vunpack.c.h.b16 %v115
    %v1761 = vunpack.c.l.b16 %v116
    %v1762 = vunpack.c.h.b16 %v116
    %v1763 = vunpack.c.l.b16 %v117
    %v1764 = vunpack.c.h.b16 %v117
    %v1765 = vunpack.c.l.b16 %v118
    %v1766 = vunpack.c.h.b16 %v118
    %v1767 = vunpack.c.l.b16 %v119
    %v1768 = vunpack.c.h.b16 %v119
    %v1769 = vunpack.c.l.b16 %v120
    %v1770 = vunpack.c.h.b16 %v120
    %v1771 = vunpack.c.l.b16 %v121
    %v1772 = vunpack.c.h.b16 %v121
    %v1773 = vunpack.c.l.b16 %v122
    %v1774 = vunpack.c.h.b16 %v122
    %v1775 = vunpack.c.l.b16 %v123
    %v1776 = vunpack.c.h.b16 %v123
    %v1777 = vunpack.c.l.b16 %v124
    %v1778 = vunpack.c.h.b16 %v124
    %v1779 = vunpack.c.l.b16 %v125
    %v1780 = vunpack.c.h.b16 %v125
    %v1781 = vunpack.c.l.b16 %v126
    %v1782 = vunpack.c.h.b16 %v126
    %v1783 = vunpack.c.l.b16 %v127
    %v1784 = vunpack.c.h.b16 %v127
    %v1785 = vunpack.c.l.b16 %v128
    %v1786 = vunpack.c.h.b16 %v128
    %v1787 = vunpack.c.l.b16 %v129
    %v1788 = vunpack.c.h.b16 %v129
    %v1789 = vunpack.c.l.b16 %v130
    %v1790 = vunpack.c.h.b16 %v130
    %v1791 = vunpack.c.l.b16 %v131
    %v1792 = vunpack.c.h.b16 %v131
    %v1793 = vunpack.c.l.b16 %v132
    %v1794 = vunpack.c.h.b16 %v132
    %v1795 = vunpack.c.l.b16 %v133
    %v1796 = vunpack.c.h.b16 %v133
    %v1797 = vunpack.c.l.b16 %v134
    %v1798 = vunpack.c.h.b16 %v134
    %v1799 = vunpack.c.l.b16 %v135
    %v1800 = vunpack.c.h.b16 %v135
    %v1801 = vunpack.c.l.b16 %v136
    %v1802 = vunpack.c.h.b16 %v136
    %v1803 = vunpack.c.l.b16 %v137
    %v1804 = vunpack.c.h.b16 %v137
    %v1805 = vunpack.c.l.b16 %v138
    %v1806 = vunpack.c.h.b16 %v138
    %v1807 = vunpack.c.l.b16 %v139
    %v1808 = vunpack.c.h.b16 %v139
    %v1809 = vunpack.c.l.b16 %v140
    %v1810 = vunpack.c.h.b16 %v140
    %v1811 = vunpack.c.l.b16 %v141
    %v1812 = vunpack.c.h.b16 %v141
    %v1813 = vunpack.c.l.b16 %v142
    %v1814 = vunpack.c.h.b16 %v142
    %v1815 = vunpack.c.l.b16 %v143
    %v1816 = vunpack.c.h.b16 %v143
    %v1817 = vunpack.c.l.b16 %v144
    %v1818 = vunpack.c.h.b16 %v144
    %v1819 = vunpack.c.l.b16 %v145
    %v1820 = vunpack.c.h.b16 %v145
    %v1821 = vunpack.c.l.b16 %v146
    %v1822 = vunpack.c.h.b16 %v146
    %v1823 = vunpack.c.l.b16 %v147
    %v1824 = vunpack.c.h.b16 %v147
    %v1825 = vunpack.c.l.b16 %v148
    %v1826 = vunpack.c.h.b16 %v148
    %v1827 = vunpack.c.l.b16 %v149
    %v1828 = vunpack.c.h.b16 %v149
    %v1829 = vunpack.c.l.b16 %v150
    %v1830 = vunpack.c.h.b16 %v150
    %v1831 = vunpack.c.l.b16 %v151
    %v1832 = vunpack.c.h.b16 %v151
    %v1833 = vunpack.c.l.b16 %v152
    %v1834 = vunpack.c.h.b16 %v152
    %v1835 = vunpack.c.l.b16 %v153
    %v1836 = vunpack.c.h.b16 %v153
    %v1837 = vunpack.c.l.b16 %v154
    %v1838 = vunpack.c.h.b16 %v154
    %v1839 = vunpack.c.l.b16 %v155
    %v1840 = vunpack.c.h.b16 %v155
    %v1841 = vunpack.c.l.b16 %v156
    %v1842 = vunpack.c.h.b16 %v156
    %v1843 = vunpack.c.l.b16 %v157
    %v1844 = vunpack.c.h.b16 %v157
    %v1845 = vunpack.c.l.b16 %v158
    %v1846 = vunpack.c.h.b16 %v158
    %v1847 = vunpack.c.l.b16 %v159
    %v1848 = vunpack.c.h.b16 %v159
    %v1849 = vunpack.c.l.b16 %v160
    %v1850 = vunpack.c.h.b16 %v160
    %v1851 = vunpack.c.l.b16 %v161
    %v1852 = vunpack.c.h.b16 %v161
    %v1853 = vunpack.c.l.b16 %v162
    %v1854 = vunpack.c.h.b16 %v162
    %v1855 = vpack.c.b16 %v1759, %v1759
    %v1856 = vpack.c.b16 %v1760, %v1760
    %v1857 = vpack.c.b16 %v1761, %v1761
    %v1858 = vpack.c.b16 %v1762, %v1762
    %v1859 = vpack.c.b16 %v1763, %v1763
    %v1860 = vpack.c.b16 %v1764, %v1764
    %v1861 = vpack.c.b16 %v1765, %v1765
    %v1862 = vpack.c.b16 %v1766, %v1766
    %v1863 = vpack.c.b16 %v1767, %v1767
    %v1864 = vpack.c.b16 %v1768, %v1768
    %v1865 = vpack.c.b16 %v1769, %v1769
    %v1866 = vpack.c.b16 %v1770, %v1770
    %v1867 = vpack.c.b16 %v1771, %v1771
    %v1868 = vpack.c.b16 %v1772, %v1772
    %v1869 = vpack.c.b16 %v1773, %v1773
    %v1870 = vpack.c.b16 %v1774, %v1774
    %v1871 = vpack.c.b16 %v1775, %v1775
    %v1872 = vpack.c.b16 %v1776, %v1776
    %v1873 = vpack.c.b16 %v1777, %v1777
    %v1874 = vpack.c.b16 %v1778, %v1778
    %v1875 = vpack.c.b16 %v1779, %v1779
    %v1876 = vpack.c.b16 %v1780, %v1780
    %v1877 = vpack.c.b16 %v1781, %v1781
    %v1878 = vpack.c.b16 %v1782, %v1782
    %v1879 = vpack.c.b16 %v1783, %v1783
    %v1880 = vpack.c.b16 %v1784, %v1784
    %v1881 = vpack.c.b16 %v1785, %v1785
    %v1882 = vpack.c.b16 %v1786, %v1786
    %v1883 = vpack.c.b16 %v1787, %v1787
    %v1884 = vpack.c.b16 %v1788, %v1788
    %v1885 = vpack.c.b16 %v1789, %v1789
    %v1886 = vpack.c.b16 %v1790, %v1790
    %v1887 = vpack.c.b16 %v1791, %v1791
    %v1888 = vpack.c.b16 %v1792, %v1792
    %v1889 = vpack.c.b16 %v1793, %v1793
    %v1890 = vpack.c.b16 %v1794, %v1794
    %v1891 = vpack.c.b16 %v1795, %v1795
    %v1892 = vpack.c.b16 %v1796, %v1796
    %v1893 = vpack.c.b16 %v1797, %v1797
    %v1894 = vpack.c.b16 %v1798, %v1798
    %v1895 = vpack.c.b16 %v1799, %v1799
    %v1896 = vpack.c.b16 %v1800, %v1800
    %v1897 = vpack.c.b16 %v1801, %v1801
    %v1898 = vpack.c.b16 %v1802, %v1802
    %v1899 = vpack.c.b16 %v1803, %v1803
    %v1900 = vpack.c.b16 %v1804, %v1804
    %v1901 = vpack.c.b16 %v1805, %v1805
    %v1902 = vpack.c.b16 %v1806, %v1806
    %v1903 = vpack.c.b16 %v1807, %v1807
    %v1904 = vpack.c.b16 %v1808, %v1808
    %v1905 = vpack.c.b16 %v1809, %v1809
    %v1906 = vpack.c.b16 %v1810, %v1810
    %v1907 = vpack.c.b16 %v1811, %v1811
    %v1908 = vpack.c.b16 %v1812, %v1812
    %v1909 = vpack.c.b16 %v1813, %v1813
    %v1910 = vpack.c.b16 %v1814, %v1814
    %v1911 = vpack.c.b16 %v1815, %v1815
    %v1912 = vpack.c.b16 %v1816, %v1816
    %v1913 = vpack.c.b16 %v1817, %v1817
    %v1914 = vpack.c.b16 %v1818, %v1818
    %v1915 = vpack.c.b16 %v1819, %v1819
    %v1916 = vpack.c.b16 %v1820, %v1820
    %v1917 = vpack.c.b16 %v1821, %v1821
    %v1918 = vpack.c.b16 %v1822, %v1822
    %v1919 = vpack.c.b16 %v1823, %v1823
    %v1920 = vpack.c.b16 %v1824, %v1824
    %v1921 = vpack.c.b16 %v1825, %v1825
    %v1922 = vpack.c.b16 %v1826, %v1826
    %v1923 = vpack.c.b16 %v1827, %v1827
    %v1924 = vpack.c.b16 %v1828, %v1828
    %v1925 = vpack.c.b16 %v1829, %v1829
    %v1926 = vpack.c.b16 %v1830, %v1830
    %v1927 = vpack.c.b16 %v1831, %v1831
    %v1928 = vpack.c.b16 %v1832, %v1832
    %v1929 = vpack.c.b16 %v1833, %v1833
    %v1930 = vpack.c.b16 %v1834, %v1834
    %v1931 = vpack.c.b16 %v1835, %v1835
    %v1932 = vpack.c.b16 %v1836, %v1836
    %v1933 = vpack.c.b16 %v1837, %v1837
    %v1934 = vpack.c.b16 %v1838, %v1838
    %v1935 = vpack.c.b16 %v1839, %v1839
    %v1936 = vpack.c.b16 %v1840, %v1840
    %v1937 = vpack.c.b16 %v1841, %v1841
    %v1938 = vpack.c.b16 %v1842, %v1842
    %v1939 = vpack.c.b16 %v1843, %v1843
    %v1940 = vpack.c.b16 %v1844, %v1844
    %v1941 = vpack.c.b16 %v1845, %v1845
    %v1942 = vpack.c.b16 %v1846, %v1846
    %v1943 = vpack.c.b16 %v1847, %v1847
    %v1944 = vpack.c.b16 %v1848, %v1848
    %v1945 = vpack.c.b16 %v1849, %v1849
    %v1946 = vpack.c.b16 %v1850, %v1850
    %v1947 = vpack.c.b16 %v1851, %v1851
    %v1948 = vpack.c.b16 %v1852, %v1852
    %v1949 = vpack.c.b16 %v1853, %v1853
    %v1950 = vpack.c.b16 %v1854, %v1854
    %v3583 = vunpack.c.l.b16 %v163
    %v3584 = vunpack.c.h.b16 %v163
    %v3585 = vunpack.c.l.b16 %v164
    %v3586 = vunpack.c.h.b16 %v164
    %v3587 = vunpack.c.l.b16 %v165
    %v3588 = vunpack.c.h.b16 %v165
    %v3589 = vunpack.c.l.b16 %v166
    %v3590 = vunpack.c.h.b16 %v166
    %v3591 = vunpack.c.l.b16 %v167
    %v3592 = vunpack.c.h.b16 %v167
    %v3593 = vunpack.c.l.b16 %v168
    %v3594 = vunpack.c.h.b16 %v168
    %v3595 = vunpack.c.l.b16 %v169
    %v3596 = vunpack.c.h.b16 %v169
    %v3597 = vunpack.c.l.b16 %v170
    %v3598 = vunpack.c.h.b16 %v170
    %v3599 = vunpack.c.l.b16 %v171
    %v3600 = vunpack.c.h.b16 %v171
    %v3601 = vunpack.c.l.b16 %v172
    %v3602 = vunpack.c.h.b16 %v172
    %v3603 = vunpack.c.l.b16 %v173
    %v3604 = vunpack.c.h.b16 %v173
    %v3605 = vunpack.c.l.b16 %v174
    %v3606 = vunpack.c.h.b16 %v174
    %v3607 = vunpack.c.l.b16 %v175
    %v3608 = vunpack.c.h.b16 %v175
    %v3609 = vunpack.c.l.b16 %v176
    %v3610 = vunpack.c.h.b16 %v176
    %v3611 = vunpack.c.l.b16 %v177
    %v3612 = vunpack.c.h.b16 %v177
    %v3613 = vunpack.c.l.b16 %v178
    %v3614 = vunpack.c.h.b16 %v178
    %v3615 = vunpack.c.l.b16 %v179
    %v3616 = vunpack.c.h.b16 %v179
    %v3617 = vunpack.c.l.b16 %v180
    %v3618 = vunpack.c.h.b16 %v180
    %v3619 = vunpack.c.l.b16 %v181
    %v3620 = vunpack.c.h.b16 %v181
    %v3621 = vunpack.c.l.b16 %v182
    %v3622 = vunpack.c.h.b16 %v182
    %v3623 = vunpack.c.l.b16 %v183
    %v3624 = vunpack.c.h.b16 %v183
    %v3625 = vunpack.c.l.b16 %v184
    %v3626 = vunpack.c.h.b16 %v184
    %v3627 = vunpack.c.l.b16 %v185
    %v3628 = vunpack.c.h.b16 %v185
    %v3629 = vunpack.c.l.b16 %v186
    %v3630 = vunpack.c.h.b16 %v186
    %v3631 = vunpack.c.l.b16 %v187
    %v3632 = vunpack.c.h.b16 %v187
    %v3633 = vunpack.c.l.b16 %v188
    %v3634 = vunpack.c.h.b16 %v188
    %v3635 = vunpack.c.l.b16 %v189
    %v3636 = vunpack.c.h.b16 %v189
    %v3637 = vunpack.c.l.b16 %v190
    %v3638 = vunpack.c.h.b16 %v190
    %v3639 = vunpack.c.l.b16 %v191
    %v3640 = vunpack.c.h.b16 %v191
    %v3641 = vunpack.c.l.b16 %v192
    %v3642 = vunpack.c.h.b16 %v192
    %v3643 = vunpack.c.l.b16 %v193
    %v3644 = vunpack.c.h.b16 %v193
    %v3645 = vunpack.c.l.b16 %v194
    %v3646 = vunpack.c.h.b16 %v194
    %v3647 = vunpack.c.l.b16 %v195
    %v3648 = vunpack.c.h.b16 %v195
    %v3649 = vunpack.c.l.b16 %v196
    %v3650 = vunpack.c.h.b16 %v196
    %v3651 = vunpack.c.l.b16 %v197
    %v3652 = vunpack.c.h.b16 %v197
    %v3653 = vunpack.c.l.b16 %v198
    %v3654 = vunpack.c.h.b16 %v198
    %v3655 = vunpack.c.l.b16 %v199
    %v3656 = vunpack.c.h.b16 %v199
    %v3657 = vunpack.c.l.b16 %v200
    %v3658 = vunpack.c.h.b16 %v200
    %v3659 = vunpack.c.l.b16 %v201
    %v3660 = vunpack.c.h.b16 %v201
    %v3661 = vunpack.c.l.b16 %v202
    %v3662 = vunpack.c.h.b16 %v202
    %v3663 = vunpack.c.l.b16 %v203
    %v3664 = vunpack.c.h.b16 %v203
    %v3665 = vunpack.c.l.b16 %v204
    %v3666 = vunpack.c.h.b16 %v204
    %v3667 = vunpack.c.l.b16 %v205
    %v3668 = vunpack.c.h.b16 %v205
    %v3669 = vunpack.c.l.b16 %v206
    %v3670 = vunpack.c.h.b16 %v206
    %v3671 = vunpack.c.l.b16 %v207
    %v3672 = vunpack.c.h.b16 %v207
    %v3673 = vunpack.c.l.b16 %v208
    %v3674 = vunpack.c.h.b16 %v208
    %v3675 = vunpack.c.l.b16 %v209
    %v3676 = vunpack.c.h.b16 %v209
    %v3677 = vunpack.c.l.b16 %v210
    %v3678 = vunpack.c.h.b16 %v210
    %v3679 = vunpack.c.l.b16 %v211
    %v3680 = vunpack.c.h.b16 %v211
    %v3681 = vunpack.c.l.b16 %v212
    %v3682 = vunpack.c.h.b16 %v212
    %v3683 = vunpack.c.l.b16 %v213
    %v3684 = vunpack.c.h.b16 %v213
    %v3685 = vunpack.c.l.b16 %v214
    %v3686 = vunpack.c.h.b16 %v214
    %v3687 = vunpack.c.l.b16 %v215
    %v3688 = vunpack.c.h.b16 %v215
    %v3689 = vunpack.c.l.b16 %v216
    %v3690 = vunpack.c.h.b16 %v216
    %v3691 = vunpack.c.l.b16 %v217
    %v3692 = vunpack.c.h.b16 %v217
    %v3693 = vunpack.c.l.b16 %v218
    %v3694 = vunpack.c.h.b16 %v218
    %v3695 = vunpack.c.l.b16 %v219
    %v3696 = vunpack.c.h.b16 %v219
    %v3697 = vunpack.c.l.b16 %v220
    %v3698 = vunpack.c.h.b16 %v220
    %v3699 = vunpack.c.l.b16 %v221
    %v3700 = vunpack.c.h.b16 %v221
    %v3701 = vunpack.c.l.b16 %v222
    %v3702 = vunpack.c.h.b16 %v222
    %v3703 = vunpack.c.l.b16 %v223
    %v3704 = vunpack.c.h.b16 %v223
    %v3705 = vunpack.c.l.b16 %v224
    %v3706 = vunpack.c.h.b16 %v224
    %v3707 = vunpack.c.l.b16 %v225
    %v3708 = vunpack.c.h.b16 %v225
    %v3709 = vunpack.c.l.b16 %v226
    %v3710 = vunpack.c.h.b16 %v226
    %v3711 = vunpack.c.l.b16 %v227
    %v3712 = vunpack.c.h.b16 %v227
    %v3713 = vunpack.c.l.b16 %v228
    %v3714 = vunpack.c.h.b16 %v228
    %v3715 = vunpack.c.l.b16 %v229
    %v3716 = vunpack.c.h.b16 %v229
    %v3717 = vunpack.c.l.b16 %v230
    %v3718 = vunpack.c.h.b16 %v230
    %v3719 = vunpack.c.l.b16 %v231
    %v3720 = vunpack.c.h.b16 %v231
    %v3721 = vunpack.c.l.b16 %v232
    %v3722 = vunpack.c.h.b16 %v232
    %v3723 = vunpack.c.l.b16 %v233
    %v3724 = vunpack.c.h.b16 %v233
    %v3725 = vunpack.c.l.b16 %v234
    %v3726 = vunpack.c.h.b16 %v234
    %v3727 = vunpack.c.l.b16 %v235
    %v3728 = vunpack.c.h.b16 %v235
    %v3729 = vunpack.c.l.b16 %v236
    %v3730 = vunpack.c.h.b16 %v236
    %v3731 = vunpack.c.l.b16 %v237
    %v3732 = vunpack.c.h.b16 %v237
    %v3733 = vunpack.c.l.b16 %v238
    %v3734 = vunpack.c.h.b16 %v238
    %v3735 = vunpack.c.l.b16 %v239
    %v3736 = vunpack.c.h.b16 %v239
    %v3737 = vunpack.c.l.b16 %v240
    %v3738 = vunpack.c.h.b16 %v240
    %v3739 = vunpack.c.l.b16 %v241
    %v3740 = vunpack.c.h.b16 %v241
    %v3741 = vunpack.c.l.b16 %v242
    %v3742 = vunpack.c.h.b16 %v242
    %v3743 = vunpack.c.l.b16 %v243
    %v3744 = vunpack.c.h.b16 %v243
    %v3745 = vunpack.c.l.b16 %v244
    %v3746 = vunpack.c.h.b16 %v244
    %v3747 = vunpack.c.l.b16 %v245
    %v3748 = vunpack.c.h.b16 %v245
    %v3749 = vunpack.c.l.b16 %v246
    %v3750 = vunpack.c.h.b16 %v246
    %v3751 = vunpack.c.l.b16 %v247
    %v3752 = vunpack.c.h.b16 %v247
    %v3753 = vunpack.c.l.b16 %v248
    %v3754 = vunpack.c.h.b16 %v248
    %v3755 = vunpack.c.l.b16 %v249
    %v3756 = vunpack.c.h.b16 %v249
    %v3757 = vunpack.c.l.b16 %v250
    %v3758 = vunpack.c.h.b16 %v250
    %v3759 = vunpack.c.l.b16 %v251
    %v3760 = vunpack.c.h.b16 %v251
    %v3761 = vunpack.c.l.b16 %v252
    %v3762 = vunpack.c.h.b16 %v252
    %v3763 = vunpack.c.l.b16 %v253
    %v3764 = vunpack.c.h.b16 %v253
    %v3765 = vunpack.c.l.b16 %v254
    %v3766 = vunpack.c.h.b16 %v254
    %v3767 = vunpack.c.l.b16 %v255
    %v3768 = vunpack.c.h.b16 %v255
    %v3769 = vunpack.c.l.b16 %v256
    %v3770 = vunpack.c.h.b16 %v256
    %v3771 = vunpack.c.l.b16 %v257
    %v3772 = vunpack.c.h.b16 %v257
    %v3773 = vunpack.c.l.b16 %v258
    %v3774 = vunpack.c.h.b16 %v258
    %v3775 = vunpack.c.l.b16 %v259
    %v3776 = vunpack.c.h.b16 %v259
    %v3777 = vunpack.c.l.b16 %v260
    %v3778 = vunpack.c.h.b16 %v260
    %v3779 = vunpack.c.l.b16 %v261
    %v3780 = vunpack.c.h.b16 %v261
    %v3781 = vunpack.c.l.b16 %v262
    %v3782 = vunpack.c.h.b16 %v262
    %v3783 = vunpack.c.l.b16 %v263
    %v3784 = vunpack.c.h.b16 %v263
    %v3785 = vunpack.c.l.b16 %v264
    %v3786 = vunpack.c.h.b16 %v264
    %v3787 = vunpack.c.l.b16 %v265
    %v3788 = vunpack.c.h.b16 %v265
    %v3789 = vunpack.c.l.b16 %v266
    %v3790 = vunpack.c.h.b16 %v266
    %v3791 = vunpack.c.l.b16 %v267
    %v3792 = vunpack.c.h.b16 %v267
    %v3793 = vunpack.c.l.b16 %v268
    %v3794 = vunpack.c.h.b16 %v268
    %v3795 = vunpack.c.l.b16 %v269
    %v3796 = vunpack.c.h.b16 %v269
    %v3797 = vunpack.c.l.b16 %v270
    %v3798 = vunpack.c.h.b16 %v270
    %v3799 = vunpack.c.l.b16 %v271
    %v3800 = vunpack.c.h.b16 %v271
    %v3801 = vunpack.c.l.b16 %v272
    %v3802 = vunpack.c.h.b16 %v272
    %v3803 = vunpack.c.l.b16 %v273
    %v3804 = vunpack.c.h.b16 %v273
    %v3805 = vunpack.c.l.b16 %v274
    %v3806 = vunpack.c.h.b16 %v274
    %v3807 = vunpack.c.l.b16 %v275
    %v3808 = vunpack.c.h.b16 %v275
    %v3809 = vunpack.c.l.b16 %v276
    %v3810 = vunpack.c.h.b16 %v276
    %v3811 = vunpack.c.l.b16 %v277
    %v3812 = vunpack.c.h.b16 %v277
    %v3813 = vunpack.c.l.b16 %v278
    %v3814 = vunpack.c.h.b16 %v278
    %v3815 = vunpack.c.l.b16 %v279
    %v3816 = vunpack.c.h.b16 %v279
    %v3817 = vunpack.c.l.b16 %v280
    %v3818 = vunpack.c.h.b16 %v280
    %v3819 = vunpack.c.l.b16 %v281
    %v3820 = vunpack.c.h.b16 %v281
    %v3821 = vunpack.c.l.b16 %v282
    %v3822 = vunpack.c.h.b16 %v282
    %v3823 = vunpack.c.l.b16 %v283
    %v3824 = vunpack.c.h.b16 %v283
    %v3825 = vunpack.c.l.b16 %v284
    %v3826 = vunpack.c.h.b16 %v284
    %v3827 = vunpack.c.l.b16 %v285
    %v3828 = vunpack.c.h.b16 %v285
    %v3829 = vunpack.c.l.b16 %v286
    %v3830 = vunpack.c.h.b16 %v286
    %v3831 = vunpack.c.l.b16 %v287
    %v3832 = vunpack.c.h.b16 %v287
    %v3833 = vunpack.c.l.b16 %v288
    %v3834 = vunpack.c.h.b16 %v288
    %v3835 = vunpack.c.l.b16 %v289
    %v3836 = vunpack.c.h.b16 %v289
    %v3837 = vunpack.c.l.b16 %v290
    %v3838 = vunpack.c.h.b16 %v290
    %v3839 = vunpack.c.l.b16 %v291
    %v3840 = vunpack.c.h.b16 %v291
    %v3841 = vunpack.c.l.b16 %v292
    %v3842 = vunpack.c.h.b16 %v292
    %v3843 = vunpack.c.l.b16 %v293
    %v3844 = vunpack.c.h.b16 %v293
    %v3845 = vunpack.c.l.b16 %v294
    %v3846 = vunpack.c.h.b16 %v294
    %v3847 = vunpack.c.l.b16 %v295
    %v3848 = vunpack.c.h.b16 %v295
    %v3849 = vunpack.c.l.b16 %v296
    %v3850 = vunpack.c.h.b16 %v296
    %v3851 = vunpack.c.l.b16 %v297
    %v3852 = vunpack.c.h.b16 %v297
    %v3853 = vunpack.c.l.b16 %v298
    %v3854 = vunpack.c.h.b16 %v298
    %v3855 = vunpack.c.l.b16 %v299
    %v3856 = vunpack.c.h.b16 %v299
    %v3857 = vunpack.c.l.b16 %v300
    %v3858 = vunpack.c.h.b16 %v300
    %v3859 = vunpack.c.l.b16 %v301
    %v3860 = vunpack.c.h.b16 %v301
    %v3861 = vunpack.c.l.b16 %v302
    %v3862 = vunpack.c.h.b16 %v302
    %v3863 = vunpack.c.l.b16 %v303
    %v3864 = vunpack.c.h.b16 %v303
    %v3865 = vunpack.c.l.b16 %v304
    %v3866 = vunpack.c.h.b16 %v304
    %v3867 = vunpack.c.l.b16 %v305
    %v3868 = vunpack.c.h.b16 %v305
    %v3869 = vunpack.c.l.b16 %v306
    %v3870 = vunpack.c.h.b16 %v306
    %v3871 = vunpack.c.l.b16 %v307
    %v3872 = vunpack.c.h.b16 %v307
    %v3873 = vunpack.c.l.b16 %v308
    %v3874 = vunpack.c.h.b16 %v308
    %v3875 = vunpack.c.l.b16 %v309
    %v3876 = vunpack.c.h.b16 %v309
    %v3877 = vunpack.c.l.b16 %v310
    %v3878 = vunpack.c.h.b16 %v310
    %v3879 = vunpack.c.l.b16 %v311
    %v3880 = vunpack.c.h.b16 %v311
    %v3881 = vunpack.c.l.b16 %v312
    %v3882 = vunpack.c.h.b16 %v312
    %v3883 = vunpack.c.l.b16 %v313
    %v3884 = vunpack.c.h.b16 %v313
    %v3885 = vunpack.c.l.b16 %v314
    %v3886 = vunpack.c.h.b16 %v314
    %v3887 = vunpack.c.l.b16 %v315
    %v3888 = vunpack.c.h.b16 %v315
    %v3889 = vunpack.c.l.b16 %v316
    %v3890 = vunpack.c.h.b16 %v316
    %v3891 = vunpack.c.l.b16 %v317
    %v3892 = vunpack.c.h.b16 %v317
    %v3893 = vunpack.c.l.b16 %v318
    %v3894 = vunpack.c.h.b16 %v318
    %v3895 = vunpack.c.l.b16 %v319
    %v3896 = vunpack.c.h.b16 %v319
    %v3897 = vunpack.c.l.b16 %v320
    %v3898 = vunpack.c.h.b16 %v320
    %v3899 = vunpack.c.l.b16 %v321
    %v3900 = vunpack.c.h.b16 %v321
    %v3901 = vunpack.c.l.b16 %v322
    %v3902 = vunpack.c.h.b16 %v322
    %v3903 = vunpack.c.l.b16 %v323
    %v3904 = vunpack.c.h.b16 %v323
    %v3905 = vunpack.c.l.b16 %v324
    %v3906 = vunpack.c.h.b16 %v324
    %v3907 = vunpack.c.l.b16 %v325
    %v3908 = vunpack.c.h.b16 %v325
    %v3909 = vunpack.c.l.b16 %v326
    %v3910 = vunpack.c.h.b16 %v326
    %v3911 = vunpack.c.l.b16 %v327
    %v3912 = vunpack.c.h.b16 %v327
    %v3913 = vunpack.c.l.b16 %v328
    %v3914 = vunpack.c.h.b16 %v328
    %v3915 = vunpack.c.l.b16 %v329
    %v3916 = vunpack.c.h.b16 %v329
    %v3917 = vunpack.c.l.b16 %v330
    %v3918 = vunpack.c.h.b16 %v330
    %v3919 = vunpack.c.l.b16 %v331
    %v3920 = vunpack.c.h.b16 %v331
    %v3921 = vunpack.c.l.b16 %v332
    %v3922 = vunpack.c.h.b16 %v332
    %v3923 = vunpack.c.l.b16 %v333
    %v3924 = vunpack.c.h.b16 %v333
    %v3925 = vunpack.c.l.b16 %v334
    %v3926 = vunpack.c.h.b16 %v334
    %v3927 = vunpack.c.l.b16 %v335
    %v3928 = vunpack.c.h.b16 %v335
    %v3929 = vunpack.c.l.b16 %v336
    %v3930 = vunpack.c.h.b16 %v336
    %v3931 = vunpack.c.l.b16 %v337
    %v3932 = vunpack.c.h.b16 %v337
    %v3933 = vunpack.c.l.b16 %v338
    %v3934 = vunpack.c.h.b16 %v338
    %v3935 = vunpack.c.l.b16 %v339
    %v3936 = vunpack.c.h.b16 %v339
    %v3937 = vunpack.c.l.b16 %v340
    %v3938 = vunpack.c.h.b16 %v340
    %v3939 = vunpack.c.l.b16 %v341
    %v3940 = vunpack.c.h.b16 %v341
    %v3941 = vunpack.c.l.b16 %v342
    %v3942 = vunpack.c.h.b16 %v342
    %v3943 = vunpack.c.l.b16 %v343
    %v3944 = vunpack.c.h.b16 %v343
    %v3945 = vunpack.c.l.b16 %v344
    %v3946 = vunpack.c.h.b16 %v344
    %v3947 = vunpack.c.l.b16 %v345
    %v3948 = vunpack.c.h.b16 %v345
    %v3949 = vunpack.c.l.b16 %v346
    %v3950 = vunpack.c.h.b16 %v346
    %v3951 = vunpack.c.l.b16 %v347
    %v3952 = vunpack.c.h.b16 %v347
    %v3953 = vunpack.c.l.b16 %v348
    %v3954 = vunpack.c.h.b16 %v348
    %v3955 = vunpack.c.l.b16 %v349
    %v3956 = vunpack.c.h.b16 %v349
    %v3957 = vunpack.c.l.b16 %v350
    %v3958 = vunpack.c.h.b16 %v350
    %v3959 = vunpack.c.l.b16 %v351
    %v3960 = vunpack.c.h.b16 %v351
    %v3961 = vunpack.c.l.b16 %v352
    %v3962 = vunpack.c.h.b16 %v352
    %v3963 = vunpack.c.l.b16 %v353
    %v3964 = vunpack.c.h.b16 %v353
    %v3965 = vunpack.c.l.b16 %v354
    %v3966 = vunpack.c.h.b16 %v354
    %v3967 = vunpack.c.l.b16 %v355
    %v3968 = vunpack.c.h.b16 %v355
    %v3969 = vunpack.c.l.b16 %v356
    %v3970 = vunpack.c.h.b16 %v356
    %v3971 = vunpack.c.l.b16 %v357
    %v3972 = vunpack.c.h.b16 %v357
    %v3973 = vunpack.c.l.b16 %v358
    %v3974 = vunpack.c.h.b16 %v358
    %v3975 = vunpack.c.l.b16 %v359
    %v3976 = vunpack.c.h.b16 %v359
    %v3977 = vunpack.c.l.b16 %v360
    %v3978 = vunpack.c.h.b16 %v360
    %v3979 = vunpack.c.l.b16 %v361
    %v3980 = vunpack.c.h.b16 %v361
    %v3981 = vunpack.c.l.b16 %v362
    %v3982 = vunpack.c.h.b16 %v362
    %v3983 = vunpack.c.l.b16 %v363
    %v3984 = vunpack.c.h.b16 %v363
    %v3985 = vunpack.c.l.b16 %v364
    %v3986 = vunpack.c.h.b16 %v364
    %v3987 = vunpack.c.l.b16 %v365
    %v3988 = vunpack.c.h.b16 %v365
    %v3989 = vunpack.c.l.b16 %v366
    %v3990 = vunpack.c.h.b16 %v366
    %v3991 = vunpack.c.l.b16 %v367
    %v3992 = vunpack.c.h.b16 %v367
    %v3993 = vunpack.c.l.b16 %v368
    %v3994 = vunpack.c.h.b16 %v368
    %v3995 = vunpack.c.l.b16 %v369
    %v3996 = vunpack.c.h.b16 %v369
    %v3997 = vunpack.c.l.b16 %v370
    %v3998 = vunpack.c.h.b16 %v370
    %v3999 = vunpack.c.l.b16 %v371
    %v4000 = vunpack.c.h.b16 %v371
    %v4001 = vunpack.c.l.b16 %v372
    %v4002 = vunpack.c.h.b16 %v372
    %v4003 = vunpack.c.l.b16 %v373
    %v4004 = vunpack.c.h.b16 %v373
    %v4005 = vunpack.c.l.b16 %v374
    %v4006 = vunpack.c.h.b16 %v374
    %v4007 = vunpack.c.l.b16 %v375
    %v4008 = vunpack.c.h.b16 %v375
    %v4009 = vunpack.c.l.b16 %v376
    %v4010 = vunpack.c.h.b16 %v376
    %v4011 = vunpack.c.l.b16 %v377
    %v4012 = vunpack.c.h.b16 %v377
    %v4013 = vunpack.c.l.b16 %v378
    %v4014 = vunpack.c.h.b16 %v378
    %v4015 = vunpack.c.l.b16 %v379
    %v4016 = vunpack.c.h.b16 %v379
    %v4017 = vunpack.c.l.b16 %v380
    %v4018 = vunpack.c.h.b16 %v380
    %v4019 = vunpack.c.l.b16 %v381
    %v4020 = vunpack.c.h.b16 %v381
    %v4021 = vunpack.c.l.b16 %v382
    %v4022 = vunpack.c.h.b16 %v382
    %v4023 = vunpack.c.l.b16 %v383
    %v4024 = vunpack.c.h.b16 %v383
    %v4025 = vunpack.c.l.b16 %v384
    %v4026 = vunpack.c.h.b16 %v384
    %v4027 = vunpack.c.l.b16 %v385
    %v4028 = vunpack.c.h.b16 %v385
    %v4029 = vunpack.c.l.b16 %v386
    %v4030 = vunpack.c.h.b16 %v386
    %v4031 = vunpack.c.l.b16 %v387
    %v4032 = vunpack.c.h.b16 %v387
    %v4033 = vunpack.c.l.b16 %v388
    %v4034 = vunpack.c.h.b16 %v388
    %v4035 = vunpack.c.l.b16 %v389
    %v4036 = vunpack.c.h.b16 %v389
    %v4037 = vunpack.c.l.b16 %v390
    %v4038 = vunpack.c.h.b16 %v390
    %v4039 = vunpack.c.l.b16 %v391
    %v4040 = vunpack.c.h.b16 %v391
    %v4041 = vunpack.c.l.b16 %v392
    %v4042 = vunpack.c.h.b16 %v392
    %v4043 = vunpack.c.l.b16 %v393
    %v4044 = vunpack.c.h.b16 %v393
    %v4045 = vunpack.c.l.b16 %v394
    %v4046 = vunpack.c.h.b16 %v394
    %v4047 = vunpack.c.l.b16 %v395
    %v4048 = vunpack.c.h.b16 %v395
    %v4049 = vunpack.c.l.b16 %v396
    %v4050 = vunpack.c.h.b16 %v396
    %v4051 = vunpack.c.l.b16 %v397
    %v4052 = vunpack.c.h.b16 %v397
    %v4053 = vunpack.c.l.b16 %v398
    %v4054 = vunpack.c.h.b16 %v398
    %v4055 = vunpack.c.l.b16 %v399
    %v4056 = vunpack.c.h.b16 %v399
    %v4057 = vunpack.c.l.b16 %v400
    %v4058 = vunpack.c.h.b16 %v400
    %v4059 = vunpack.c.l.b16 %v401
    %v4060 = vunpack.c.h.b16 %v401
    %v4061 = vunpack.c.l.b16 %v402
    %v4062 = vunpack.c.h.b16 %v402
    %v4063 = vunpack.c.l.b16 %v403
    %v4064 = vunpack.c.h.b16 %v403
    %v4065 = vunpack.c.l.b16 %v404
    %v4066 = vunpack.c.h.b16 %v404
    %v4067 = vunpack.c.l.b16 %v405
    %v4068 = vunpack.c.h.b16 %v405
    %v4069 = vunpack.c.l.b16 %v406
    %v4070 = vunpack.c.h.b16 %v406
    %v4071 = vunpack.c.l.b16 %v407
    %v4072 = vunpack.c.h.b16 %v407
    %v4073 = vunpack.c.l.b16 %v408
    %v4074 = vunpack.c.h.b16 %v408
    %v4075 = vunpack.c.l.b16 %v409
    %v4076 = vunpack.c.h.b16 %v409
    %v4077 = vunpack.c.l.b16 %v410
    %v4078 = vunpack.c.h.b16 %v410
    %v4079 = vunpack.c.l.b16 %v411
    %v4080 = vunpack.c.h.b16 %v411
    %v4081 = vunpack.c.l.b16 %v412
    %v4082 = vunpack.c.h.b16 %v412
    %v4083 = vunpack.c.l.b16 %v413
    %v4084 = vunpack.c.h.b16 %v413
    %v4085 = vunpack.c.l.b16 %v414
    %v4086 = vunpack.c.h.b16 %v414
    %v4087 = vunpack.c.l.b16 %v415
    %v4088 = vunpack.c.h.b16 %v415
    %v4089 = vunpack.c.l.b16 %v416
    %v4090 = vunpack.c.h.b16 %v416
    %v4091 = vunpack.c.l.b16 %v417
    %v4092 = vunpack.c.h.b16 %v417
    %v4093 = vunpack.c.l.b16 %v418
    %v4094 = vunpack.c.h.b16 %v418
    %v4095 = vunpack.c.l.b16 %v419
    %v4096 = vunpack.c.h.b16 %v419
    %v4097 = vunpack.c.l.b16 %v420
    %v4098 = vunpack.c.h.b16 %v420
    %v4099 = vunpack.c.l.b16 %v421
    %v4100 = vunpack.c.h.b16 %v421
    %v4101 = vunpack.c.l.b16 %v422
    %v4102 = vunpack.c.h.b16 %v422
    %v4103 = vunpack.c.l.b16 %v423
    %v4104 = vunpack.c.h.b16 %v423
    %v4105 = vunpack.c.l.b16 %v424
    %v4106 = vunpack.c.h.b16 %v424
    %v4107 = vunpack.c.l.b16 %v425
    %v4108 = vunpack.c.h.b16 %v425
    %v4109 = vunpack.c.l.b16 %v426
    %v4110 = vunpack.c.h.b16 %v426
    %v4111 = vunpack.c.l.b16 %v427
    %v4112 = vunpack.c.h.b16 %v427
    %v4113 = vunpack.c.l.b16 %v428
    %v4114 = vunpack.c.h.b16 %v428
    %v4115 = vunpack.c.l.b16 %v429
    %v4116 = vunpack.c.h.b16 %v429
    %v4117 = vunpack.c.l.b16 %v430
    %v4118 = vunpack.c.h.b16 %v430
    %v4119 = vunpack.c.l.b16 %v431
    %v4120 = vunpack.c.h.b16 %v431
    %v4121 = vunpack.c.l.b16 %v432
    %v4122 = vunpack.c.h.b16 %v432
    %v4123 = vunpack.c.l.b16 %v433
    %v4124 = vunpack.c.h.b16 %v433
    %v4125 = vunpack.c.l.b16 %v434
    %v4126 = vunpack.c.h.b16 %v434
    %v4127 = vunpack.c.l.b16 %v435
    %v4128 = vunpack.c.h.b16 %v435
    %v4129 = vunpack.c.l.b16 %v436
    %v4130 = vunpack.c.h.b16 %v436
    %v4131 = vunpack.c.l.b16 %v437
    %v4132 = vunpack.c.h.b16 %v437
    %v4133 = vunpack.c.l.b16 %v438
    %v4134 = vunpack.c.h.b16 %v438
    %v4135 = vunpack.c.l.b16 %v439
    %v4136 = vunpack.c.h.b16 %v439
    %v4137 = vunpack.c.l.b16 %v440
    %v4138 = vunpack.c.h.b16 %v440
    %v4139 = vunpack.c.l.b16 %v441
    %v4140 = vunpack.c.h.b16 %v441
    %v4141 = vunpack.c.l.b16 %v442
    %v4142 = vunpack.c.h.b16 %v442
    %v4143 = vunpack.c.l.b16 %v443
    %v4144 = vunpack.c.h.b16 %v443
    %v4145 = vunpack.c.l.b16 %v444
    %v4146 = vunpack.c.h.b16 %v444
    %v4147 = vunpack.c.l.b16 %v445
    %v4148 = vunpack.c.h.b16 %v445
    %v4149 = vunpack.c.l.b16 %v446
    %v4150 = vunpack.c.h.b16 %v446
    %v4151 = vunpack.c.l.b16 %v447
    %v4152 = vunpack.c.h.b16 %v447
    %v4153 = vunpack.c.l.b16 %v448
    %v4154 = vunpack.c.h.b16 %v448
    %v4155 = vunpack.c.l.b16 %v449
    %v4156 = vunpack.c.h.b16 %v449
    %v4157 = vunpack.c.l.b16 %v450
    %v4158 = vunpack.c.h.b16 %v450
    %v4159 = vunpack.c.l.b16 %v451
    %v4160 = vunpack.c.h.b16 %v451
    %v4161 = vunpack.c.l.b16 %v452
    %v4162 = vunpack.c.h.b16 %v452
    %v4163 = vunpack.c.l.b16 %v453
    %v4164 = vunpack.c.h.b16 %v453
    %v4165 = vunpack.c.l.b16 %v454
    %v4166 = vunpack.c.h.b16 %v454
    %v4167 = vunpack.c.l.b16 %v455
    %v4168 = vunpack.c.h.b16 %v455
    %v4169 = vunpack.c.l.b16 %v456
    %v4170 = vunpack.c.h.b16 %v456
    %v4171 = vunpack.c.l.b16 %v457
    %v4172 = vunpack.c.h.b16 %v457
    %v4173 = vunpack.c.l.b16 %v458
    %v4174 = vunpack.c.h.b16 %v458
    %v4175 = vunpack.c.l.b16 %v459
    %v4176 = vunpack.c.h.b16 %v459
    %v4177 = vunpack.c.l.b16 %v460
    %v4178 = vunpack.c.h.b16 %v460
    %v4179 = vunpack.c.l.b16 %v461
    %v4180 = vunpack.c.h.b16 %v461
    %v4181 = vunpack.c.l.b16 %v462
    %v4182 = vunpack.c.h.b16 %v462
    %v4183 = vunpack.c.l.b16 %v463
    %v4184 = vunpack.c.h.b16 %v463
    %v4185 = vunpack.c.l.b16 %v464
    %v4186 = vunpack.c.h.b16 %v464
    %v4187 = vunpack.c.l.b16 %v465
    %v4188 = vunpack.c.h.b16 %v465
    %v4189 = vunpack.c.l.b16 %v466
    %v4190 = vunpack.c.h.b16 %v466
    %v4191 = vunpack.c.l.b16 %v467
    %v4192 = vunpack.c.h.b16 %v467
    %v4193 = vunpack.c.l.b16 %v468
    %v4194 = vunpack.c.h.b16 %v468
    %v4195 = vunpack.c.l.b16 %v469
    %v4196 = vunpack.c.h.b16 %v469
    %v4197 = vunpack.c.l.b16 %v470
    %v4198 = vunpack.c.h.b16 %v470
    %v4199 = vunpack.c.l.b16 %v471
    %v4200 = vunpack.c.h.b16 %v471
    %v4201 = vunpack.c.l.b16 %v472
    %v4202 = vunpack.c.h.b16 %v472
    %v4203 = vunpack.c.l.b16 %v473
    %v4204 = vunpack.c.h.b16 %v473
    %v4205 = vunpack.c.l.b16 %v474
    %v4206 = vunpack.c.h.b16 %v474
    %v4207 = vunpack.c.l.b16 %v475
    %v4208 = vunpack.c.h.b16 %v475
    %v4209 = vunpack.c.l.b16 %v476
    %v4210 = vunpack.c.h.b16 %v476
    %v4211 = vunpack.c.l.b16 %v477
    %v4212 = vunpack.c.h.b16 %v477
    %v4213 = vunpack.c.l.b16 %v478
    %v4214 = vunpack.c.h.b16 %v478
    %v4215 = vunpack.c.l.b16 %v479
    %v4216 = vunpack.c.h.b16 %v479
    %v4217 = vunpack.c.l.b16 %v480
    %v4218 = vunpack.c.h.b16 %v480
    %v4219 = vunpack.c.l.b16 %v481
    %v4220 = vunpack.c.h.b16 %v481
    %v4221 = vunpack.c.l.b16 %v482
    %v4222 = vunpack.c.h.b16 %v482
    %v4223 = vunpack.c.l.b16 %v483
    %v4224 = vunpack.c.h.b16 %v483
    %v4225 = vunpack.c.l.b16 %v484
    %v4226 = vunpack.c.h.b16 %v484
    %v4227 = vunpack.c.l.b16 %v485
    %v4228 = vunpack.c.h.b16 %v485
    %v4229 = vunpack.c.l.b16 %v486
    %v4230 = vunpack.c.h.b16 %v486
    %v4231 = vunpack.c.l.b16 %v487
    %v4232 = vunpack.c.h.b16 %v487
    %v4233 = vunpack.c.l.b16 %v488
    %v4234 = vunpack.c.h.b16 %v488
    %v4235 = vunpack.c.l.b16 %v489
    %v4236 = vunpack.c.h.b16 %v489
    %v4237 = vunpack.c.l.b16 %v490
    %v4238 = vunpack.c.h.b16 %v490
    %v4239 = vunpack.c.l.b16 %v491
    %v4240 = vunpack.c.h.b16 %v491
    %v4241 = vunpack.c.l.b16 %v492
    %v4242 = vunpack.c.h.b16 %v492
    %v4243 = vunpack.c.l.b16 %v493
    %v4244 = vunpack.c.h.b16 %v493
    %v4245 = vunpack.c.l.b16 %v494
    %v4246 = vunpack.c.h.b16 %v494
    %v4247 = vunpack.c.l.b16 %v495
    %v4248 = vunpack.c.h.b16 %v495
    %v4249 = vunpack.c.l.b16 %v496
    %v4250 = vunpack.c.h.b16 %v496
    %v4251 = vunpack.c.l.b16 %v497
    %v4252 = vunpack.c.h.b16 %v497
    %v4253 = vunpack.c.l.b16 %v498
    %v4254 = vunpack.c.h.b16 %v498
    %v4255 = vunpack.c.l.b16 %v499
    %v4256 = vunpack.c.h.b16 %v499
    %v4257 = vunpack.c.l.b16 %v500
    %v4258 = vunpack.c.h.b16 %v500
    %v4259 = vunpack.c.l.b16 %v501
    %v4260 = vunpack.c.h.b16 %v501
    %v4261 = vunpack.c.l.b16 %v502
    %v4262 = vunpack.c.h.b16 %v502
    %v4263 = vunpack.c.l.b16 %v503
    %v4264 = vunpack.c.h.b16 %v503
    %v4265 = vunpack.c.l.b16 %v504
    %v4266 = vunpack.c.h.b16 %v504
    %v4267 = vunpack.c.l.b16 %v505
    %v4268 = vunpack.c.h.b16 %v505
    %v4269 = vunpack.c.l.b16 %v506
    %v4270 = vunpack.c.h.b16 %v506
    %v4271 = vunpack.c.l.b16 %v507
    %v4272 = vunpack.c.h.b16 %v507
    %v4273 = vunpack.c.l.b16 %v508
    %v4274 = vunpack.c.h.b16 %v508
    %v4275 = vunpack.c.l.b16 %v509
    %v4276 = vunpack.c.h.b16 %v509
    %v4277 = vunpack.c.l.b16 %v510
    %v4278 = vunpack.c.h.b16 %v510
    %v4279 = vunpack.c.l.b16 %v511
    %v4280 = vunpack.c.h.b16 %v511
    %v4281 = vunpack.c.l.b16 %v512
    %v4282 = vunpack.c.h.b16 %v512
    %v4283 = vunpack.c.l.b16 %v513
    %v4284 = vunpack.c.h.b16 %v513
    %v4285 = vunpack.c.l.b16 %v514
    %v4286 = vunpack.c.h.b16 %v514
    %v4287 = vunpack.c.l.b16 %v515
    %v4288 = vunpack.c.h.b16 %v515
    %v4289 = vunpack.c.l.b16 %v516
    %v4290 = vunpack.c.h.b16 %v516
    %v4291 = vunpack.c.l.b16 %v517
    %v4292 = vunpack.c.h.b16 %v517
    %v4293 = vunpack.c.l.b16 %v518
    %v4294 = vunpack.c.h.b16 %v518
    %v4295 = vunpack.c.l.b16 %v519
    %v4296 = vunpack.c.h.b16 %v519
    %v4297 = vunpack.c.l.b16 %v520
    %v4298 = vunpack.c.h.b16 %v520
    %v4299 = vunpack.c.l.b16 %v521
    %v4300 = vunpack.c.h.b16 %v521
    %v4301 = vunpack.c.l.b16 %v522
    %v4302 = vunpack.c.h.b16 %v522
    %v4303 = vunpack.c.l.b16 %v523
    %v4304 = vunpack.c.h.b16 %v523
    %v4305 = vunpack.c.l.b16 %v524
    %v4306 = vunpack.c.h.b16 %v524
    %v4307 = vunpack.c.l.b16 %v525
    %v4308 = vunpack.c.h.b16 %v525
    %v4309 = vunpack.c.l.b16 %v526
    %v4310 = vunpack.c.h.b16 %v526
    %v4311 = vunpack.c.l.b16 %v527
    %v4312 = vunpack.c.h.b16 %v527
    %v4313 = vunpack.c.l.b16 %v528
    %v4314 = vunpack.c.h.b16 %v528
    %v4315 = vunpack.c.l.b16 %v529
    %v4316 = vunpack.c.h.b16 %v529
    %v4317 = vunpack.c.l.b16 %v530
    %v4318 = vunpack.c.h.b16 %v530
    %v4319 = vunpack.c.l.b16 %v531
    %v4320 = vunpack.c.h.b16 %v531
    %v4321 = vunpack.c.l.b16 %v532
    %v4322 = vunpack.c.h.b16 %v532
    %v4323 = vunpack.c.l.b16 %v533
    %v4324 = vunpack.c.h.b16 %v533
    %v4325 = vunpack.c.l.b16 %v534
    %v4326 = vunpack.c.h.b16 %v534
    %v4327 = vunpack.c.l.b16 %v535
    %v4328 = vunpack.c.h.b16 %v535
    %v4329 = vunpack.c.l.b16 %v536
    %v4330 = vunpack.c.h.b16 %v536
    %v4331 = vunpack.c.l.b16 %v537
    %v4332 = vunpack.c.h.b16 %v537
    %v4333 = vunpack.c.l.b16 %v538
    %v4334 = vunpack.c.h.b16 %v538
    %v4335 = vunpack.c.l.b16 %v539
    %v4336 = vunpack.c.h.b16 %v539
    %v4337 = vunpack.c.l.b16 %v540
    %v4338 = vunpack.c.h.b16 %v540
    %v4339 = vunpack.c.l.b16 %v541
    %v4340 = vunpack.c.h.b16 %v541
    %v4341 = vunpack.c.l.b16 %v542
    %v4342 = vunpack.c.h.b16 %v542
    %v4343 = vunpack.c.l.b16 %v543
    %v4344 = vunpack.c.h.b16 %v543
    %v4345 = vunpack.c.l.b16 %v544
    %v4346 = vunpack.c.h.b16 %v544
    %v4347 = vunpack.c.l.b16 %v545
    %v4348 = vunpack.c.h.b16 %v545
    %v4349 = vunpack.c.l.b16 %v546
    %v4350 = vunpack.c.h.b16 %v546
    %v4351 = vunpack.c.l.b16 %v547
    %v4352 = vunpack.c.h.b16 %v547
    %v4353 = vunpack.c.l.b16 %v548
    %v4354 = vunpack.c.h.b16 %v548
    %v4355 = vunpack.c.l.b16 %v549
    %v4356 = vunpack.c.h.b16 %v549
    %v4357 = vunpack.c.l.b16 %v550
    %v4358 = vunpack.c.h.b16 %v550
    %v4359 = vunpack.c.l.b16 %v551
    %v4360 = vunpack.c.h.b16 %v551
    %v4361 = vunpack.c.l.b16 %v552
    %v4362 = vunpack.c.h.b16 %v552
    %v4363 = vunpack.c.l.b16 %v553
    %v4364 = vunpack.c.h.b16 %v553
    %v4365 = vunpack.c.l.b16 %v554
    %v4366 = vunpack.c.h.b16 %v554
    %v4367 = vunpack.c.l.b16 %v555
    %v4368 = vunpack.c.h.b16 %v555
    %v4369 = vunpack.c.l.b16 %v556
    %v4370 = vunpack.c.h.b16 %v556
    %v4371 = vunpack.c.l.b16 %v557
    %v4372 = vunpack.c.h.b16 %v557
    %v4373 = vunpack.c.l.b16 %v558
    %v4374 = vunpack.c.h.b16 %v558
    %v4375 = vunpack.c.l.b16 %v559
    %v4376 = vunpack.c.h.b16 %v559
    %v4377 = vunpack.c.l.b16 %v560
    %v4378 = vunpack.c.h.b16 %v560
    %v4379 = vunpack.c.l.b16 %v561
    %v4380 = vunpack.c.h.b16 %v561
    %v4381 = vunpack.c.l.b16 %v562
    %v4382 = vunpack.c.h.b16 %v562
    %v4383 = vunpack.c.l.b16 %v563
    %v4384 = vunpack.c.h.b16 %v563
    %v4385 = vunpack.c.l.b16 %v564
    %v4386 = vunpack.c.h.b16 %v564
    %v4387 = vunpack.c.l.b16 %v565
    %v4388 = vunpack.c.h.b16 %v565
    %v4389 = vunpack.c.l.b16 %v566
    %v4390 = vunpack.c.h.b16 %v566
    %v4391 = vunpack.c.l.b16 %v567
    %v4392 = vunpack.c.h.b16 %v567
    %v4393 = vunpack.c.l.b16 %v568
    %v4394 = vunpack.c.h.b16 %v568
    %v4395 = vunpack.c.l.b16 %v569
    %v4396 = vunpack.c.h.b16 %v569
    %v4397 = vunpack.c.l.b16 %v570
    %v4398 = vunpack.c.h.b16 %v570
    %v4399 = vunpack.c.l.b16 %v571
    %v4400 = vunpack.c.h.b16 %v571
    %v4401 = vunpack.c.l.b16 %v572
    %v4402 = vunpack.c.h.b16 %v572
    %v4403 = vunpack.c.l.b16 %v573
    %v4404 = vunpack.c.h.b16 %v573
    %v4405 = vunpack.c.l.b16 %v574
    %v4406 = vunpack.c.h.b16 %v574
    %v4407 = vunpack.c.l.b16 %v575
    %v4408 = vunpack.c.h.b16 %v575
    %v4409 = vunpack.c.l.b16 %v576
    %v4410 = vunpack.c.h.b16 %v576
    %v4411 = vunpack.c.l.b16 %v577
    %v4412 = vunpack.c.h.b16 %v577
    %v4413 = vunpack.c.l.b16 %v578
    %v4414 = vunpack.c.h.b16 %v578
    %v4415 = vunpack.c.l.b16 %v579
    %v4416 = vunpack.c.h.b16 %v579
    %v4417 = vunpack.c.l.b16 %v580
    %v4418 = vunpack.c.h.b16 %v580
    %v4419 = vunpack.c.l.b16 %v581
    %v4420 = vunpack.c.h.b16 %v581
    %v4421 = vunpack.c.l.b16 %v582
    %v4422 = vunpack.c.h.b16 %v582
    %v4423 = vunpack.c.l.b16 %v583
    %v4424 = vunpack.c.h.b16 %v583
    %v4425 = vunpack.c.l.b16 %v584
    %v4426 = vunpack.c.h.b16 %v584
    %v4427 = vunpack.c.l.b16 %v585
    %v4428 = vunpack.c.h.b16 %v585
    %v4429 = vunpack.c.l.b16 %v586
    %v4430 = vunpack.c.h.b16 %v586
    %v4431 = vunpack.c.l.b16 %v587
    %v4432 = vunpack.c.h.b16 %v587
    %v4433 = vunpack.c.l.b16 %v588
    %v4434 = vunpack.c.h.b16 %v588
    %v4435 = vunpack.c.l.b16 %v589
    %v4436 = vunpack.c.h.b16 %v589
    %v4437 = vunpack.c.l.b16 %v590
    %v4438 = vunpack.c.h.b16 %v590
    %v4439 = vunpack.c.l.b16 %v591
    %v4440 = vunpack.c.h.b16 %v591
    %v4441 = vunpack.c.l.b16 %v592
    %v4442 = vunpack.c.h.b16 %v592
    %v4443 = vunpack.c.l.b16 %v593
    %v4444 = vunpack.c.h.b16 %v593
    %v4445 = vunpack.c.l.b16 %v594
    %v4446 = vunpack.c.h.b16 %v594
    %v4447 = vunpack.c.l.b16 %v595
    %v4448 = vunpack.c.h.b16 %v595
    %v4449 = vunpack.c.l.b16 %v596
    %v4450 = vunpack.c.h.b16 %v596
    %v4451 = vunpack.c.l.b16 %v597
    %v4452 = vunpack.c.h.b16 %v597
    %v4453 = vunpack.c.l.b16 %v598
    %v4454 = vunpack.c.h.b16 %v598
    %v4455 = vunpack.c.l.b16 %v599
    %v4456 = vunpack.c.h.b16 %v599
    %v4457 = vunpack.c.l.b16 %v600
    %v4458 = vunpack.c.h.b16 %v600
    %v4459 = vunpack.c.l.b16 %v601
    %v4460 = vunpack.c.h.b16 %v601
    %v4461 = vunpack.c.l.b16 %v602
    %v4462 = vunpack.c.h.b16 %v602
    %v4463 = vunpack.c.l.b16 %v603
    %v4464 = vunpack.c.h.b16 %v603
    %v4465 = vunpack.c.l.b16 %v604
    %v4466 = vunpack.c.h.b16 %v604
    %v4467 = vunpack.c.l.b16 %v605
    %v4468 = vunpack.c.h.b16 %v605
    %v4469 = vunpack.c.l.b16 %v606
    %v4470 = vunpack.c.h.b16 %v606
    %v4471 = vunpack.c.l.b16 %v607
    %v4472 = vunpack.c.h.b16 %v607
    %v4473 = vunpack.c.l.b16 %v608
    %v4474 = vunpack.c.h.b16 %v608
    %v4475 = vunpack.c.l.b16 %v609
    %v4476 = vunpack.c.h.b16 %v609
    %v4477 = vunpack.c.l.b16 %v610
    %v4478 = vunpack.c.h.b16 %v610
    %v4479 = vunpack.c.l.b16 %v611
    %v4480 = vunpack.c.h.b16 %v611
    %v4481 = vunpack.c.l.b16 %v612
    %v4482 = vunpack.c.h.b16 %v612
    %v4483 = vunpack.c.l.b16 %v613
    %v4484 = vunpack.c.h.b16 %v613
    %v4485 = vunpack.c.l.b16 %v614
    %v4486 = vunpack.c.h.b16 %v614
    %v4487 = vunpack.c.l.b16 %v615
    %v4488 = vunpack.c.h.b16 %v615
    %v4489 = vunpack.c.l.b16 %v616
    %v4490 = vunpack.c.h.b16 %v616
    %v4491 = vunpack.c.l.b16 %v617
    %v4492 = vunpack.c.h.b16 %v617
    %v4493 = vunpack.c.l.b16 %v618
    %v4494 = vunpack.c.h.b16 %v618
    %v4495 = vunpack.c.l.b16 %v619
    %v4496 = vunpack.c.h.b16 %v619
    %v4497 = vunpack.c.l.b16 %v620
    %v4498 = vunpack.c.h.b16 %v620
    %v4499 = vunpack.c.l.b16 %v621
    %v4500 = vunpack.c.h.b16 %v621
    %v4501 = vunpack.c.l.b16 %v622
    %v4502 = vunpack.c.h.b16 %v622
    %v4503 = vunpack.c.l.b16 %v623
    %v4504 = vunpack.c.h.b16 %v623
    %v4505 = vunpack.c.l.b16 %v624
    %v4506 = vunpack.c.h.b16 %v624
    %v4507 = vunpack.c.l.b16 %v625
    %v4508 = vunpack.c.h.b16 %v625
    %v4509 = vunpack.c.l.b16 %v626
    %v4510 = vunpack.c.h.b16 %v626
    %v4511 = vunpack.c.l.b16 %v627
    %v4512 = vunpack.c.h.b16 %v627
    %v4513 = vunpack.c.l.b16 %v628
    %v4514 = vunpack.c.h.b16 %v628
    %v4515 = vunpack.c.l.b16 %v629
    %v4516 = vunpack.c.h.b16 %v629
    %v4517 = vunpack.c.l.b16 %v630
    %v4518 = vunpack.c.h.b16 %v630
    %v4519 = vunpack.c.l.b16 %v631
    %v4520 = vunpack.c.h.b16 %v631
    %v4521 = vunpack.c.l.b16 %v632
    %v4522 = vunpack.c.h.b16 %v632
    %v4523 = vunpack.c.l.b16 %v633
    %v4524 = vunpack.c.h.b16 %v633
    %v4525 = vunpack.c.l.b16 %v634
    %v4526 = vunpack.c.h.b16 %v634
    %v4527 = vunpack.c.l.b16 %v635
    %v4528 = vunpack.c.h.b16 %v635
    %v4529 = vunpack.c.l.b16 %v636
    %v4530 = vunpack.c.h.b16 %v636
    %v4531 = vunpack.c.l.b16 %v637
    %v4532 = vunpack.c.h.b16 %v637
    %v4533 = vunpack.c.l.b16 %v638
    %v4534 = vunpack.c.h.b16 %v638
    %v4535 = vunpack.c.l.b16 %v639
    %v4536 = vunpack.c.h.b16 %v639
    %v4537 = vunpack.c.l.b16 %v640
    %v4538 = vunpack.c.h.b16 %v640
    %v4539 = vunpack.c.l.b16 %v641
    %v4540 = vunpack.c.h.b16 %v641
    %v4541 = vunpack.c.l.b16 %v642
    %v4542 = vunpack.c.h.b16 %v642
    %v4543 = vunpack.c.l.b16 %v643
    %v4544 = vunpack.c.h.b16 %v643
    %v4545 = vunpack.c.l.b16 %v644
    %v4546 = vunpack.c.h.b16 %v644
    %v4547 = vunpack.c.l.b16 %v645
    %v4548 = vunpack.c.h.b16 %v645
    %v4549 = vunpack.c.l.b16 %v646
    %v4550 = vunpack.c.h.b16 %v646
    %v4551 = vunpack.c.l.b16 %v647
    %v4552 = vunpack.c.h.b16 %v647
    %v4553 = vunpack.c.l.b16 %v648
    %v4554 = vunpack.c.h.b16 %v648
    %v4555 = vunpack.c.l.b16 %v649
    %v4556 = vunpack.c.h.b16 %v649
    %v4557 = vunpack.c.l.b16 %v650
    %v4558 = vunpack.c.h.b16 %v650
    %v4559 = vunpack.c.l.b16 %v651
    %v4560 = vunpack.c.h.b16 %v651
    %v4561 = vunpack.c.l.b16 %v652
    %v4562 = vunpack.c.h.b16 %v652
    %v4563 = vunpack.c.l.b16 %v653
    %v4564 = vunpack.c.h.b16 %v653
    %v4565 = vunpack.c.l.b16 %v654
    %v4566 = vunpack.c.h.b16 %v654
    %v4567 = vunpack.c.l.b16 %v655
    %v4568 = vunpack.c.h.b16 %v655
    %v4569 = vunpack.c.l.b16 %v656
    %v4570 = vunpack.c.h.b16 %v656
    %v4571 = vunpack.c.l.b16 %v657
    %v4572 = vunpack.c.h.b16 %v657
    %v4573 = vunpack.c.l.b16 %v658
    %v4574 = vunpack.c.h.b16 %v658
    %v4575 = vunpack.c.l.b16 %v659
    %v4576 = vunpack.c.h.b16 %v659
    %v4577 = vunpack.c.l.b16 %v660
    %v4578 = vunpack.c.h.b16 %v660
    %v4579 = vunpack.c.l.b16 %v661
    %v4580 = vunpack.c.h.b16 %v661
    %v4581 = vunpack.c.l.b16 %v662
    %v4582 = vunpack.c.h.b16 %v662
    %v4583 = vunpack.c.l.b16 %v663
    %v4584 = vunpack.c.h.b16 %v663
    %v4585 = vunpack.c.l.b16 %v664
    %v4586 = vunpack.c.h.b16 %v664
    %v4587 = vunpack.c.l.b16 %v665
    %v4588 = vunpack.c.h.b16 %v665
    %v4589 = vunpack.c.l.b16 %v666
    %v4590 = vunpack.c.h.b16 %v666
    %v4591 = vunpack.c.l.b16 %v667
    %v4592 = vunpack.c.h.b16 %v667
    %v4593 = vunpack.c.l.b16 %v668
    %v4594 = vunpack.c.h.b16 %v668
    %v4595 = vunpack.c.l.b16 %v669
    %v4596 = vunpack.c.h.b16 %v669
    %v4597 = vunpack.c.l.b16 %v670
    %v4598 = vunpack.c.h.b16 %v670
    %v4599 = vunpack.c.l.b16 %v671
    %v4600 = vunpack.c.h.b16 %v671
    %v4601 = vunpack.c.l.b16 %v672
    %v4602 = vunpack.c.h.b16 %v672
    %v4603 = vunpack.c.l.b16 %v673
    %v4604 = vunpack.c.h.b16 %v673
    %v4605 = vunpack.c.l.b16 %v674
    %v4606 = vunpack.c.h.b16 %v674
    %v4607 = vunpack.c.l.b16 %v675
    %v4608 = vunpack.c.h.b16 %v675
    %v4609 = vunpack.c.l.b16 %v676
    %v4610 = vunpack.c.h.b16 %v676
    %v4611 = vunpack.c.l.b16 %v677
    %v4612 = vunpack.c.h.b16 %v677
    %v4613 = vunpack.c.l.b16 %v678
    %v4614 = vunpack.c.h.b16 %v678
    %v4615 = vunpack.c.l.b16 %v679
    %v4616 = vunpack.c.h.b16 %v679
    %v4617 = vunpack.c.l.b16 %v680
    %v4618 = vunpack.c.h.b16 %v680
    %v4619 = vunpack.c.l.b16 %v681
    %v4620 = vunpack.c.h.b16 %v681
    %v4621 = vunpack.c.l.b16 %v682
    %v4622 = vunpack.c.h.b16 %v682
    %v4623 = vunpack.c.l.b16 %v683
    %v4624 = vunpack.c.h.b16 %v683
    %v4625 = vunpack.c.l.b16 %v684
    %v4626 = vunpack.c.h.b16 %v684
    %v4627 = vunpack.c.l.b16 %v685
    %v4628 = vunpack.c.h.b16 %v685
    %v4629 = vunpack.c.l.b16 %v686
    %v4630 = vunpack.c.h.b16 %v686
    %v4631 = vunpack.c.l.b16 %v687
    %v4632 = vunpack.c.h.b16 %v687
    %v4633 = vunpack.c.l.b16 %v688
    %v4634 = vunpack.c.h.b16 %v688
    %v4635 = vunpack.c.l.b16 %v689
    %v4636 = vunpack.c.h.b16 %v689
    %v4637 = vunpack.c.l.b16 %v690
    %v4638 = vunpack.c.h.b16 %v690
    %v4639 = vunpack.c.l.b16 %v691
    %v4640 = vunpack.c.h.b16 %v691
    %v4641 = vunpack.c.l.b16 %v692
    %v4642 = vunpack.c.h.b16 %v692
    %v4643 = vunpack.c.l.b16 %v693
    %v4644 = vunpack.c.h.b16 %v693
    %v4645 = vunpack.c.l.b16 %v694
    %v4646 = vunpack.c.h.b16 %v694
    %v4647 = vunpack.c.l.b16 %v695
    %v4648 = vunpack.c.h.b16 %v695
    %v4649 = vunpack.c.l.b16 %v696
    %v4650 = vunpack.c.h.b16 %v696
    %v4651 = vunpack.c.l.b16 %v697
    %v4652 = vunpack.c.h.b16 %v697
    %v4653 = vunpack.c.l.b16 %v698
    %v4654 = vunpack.c.h.b16 %v698
    %v4655 = vunpack.c.l.b16 %v699
    %v4656 = vunpack.c.h.b16 %v699
    %v4657 = vunpack.c.l.b16 %v700
    %v4658 = vunpack.c.h.b16 %v700
    %v4659 = vunpack.c.l.b16 %v701
    %v4660 = vunpack.c.h.b16 %v701
    %v4661 = vunpack.c.l.b16 %v702
    %v4662 = vunpack.c.h.b16 %v702
    %v4663 = vunpack.c.l.b16 %v703
    %v4664 = vunpack.c.h.b16 %v703
    %v4665 = vunpack.c.l.b16 %v704
    %v4666 = vunpack.c.h.b16 %v704
    %v4667 = vunpack.c.l.b16 %v705
    %v4668 = vunpack.c.h.b16 %v705
    %v4669 = vunpack.c.l.b16 %v706
    %v4670 = vunpack.c.h.b16 %v706
    %v4671 = vunpack.c.l.b16 %v707
    %v4672 = vunpack.c.h.b16 %v707
    %v4673 = vunpack.c.l.b16 %v708
    %v4674 = vunpack.c.h.b16 %v708
    %v4675 = vunpack.c.l.b16 %v709
    %v4676 = vunpack.c.h.b16 %v709
    %v4677 = vunpack.c.l.b16 %v710
    %v4678 = vunpack.c.h.b16 %v710
    %v4679 = vunpack.c.l.b16 %v711
    %v4680 = vunpack.c.h.b16 %v711
    %v4681 = vunpack.c.l.b16 %v712
    %v4682 = vunpack.c.h.b16 %v712
    %v4683 = vunpack.c.l.b16 %v713
    %v4684 = vunpack.c.h.b16 %v713
    %v4685 = vunpack.c.l.b16 %v714
    %v4686 = vunpack.c.h.b16 %v714
    %v4687 = vunpack.c.l.b16 %v715
    %v4688 = vunpack.c.h.b16 %v715
    %v4689 = vunpack.c.l.b16 %v716
    %v4690 = vunpack.c.h.b16 %v716
    %v4691 = vunpack.c.l.b16 %v717
    %v4692 = vunpack.c.h.b16 %v717
    %v4693 = vunpack.c.l.b16 %v718
    %v4694 = vunpack.c.h.b16 %v718
    %v4695 = vunpack.c.l.b16 %v719
    %v4696 = vunpack.c.h.b16 %v719
    %v4697 = vunpack.c.l.b16 %v720
    %v4698 = vunpack.c.h.b16 %v720
    %v4699 = vunpack.c.l.b16 %v721
    %v4700 = vunpack.c.h.b16 %v721
    %v4701 = vunpack.c.l.b16 %v722
    %v4702 = vunpack.c.h.b16 %v722
    %v4703 = vunpack.c.l.b16 %v723
    %v4704 = vunpack.c.h.b16 %v723
    %v4705 = vunpack.c.l.b16 %v724
    %v4706 = vunpack.c.h.b16 %v724
    %v4707 = vunpack.c.l.b16 %v725
    %v4708 = vunpack.c.h.b16 %v725
    %v4709 = vunpack.c.l.b16 %v726
    %v4710 = vunpack.c.h.b16 %v726
    %v4711 = vunpack.c.l.b16 %v727
    %v4712 = vunpack.c.h.b16 %v727
    %v4713 = vunpack.c.l.b16 %v728
    %v4714 = vunpack.c.h.b16 %v728
    %v4715 = vunpack.c.l.b16 %v729
    %v4716 = vunpack.c.h.b16 %v729
    %v4717 = vunpack.c.l.b16 %v730
    %v4718 = vunpack.c.h.b16 %v730
    %v4719 = vunpack.c.l.b16 %v731
    %v4720 = vunpack.c.h.b16 %v731
    %v4721 = vunpack.c.l.b16 %v732
    %v4722 = vunpack.c.h.b16 %v732
    %v4723 = vunpack.c.l.b16 %v733
    %v4724 = vunpack.c.h.b16 %v733
    %v4725 = vunpack.c.l.b16 %v734
    %v4726 = vunpack.c.h.b16 %v734
    %v4727 = vunpack.c.l.b16 %v735
    %v4728 = vunpack.c.h.b16 %v735
    %v4729 = vunpack.c.l.b16 %v736
    %v4730 = vunpack.c.h.b16 %v736
    %v4731 = vunpack.c.l.b16 %v737
    %v4732 = vunpack.c.h.b16 %v737
    %v4733 = vunpack.c.l.b16 %v738
    %v4734 = vunpack.c.h.b16 %v738
    %v4735 = vunpack.c.l.b16 %v739
    %v4736 = vunpack.c.h.b16 %v739
    %v4737 = vunpack.c.l.b16 %v740
    %v4738 = vunpack.c.h.b16 %v740
    %v4739 = vunpack.c.l.b16 %v741
    %v4740 = vunpack.c.h.b16 %v741
    %v4741 = vunpack.c.l.b16 %v742
    %v4742 = vunpack.c.h.b16 %v742
    %v4743 = vunpack.c.l.b16 %v743
    %v4744 = vunpack.c.h.b16 %v743
    %v4745 = vunpack.c.l.b16 %v744
    %v4746 = vunpack.c.h.b16 %v744
    %v4747 = vunpack.c.l.b16 %v745
    %v4748 = vunpack.c.h.b16 %v745
    %v4749 = vunpack.c.l.b16 %v746
    %v4750 = vunpack.c.h.b16 %v746
    %v4751 = vunpack.c.l.b16 %v747
    %v4752 = vunpack.c.h.b16 %v747
    %v4753 = vunpack.c.l.b16 %v748
    %v4754 = vunpack.c.h.b16 %v748
    %v4755 = vunpack.c.l.b16 %v749
    %v4756 = vunpack.c.h.b16 %v749
    %v4757 = vunpack.c.l.b16 %v750
    %v4758 = vunpack.c.h.b16 %v750
    %v4759 = vunpack.c.l.b16 %v751
    %v4760 = vunpack.c.h.b16 %v751
    %v4761 = vunpack.c.l.b16 %v752
    %v4762 = vunpack.c.h.b16 %v752
    %v4763 = vunpack.c.l.b16 %v753
    %v4764 = vunpack.c.h.b16 %v753
    %v4765 = vunpack.c.l.b16 %v754
    %v4766 = vunpack.c.h.b16 %v754
    %v4767 = vunpack.c.l.b16 %v755
    %v4768 = vunpack.c.h.b16 %v755
    %v4769 = vunpack.c.l.b16 %v756
    %v4770 = vunpack.c.h.b16 %v756
    %v4771 = vunpack.c.l.b16 %v757
    %v4772 = vunpack.c.h.b16 %v757
    %v4773 = vunpack.c.l.b16 %v758
    %v4774 = vunpack.c.h.b16 %v758
    %v4775 = vunpack.c.l.b16 %v759
    %v4776 = vunpack.c.h.b16 %v759
    %v4777 = vunpack.c.l.b16 %v760
    %v4778 = vunpack.c.h.b16 %v760
    %v4779 = vunpack.c.l.b16 %v761
    %v4780 = vunpack.c.h.b16 %v761
    %v4781 = vunpack.c.l.b16 %v762
    %v4782 = vunpack.c.h.b16 %v762
    %v4783 = vunpack.c.l.b16 %v763
    %v4784 = vunpack.c.h.b16 %v763
    %v4785 = vunpack.c.l.b16 %v764
    %v4786 = vunpack.c.h.b16 %v764
    %v4787 = vunpack.c.l.b16 %v765
    %v4788 = vunpack.c.h.b16 %v765
    %v4789 = vunpack.c.l.b16 %v766
    %v4790 = vunpack.c.h.b16 %v766
    %v4791 = vunpack.c.l.b16 %v767
    %v4792 = vunpack.c.h.b16 %v767
    %v4793 = vunpack.c.l.b16 %v768
    %v4794 = vunpack.c.h.b16 %v768
    %v4795 = vunpack.c.l.b16 %v769
    %v4796 = vunpack.c.h.b16 %v769
    %v4797 = vunpack.c.l.b16 %v770
    %v4798 = vunpack.c.h.b16 %v770
    %v4799 = vunpack.c.l.b16 %v771
    %v4800 = vunpack.c.h.b16 %v771
    %v4801 = vunpack.c.l.b16 %v772
    %v4802 = vunpack.c.h.b16 %v772
    %v4803 = vunpack.c.l.b16 %v773
    %v4804 = vunpack.c.h.b16 %v773
    %v4805 = vunpack.c.l.b16 %v774
    %v4806 = vunpack.c.h.b16 %v774
    %v4807 = vunpack.c.l.b16 %v775
    %v4808 = vunpack.c.h.b16 %v775
    %v4809 = vunpack.c.l.b16 %v776
    %v4810 = vunpack.c.h.b16 %v776
    %v4811 = vunpack.c.l.b16 %v777
    %v4812 = vunpack.c.h.b16 %v777
    %v4813 = vunpack.c.l.b16 %v778
    %v4814 = vunpack.c.h.b16 %v778
    %v4815 = vunpack.c.l.b16 %v779
    %v4816 = vunpack.c.h.b16 %v779
    %v4817 = vunpack.c.l.b16 %v780
    %v4818 = vunpack.c.h.b16 %v780
    %v4819 = vunpack.c.l.b16 %v781
    %v4820 = vunpack.c.h.b16 %v781
    %v4821 = vunpack.c.l.b16 %v782
    %v4822 = vunpack.c.h.b16 %v782
    %v4823 = vunpack.c.l.b16 %v783
    %v4824 = vunpack.c.h.b16 %v783
    %v4825 = vunpack.c.l.b16 %v784
    %v4826 = vunpack.c.h.b16 %v784
    %v4827 = vunpack.c.l.b16 %v785
    %v4828 = vunpack.c.h.b16 %v785
    %v4829 = vunpack.c.l.b16 %v786
    %v4830 = vunpack.c.h.b16 %v786
    %v4831 = vunpack.c.l.b16 %v787
    %v4832 = vunpack.c.h.b16 %v787
    %v4833 = vunpack.c.l.b16 %v788
    %v4834 = vunpack.c.h.b16 %v788
    %v4835 = vunpack.c.l.b16 %v789
    %v4836 = vunpack.c.h.b16 %v789
    %v4837 = vunpack.c.l.b16 %v790
    %v4838 = vunpack.c.h.b16 %v790
    %v4839 = vunpack.c.l.b16 %v791
    %v4840 = vunpack.c.h.b16 %v791
    %v4841 = vunpack.c.l.b16 %v792
    %v4842 = vunpack.c.h.b16 %v792
    %v4843 = vunpack.c.l.b16 %v793
    %v4844 = vunpack.c.h.b16 %v793
    %v4845 = vunpack.c.l.b16 %v794
    %v4846 = vunpack.c.h.b16 %v794
    %v4847 = vunpack.c.l.b16 %v795
    %v4848 = vunpack.c.h.b16 %v795
    %v4849 = vunpack.c.l.b16 %v796
    %v4850 = vunpack.c.h.b16 %v796
    %v4851 = vunpack.c.l.b16 %v797
    %v4852 = vunpack.c.h.b16 %v797
    %v4853 = vunpack.c.l.b16 %v798
    %v4854 = vunpack.c.h.b16 %v798
    %v4855 = vunpack.c.l.b16 %v799
    %v4856 = vunpack.c.h.b16 %v799
    %v4857 = vunpack.c.l.b16 %v800
    %v4858 = vunpack.c.h.b16 %v800
    %v4859 = vunpack.c.l.b16 %v801
    %v4860 = vunpack.c.h.b16 %v801
    %v4861 = vunpack.c.l.b16 %v802
    %v4862 = vunpack.c.h.b16 %v802
    %v4863 = vunpack.c.l.b16 %v803
    %v4864 = vunpack.c.h.b16 %v803
    %v4865 = vunpack.c.l.b16 %v804
    %v4866 = vunpack.c.h.b16 %v804
    %v4867 = vunpack.c.l.b16 %v805
    %v4868 = vunpack.c.h.b16 %v805
    %v4869 = vunpack.c.l.b16 %v806
    %v4870 = vunpack.c.h.b16 %v806
    %v4871 = vunpack.c.l.b16 %v807
    %v4872 = vunpack.c.h.b16 %v807
    %v4873 = vunpack.c.l.b16 %v808
    %v4874 = vunpack.c.h.b16 %v808
    %v4875 = vunpack.c.l.b16 %v809
    %v4876 = vunpack.c.h.b16 %v809
    %v4877 = vunpack.c.l.b16 %v810
    %v4878 = vunpack.c.h.b16 %v810
    %v4879 = vunpack.c.l.b16 %v811
    %v4880 = vunpack.c.h.b16 %v811
    %v4881 = vunpack.c.l.b16 %v812
    %v4882 = vunpack.c.h.b16 %v812
    %v4883 = vunpack.c.l.b16 %v813
    %v4884 = vunpack.c.h.b16 %v813
    %v4885 = vunpack.c.l.b16 %v814
    %v4886 = vunpack.c.h.b16 %v814
    %v4887 = vunpack.c.l.b16 %v815
    %v4888 = vunpack.c.h.b16 %v815
    %v4889 = vunpack.c.l.b16 %v816
    %v4890 = vunpack.c.h.b16 %v816
    %v4891 = vunpack.c.l.b16 %v817
    %v4892 = vunpack.c.h.b16 %v817
    %v4893 = vunpack.c.l.b16 %v818
    %v4894 = vunpack.c.h.b16 %v818
    %v4895 = vunpack.c.l.b16 %v819
    %v4896 = vunpack.c.h.b16 %v819
    %v4897 = vunpack.c.l.b16 %v820
    %v4898 = vunpack.c.h.b16 %v820
    %v4899 = vunpack.c.l.b16 %v821
    %v4900 = vunpack.c.h.b16 %v821
    %v4901 = vunpack.c.l.b16 %v822
    %v4902 = vunpack.c.h.b16 %v822
    %v4903 = vunpack.c.l.b16 %v823
    %v4904 = vunpack.c.h.b16 %v823
    %v4905 = vunpack.c.l.b16 %v824
    %v4906 = vunpack.c.h.b16 %v824
    %v4907 = vunpack.c.l.b16 %v825
    %v4908 = vunpack.c.h.b16 %v825
    %v4909 = vunpack.c.l.b16 %v826
    %v4910 = vunpack.c.h.b16 %v826
    %v4911 = vunpack.c.l.b16 %v827
    %v4912 = vunpack.c.h.b16 %v827
    %v4913 = vunpack.c.l.b16 %v828
    %v4914 = vunpack.c.h.b16 %v828
    %v4915 = vunpack.c.l.b16 %v829
    %v4916 = vunpack.c.h.b16 %v829
    %v4917 = vunpack.c.l.b16 %v830
    %v4918 = vunpack.c.h.b16 %v830
    %v4919 = vunpack.c.l.b16 %v831
    %v4920 = vunpack.c.h.b16 %v831
    %v4921 = vunpack.c.l.b16 %v832
    %v4922 = vunpack.c.h.b16 %v832
    %v4923 = vunpack.c.l.b16 %v833
    %v4924 = vunpack.c.h.b16 %v833
    %v4925 = vunpack.c.l.b16 %v834
    %v4926 = vunpack.c.h.b16 %v834
    %v4927 = vunpack.c.l.b16 %v835
    %v4928 = vunpack.c.h.b16 %v835
    %v4929 = vunpack.c.l.b16 %v836
    %v4930 = vunpack.c.h.b16 %v836
    %v4931 = vunpack.c.l.b16 %v837
    %v4932 = vunpack.c.h.b16 %v837
    %v4933 = vunpack.c.l.b16 %v838
    %v4934 = vunpack.c.h.b16 %v838
    %v4935 = vunpack.c.l.b16 %v839
    %v4936 = vunpack.c.h.b16 %v839
    %v4937 = vunpack.c.l.b16 %v840
    %v4938 = vunpack.c.h.b16 %v840
    %v4939 = vunpack.c.l.b16 %v841
    %v4940 = vunpack.c.h.b16 %v841
    %v4941 = vunpack.c.l.b16 %v842
    %v4942 = vunpack.c.h.b16 %v842
    %v4943 = vunpack.c.l.b16 %v843
    %v4944 = vunpack.c.h.b16 %v843
    %v4945 = vunpack.c.l.b16 %v844
    %v4946 = vunpack.c.h.b16 %v844
    %v4947 = vunpack.c.l.b16 %v845
    %v4948 = vunpack.c.h.b16 %v845
    %v4949 = vunpack.c.l.b16 %v846
    %v4950 = vunpack.c.h.b16 %v846
    %v4951 = vunpack.c.l.b16 %v847
    %v4952 = vunpack.c.h.b16 %v847
    %v4953 = vunpack.c.l.b16 %v848
    %v4954 = vunpack.c.h.b16 %v848
    %v4955 = vunpack.c.l.b16 %v849
    %v4956 = vunpack.c.h.b16 %v849
    %v4957 = vunpack.c.l.b16 %v850
    %v4958 = vunpack.c.h.b16 %v850
    %v4959 = vunpack.c.l.b16 %v851
    %v4960 = vunpack.c.h.b16 %v851
    %v4961 = vunpack.c.l.b16 %v852
    %v4962 = vunpack.c.h.b16 %v852
    %v4963 = vunpack.c.l.b16 %v853
    %v4964 = vunpack.c.h.b16 %v853
    %v4965 = vunpack.c.l.b16 %v854
    %v4966 = vunpack.c.h.b16 %v854
    %v4967 = vunpack.c.l.b16 %v855
    %v4968 = vunpack.c.h.b16 %v855
    %v4969 = vunpack.c.l.b16 %v856
    %v4970 = vunpack.c.h.b16 %v856
    %v4971 = vunpack.c.l.b16 %v857
    %v4972 = vunpack.c.h.b16 %v857
    %v4973 = vunpack.c.l.b16 %v858
    %v4974 = vunpack.c.h.b16 %v858
    %v4975 = vunpack.c.l.b16 %v859
    %v4976 = vunpack.c.h.b16 %v859
    %v4977 = vunpack.c.l.b16 %v860
    %v4978 = vunpack.c.h.b16 %v860
    %v4979 = vunpack.c.l.b16 %v861
    %v4980 = vunpack.c.h.b16 %v861
    %v4981 = vunpack.c.l.b16 %v862
    %v4982 = vunpack.c.h.b16 %v862
    %v4983 = vunpack.c.l.b16 %v863
    %v4984 = vunpack.c.h.b16 %v863
    %v4985 = vunpack.c.l.b16 %v864
    %v4986 = vunpack.c.h.b16 %v864
    %v4987 = vunpack.c.l.b16 %v865
    %v4988 = vunpack.c.h.b16 %v865
    %v4989 = vunpack.c.l.b16 %v866
    %v4990 = vunpack.c.h.b16 %v866
    %v4991 = vunpack.c.l.b16 %v867
    %v4992 = vunpack.c.h.b16 %v867
    %v4993 = vunpack.c.l.b16 %v868
    %v4994 = vunpack.c.h.b16 %v868
    %v4995 = vunpack.c.l.b16 %v869
    %v4996 = vunpack.c.h.b16 %v869
    %v4997 = vunpack.c.l.b16 %v870
    %v4998 = vunpack.c.h.b16 %v870
    %v4999 = vunpack.c.l.b16 %v871
    %v5000 = vunpack.c.h.b16 %v871
    %v5001 = vunpack.c.l.b16 %v872
    %v5002 = vunpack.c.h.b16 %v872
    %v5003 = vunpack.c.l.b16 %v873
    %v5004 = vunpack.c.h.b16 %v873
    %v5005 = vunpack.c.l.b16 %v874
    %v5006 = vunpack.c.h.b16 %v874
    %v5007 = vunpack.c.l.b16 %v875
    %v5008 = vunpack.c.h.b16 %v875
    %v5009 = vunpack.c.l.b16 %v876
    %v5010 = vunpack.c.h.b16 %v876
    %v5011 = vunpack.c.l.b16 %v877
    %v5012 = vunpack.c.h.b16 %v877
    %v5013 = vunpack.c.l.b16 %v878
    %v5014 = vunpack.c.h.b16 %v878
    %v5015 = vunpack.c.l.b16 %v879
    %v5016 = vunpack.c.h.b16 %v879
    %v5017 = vunpack.c.l.b16 %v880
    %v5018 = vunpack.c.h.b16 %v880
    %v5019 = vunpack.c.l.b16 %v881
    %v5020 = vunpack.c.h.b16 %v881
    %v5021 = vunpack.c.l.b16 %v882
    %v5022 = vunpack.c.h.b16 %v882
    %v5023 = vunpack.c.l.b16 %v883
    %v5024 = vunpack.c.h.b16 %v883
    %v5025 = vunpack.c.l.b16 %v884
    %v5026 = vunpack.c.h.b16 %v884
    %v5027 = vunpack.c.l.b16 %v885
    %v5028 = vunpack.c.h.b16 %v885
    %v5029 = vunpack.c.l.b16 %v886
    %v5030 = vunpack.c.h.b16 %v886
    %v5031 = vunpack.c.l.b16 %v887
    %v5032 = vunpack.c.h.b16 %v887
    %v5033 = vunpack.c.l.b16 %v888
    %v5034 = vunpack.c.h.b16 %v888
    %v5035 = vunpack.c.l.b16 %v889
    %v5036 = vunpack.c.h.b16 %v889
    %v5037 = vunpack.c.l.b16 %v890
    %v5038 = vunpack.c.h.b16 %v890
    %v5039 = vunpack.c.l.b16 %v891
    %v5040 = vunpack.c.h.b16 %v891
    %v5041 = vunpack.c.l.b16 %v892
    %v5042 = vunpack.c.h.b16 %v892
    %v5043 = vunpack.c.l.b16 %v893
    %v5044 = vunpack.c.h.b16 %v893
    %v5045 = vunpack.c.l.b16 %v894
    %v5046 = vunpack.c.h.b16 %v894
    %v5047 = vunpack.c.l.b16 %v895
    %v5048 = vunpack.c.h.b16 %v895
    %v5049 = vunpack.c.l.b16 %v896
    %v5050 = vunpack.c.h.b16 %v896
    %v5051 = vunpack.c.l.b16 %v897
    %v5052 = vunpack.c.h.b16 %v897
    %v5053 = vunpack.c.l.b16 %v898
    %v5054 = vunpack.c.h.b16 %v898
    %v5055 = vunpack.c.l.b16 %v899
    %v5056 = vunpack.c.h.b16 %v899
    %v5057 = vunpack.c.l.b16 %v900
    %v5058 = vunpack.c.h.b16 %v900
    %v5059 = vunpack.c.l.b16 %v901
    %v5060 = vunpack.c.h.b16 %v901
    %v5061 = vunpack.c.l.b16 %v902
    %v5062 = vunpack.c.h.b16 %v902
    %v5063 = vunpack.c.l.b16 %v903
    %v5064 = vunpack.c.h.b16 %v903
    %v5065 = vunpack.c.l.b16 %v904
    %v5066 = vunpack.c.h.b16 %v904
    %v5067 = vunpack.c.l.b16 %v905
    %v5068 = vunpack.c.h.b16 %v905
    %v5069 = vunpack.c.l.b16 %v906
    %v5070 = vunpack.c.h.b16 %v906
    %v5071 = vunpack.c.l.b16 %v907
    %v5072 = vunpack.c.h.b16 %v907
    %v5073 = vunpack.c.l.b16 %v908
    %v5074 = vunpack.c.h.b16 %v908
    %v5075 = vunpack.c.l.b16 %v909
    %v5076 = vunpack.c.h.b16 %v909
    %v5077 = vunpack.c.l.b16 %v910
    %v5078 = vunpack.c.h.b16 %v910
    %v5079 = vunpack.c.l.b16 %v911
    %v5080 = vunpack.c.h.b16 %v911
    %v5081 = vunpack.c.l.b16 %v912
    %v5082 = vunpack.c.h.b16 %v912
    %v5083 = vunpack.c.l.b16 %v913
    %v5084 = vunpack.c.h.b16 %v913
    %v5085 = vunpack.c.l.b16 %v914
    %v5086 = vunpack.c.h.b16 %v914
    %v5087 = vunpack.c.l.b16 %v915
    %v5088 = vunpack.c.h.b16 %v915
    %v5089 = vunpack.c.l.b16 %v916
    %v5090 = vunpack.c.h.b16 %v916
    %v5091 = vunpack.c.l.b16 %v917
    %v5092 = vunpack.c.h.b16 %v917
    %v5093 = vunpack.c.l.b16 %v918
    %v5094 = vunpack.c.h.b16 %v918
    %v5095 = vunpack.c.l.b16 %v919
    %v5096 = vunpack.c.h.b16 %v919
    %v5097 = vunpack.c.l.b16 %v920
    %v5098 = vunpack.c.h.b16 %v920
    %v5099 = vunpack.c.l.b16 %v921
    %v5100 = vunpack.c.h.b16 %v921
    %v5101 = vunpack.c.l.b16 %v922
    %v5102 = vunpack.c.h.b16 %v922
    %v5103 = vunpack.c.l.b16 %v923
    %v5104 = vunpack.c.h.b16 %v923
    %v5105 = vunpack.c.l.b16 %v924
    %v5106 = vunpack.c.h.b16 %v924
    %v5107 = vunpack.c.l.b16 %v925
    %v5108 = vunpack.c.h.b16 %v925
    %v5109 = vunpack.c.l.b16 %v926
    %v5110 = vunpack.c.h.b16 %v926
    %v5111 = vunpack.c.l.b16 %v927
    %v5112 = vunpack.c.h.b16 %v927
    %v5113 = vunpack.c.l.b16 %v928
    %v5114 = vunpack.c.h.b16 %v928
    %v5115 = vunpack.c.l.b16 %v929
    %v5116 = vunpack.c.h.b16 %v929
    %v5117 = vunpack.c.l.b16 %v930
    %v5118 = vunpack.c.h.b16 %v930
    %v5119 = vunpack.c.l.b16 %v931
    %v5120 = vunpack.c.h.b16 %v931
    %v5121 = vunpack.c.l.b16 %v932
    %v5122 = vunpack.c.h.b16 %v932
    %v5123 = vunpack.c.l.b16 %v933
    %v5124 = vunpack.c.h.b16 %v933
    %v5125 = vunpack.c.l.b16 %v934
    %v5126 = vunpack.c.h.b16 %v934
    %v5127 = vunpack.c.l.b16 %v935
    %v5128 = vunpack.c.h.b16 %v935
    %v5129 = vunpack.c.l.b16 %v936
    %v5130 = vunpack.c.h.b16 %v936
    %v5131 = vunpack.c.l.b16 %v937
    %v5132 = vunpack.c.h.b16 %v937
    %v5133 = vunpack.c.l.b16 %v938
    %v5134 = vunpack.c.h.b16 %v938
    %v5135 = vunpack.c.l.b16 %v939
    %v5136 = vunpack.c.h.b16 %v939
    %v5137 = vunpack.c.l.b16 %v940
    %v5138 = vunpack.c.h.b16 %v940
    %v5139 = vunpack.c.l.b16 %v941
    %v5140 = vunpack.c.h.b16 %v941
    %v5141 = vunpack.c.l.b16 %v942
    %v5142 = vunpack.c.h.b16 %v942
    %v5143 = vunpack.c.l.b16 %v943
    %v5144 = vunpack.c.h.b16 %v943
    %v5145 = vunpack.c.l.b16 %v944
    %v5146 = vunpack.c.h.b16 %v944
    %v5147 = vunpack.c.l.b16 %v945
    %v5148 = vunpack.c.h.b16 %v945
    %v5149 = vunpack.c.l.b16 %v946
    %v5150 = vunpack.c.h.b16 %v946
    %v5151 = vunpack.c.l.b16 %v947
    %v5152 = vunpack.c.h.b16 %v947
    %v5153 = vunpack.c.l.b16 %v948
    %v5154 = vunpack.c.h.b16 %v948
    %v5155 = vunpack.c.l.b16 %v949
    %v5156 = vunpack.c.h.b16 %v949
    %v5157 = vunpack.c.l.b16 %v950
    %v5158 = vunpack.c.h.b16 %v950
    %v5159 = vunpack.c.l.b16 %v951
    %v5160 = vunpack.c.h.b16 %v951
    %v5161 = vunpack.c.l.b16 %v952
    %v5162 = vunpack.c.h.b16 %v952
    %v5163 = vunpack.c.l.b16 %v953
    %v5164 = vunpack.c.h.b16 %v953
    %v5165 = vunpack.c.l.b16 %v954
    %v5166 = vunpack.c.h.b16 %v954
    %v5167 = vunpack.c.l.b16 %v955
    %v5168 = vunpack.c.h.b16 %v955
    %v5169 = vunpack.c.l.b16 %v956
    %v5170 = vunpack.c.h.b16 %v956
    %v5171 = vunpack.c.l.b16 %v957
    %v5172 = vunpack.c.h.b16 %v957
    %v5173 = vunpack.c.l.b16 %v958
    %v5174 = vunpack.c.h.b16 %v958
    %v5175 = vunpack.c.l.b16 %v959
    %v5176 = vunpack.c.h.b16 %v959
    %v5177 = vunpack.c.l.b16 %v960
    %v5178 = vunpack.c.h.b16 %v960
    %v5179 = vunpack.c.l.b16 %v961
    %v5180 = vunpack.c.h.b16 %v961
    %v5181 = vunpack.c.l.b16 %v962
    %v5182 = vunpack.c.h.b16 %v962
    %v5183 = vunpack.c.l.b16 %v963
    %v5184 = vunpack.c.h.b16 %v963
    %v5185 = vunpack.c.l.b16 %v964
    %v5186 = vunpack.c.h.b16 %v964
    %v5187 = vunpack.c.l.b16 %v965
    %v5188 = vunpack.c.h.b16 %v965
    %v5189 = vunpack.c.l.b16 %v966
    %v5190 = vunpack.c.h.b16 %v966
    %v5191 = vunpack.c.l.b16 %v967
    %v5192 = vunpack.c.h.b16 %v967
    %v5193 = vunpack.c.l.b16 %v968
    %v5194 = vunpack.c.h.b16 %v968
    %v5195 = vunpack.c.l.b16 %v969
    %v5196 = vunpack.c.h.b16 %v969
    %v5197 = vunpack.c.l.b16 %v970
    %v5198 = vunpack.c.h.b16 %v970
    %v5199 = vunpack.c.l.b16 %v971
    %v5200 = vunpack.c.h.b16 %v971
    %v5201 = vunpack.c.l.b16 %v972
    %v5202 = vunpack.c.h.b16 %v972
    %v5203 = vunpack.c.l.b16 %v973
    %v5204 = vunpack.c.h.b16 %v973
    %v5205 = vunpack.c.l.b16 %v974
    %v5206 = vunpack.c.h.b16 %v974
    %v5207 = vunpack.c.l.b16 %v975
    %v5208 = vunpack.c.h.b16 %v975
    %v5209 = vunpack.c.l.b16 %v976
    %v5210 = vunpack.c.h.b16 %v976
    %v5211 = vunpack.c.l.b16 %v977
    %v5212 = vunpack.c.h.b16 %v977
    %v5213 = vunpack.c.l.b16 %v978
    %v5214 = vunpack.c.h.b16 %v978
    %v5215 = vunpack.c.l.b16 %v979
    %v5216 = vunpack.c.h.b16 %v979
    %v5217 = vunpack.c.l.b16 %v980
    %v5218 = vunpack.c.h.b16 %v980
    %v5219 = vunpack.c.l.b16 %v981
    %v5220 = vunpack.c.h.b16 %v981
    %v5221 = vunpack.c.l.b16 %v982
    %v5222 = vunpack.c.h.b16 %v982
    %v5223 = vunpack.c.l.b16 %v983
    %v5224 = vunpack.c.h.b16 %v983
    %v5225 = vunpack.c.l.b16 %v984
    %v5226 = vunpack.c.h.b16 %v984
    %v5227 = vunpack.c.l.b16 %v985
    %v5228 = vunpack.c.h.b16 %v985
    %v5229 = vunpack.c.l.b16 %v986
    %v5230 = vunpack.c.h.b16 %v986
    %v5231 = vunpack.c.l.b16 %v987
    %v5232 = vunpack.c.h.b16 %v987
    %v5233 = vunpack.c.l.b16 %v988
    %v5234 = vunpack.c.h.b16 %v988
    %v5235 = vunpack.c.l.b16 %v989
    %v5236 = vunpack.c.h.b16 %v989
    %v5237 = vunpack.c.l.b16 %v990
    %v5238 = vunpack.c.h.b16 %v990
    %v5239 = vunpack.c.l.b16 %v991
    %v5240 = vunpack.c.h.b16 %v991
    %v5241 = vunpack.c.l.b16 %v992
    %v5242 = vunpack.c.h.b16 %v992
    %v5243 = vunpack.c.l.b16 %v993
    %v5244 = vunpack.c.h.b16 %v993
    %v5245 = vunpack.c.l.b16 %v994
    %v5246 = vunpack.c.h.b16 %v994
    %v5247 = vunpack.c.l.b16 %v995
    %v5248 = vunpack.c.h.b16 %v995
    %v5249 = vunpack.c.l.b16 %v996
    %v5250 = vunpack.c.h.b16 %v996
    %v5251 = vunpack.c.l.b16 %v997
    %v5252 = vunpack.c.h.b16 %v997
    %v5253 = vunpack.c.l.b16 %v998
    %v5254 = vunpack.c.h.b16 %v998
    %v5255 = vunpack.c.l.b16 %v999
    %v5256 = vunpack.c.h.b16 %v999
    %v5257 = vunpack.c.l.b16 %v1000
    %v5258 = vunpack.c.h.b16 %v1000
    %v5259 = vunpack.c.l.b16 %v1001
    %v5260 = vunpack.c.h.b16 %v1001
    %v5261 = vunpack.c.l.b16 %v1002
    %v5262 = vunpack.c.h.b16 %v1002
    %v5263 = vunpack.c.l.b16 %v1003
    %v5264 = vunpack.c.h.b16 %v1003
    %v5265 = vunpack.c.l.b16 %v1004
    %v5266 = vunpack.c.h.b16 %v1004
    %v5267 = vunpack.c.l.b16 %v1005
    %v5268 = vunpack.c.h.b16 %v1005
    %v5269 = vunpack.c.l.b16 %v1006
    %v5270 = vunpack.c.h.b16 %v1006
    %v5271 = vunpack.c.l.b16 %v1007
    %v5272 = vunpack.c.h.b16 %v1007
    %v5273 = vunpack.c.l.b16 %v1008
    %v5274 = vunpack.c.h.b16 %v1008
    %v5275 = vunpack.c.l.b16 %v1009
    %v5276 = vunpack.c.h.b16 %v1009
    %v5277 = vunpack.c.l.b16 %v1010
    %v5278 = vunpack.c.h.b16 %v1010
    %v5279 = vunpack.c.l.b16 %v1011
    %v5280 = vunpack.c.h.b16 %v1011
    %v5281 = vunpack.c.l.b16 %v1012
    %v5282 = vunpack.c.h.b16 %v1012
    %v5283 = vunpack.c.l.b16 %v1013
    %v5284 = vunpack.c.h.b16 %v1013
    %v5285 = vunpack.c.l.b16 %v1014
    %v5286 = vunpack.c.h.b16 %v1014
    %v5287 = vunpack.c.l.b16 %v1015
    %v5288 = vunpack.c.h.b16 %v1015
    %v5289 = vunpack.c.l.b16 %v1016
    %v5290 = vunpack.c.h.b16 %v1016
    %v5291 = vunpack.c.l.b16 %v1017
    %v5292 = vunpack.c.h.b16 %v1017
    %v5293 = vunpack.c.l.b16 %v1018
    %v5294 = vunpack.c.h.b16 %v1018
    %v5295 = vunpack.c.l.b16 %v1019
    %v5296 = vunpack.c.h.b16 %v1019
    %v5297 = vunpack.c.l.b16 %v1020
    %v5298 = vunpack.c.h.b16 %v1020
    %v5299 = vunpack.c.l.b16 %v1021
    %v5300 = vunpack.c.h.b16 %v1021
    %v5301 = vunpack.c.l.b16 %v1022
    %v5302 = vunpack.c.h.b16 %v1022
    %v5303 = vunpack.c.l.b16 %v1023
    %v5304 = vunpack.c.h.b16 %v1023
    %v5305 = vunpack.c.l.b16 %v1024
    %v5306 = vunpack.c.h.b16 %v1024
    %v5307 = vunpack.c.l.b16 %v1025
    %v5308 = vunpack.c.h.b16 %v1025
    %v5309 = vunpack.c.l.b16 %v1026
    %v5310 = vunpack.c.h.b16 %v1026
    %v5311 = vunpack.c.l.b16 %v1027
    %v5312 = vunpack.c.h.b16 %v1027
    %v5313 = vunpack.c.l.b16 %v1028
    %v5314 = vunpack.c.h.b16 %v1028
    %v5315 = vunpack.c.l.b16 %v1029
    %v5316 = vunpack.c.h.b16 %v1029
    %v5317 = vunpack.c.l.b16 %v1030
    %v5318 = vunpack.c.h.b16 %v1030
    %v5319 = vunpack.c.l.b16 %v1031
    %v5320 = vunpack.c.h.b16 %v1031
    %v5321 = vunpack.c.l.b16 %v1032
    %v5322 = vunpack.c.h.b16 %v1032
    %v5323 = vunpack.c.l.b16 %v1033
    %v5324 = vunpack.c.h.b16 %v1033
    %v5325 = vunpack.c.l.b16 %v1034
    %v5326 = vunpack.c.h.b16 %v1034
    %v5327 = vunpack.c.l.b16 %v1035
    %v5328 = vunpack.c.h.b16 %v1035
    %v5329 = vunpack.c.l.b16 %v1036
    %v5330 = vunpack.c.h.b16 %v1036
    %v5331 = vunpack.c.l.b16 %v1037
    %v5332 = vunpack.c.h.b16 %v1037
    %v5333 = vunpack.c.l.b16 %v1038
    %v5334 = vunpack.c.h.b16 %v1038
    %v5335 = vunpack.c.l.b16 %v1039
    %v5336 = vunpack.c.h.b16 %v1039
    %v5337 = vunpack.c.l.b16 %v1040
    %v5338 = vunpack.c.h.b16 %v1040
    %v5339 = vunpack.c.l.b16 %v1041
    %v5340 = vunpack.c.h.b16 %v1041
    %v5341 = vunpack.c.l.b16 %v1042
    %v5342 = vunpack.c.h.b16 %v1042
    %v5343 = vunpack.c.l.b16 %v1043
    %v5344 = vunpack.c.h.b16 %v1043
    %v5345 = vunpack.c.l.b16 %v1044
    %v5346 = vunpack.c.h.b16 %v1044
    %v5347 = vunpack.c.l.b16 %v1045
    %v5348 = vunpack.c.h.b16 %v1045
    %v5349 = vunpack.c.l.b16 %v1046
    %v5350 = vunpack.c.h.b16 %v1046
    %v5351 = vunpack.c.l.b16 %v1047
    %v5352 = vunpack.c.h.b16 %v1047
    %v5353 = vunpack.c.l.b16 %v1048
    %v5354 = vunpack.c.h.b16 %v1048
    %v5355 = vunpack.c.l.b16 %v1049
    %v5356 = vunpack.c.h.b16 %v1049
    %v5357 = vunpack.c.l.b16 %v1050
    %v5358 = vunpack.c.h.b16 %v1050
    %v5359 = vunpack.c.l.b16 %v1051
    %v5360 = vunpack.c.h.b16 %v1051
    %v5361 = vunpack.c.l.b16 %v1052
    %v5362 = vunpack.c.h.b16 %v1052
    %v5363 = vunpack.c.l.b16 %v1053
    %v5364 = vunpack.c.h.b16 %v1053
    %v5365 = vunpack.c.l.b16 %v1054
    %v5366 = vunpack.c.h.b16 %v1054
    %v5367 = vunpack.c.l.b16 %v1055
    %v5368 = vunpack.c.h.b16 %v1055
    %v5369 = vunpack.c.l.b16 %v1056
    %v5370 = vunpack.c.h.b16 %v1056
    %v5371 = vunpack.c.l.b16 %v1057
    %v5372 = vunpack.c.h.b16 %v1057
    %v5373 = vunpack.c.l.b16 %v1058
    %v5374 = vunpack.c.h.b16 %v1058
    %v5375 = vunpack.c.l.b16 %v1059
    %v5376 = vunpack.c.h.b16 %v1059
    %v5377 = vunpack.c.l.b16 %v1060
    %v5378 = vunpack.c.h.b16 %v1060
    %v5379 = vunpack.c.l.b16 %v1061
    %v5380 = vunpack.c.h.b16 %v1061
    %v5381 = vunpack.c.l.b16 %v1062
    %v5382 = vunpack.c.h.b16 %v1062
    %v5383 = vunpack.c.l.b16 %v1063
    %v5384 = vunpack.c.h.b16 %v1063
    %v5385 = vunpack.c.l.b16 %v1064
    %v5386 = vunpack.c.h.b16 %v1064
    %v5387 = vunpack.c.l.b16 %v1065
    %v5388 = vunpack.c.h.b16 %v1065
    %v5389 = vunpack.c.l.b16 %v1066
    %v5390 = vunpack.c.h.b16 %v1066
    %v5391 = vunpack.c.l.b16 %v1067
    %v5392 = vunpack.c.h.b16 %v1067
    %v5393 = vunpack.c.l.b16 %v1068
    %v5394 = vunpack.c.h.b16 %v1068
    %v5395 = vunpack.c.l.b16 %v1069
    %v5396 = vunpack.c.h.b16 %v1069
    %v5397 = vunpack.c.l.b16 %v1070
    %v5398 = vunpack.c.h.b16 %v1070
    %v5399 = vunpack.c.l.b16 %v1071
    %v5400 = vunpack.c.h.b16 %v1071
    %v5401 = vunpack.c.l.b16 %v1072
    %v5402 = vunpack.c.h.b16 %v1072
    %v5403 = vunpack.c.l.b16 %v1073
    %v5404 = vunpack.c.h.b16 %v1073
    %v5405 = vunpack.c.l.b16 %v1074
    %v5406 = vunpack.c.h.b16 %v1074
    %v5407 = vunpack.c.l.b16 %v1075
    %v5408 = vunpack.c.h.b16 %v1075
    %v5409 = vunpack.c.l.b16 %v1076
    %v5410 = vunpack.c.h.b16 %v1076
    %v5411 = vunpack.c.l.b16 %v1077
    %v5412 = vunpack.c.h.b16 %v1077
    %v5413 = vunpack.c.l.b16 %v1078
    %v5414 = vunpack.c.h.b16 %v1078
    %v5415 = vunpack.c.l.b16 %v1079
    %v5416 = vunpack.c.h.b16 %v1079
    %v5417 = vunpack.c.l.b16 %v1080
    %v5418 = vunpack.c.h.b16 %v1080
    %v5419 = vunpack.c.l.b16 %v1081
    %v5420 = vunpack.c.h.b16 %v1081
    %v5421 = vunpack.c.l.b16 %v1082
    %v5422 = vunpack.c.h.b16 %v1082
    %v5423 = vunpack.c.l.b16 %v1083
    %v5424 = vunpack.c.h.b16 %v1083
    %v5425 = vunpack.c.l.b16 %v1084
    %v5426 = vunpack.c.h.b16 %v1084
    %v5427 = vunpack.c.l.b16 %v1085
    %v5428 = vunpack.c.h.b16 %v1085
    %v5429 = vunpack.c.l.b16 %v1086
    %v5430 = vunpack.c.h.b16 %v1086
    %v5431 = vunpack.c.l.b16 %v1087
    %v5432 = vunpack.c.h.b16 %v1087
    %v5433 = vunpack.c.l.b16 %v1088
    %v5434 = vunpack.c.h.b16 %v1088
    %v5435 = vunpack.c.l.b16 %v1089
    %v5436 = vunpack.c.h.b16 %v1089
    %v5437 = vunpack.c.l.b16 %v1090
    %v5438 = vunpack.c.h.b16 %v1090
    %v5439 = vunpack.c.l.b16 %v1091
    %v5440 = vunpack.c.h.b16 %v1091
    %v5441 = vunpack.c.l.b16 %v1092
    %v5442 = vunpack.c.h.b16 %v1092
    %v5443 = vunpack.c.l.b16 %v1093
    %v5444 = vunpack.c.h.b16 %v1093
    %v5445 = vunpack.c.l.b16 %v1094
    %v5446 = vunpack.c.h.b16 %v1094
    %v5447 = vunpack.c.l.b16 %v1095
    %v5448 = vunpack.c.h.b16 %v1095
    %v5449 = vunpack.c.l.b16 %v1096
    %v5450 = vunpack.c.h.b16 %v1096
    %v5451 = vunpack.c.l.b16 %v1097
    %v5452 = vunpack.c.h.b16 %v1097
    %v5453 = vunpack.c.l.b16 %v1098
    %v5454 = vunpack.c.h.b16 %v1098
    %v5455 = vunpack.c.l.b16 %v1099
    %v5456 = vunpack.c.h.b16 %v1099
    %v5457 = vunpack.c.l.b16 %v1100
    %v5458 = vunpack.c.h.b16 %v1100
    %v5459 = vunpack.c.l.b16 %v1101
    %v5460 = vunpack.c.h.b16 %v1101
    %v5461 = vunpack.c.l.b16 %v1102
    %v5462 = vunpack.c.h.b16 %v1102
    %v5463 = vunpack.c.l.b16 %v1103
    %v5464 = vunpack.c.h.b16 %v1103
    %v5465 = vunpack.c.l.b16 %v1104
    %v5466 = vunpack.c.h.b16 %v1104
    %v5467 = vunpack.c.l.b16 %v1105
    %v5468 = vunpack.c.h.b16 %v1105
    %v5469 = vunpack.c.l.b16 %v1106
    %v5470 = vunpack.c.h.b16 %v1106
    %v5471 = vunpack.c.l.b16 %v1107
    %v5472 = vunpack.c.h.b16 %v1107
    %v5473 = vunpack.c.l.b16 %v1108
    %v5474 = vunpack.c.h.b16 %v1108
    %v5475 = vunpack.c.l.b16 %v1109
    %v5476 = vunpack.c.h.b16 %v1109
    %v5477 = vunpack.c.l.b16 %v1110
    %v5478 = vunpack.c.h.b16 %v1110
    %v5479 = vunpack.c.l.b16 %v1111
    %v5480 = vunpack.c.h.b16 %v1111
    %v5481 = vunpack.c.l.b16 %v1112
    %v5482 = vunpack.c.h.b16 %v1112
    %v5483 = vunpack.c.l.b16 %v1113
    %v5484 = vunpack.c.h.b16 %v1113
    %v5485 = vunpack.c.l.b16 %v1114
    %v5486 = vunpack.c.h.b16 %v1114
    %v5487 = vunpack.c.l.b16 %v1115
    %v5488 = vunpack.c.h.b16 %v1115
    %v5489 = vunpack.c.l.b16 %v1116
    %v5490 = vunpack.c.h.b16 %v1116
    %v5491 = vunpack.c.l.b16 %v1117
    %v5492 = vunpack.c.h.b16 %v1117
    %v5493 = vunpack.c.l.b16 %v1118
    %v5494 = vunpack.c.h.b16 %v1118
    %v5495 = vunpack.c.l.b16 %v1119
    %v5496 = vunpack.c.h.b16 %v1119
    %v5497 = vunpack.c.l.b16 %v1120
    %v5498 = vunpack.c.h.b16 %v1120
    %v5499 = vunpack.c.l.b16 %v1121
    %v5500 = vunpack.c.h.b16 %v1121
    %v5501 = vunpack.c.l.b16 %v1122
    %v5502 = vunpack.c.h.b16 %v1122
    %v5503 = vunpack.c.l.b16 %v1123
    %v5504 = vunpack.c.h.b16 %v1123
    %v5505 = vunpack.c.l.b16 %v1124
    %v5506 = vunpack.c.h.b16 %v1124
    %v5507 = vunpack.c.l.b16 %v1125
    %v5508 = vunpack.c.h.b16 %v1125
    %v5509 = vunpack.c.l.b16 %v1126
    %v5510 = vunpack.c.h.b16 %v1126
    %v5511 = vunpack.c.l.b16 %v1127
    %v5512 = vunpack.c.h.b16 %v1127
    %v5513 = vunpack.c.l.b16 %v1128
    %v5514 = vunpack.c.h.b16 %v1128
    %v5515 = vunpack.c.l.b16 %v1129
    %v5516 = vunpack.c.h.b16 %v1129
    %v5517 = vunpack.c.l.b16 %v1130
    %v5518 = vunpack.c.h.b16 %v1130
    %v5519 = vunpack.c.l.b16 %v1131
    %v5520 = vunpack.c.h.b16 %v1131
    %v5521 = vunpack.c.l.b16 %v1132
    %v5522 = vunpack.c.h.b16 %v1132
    %v5523 = vunpack.c.l.b16 %v1133
    %v5524 = vunpack.c.h.b16 %v1133
    %v5525 = vunpack.c.l.b16 %v1134
    %v5526 = vunpack.c.h.b16 %v1134
    %v5527 = vunpack.c.l.b16 %v1135
    %v5528 = vunpack.c.h.b16 %v1135
    %v5529 = vunpack.c.l.b16 %v1136
    %v5530 = vunpack.c.h.b16 %v1136
    %v5531 = vunpack.c.l.b16 %v1137
    %v5532 = vunpack.c.h.b16 %v1137
    %v5533 = vunpack.c.l.b16 %v1138
    %v5534 = vunpack.c.h.b16 %v1138
    %v5535 = vunpack.c.l.b16 %v1139
    %v5536 = vunpack.c.h.b16 %v1139
    %v5537 = vunpack.c.l.b16 %v1140
    %v5538 = vunpack.c.h.b16 %v1140
    %v5539 = vunpack.c.l.b16 %v1141
    %v5540 = vunpack.c.h.b16 %v1141
    %v5541 = vunpack.c.l.b16 %v1142
    %v5542 = vunpack.c.h.b16 %v1142
    %v5543 = vunpack.c.l.b16 %v1143
    %v5544 = vunpack.c.h.b16 %v1143
    %v5545 = vunpack.c.l.b16 %v1144
    %v5546 = vunpack.c.h.b16 %v1144
    %v5547 = vunpack.c.l.b16 %v1145
    %v5548 = vunpack.c.h.b16 %v1145
    %v5549 = vunpack.c.l.b16 %v1146
    %v5550 = vunpack.c.h.b16 %v1146
    %v5551 = vunpack.c.l.b16 %v1147
    %v5552 = vunpack.c.h.b16 %v1147
    %v5553 = vunpack.c.l.b16 %v1148
    %v5554 = vunpack.c.h.b16 %v1148
    %v5555 = vunpack.c.l.b16 %v1149
    %v5556 = vunpack.c.h.b16 %v1149
    %v5557 = vunpack.c.l.b16 %v1150
    %v5558 = vunpack.c.h.b16 %v1150
    %v5559 = vunpack.c.l.b16 %v1151
    %v5560 = vunpack.c.h.b16 %v1151
    %v5561 = vunpack.c.l.b16 %v1152
    %v5562 = vunpack.c.h.b16 %v1152
    %v5563 = vunpack.c.l.b16 %v1153
    %v5564 = vunpack.c.h.b16 %v1153
    %v5565 = vunpack.c.l.b16 %v1154
    %v5566 = vunpack.c.h.b16 %v1154
    %v5567 = vunpack.c.l.b16 %v1155
    %v5568 = vunpack.c.h.b16 %v1155
    %v5569 = vunpack.c.l.b16 %v1156
    %v5570 = vunpack.c.h.b16 %v1156
    %v5571 = vunpack.c.l.b16 %v1157
    %v5572 = vunpack.c.h.b16 %v1157
    %v5573 = vunpack.c.l.b16 %v1158
    %v5574 = vunpack.c.h.b16 %v1158
    %v5575 = vunpack.c.l.b16 %v1159
    %v5576 = vunpack.c.h.b16 %v1159
    %v5577 = vunpack.c.l.b16 %v1160
    %v5578 = vunpack.c.h.b16 %v1160
    %v5579 = vunpack.c.l.b16 %v1161
    %v5580 = vunpack.c.h.b16 %v1161
    %v5581 = vunpack.c.l.b16 %v1162
    %v5582 = vunpack.c.h.b16 %v1162
    %v5583 = vunpack.c.l.b16 %v1163
    %v5584 = vunpack.c.h.b16 %v1163
    %v5585 = vunpack.c.l.b16 %v1164
    %v5586 = vunpack.c.h.b16 %v1164
    %v5587 = vunpack.c.l.b16 %v1165
    %v5588 = vunpack.c.h.b16 %v1165
    %v5589 = vunpack.c.l.b16 %v1166
    %v5590 = vunpack.c.h.b16 %v1166
    %v5591 = vunpack.c.l.b16 %v1167
    %v5592 = vunpack.c.h.b16 %v1167
    %v5593 = vunpack.c.l.b16 %v1168
    %v5594 = vunpack.c.h.b16 %v1168
    %v5595 = vunpack.c.l.b16 %v1169
    %v5596 = vunpack.c.h.b16 %v1169
    %v5597 = vunpack.c.l.b16 %v1170
    %v5598 = vunpack.c.h.b16 %v1170
    %v5599 = vunpack.c.l.b16 %v1171
    %v5600 = vunpack.c.h.b16 %v1171
    %v5601 = vunpack.c.l.b16 %v1172
    %v5602 = vunpack.c.h.b16 %v1172
    %v5603 = vunpack.c.l.b16 %v1173
    %v5604 = vunpack.c.h.b16 %v1173
    %v5605 = vunpack.c.l.b16 %v1174
    %v5606 = vunpack.c.h.b16 %v1174
    %v5607 = vunpack.c.l.b16 %v1175
    %v5608 = vunpack.c.h.b16 %v1175
    %v5609 = vunpack.c.l.b16 %v1176
    %v5610 = vunpack.c.h.b16 %v1176
    %v5611 = vunpack.c.l.b16 %v1177
    %v5612 = vunpack.c.h.b16 %v1177
    %v5613 = vunpack.c.l.b16 %v1178
    %v5614 = vunpack.c.h.b16 %v1178
    %v5615 = vunpack.c.l.b16 %v1179
    %v5616 = vunpack.c.h.b16 %v1179
    %v5617 = vunpack.c.l.b16 %v1180
    %v5618 = vunpack.c.h.b16 %v1180
    %v5619 = vunpack.c.l.b16 %v1181
    %v5620 = vunpack.c.h.b16 %v1181
    %v5621 = vunpack.c.l.b16 %v1182
    %v5622 = vunpack.c.h.b16 %v1182
    %v5623 = vunpack.c.l.b16 %v1183
    %v5624 = vunpack.c.h.b16 %v1183
    %v5625 = vunpack.c.l.b16 %v1184
    %v5626 = vunpack.c.h.b16 %v1184
    %v5627 = vunpack.c.l.b16 %v1185
    %v5628 = vunpack.c.h.b16 %v1185
    %v5629 = vunpack.c.l.b16 %v1186
    %v5630 = vunpack.c.h.b16 %v1186
    %v5631 = vunpack.c.l.b16 %v1187
    %v5632 = vunpack.c.h.b16 %v1187
    %v5633 = vunpack.c.l.b16 %v1188
    %v5634 = vunpack.c.h.b16 %v1188
    %v5635 = vunpack.c.l.b16 %v1189
    %v5636 = vunpack.c.h.b16 %v1189
    %v5637 = vunpack.c.l.b16 %v1190
    %v5638 = vunpack.c.h.b16 %v1190
    %v5639 = vunpack.c.l.b16 %v1191
    %v5640 = vunpack.c.h.b16 %v1191
    %v5641 = vunpack.c.l.b16 %v1192
    %v5642 = vunpack.c.h.b16 %v1192
    %v5643 = vunpack.c.l.b16 %v1193
    %v5644 = vunpack.c.h.b16 %v1193
    %v5645 = vunpack.c.l.b16 %v1194
    %v5646 = vunpack.c.h.b16 %v1194
    %v5647 = vunpack.c.l.b16 %v1195
    %v5648 = vunpack.c.h.b16 %v1195
    %v5649 = vunpack.c.l.b16 %v1196
    %v5650 = vunpack.c.h.b16 %v1196
    %v5651 = vunpack.c.l.b16 %v1197
    %v5652 = vunpack.c.h.b16 %v1197
    %v5653 = vunpack.c.l.b16 %v1198
    %v5654 = vunpack.c.h.b16 %v1198
    %v5655 = vunpack.c.l.b16 %v1199
    %v5656 = vunpack.c.h.b16 %v1199
    %v5657 = vunpack.c.l.b16 %v1200
    %v5658 = vunpack.c.h.b16 %v1200
    %v5659 = vunpack.c.l.b16 %v1201
    %v5660 = vunpack.c.h.b16 %v1201
    %v5661 = vunpack.c.l.b16 %v1202
    %v5662 = vunpack.c.h.b16 %v1202
    %v5663 = vunpack.c.l.b16 %v1203
    %v5664 = vunpack.c.h.b16 %v1203
    %v5665 = vunpack.c.l.b16 %v1204
    %v5666 = vunpack.c.h.b16 %v1204
    %v5667 = vunpack.c.l.b16 %v1205
    %v5668 = vunpack.c.h.b16 %v1205
    %v5669 = vunpack.c.l.b16 %v1206
    %v5670 = vunpack.c.h.b16 %v1206
    %v5671 = vunpack.c.l.b16 %v1207
    %v5672 = vunpack.c.h.b16 %v1207
    %v5673 = vunpack.c.l.b16 %v1208
    %v5674 = vunpack.c.h.b16 %v1208
    %v5675 = vunpack.c.l.b16 %v1209
    %v5676 = vunpack.c.h.b16 %v1209
    %v5677 = vunpack.c.l.b16 %v1210
    %v5678 = vunpack.c.h.b16 %v1210
    %v5679 = vunpack.c.l.b16 %v1211
    %v5680 = vunpack.c.h.b16 %v1211
    %v5681 = vunpack.c.l.b16 %v1212
    %v5682 = vunpack.c.h.b16 %v1212
    %v5683 = vunpack.c.l.b16 %v1213
    %v5684 = vunpack.c.h.b16 %v1213
    %v5685 = vunpack.c.l.b16 %v1214
    %v5686 = vunpack.c.h.b16 %v1214
    %v5687 = vunpack.c.l.b16 %v1215
    %v5688 = vunpack.c.h.b16 %v1215
    %v5689 = vunpack.c.l.b16 %v1216
    %v5690 = vunpack.c.h.b16 %v1216
    %v5691 = vunpack.c.l.b16 %v1217
    %v5692 = vunpack.c.h.b16 %v1217
    %v5693 = vunpack.c.l.b16 %v1218
    %v5694 = vunpack.c.h.b16 %v1218
    %v5695 = vunpack.c.l.b16 %v1219
    %v5696 = vunpack.c.h.b16 %v1219
    %v5697 = vunpack.c.l.b16 %v1220
    %v5698 = vunpack.c.h.b16 %v1220
    %v5699 = vunpack.c.l.b16 %v1221
    %v5700 = vunpack.c.h.b16 %v1221
    %v5701 = vunpack.c.l.b16 %v1222
    %v5702 = vunpack.c.h.b16 %v1222
    %v5703 = vunpack.c.l.b16 %v1223
    %v5704 = vunpack.c.h.b16 %v1223
    %v5705 = vunpack.c.l.b16 %v1224
    %v5706 = vunpack.c.h.b16 %v1224
    %v5707 = vunpack.c.l.b16 %v1225
    %v5708 = vunpack.c.h.b16 %v1225
    %v5709 = vunpack.c.l.b16 %v1226
    %v5710 = vunpack.c.h.b16 %v1226
    %v5711 = vunpack.c.l.b16 %v1227
    %v5712 = vunpack.c.h.b16 %v1227
    %v5713 = vunpack.c.l.b16 %v1228
    %v5714 = vunpack.c.h.b16 %v1228
    %v5715 = vunpack.c.l.b16 %v1229
    %v5716 = vunpack.c.h.b16 %v1229
    %v5717 = vunpack.c.l.b16 %v1230
    %v5718 = vunpack.c.h.b16 %v1230
    %v5719 = vunpack.c.l.b16 %v1231
    %v5720 = vunpack.c.h.b16 %v1231
    %v5721 = vunpack.c.l.b16 %v1232
    %v5722 = vunpack.c.h.b16 %v1232
    %v5723 = vunpack.c.l.b16 %v1233
    %v5724 = vunpack.c.h.b16 %v1233
    %v5725 = vunpack.c.l.b16 %v1234
    %v5726 = vunpack.c.h.b16 %v1234
    %v5727 = vunpack.c.l.b16 %v1235
    %v5728 = vunpack.c.h.b16 %v1235
    %v5729 = vunpack.c.l.b16 %v1236
    %v5730 = vunpack.c.h.b16 %v1236
    %v5731 = vunpack.c.l.b16 %v1237
    %v5732 = vunpack.c.h.b16 %v1237
    %v5733 = vunpack.c.l.b16 %v1238
    %v5734 = vunpack.c.h.b16 %v1238
    %v5735 = vunpack.c.l.b16 %v1239
    %v5736 = vunpack.c.h.b16 %v1239
    %v5737 = vunpack.c.l.b16 %v1240
    %v5738 = vunpack.c.h.b16 %v1240
    %v5739 = vunpack.c.l.b16 %v1241
    %v5740 = vunpack.c.h.b16 %v1241
    %v5741 = vunpack.c.l.b16 %v1242
    %v5742 = vunpack.c.h.b16 %v1242
    %v5743 = vunpack.c.l.b16 %v1243
    %v5744 = vunpack.c.h.b16 %v1243
    %v5745 = vunpack.c.l.b16 %v1244
    %v5746 = vunpack.c.h.b16 %v1244
    %v5747 = vunpack.c.l.b16 %v1245
    %v5748 = vunpack.c.h.b16 %v1245
    %v5749 = vunpack.c.l.b16 %v1246
    %v5750 = vunpack.c.h.b16 %v1246
    %v5751 = vunpack.c.l.b16 %v1247
    %v5752 = vunpack.c.h.b16 %v1247
    %v5753 = vunpack.c.l.b16 %v1248
    %v5754 = vunpack.c.h.b16 %v1248
    %v5755 = vunpack.c.l.b16 %v1249
    %v5756 = vunpack.c.h.b16 %v1249
    %v5757 = vunpack.c.l.b16 %v1250
    %v5758 = vunpack.c.h.b16 %v1250
    %v5759 = vunpack.c.l.b16 %v1251
    %v5760 = vunpack.c.h.b16 %v1251
    %v5761 = vunpack.c.l.b16 %v1252
    %v5762 = vunpack.c.h.b16 %v1252
    %v5763 = vunpack.c.l.b16 %v1253
    %v5764 = vunpack.c.h.b16 %v1253
    %v5765 = vunpack.c.l.b16 %v1254
    %v5766 = vunpack.c.h.b16 %v1254
    %v5767 = vunpack.c.l.b16 %v1255
    %v5768 = vunpack.c.h.b16 %v1255
    %v5769 = vunpack.c.l.b16 %v1256
    %v5770 = vunpack.c.h.b16 %v1256
    %v5771 = vunpack.c.l.b16 %v1257
    %v5772 = vunpack.c.h.b16 %v1257
    %v5773 = vunpack.c.l.b16 %v1258
    %v5774 = vunpack.c.h.b16 %v1258
    %v5775 = vunpack.c.l.b16 %v1259
    %v5776 = vunpack.c.h.b16 %v1259
    %v5777 = vunpack.c.l.b16 %v1260
    %v5778 = vunpack.c.h.b16 %v1260
    %v5779 = vunpack.c.l.b16 %v1261
    %v5780 = vunpack.c.h.b16 %v1261
    %v5781 = vunpack.c.l.b16 %v1262
    %v5782 = vunpack.c.h.b16 %v1262
    %v5783 = vunpack.c.l.b16 %v1263
    %v5784 = vunpack.c.h.b16 %v1263
    %v5785 = vunpack.c.l.b16 %v1264
    %v5786 = vunpack.c.h.b16 %v1264
    %v5787 = vunpack.c.l.b16 %v1265
    %v5788 = vunpack.c.h.b16 %v1265
    %v5789 = vunpack.c.l.b16 %v1266
    %v5790 = vunpack.c.h.b16 %v1266
    %v5791 = vunpack.c.l.b16 %v1267
    %v5792 = vunpack.c.h.b16 %v1267
    %v5793 = vunpack.c.l.b16 %v1268
    %v5794 = vunpack.c.h.b16 %v1268
    %v5795 = vunpack.c.l.b16 %v1269
    %v5796 = vunpack.c.h.b16 %v1269
    %v5797 = vunpack.c.l.b16 %v1270
    %v5798 = vunpack.c.h.b16 %v1270
    %v5799 = vunpack.c.l.b16 %v1271
    %v5800 = vunpack.c.h.b16 %v1271
    %v5801 = vunpack.c.l.b16 %v1272
    %v5802 = vunpack.c.h.b16 %v1272
    %v5803 = vunpack.c.l.b16 %v1273
    %v5804 = vunpack.c.h.b16 %v1273
    %v5805 = vunpack.c.l.b16 %v1274
    %v5806 = vunpack.c.h.b16 %v1274
    %v5807 = vunpack.c.l.b16 %v1275
    %v5808 = vunpack.c.h.b16 %v1275
    %v5809 = vunpack.c.l.b16 %v1276
    %v5810 = vunpack.c.h.b16 %v1276
    %v5811 = vunpack.c.l.b16 %v1277
    %v5812 = vunpack.c.h.b16 %v1277
    %v5813 = vunpack.c.l.b16 %v1278
    %v5814 = vunpack.c.h.b16 %v1278
    %v5815 = vunpack.c.l.b16 %v1279
    %v5816 = vunpack.c.h.b16 %v1279
    %v5817 = vunpack.c.l.b16 %v1280
    %v5818 = vunpack.c.h.b16 %v1280
    %v5819 = vunpack.c.l.b16 %v1281
    %v5820 = vunpack.c.h.b16 %v1281
    %v5821 = vunpack.c.l.b16 %v1282
    %v5822 = vunpack.c.h.b16 %v1282
    %v5823 = vunpack.c.l.b16 %v1283
    %v5824 = vunpack.c.h.b16 %v1283
    %v5825 = vunpack.c.l.b16 %v1284
    %v5826 = vunpack.c.h.b16 %v1284
    %v5827 = vunpack.c.l.b16 %v1285
    %v5828 = vunpack.c.h.b16 %v1285
    %v5829 = vunpack.c.l.b16 %v1286
    %v5830 = vunpack.c.h.b16 %v1286
    %v5831 = vunpack.c.l.b16 %v1287
    %v5832 = vunpack.c.h.b16 %v1287
    %v5833 = vunpack.c.l.b16 %v1288
    %v5834 = vunpack.c.h.b16 %v1288
    %v5835 = vunpack.c.l.b16 %v1289
    %v5836 = vunpack.c.h.b16 %v1289
    %v5837 = vunpack.c.l.b16 %v1290
    %v5838 = vunpack.c.h.b16 %v1290
    %v5839 = vunpack.c.l.b16 %v1291
    %v5840 = vunpack.c.h.b16 %v1291
    %v5841 = vunpack.c.l.b16 %v1292
    %v5842 = vunpack.c.h.b16 %v1292
    %v5843 = vunpack.c.l.b16 %v1293
    %v5844 = vunpack.c.h.b16 %v1293
    %v5845 = vunpack.c.l.b16 %v1294
    %v5846 = vunpack.c.h.b16 %v1294
    %v5847 = vunpack.c.l.b16 %v1295
    %v5848 = vunpack.c.h.b16 %v1295
    %v5849 = vunpack.c.l.b16 %v1296
    %v5850 = vunpack.c.h.b16 %v1296
    %v5851 = vunpack.c.l.b16 %v1297
    %v5852 = vunpack.c.h.b16 %v1297
    %v5853 = vunpack.c.l.b16 %v1298
    %v5854 = vunpack.c.h.b16 %v1298
    %v5855 = vunpack.c.l.b16 %v1299
    %v5856 = vunpack.c.h.b16 %v1299
    %v5857 = vunpack.c.l.b16 %v1300
    %v5858 = vunpack.c.h.b16 %v1300
    %v5859 = vunpack.c.l.b16 %v1301
    %v5860 = vunpack.c.h.b16 %v1301
    %v5861 = vunpack.c.l.b16 %v1302
    %v5862 = vunpack.c.h.b16 %v1302
    %v5863 = vunpack.c.l.b16 %v1303
    %v5864 = vunpack.c.h.b16 %v1303
    %v5865 = vunpack.c.l.b16 %v1304
    %v5866 = vunpack.c.h.b16 %v1304
    %v5867 = vunpack.c.l.b16 %v1305
    %v5868 = vunpack.c.h.b16 %v1305
    %v5869 = vunpack.c.l.b16 %v1306
    %v5870 = vunpack.c.h.b16 %v1306
    %v5871 = vunpack.c.l.b16 %v1307
    %v5872 = vunpack.c.h.b16 %v1307
    %v5873 = vunpack.c.l.b16 %v1308
    %v5874 = vunpack.c.h.b16 %v1308
    %v5875 = vunpack.c.l.b16 %v1309
    %v5876 = vunpack.c.h.b16 %v1309
    %v5877 = vunpack.c.l.b16 %v1310
    %v5878 = vunpack.c.h.b16 %v1310
    %v5879 = vunpack.c.l.b16 %v1311
    %v5880 = vunpack.c.h.b16 %v1311
    %v5881 = vunpack.c.l.b16 %v1312
    %v5882 = vunpack.c.h.b16 %v1312
    %v5883 = vunpack.c.l.b16 %v1313
    %v5884 = vunpack.c.h.b16 %v1313
    %v5885 = vunpack.c.l.b16 %v1314
    %v5886 = vunpack.c.h.b16 %v1314
    %v5887 = vunpack.c.l.b16 %v1315
    %v5888 = vunpack.c.h.b16 %v1315
    %v5889 = vunpack.c.l.b16 %v1316
    %v5890 = vunpack.c.h.b16 %v1316
    %v5891 = vunpack.c.l.b16 %v1317
    %v5892 = vunpack.c.h.b16 %v1317
    %v5893 = vunpack.c.l.b16 %v1318
    %v5894 = vunpack.c.h.b16 %v1318
    %v5895 = vunpack.c.l.b16 %v1319
    %v5896 = vunpack.c.h.b16 %v1319
    %v5897 = vunpack.c.l.b16 %v1320
    %v5898 = vunpack.c.h.b16 %v1320
    %v5899 = vunpack.c.l.b16 %v1321
    %v5900 = vunpack.c.h.b16 %v1321
    %v5901 = vunpack.c.l.b16 %v1322
    %v5902 = vunpack.c.h.b16 %v1322
    %v5903 = vunpack.c.l.b16 %v1323
    %v5904 = vunpack.c.h.b16 %v1323
    %v5905 = vunpack.c.l.b16 %v1324
    %v5906 = vunpack.c.h.b16 %v1324
    %v5907 = vunpack.c.l.b16 %v1325
    %v5908 = vunpack.c.h.b16 %v1325
    %v5909 = vunpack.c.l.b16 %v1326
    %v5910 = vunpack.c.h.b16 %v1326
    %v5911 = vunpack.c.l.b16 %v1327
    %v5912 = vunpack.c.h.b16 %v1327
    %v5913 = vunpack.c.l.b16 %v1328
    %v5914 = vunpack.c.h.b16 %v1328
    %v5915 = vunpack.c.l.b16 %v1329
    %v5916 = vunpack.c.h.b16 %v1329
    %v5917 = vunpack.c.l.b16 %v1330
    %v5918 = vunpack.c.h.b16 %v1330
    %v5919 = vunpack.c.l.b16 %v1331
    %v5920 = vunpack.c.h.b16 %v1331
    %v5921 = vunpack.c.l.b16 %v1332
    %v5922 = vunpack.c.h.b16 %v1332
    %v5923 = vunpack.c.l.b16 %v1333
    %v5924 = vunpack.c.h.b16 %v1333
    %v5925 = vunpack.c.l.b16 %v1334
    %v5926 = vunpack.c.h.b16 %v1334
    %v5927 = vunpack.c.l.b16 %v1335
    %v5928 = vunpack.c.h.b16 %v1335
    %v5929 = vunpack.c.l.b16 %v1336
    %v5930 = vunpack.c.h.b16 %v1336
    %v5931 = vunpack.c.l.b16 %v1337
    %v5932 = vunpack.c.h.b16 %v1337
    %v5933 = vunpack.c.l.b16 %v1338
    %v5934 = vunpack.c.h.b16 %v1338
    %v5935 = vunpack.c.l.b16 %v1339
    %v5936 = vunpack.c.h.b16 %v1339
    %v5937 = vunpack.c.l.b16 %v1340
    %v5938 = vunpack.c.h.b16 %v1340
    %v5939 = vunpack.c.l.b16 %v1341
    %v5940 = vunpack.c.h.b16 %v1341
    %v5941 = vunpack.c.l.b16 %v1342
    %v5942 = vunpack.c.h.b16 %v1342
    %v5943 = vunpack.c.l.b16 %v1343
    %v5944 = vunpack.c.h.b16 %v1343
    %v5945 = vunpack.c.l.b16 %v1344
    %v5946 = vunpack.c.h.b16 %v1344
    %v5947 = vunpack.c.l.b16 %v1345
    %v5948 = vunpack.c.h.b16 %v1345
    %v5949 = vunpack.c.l.b16 %v1346
    %v5950 = vunpack.c.h.b16 %v1346
    %v5951 = vunpack.c.l.b16 %v1347
    %v5952 = vunpack.c.h.b16 %v1347
    %v5953 = vunpack.c.l.b16 %v1348
    %v5954 = vunpack.c.h.b16 %v1348
    %v5955 = vunpack.c.l.b16 %v1349
    %v5956 = vunpack.c.h.b16 %v1349
    %v5957 = vunpack.c.l.b16 %v1350
    %v5958 = vunpack.c.h.b16 %v1350
    %v5959 = vunpack.c.l.b16 %v1351
    %v5960 = vunpack.c.h.b16 %v1351
    %v5961 = vunpack.c.l.b16 %v1352
    %v5962 = vunpack.c.h.b16 %v1352
    %v5963 = vunpack.c.l.b16 %v1353
    %v5964 = vunpack.c.h.b16 %v1353
    %v5965 = vunpack.c.l.b16 %v1354
    %v5966 = vunpack.c.h.b16 %v1354
    %v5967 = vunpack.c.l.b16 %v1355
    %v5968 = vunpack.c.h.b16 %v1355
    %v5969 = vunpack.c.l.b16 %v1356
    %v5970 = vunpack.c.h.b16 %v1356
    %v5971 = vunpack.c.l.b16 %v1357
    %v5972 = vunpack.c.h.b16 %v1357
    %v5973 = vunpack.c.l.b16 %v1358
    %v5974 = vunpack.c.h.b16 %v1358
    %v5975 = vunpack.c.l.b16 %v1359
    %v5976 = vunpack.c.h.b16 %v1359
    %v5977 = vunpack.c.l.b16 %v1360
    %v5978 = vunpack.c.h.b16 %v1360
    %v5979 = vunpack.c.l.b16 %v1361
    %v5980 = vunpack.c.h.b16 %v1361
    %v5981 = vunpack.c.l.b16 %v1362
    %v5982 = vunpack.c.h.b16 %v1362
    %v5983 = vunpack.c.l.b16 %v1363
    %v5984 = vunpack.c.h.b16 %v1363
    %v5985 = vunpack.c.l.b16 %v1364
    %v5986 = vunpack.c.h.b16 %v1364
    %v5987 = vunpack.c.l.b16 %v1365
    %v5988 = vunpack.c.h.b16 %v1365
    %v5989 = vunpack.c.l.b16 %v1366
    %v5990 = vunpack.c.h.b16 %v1366
    %v5991 = vunpack.c.l.b16 %v1367
    %v5992 = vunpack.c.h.b16 %v1367
    %v5993 = vunpack.c.l.b16 %v1368
    %v5994 = vunpack.c.h.b16 %v1368
    %v5995 = vunpack.c.l.b16 %v1369
    %v5996 = vunpack.c.h.b16 %v1369
    %v5997 = vunpack.c.l.b16 %v1370
    %v5998 = vunpack.c.h.b16 %v1370
    %v5999 = vunpack.c.l.b16 %v1371
    %v6000 = vunpack.c.h.b16 %v1371
    %v6001 = vunpack.c.l.b16 %v1372
    %v6002 = vunpack.c.h.b16 %v1372
    %v6003 = vunpack.c.l.b16 %v1373
    %v6004 = vunpack.c.h.b16 %v1373
    %v6005 = vunpack.c.l.b16 %v1374
    %v6006 = vunpack.c.h.b16 %v1374
    %v6007 = vunpack.c.l.b16 %v1375
    %v6008 = vunpack.c.h.b16 %v1375
    %v6009 = vunpack.c.l.b16 %v1376
    %v6010 = vunpack.c.h.b16 %v1376
    %v6011 = vunpack.c.l.b16 %v1377
    %v6012 = vunpack.c.h.b16 %v1377
    %v6013 = vunpack.c.l.b16 %v1378
    %v6014 = vunpack.c.h.b16 %v1378
    %v6015 = vunpack.c.l.b16 %v1379
    %v6016 = vunpack.c.h.b16 %v1379
    %v6017 = vunpack.c.l.b16 %v1380
    %v6018 = vunpack.c.h.b16 %v1380
    %v6019 = vunpack.c.l.b16 %v1381
    %v6020 = vunpack.c.h.b16 %v1381
    %v6021 = vunpack.c.l.b16 %v1382
    %v6022 = vunpack.c.h.b16 %v1382
    %v6023 = vunpack.c.l.b16 %v1383
    %v6024 = vunpack.c.h.b16 %v1383
    %v6025 = vunpack.c.l.b16 %v1384
    %v6026 = vunpack.c.h.b16 %v1384
    %v6027 = vunpack.c.l.b16 %v1385
    %v6028 = vunpack.c.h.b16 %v1385
    %v6029 = vunpack.c.l.b16 %v1386
    %v6030 = vunpack.c.h.b16 %v1386
    %v6031 = vunpack.c.l.b16 %v1387
    %v6032 = vunpack.c.h.b16 %v1387
    %v6033 = vunpack.c.l.b16 %v1388
    %v6034 = vunpack.c.h.b16 %v1388
    %v6035 = vunpack.c.l.b16 %v1389
    %v6036 = vunpack.c.h.b16 %v1389
    %v6037 = vunpack.c.l.b16 %v1390
    %v6038 = vunpack.c.h.b16 %v1390
    %v6039 = vunpack.c.l.b16 %v1391
    %v6040 = vunpack.c.h.b16 %v1391
    %v6041 = vunpack.c.l.b16 %v1392
    %v6042 = vunpack.c.h.b16 %v1392
    %v6043 = vunpack.c.l.b16 %v1393
    %v6044 = vunpack.c.h.b16 %v1393
    %v6045 = vunpack.c.l.b16 %v1394
    %v6046 = vunpack.c.h.b16 %v1394
    %v6047 = vunpack.c.l.b16 %v1395
    %v6048 = vunpack.c.h.b16 %v1395
    %v6049 = vunpack.c.l.b16 %v1396
    %v6050 = vunpack.c.h.b16 %v1396
    %v6051 = vunpack.c.l.b16 %v1397
    %v6052 = vunpack.c.h.b16 %v1397
    %v6053 = vunpack.c.l.b16 %v1398
    %v6054 = vunpack.c.h.b16 %v1398
    %v6055 = vunpack.c.l.b16 %v1399
    %v6056 = vunpack.c.h.b16 %v1399
    %v6057 = vunpack.c.l.b16 %v1400
    %v6058 = vunpack.c.h.b16 %v1400
    %v6059 = vunpack.c.l.b16 %v1401
    %v6060 = vunpack.c.h.b16 %v1401
    %v6061 = vunpack.c.l.b16 %v1402
    %v6062 = vunpack.c.h.b16 %v1402
    %v6063 = vunpack.c.l.b16 %v1403
    %v6064 = vunpack.c.h.b16 %v1403
    %v6065 = vunpack.c.l.b16 %v1404
    %v6066 = vunpack.c.h.b16 %v1404
    %v6067 = vunpack.c.l.b16 %v1405
    %v6068 = vunpack.c.h.b16 %v1405
    %v6069 = vunpack.c.l.b16 %v1406
    %v6070 = vunpack.c.h.b16 %v1406
    %v6071 = vunpack.c.l.b16 %v1407
    %v6072 = vunpack.c.h.b16 %v1407
    %v6073 = vunpack.c.l.b16 %v1408
    %v6074 = vunpack.c.h.b16 %v1408
    %v6075 = vunpack.c.l.b16 %v1409
    %v6076 = vunpack.c.h.b16 %v1409
    %v6077 = vunpack.c.l.b16 %v1410
    %v6078 = vunpack.c.h.b16 %v1410
    %v6079 = vunpack.c.l.b16 %v1411
    %v6080 = vunpack.c.h.b16 %v1411
    %v6081 = vunpack.c.l.b16 %v1412
    %v6082 = vunpack.c.h.b16 %v1412
    %v6083 = vunpack.c.l.b16 %v1413
    %v6084 = vunpack.c.h.b16 %v1413
    %v6085 = vunpack.c.l.b16 %v1414
    %v6086 = vunpack.c.h.b16 %v1414
    %v6087 = vunpack.c.l.b16 %v1415
    %v6088 = vunpack.c.h.b16 %v1415
    %v6089 = vunpack.c.l.b16 %v1416
    %v6090 = vunpack.c.h.b16 %v1416
    %v6091 = vunpack.c.l.b16 %v1417
    %v6092 = vunpack.c.h.b16 %v1417
    %v6093 = vunpack.c.l.b16 %v1418
    %v6094 = vunpack.c.h.b16 %v1418
    %v6095 = vunpack.c.l.b16 %v1419
    %v6096 = vunpack.c.h.b16 %v1419
    %v6097 = vunpack.c.l.b16 %v1420
    %v6098 = vunpack.c.h.b16 %v1420
    %v6099 = vunpack.c.l.b16 %v1421
    %v6100 = vunpack.c.h.b16 %v1421
    %v6101 = vunpack.c.l.b16 %v1422
    %v6102 = vunpack.c.h.b16 %v1422
    %v6103 = vunpack.c.l.b16 %v1423
    %v6104 = vunpack.c.h.b16 %v1423
    %v6105 = vunpack.c.l.b16 %v1424
    %v6106 = vunpack.c.h.b16 %v1424
    %v6107 = vunpack.c.l.b16 %v1425
    %v6108 = vunpack.c.h.b16 %v1425
    %v6109 = vunpack.c.l.b16 %v1426
    %v6110 = vunpack.c.h.b16 %v1426
    %v6111 = vunpack.c.l.b16 %v1427
    %v6112 = vunpack.c.h.b16 %v1427
    %v6113 = vunpack.c.l.b16 %v1428
    %v6114 = vunpack.c.h.b16 %v1428
    %v6115 = vunpack.c.l.b16 %v1429
    %v6116 = vunpack.c.h.b16 %v1429
    %v6117 = vunpack.c.l.b16 %v1430
    %v6118 = vunpack.c.h.b16 %v1430
    %v6119 = vunpack.c.l.b16 %v1431
    %v6120 = vunpack.c.h.b16 %v1431
    %v6121 = vunpack.c.l.b16 %v1432
    %v6122 = vunpack.c.h.b16 %v1432
    %v6123 = vunpack.c.l.b16 %v1433
    %v6124 = vunpack.c.h.b16 %v1433
    %v6125 = vunpack.c.l.b16 %v1434
    %v6126 = vunpack.c.h.b16 %v1434
    %v6127 = vunpack.c.l.b16 %v1435
    %v6128 = vunpack.c.h.b16 %v1435
    %v6129 = vunpack.c.l.b16 %v1436
    %v6130 = vunpack.c.h.b16 %v1436
    %v6131 = vunpack.c.l.b16 %v1437
    %v6132 = vunpack.c.h.b16 %v1437
    %v6133 = vunpack.c.l.b16 %v1438
    %v6134 = vunpack.c.h.b16 %v1438
    %v6135 = vunpack.c.l.b16 %v1439
    %v6136 = vunpack.c.h.b16 %v1439
    %v6137 = vunpack.c.l.b16 %v1440
    %v6138 = vunpack.c.h.b16 %v1440
    %v6139 = vunpack.c.l.b16 %v1441
    %v6140 = vunpack.c.h.b16 %v1441
    %v6141 = vunpack.c.l.b16 %v1442
    %v6142 = vunpack.c.h.b16 %v1442
    %v6143 = vunpack.c.l.b16 %v1443
    %v6144 = vunpack.c.h.b16 %v1443
    %v6145 = vunpack.c.l.b16 %v1444
    %v6146 = vunpack.c.h.b16 %v1444
    %v6147 = vunpack.c.l.b16 %v1445
    %v6148 = vunpack.c.h.b16 %v1445
    %v6149 = vunpack.c.l.b16 %v1446
    %v6150 = vunpack.c.h.b16 %v1446
    %v6151 = vunpack.c.l.b16 %v1447
    %v6152 = vunpack.c.h.b16 %v1447
    %v6153 = vunpack.c.l.b16 %v1448
    %v6154 = vunpack.c.h.b16 %v1448
    %v6155 = vunpack.c.l.b16 %v1449
    %v6156 = vunpack.c.h.b16 %v1449
    %v6157 = vunpack.c.l.b16 %v1450
    %v6158 = vunpack.c.h.b16 %v1450
    %v6159 = vunpack.c.l.b16 %v1451
    %v6160 = vunpack.c.h.b16 %v1451
    %v6161 = vunpack.c.l.b16 %v1452
    %v6162 = vunpack.c.h.b16 %v1452
    %v6163 = vunpack.c.l.b16 %v1453
    %v6164 = vunpack.c.h.b16 %v1453
    %v6165 = vunpack.c.l.b16 %v1454
    %v6166 = vunpack.c.h.b16 %v1454
    %v6167 = vunpack.c.l.b16 %v1455
    %v6168 = vunpack.c.h.b16 %v1455
    %v6169 = vunpack.c.l.b16 %v1456
    %v6170 = vunpack.c.h.b16 %v1456
    %v6171 = vunpack.c.l.b16 %v1457
    %v6172 = vunpack.c.h.b16 %v1457
    %v6173 = vunpack.c.l.b16 %v1458
    %v6174 = vunpack.c.h.b16 %v1458
    %v6175 = vunpack.c.l.b16 %v1459
    %v6176 = vunpack.c.h.b16 %v1459
    %v6177 = vunpack.c.l.b16 %v1460
    %v6178 = vunpack.c.h.b16 %v1460
    %v6179 = vunpack.c.l.b16 %v1461
    %v6180 = vunpack.c.h.b16 %v1461
    %v6181 = vunpack.c.l.b16 %v1462
    %v6182 = vunpack.c.h.b16 %v1462
    %v6183 = vunpack.c.l.b16 %v1463
    %v6184 = vunpack.c.h.b16 %v1463
    %v6185 = vunpack.c.l.b16 %v1464
    %v6186 = vunpack.c.h.b16 %v1464
    %v6187 = vunpack.c.l.b16 %v1465
    %v6188 = vunpack.c.h.b16 %v1465
    %v6189 = vunpack.c.l.b16 %v1466
    %v6190 = vunpack.c.h.b16 %v1466
    %v6191 = vunpack.c.l.b16 %v1467
    %v6192 = vunpack.c.h.b16 %v1467
    %v6193 = vunpack.c.l.b16 %v1468
    %v6194 = vunpack.c.h.b16 %v1468
    %v6195 = vunpack.c.l.b16 %v1469
    %v6196 = vunpack.c.h.b16 %v1469
    %v6197 = vunpack.c.l.b16 %v1470
    %v6198 = vunpack.c.h.b16 %v1470
    %v6199 = vunpack.c.l.b16 %v1471
    %v6200 = vunpack.c.h.b16 %v1471
    %v6201 = vunpack.c.l.b16 %v1472
    %v6202 = vunpack.c.h.b16 %v1472
    %v6203 = vunpack.c.l.b16 %v1473
    %v6204 = vunpack.c.h.b16 %v1473
    %v6205 = vunpack.c.l.b16 %v1474
    %v6206 = vunpack.c.h.b16 %v1474
    %v6207 = vunpack.c.l.b16 %v1475
    %v6208 = vunpack.c.h.b16 %v1475
    %v6209 = vunpack.c.l.b16 %v1476
    %v6210 = vunpack.c.h.b16 %v1476
    %v6211 = vunpack.c.l.b16 %v1477
    %v6212 = vunpack.c.h.b16 %v1477
    %v6213 = vunpack.c.l.b16 %v1478
    %v6214 = vunpack.c.h.b16 %v1478
    %v6215 = vunpack.c.l.b16 %v1479
    %v6216 = vunpack.c.h.b16 %v1479
    %v6217 = vunpack.c.l.b16 %v1480
    %v6218 = vunpack.c.h.b16 %v1480
    %v6219 = vunpack.c.l.b16 %v1481
    %v6220 = vunpack.c.h.b16 %v1481
    %v6221 = vunpack.c.l.b16 %v1482
    %v6222 = vunpack.c.h.b16 %v1482
    %v6223 = vunpack.c.l.b16 %v1483
    %v6224 = vunpack.c.h.b16 %v1483
    %v6225 = vunpack.c.l.b16 %v1484
    %v6226 = vunpack.c.h.b16 %v1484
    %v6227 = vunpack.c.l.b16 %v1485
    %v6228 = vunpack.c.h.b16 %v1485
    %v6229 = vunpack.c.l.b16 %v1486
    %v6230 = vunpack.c.h.b16 %v1486
    %v6231 = vunpack.c.l.b16 %v1487
    %v6232 = vunpack.c.h.b16 %v1487
    %v6233 = vunpack.c.l.b16 %v1488
    %v6234 = vunpack.c.h.b16 %v1488
    %v6235 = vunpack.c.l.b16 %v1489
    %v6236 = vunpack.c.h.b16 %v1489
    %v6237 = vunpack.c.l.b16 %v1490
    %v6238 = vunpack.c.h.b16 %v1490
    %v6239 = vunpack.c.l.b16 %v1491
    %v6240 = vunpack.c.h.b16 %v1491
    %v6241 = vunpack.c.l.b16 %v1492
    %v6242 = vunpack.c.h.b16 %v1492
    %v6243 = vunpack.c.l.b16 %v1493
    %v6244 = vunpack.c.h.b16 %v1493
    %v6245 = vunpack.c.l.b16 %v1494
    %v6246 = vunpack.c.h.b16 %v1494
    %v6247 = vunpack.c.l.b16 %v1495
    %v6248 = vunpack.c.h.b16 %v1495
    %v6249 = vunpack.c.l.b16 %v1496
    %v6250 = vunpack.c.h.b16 %v1496
    %v6251 = vunpack.c.l.b16 %v1497
    %v6252 = vunpack.c.h.b16 %v1497
    %v6253 = vunpack.c.l.b16 %v1498
    %v6254 = vunpack.c.h.b16 %v1498
    %v6255 = vunpack.c.l.b16 %v1499
    %v6256 = vunpack.c.h.b16 %v1499
    %v6257 = vunpack.c.l.b16 %v1500
    %v6258 = vunpack.c.h.b16 %v1500
    %v6259 = vunpack.c.l.b16 %v1501
    %v6260 = vunpack.c.h.b16 %v1501
    %v6261 = vunpack.c.l.b16 %v1502
    %v6262 = vunpack.c.h.b16 %v1502
    %v6263 = vunpack.c.l.b16 %v1503
    %v6264 = vunpack.c.h.b16 %v1503
    %v6265 = vunpack.c.l.b16 %v1504
    %v6266 = vunpack.c.h.b16 %v1504
    %v6267 = vunpack.c.l.b16 %v1505
    %v6268 = vunpack.c.h.b16 %v1505
    %v6269 = vunpack.c.l.b16 %v1506
    %v6270 = vunpack.c.h.b16 %v1506
    %v6271 = vunpack.c.l.b16 %v1507
    %v6272 = vunpack.c.h.b16 %v1507
    %v6273 = vunpack.c.l.b16 %v1508
    %v6274 = vunpack.c.h.b16 %v1508
    %v6275 = vunpack.c.l.b16 %v1509
    %v6276 = vunpack.c.h.b16 %v1509
    %v6277 = vunpack.c.l.b16 %v1510
    %v6278 = vunpack.c.h.b16 %v1510
    %v6279 = vunpack.c.l.b16 %v1511
    %v6280 = vunpack.c.h.b16 %v1511
    %v6281 = vunpack.c.l.b16 %v1512
    %v6282 = vunpack.c.h.b16 %v1512
    %v6283 = vunpack.c.l.b16 %v1513
    %v6284 = vunpack.c.h.b16 %v1513
    %v6285 = vunpack.c.l.b16 %v1514
    %v6286 = vunpack.c.h.b16 %v1514
    %v6287 = vunpack.c.l.b16 %v1515
    %v6288 = vunpack.c.h.b16 %v1515
    %v6289 = vunpack.c.l.b16 %v1516
    %v6290 = vunpack.c.h.b16 %v1516
    %v6291 = vunpack.c.l.b16 %v1517
    %v6292 = vunpack.c.h.b16 %v1517
    %v6293 = vunpack.c.l.b16 %v1518
    %v6294 = vunpack.c.h.b16 %v1518
    %v6295 = vunpack.c.l.b16 %v1519
    %v6296 = vunpack.c.h.b16 %v1519
    %v6297 = vunpack.c.l.b16 %v1520
    %v6298 = vunpack.c.h.b16 %v1520
    %v6299 = vunpack.c.l.b16 %v1521
    %v6300 = vunpack.c.h.b16 %v1521
    %v6301 = vunpack.c.l.b16 %v1522
    %v6302 = vunpack.c.h.b16 %v1522
    %v6303 = vunpack.c.l.b16 %v1523
    %v6304 = vunpack.c.h.b16 %v1523
    %v6305 = vunpack.c.l.b16 %v1524
    %v6306 = vunpack.c.h.b16 %v1524
    %v6307 = vunpack.c.l.b16 %v1525
    %v6308 = vunpack.c.h.b16 %v1525
    %v6309 = vunpack.c.l.b16 %v1526
    %v6310 = vunpack.c.h.b16 %v1526
    %v6311 = vunpack.c.l.b16 %v1527
    %v6312 = vunpack.c.h.b16 %v1527
    %v6313 = vunpack.c.l.b16 %v1528
    %v6314 = vunpack.c.h.b16 %v1528
    %v6315 = vunpack.c.l.b16 %v1529
    %v6316 = vunpack.c.h.b16 %v1529
    %v6317 = vunpack.c.l.b16 %v1530
    %v6318 = vunpack.c.h.b16 %v1530
    %v6319 = vunpack.c.l.b16 %v1531
    %v6320 = vunpack.c.h.b16 %v1531
    %v6321 = vunpack.c.l.b16 %v1532
    %v6322 = vunpack.c.h.b16 %v1532
    %v6323 = vunpack.c.l.b16 %v1533
    %v6324 = vunpack.c.h.b16 %v1533
    %v6325 = vunpack.c.l.b16 %v1534
    %v6326 = vunpack.c.h.b16 %v1534
    %v6327 = vunpack.c.l.b16 %v1535
    %v6328 = vunpack.c.h.b16 %v1535
    %v6329 = vunpack.c.l.b16 %v1536
    %v6330 = vunpack.c.h.b16 %v1536
    %v6331 = vunpack.c.l.b16 %v1537
    %v6332 = vunpack.c.h.b16 %v1537
    %v6333 = vunpack.c.l.b16 %v1538
    %v6334 = vunpack.c.h.b16 %v1538
    %v6335 = vunpack.c.l.b16 %v1539
    %v6336 = vunpack.c.h.b16 %v1539
    %v6337 = vunpack.c.l.b16 %v1540
    %v6338 = vunpack.c.h.b16 %v1540
    %v6339 = vunpack.c.l.b16 %v1541
    %v6340 = vunpack.c.h.b16 %v1541
    %v6341 = vunpack.c.l.b16 %v1542
    %v6342 = vunpack.c.h.b16 %v1542
    %v6343 = vunpack.c.l.b16 %v1543
    %v6344 = vunpack.c.h.b16 %v1543
    %v6345 = vunpack.c.l.b16 %v1544
    %v6346 = vunpack.c.h.b16 %v1544
    %v6347 = vunpack.c.l.b16 %v1545
    %v6348 = vunpack.c.h.b16 %v1545
    %v6349 = vunpack.c.l.b16 %v1546
    %v6350 = vunpack.c.h.b16 %v1546
    %v6351 = vunpack.c.l.b16 %v1547
    %v6352 = vunpack.c.h.b16 %v1547
    %v6353 = vunpack.c.l.b16 %v1548
    %v6354 = vunpack.c.h.b16 %v1548
    %v6355 = vunpack.c.l.b16 %v1549
    %v6356 = vunpack.c.h.b16 %v1549
    %v6357 = vunpack.c.l.b16 %v1550
    %v6358 = vunpack.c.h.b16 %v1550
    %v6359 = vunpack.c.l.b16 %v1551
    %v6360 = vunpack.c.h.b16 %v1551
    %v6361 = vunpack.c.l.b16 %v1552
    %v6362 = vunpack.c.h.b16 %v1552
    %v6363 = vunpack.c.l.b16 %v1553
    %v6364 = vunpack.c.h.b16 %v1553
    %v6365 = vunpack.c.l.b16 %v1554
    %v6366 = vunpack.c.h.b16 %v1554
    %v6367 = vunpack.c.l.b16 %v1555
    %v6368 = vunpack.c.h.b16 %v1555
    %v6369 = vunpack.c.l.b16 %v1556
    %v6370 = vunpack.c.h.b16 %v1556
    %v6371 = vunpack.c.l.b16 %v1557
    %v6372 = vunpack.c.h.b16 %v1557
    %v6373 = vunpack.c.l.b16 %v1558
    %v6374 = vunpack.c.h.b16 %v1558
    %v6375 = vunpack.c.l.b16 %v1559
    %v6376 = vunpack.c.h.b16 %v1559
    %v6377 = vunpack.c.l.b16 %v1560
    %v6378 = vunpack.c.h.b16 %v1560
    %v6379 = vunpack.c.l.b16 %v1561
    %v6380 = vunpack.c.h.b16 %v1561
    %v6381 = vunpack.c.l.b16 %v1562
    %v6382 = vunpack.c.h.b16 %v1562
    %v6383 = vunpack.c.l.b16 %v1563
    %v6384 = vunpack.c.h.b16 %v1563
    %v6385 = vunpack.c.l.b16 %v1564
    %v6386 = vunpack.c.h.b16 %v1564
    %v6387 = vunpack.c.l.b16 %v1565
    %v6388 = vunpack.c.h.b16 %v1565
    %v6389 = vunpack.c.l.b16 %v1566
    %v6390 = vunpack.c.h.b16 %v1566
    %v6391 = vunpack.c.l.b16 %v1567
    %v6392 = vunpack.c.h.b16 %v1567
    %v6393 = vunpack.c.l.b16 %v1568
    %v6394 = vunpack.c.h.b16 %v1568
    %v6395 = vunpack.c.l.b16 %v1569
    %v6396 = vunpack.c.h.b16 %v1569
    %v6397 = vunpack.c.l.b16 %v1570
    %v6398 = vunpack.c.h.b16 %v1570
    %v6399 = vunpack.c.l.b16 %v1571
    %v6400 = vunpack.c.h.b16 %v1571
    %v6401 = vunpack.c.l.b16 %v1572
    %v6402 = vunpack.c.h.b16 %v1572
    %v6403 = vunpack.c.l.b16 %v1573
    %v6404 = vunpack.c.h.b16 %v1573
    %v6405 = vunpack.c.l.b16 %v1574
    %v6406 = vunpack.c.h.b16 %v1574
    %v6407 = vunpack.c.l.b16 %v1575
    %v6408 = vunpack.c.h.b16 %v1575
    %v6409 = vunpack.c.l.b16 %v1576
    %v6410 = vunpack.c.h.b16 %v1576
    %v6411 = vunpack.c.l.b16 %v1577
    %v6412 = vunpack.c.h.b16 %v1577
    %v6413 = vunpack.c.l.b16 %v1578
    %v6414 = vunpack.c.h.b16 %v1578
    %v6415 = vunpack.c.l.b16 %v1579
    %v6416 = vunpack.c.h.b16 %v1579
    %v6417 = vunpack.c.l.b16 %v1580
    %v6418 = vunpack.c.h.b16 %v1580
    %v6419 = vunpack.c.l.b16 %v1581
    %v6420 = vunpack.c.h.b16 %v1581
    %v6421 = vunpack.c.l.b16 %v1582
    %v6422 = vunpack.c.h.b16 %v1582
    %v6423 = vunpack.c.l.b16 %v1583
    %v6424 = vunpack.c.h.b16 %v1583
    %v6425 = vunpack.c.l.b16 %v1584
    %v6426 = vunpack.c.h.b16 %v1584
    %v6427 = vunpack.c.l.b16 %v1585
    %v6428 = vunpack.c.h.b16 %v1585
    %v6429 = vunpack.c.l.b16 %v1586
    %v6430 = vunpack.c.h.b16 %v1586
    %v6431 = vunpack.c.l.b16 %v1587
    %v6432 = vunpack.c.h.b16 %v1587
    %v6433 = vunpack.c.l.b16 %v1588
    %v6434 = vunpack.c.h.b16 %v1588
    %v6435 = vunpack.c.l.b16 %v1589
    %v6436 = vunpack.c.h.b16 %v1589
    %v6437 = vunpack.c.l.b16 %v1590
    %v6438 = vunpack.c.h.b16 %v1590
    %v6439 = vunpack.c.l.b16 %v1591
    %v6440 = vunpack.c.h.b16 %v1591
    %v6441 = vunpack.c.l.b16 %v1592
    %v6442 = vunpack.c.h.b16 %v1592
    %v6443 = vunpack.c.l.b16 %v1593
    %v6444 = vunpack.c.h.b16 %v1593
    %v6445 = vunpack.c.l.b16 %v1594
    %v6446 = vunpack.c.h.b16 %v1594
    %v6447 = vunpack.c.l.b16 %v1595
    %v6448 = vunpack.c.h.b16 %v1595
    %v6449 = vunpack.c.l.b16 %v1596
    %v6450 = vunpack.c.h.b16 %v1596
    %v6451 = vunpack.c.l.b16 %v1597
    %v6452 = vunpack.c.h.b16 %v1597
    %v6453 = vunpack.c.l.b16 %v1598
    %v6454 = vunpack.c.h.b16 %v1598
    %v6455 = vunpack.c.l.b16 %v1599
    %v6456 = vunpack.c.h.b16 %v1599
    %v6457 = vunpack.c.l.b16 %v1600
    %v6458 = vunpack.c.h.b16 %v1600
    %v6459 = vunpack.c.l.b16 %v1601
    %v6460 = vunpack.c.h.b16 %v1601
    %v6461 = vunpack.c.l.b16 %v1602
    %v6462 = vunpack.c.h.b16 %v1602
    %v6463 = vunpack.c.l.b16 %v1603
    %v6464 = vunpack.c.h.b16 %v1603
    %v6465 = vunpack.c.l.b16 %v1604
    %v6466 = vunpack.c.h.b16 %v1604
    %v6467 = vunpack.c.l.b16 %v1605
    %v6468 = vunpack.c.h.b16 %v1605
    %v6469 = vunpack.c.l.b16 %v1606
    %v6470 = vunpack.c.h.b16 %v1606
    %v6471 = vunpack.c.l.b16 %v1607
    %v6472 = vunpack.c.h.b16 %v1607
    %v6473 = vunpack.c.l.b16 %v1608
    %v6474 = vunpack.c.h.b16 %v1608
    %v6475 = vunpack.c.l.b16 %v1609
    %v6476 = vunpack.c.h.b16 %v1609
    %v6477 = vunpack.c.l.b16 %v1610
    %v6478 = vunpack.c.h.b16 %v1610
    %v6479 = vunpack.c.l.b16 %v1611
    %v6480 = vunpack.c.h.b16 %v1611
    %v6481 = vunpack.c.l.b16 %v1612
    %v6482 = vunpack.c.h.b16 %v1612
    %v6483 = vunpack.c.l.b16 %v1613
    %v6484 = vunpack.c.h.b16 %v1613
    %v6485 = vunpack.c.l.b16 %v1614
    %v6486 = vunpack.c.h.b16 %v1614
    %v6487 = vunpack.c.l.b16 %v1615
    %v6488 = vunpack.c.h.b16 %v1615
    %v6489 = vunpack.c.l.b16 %v1616
    %v6490 = vunpack.c.h.b16 %v1616
    %v6491 = vunpack.c.l.b16 %v1617
    %v6492 = vunpack.c.h.b16 %v1617
    %v6493 = vunpack.c.l.b16 %v1618
    %v6494 = vunpack.c.h.b16 %v1618
    %v6495 = vunpack.c.l.b16 %v1619
    %v6496 = vunpack.c.h.b16 %v1619
    %v6497 = vunpack.c.l.b16 %v1620
    %v6498 = vunpack.c.h.b16 %v1620
    %v6499 = vunpack.c.l.b16 %v1621
    %v6500 = vunpack.c.h.b16 %v1621
    %v6501 = vunpack.c.l.b16 %v1622
    %v6502 = vunpack.c.h.b16 %v1622
    %v6503 = vunpack.c.l.b16 %v1623
    %v6504 = vunpack.c.h.b16 %v1623
    %v6505 = vunpack.c.l.b16 %v1624
    %v6506 = vunpack.c.h.b16 %v1624
    %v6507 = vunpack.c.l.b16 %v1625
    %v6508 = vunpack.c.h.b16 %v1625
    %v6509 = vunpack.c.l.b16 %v1626
    %v6510 = vunpack.c.h.b16 %v1626
    %v6511 = vunpack.c.l.b16 %v1627
    %v6512 = vunpack.c.h.b16 %v1627
    %v6513 = vunpack.c.l.b16 %v1628
    %v6514 = vunpack.c.h.b16 %v1628
    %v6515 = vunpack.c.l.b16 %v1629
    %v6516 = vunpack.c.h.b16 %v1629
    %v6517 = vunpack.c.l.b16 %v1630
    %v6518 = vunpack.c.h.b16 %v1630
    %v6519 = vunpack.c.l.b16 %v1631
    %v6520 = vunpack.c.h.b16 %v1631
    %v6521 = vunpack.c.l.b16 %v1632
    %v6522 = vunpack.c.h.b16 %v1632
    %v6523 = vunpack.c.l.b16 %v1633
    %v6524 = vunpack.c.h.b16 %v1633
    %v6525 = vunpack.c.l.b16 %v1634
    %v6526 = vunpack.c.h.b16 %v1634
    %v6527 = vunpack.c.l.b16 %v1635
    %v6528 = vunpack.c.h.b16 %v1635
    %v6529 = vunpack.c.l.b16 %v1636
    %v6530 = vunpack.c.h.b16 %v1636
    %v6531 = vunpack.c.l.b16 %v1637
    %v6532 = vunpack.c.h.b16 %v1637
    %v6533 = vunpack.c.l.b16 %v1638
    %v6534 = vunpack.c.h.b16 %v1638
    %v6535 = vunpack.c.l.b16 %v1639
    %v6536 = vunpack.c.h.b16 %v1639
    %v6537 = vunpack.c.l.b16 %v1640
    %v6538 = vunpack.c.h.b16 %v1640
    %v6539 = vunpack.c.l.b16 %v1641
    %v6540 = vunpack.c.h.b16 %v1641
    %v6541 = vunpack.c.l.b16 %v1642
    %v6542 = vunpack.c.h.b16 %v1642
    %v6543 = vunpack.c.l.b16 %v1643
    %v6544 = vunpack.c.h.b16 %v1643
    %v6545 = vunpack.c.l.b16 %v1644
    %v6546 = vunpack.c.h.b16 %v1644
    %v6547 = vunpack.c.l.b16 %v1645
    %v6548 = vunpack.c.h.b16 %v1645
    %v6549 = vunpack.c.l.b16 %v1646
    %v6550 = vunpack.c.h.b16 %v1646
    %v6551 = vunpack.c.l.b16 %v1647
    %v6552 = vunpack.c.h.b16 %v1647
    %v6553 = vunpack.c.l.b16 %v1648
    %v6554 = vunpack.c.h.b16 %v1648
    %v6555 = vunpack.c.l.b16 %v1649
    %v6556 = vunpack.c.h.b16 %v1649
    %v6557 = vunpack.c.l.b16 %v1650
    %v6558 = vunpack.c.h.b16 %v1650
    %v6559 = vunpack.c.l.b16 %v1651
    %v6560 = vunpack.c.h.b16 %v1651
    %v6561 = vunpack.c.l.b16 %v1652
    %v6562 = vunpack.c.h.b16 %v1652
    %v6563 = vunpack.c.l.b16 %v1653
    %v6564 = vunpack.c.h.b16 %v1653
    %v6565 = vunpack.c.l.b16 %v1654
    %v6566 = vunpack.c.h.b16 %v1654
    %v6567 = vunpack.c.l.b16 %v1655
    %v6568 = vunpack.c.h.b16 %v1655
    %v6569 = vunpack.c.l.b16 %v1656
    %v6570 = vunpack.c.h.b16 %v1656
    %v6571 = vunpack.c.l.b16 %v1657
    %v6572 = vunpack.c.h.b16 %v1657
    %v6573 = vunpack.c.l.b16 %v1658
    %v6574 = vunpack.c.h.b16 %v1658
    %v6575 = vunpack.c.l.b16 %v1659
    %v6576 = vunpack.c.h.b16 %v1659
    %v6577 = vunpack.c.l.b16 %v1660
    %v6578 = vunpack.c.h.b16 %v1660
    %v6579 = vunpack.c.l.b16 %v1661
    %v6580 = vunpack.c.h.b16 %v1661
    %v6581 = vunpack.c.l.b16 %v1662
    %v6582 = vunpack.c.h.b16 %v1662
    %v6583 = vunpack.c.l.b16 %v1663
    %v6584 = vunpack.c.h.b16 %v1663
    %v6585 = vunpack.c.l.b16 %v1664
    %v6586 = vunpack.c.h.b16 %v1664
    %v6587 = vunpack.c.l.b16 %v1665
    %v6588 = vunpack.c.h.b16 %v1665
    %v6589 = vunpack.c.l.b16 %v1666
    %v6590 = vunpack.c.h.b16 %v1666
    %v6591 = vunpack.c.l.b16 %v1667
    %v6592 = vunpack.c.h.b16 %v1667
    %v6593 = vunpack.c.l.b16 %v1668
    %v6594 = vunpack.c.h.b16 %v1668
    %v6595 = vunpack.c.l.b16 %v1669
    %v6596 = vunpack.c.h.b16 %v1669
    %v6597 = vunpack.c.l.b16 %v1670
    %v6598 = vunpack.c.h.b16 %v1670
    %v6599 = vunpack.c.l.b16 %v1671
    %v6600 = vunpack.c.h.b16 %v1671
    %v6601 = vunpack.c.l.b16 %v1672
    %v6602 = vunpack.c.h.b16 %v1672
    %v6603 = vunpack.c.l.b16 %v1673
    %v6604 = vunpack.c.h.b16 %v1673
    %v6605 = vunpack.c.l.b16 %v1674
    %v6606 = vunpack.c.h.b16 %v1674
    %v6607 = vunpack.c.l.b16 %v1675
    %v6608 = vunpack.c.h.b16 %v1675
    %v6609 = vunpack.c.l.b16 %v1676
    %v6610 = vunpack.c.h.b16 %v1676
    %v6611 = vunpack.c.l.b16 %v1677
    %v6612 = vunpack.c.h.b16 %v1677
    %v6613 = vunpack.c.l.b16 %v1678
    %v6614 = vunpack.c.h.b16 %v1678
    %v6615 = vunpack.c.l.b16 %v1679
    %v6616 = vunpack.c.h.b16 %v1679
    %v6617 = vunpack.c.l.b16 %v1680
    %v6618 = vunpack.c.h.b16 %v1680
    %v6619 = vunpack.c.l.b16 %v1681
    %v6620 = vunpack.c.h.b16 %v1681
    %v6621 = vunpack.c.l.b16 %v1682
    %v6622 = vunpack.c.h.b16 %v1682
    %v6623 = vunpack.c.l.b16 %v1683
    %v6624 = vunpack.c.h.b16 %v1683
    %v6625 = vunpack.c.l.b16 %v1684
    %v6626 = vunpack.c.h.b16 %v1684
    %v6627 = vunpack.c.l.b16 %v1685
    %v6628 = vunpack.c.h.b16 %v1685
    %v6629 = vunpack.c.l.b16 %v1686
    %v6630 = vunpack.c.h.b16 %v1686
    %v6631 = vunpack.c.l.b16 %v1687
    %v6632 = vunpack.c.h.b16 %v1687
    %v6633 = vunpack.c.l.b16 %v1688
    %v6634 = vunpack.c.h.b16 %v1688
    %v6635 = vunpack.c.l.b16 %v1689
    %v6636 = vunpack.c.h.b16 %v1689
    %v6637 = vunpack.c.l.b16 %v1690
    %v6638 = vunpack.c.h.b16 %v1690
    %v6639 = vunpack.c.l.b16 %v1691
    %v6640 = vunpack.c.h.b16 %v1691
    %v6641 = vunpack.c.l.b16 %v1692
    %v6642 = vunpack.c.h.b16 %v1692
    %v6643 = vunpack.c.l.b16 %v1693
    %v6644 = vunpack.c.h.b16 %v1693
    %v6645 = vunpack.c.l.b16 %v1694
    %v6646 = vunpack.c.h.b16 %v1694
    %v6647 = vunpack.c.l.b16 %v1695
    %v6648 = vunpack.c.h.b16 %v1695
    %v6649 = vunpack.c.l.b16 %v1696
    %v6650 = vunpack.c.h.b16 %v1696
    %v6651 = vunpack.c.l.b16 %v1697
    %v6652 = vunpack.c.h.b16 %v1697
    %v6653 = vunpack.c.l.b16 %v1698
    %v6654 = vunpack.c.h.b16 %v1698
    %v6655 = vpack.c.b16 %v3585, %v3583
    %v6656 = vpack.c.b16 %v3586, %v3584
    %v6657 = vpack.c.b16 %v3589, %v3587
    %v6658 = vpack.c.b16 %v3590, %v3588
    %v6659 = vpack.c.b16 %v3593, %v3591
    %v6660 = vpack.c.b16 %v3594, %v3592
    %v6661 = vpack.c.b16 %v3597, %v3595
    %v6662 = vpack.c.b16 %v3598, %v3596
    %v6663 = vpack.c.b16 %v3601, %v3599
    %v6664 = vpack.c.b16 %v3602, %v3600
    %v6665 = vpack.c.b16 %v3605, %v3603
    %v6666 = vpack.c.b16 %v3606, %v3604
    %v6667 = vpack.c.b16 %v3609, %v3607
    %v6668 = vpack.c.b16 %v3610, %v3608
    %v6669 = vpack.c.b16 %v3613, %v3611
    %v6670 = vpack.c.b16 %v3614, %v3612
    %v6671 = vpack.c.b16 %v3617, %v3615
    %v6672 = vpack.c.b16 %v3618, %v3616
    %v6673 = vpack.c.b16 %v3621, %v3619
    %v6674 = vpack.c.b16 %v3622, %v3620
    %v6675 = vpack.c.b16 %v3625, %v3623
    %v6676 = vpack.c.b16 %v3626, %v3624
    %v6677 = vpack.c.b16 %v3629, %v3627
    %v6678 = vpack.c.b16 %v3630, %v3628
    %v6679 = vpack.c.b16 %v3633, %v3631
    %v6680 = vpack.c.b16 %v3634, %v3632
    %v6681 = vpack.c.b16 %v3637, %v3635
    %v6682 = vpack.c.b16 %v3638, %v3636
    %v6683 = vpack.c.b16 %v3641, %v3639
    %v6684 = vpack.c.b16 %v3642, %v3640
    %v6685 = vpack.c.b16 %v3645, %v3643
    %v6686 = vpack.c.b16 %v3646, %v3644
    %v6687 = vpack.c.b16 %v3649, %v3647
    %v6688 = vpack.c.b16 %v3650, %v3648
    %v6689 = vpack.c.b16 %v3653, %v3651
    %v6690 = vpack.c.b16 %v3654, %v3652
    %v6691 = vpack.c.b16 %v3657, %v3655
    %v6692 = vpack.c.b16 %v3658, %v3656
    %v6693 = vpack.c.b16 %v3661, %v3659
    %v6694 = vpack.c.b16 %v3662, %v3660
    %v6695 = vpack.c.b16 %v3665, %v3663
    %v6696 = vpack.c.b16 %v3666, %v3664
    %v6697 = vpack.c.b16 %v3669, %v3667
    %v6698 = vpack.c.b16 %v3670, %v3668
    %v6699 = vpack.c.b16 %v3673, %v3671
    %v6700 = vpack.c.b16 %v3674, %v3672
    %v6701 = vpack.c.b16 %v3677, %v3675
    %v6702 = vpack.c.b16 %v3678, %v3676
    %v6703 = vpack.c.b16 %v3681, %v3679
    %v6704 = vpack.c.b16 %v3682, %v3680
    %v6705 = vpack.c.b16 %v3685, %v3683
    %v6706 = vpack.c.b16 %v3686, %v3684
    %v6707 = vpack.c.b16 %v3689, %v3687
    %v6708 = vpack.c.b16 %v3690, %v3688
    %v6709 = vpack.c.b16 %v3693, %v3691
    %v6710 = vpack.c.b16 %v3694, %v3692
    %v6711 = vpack.c.b16 %v3697, %v3695
    %v6712 = vpack.c.b16 %v3698, %v3696
    %v6713 = vpack.c.b16 %v3701, %v3699
    %v6714 = vpack.c.b16 %v3702, %v3700
    %v6715 = vpack.c.b16 %v3705, %v3703
    %v6716 = vpack.c.b16 %v3706, %v3704
    %v6717 = vpack.c.b16 %v3709, %v3707
    %v6718 = vpack.c.b16 %v3710, %v3708
    %v6719 = vpack.c.b16 %v3713, %v3711
    %v6720 = vpack.c.b16 %v3714, %v3712
    %v6721 = vpack.c.b16 %v3717, %v3715
    %v6722 = vpack.c.b16 %v3718, %v3716
    %v6723 = vpack.c.b16 %v3721, %v3719
    %v6724 = vpack.c.b16 %v3722, %v3720
    %v6725 = vpack.c.b16 %v3725, %v3723
    %v6726 = vpack.c.b16 %v3726, %v3724
    %v6727 = vpack.c.b16 %v3729, %v3727
    %v6728 = vpack.c.b16 %v3730, %v3728
    %v6729 = vpack.c.b16 %v3733, %v3731
    %v6730 = vpack.c.b16 %v3734, %v3732
    %v6731 = vpack.c.b16 %v3737, %v3735
    %v6732 = vpack.c.b16 %v3738, %v3736
    %v6733 = vpack.c.b16 %v3741, %v3739
    %v6734 = vpack.c.b16 %v3742, %v3740
    %v6735 = vpack.c.b16 %v3745, %v3743
    %v6736 = vpack.c.b16 %v3746, %v3744
    %v6737 = vpack.c.b16 %v3749, %v3747
    %v6738 = vpack.c.b16 %v3750, %v3748
    %v6739 = vpack.c.b16 %v3753, %v3751
    %v6740 = vpack.c.b16 %v3754, %v3752
    %v6741 = vpack.c.b16 %v3757, %v3755
    %v6742 = vpack.c.b16 %v3758, %v3756
    %v6743 = vpack.c.b16 %v3761, %v3759
    %v6744 = vpack.c.b16 %v3762, %v3760
    %v6745 = vpack.c.b16 %v3765, %v3763
    %v6746 = vpack.c.b16 %v3766, %v3764
    %v6747 = vpack.c.b16 %v3769, %v3767
    %v6748 = vpack.c.b16 %v3770, %v3768
    %v6749 = vpack.c.b16 %v3773, %v3771
    %v6750 = vpack.c.b16 %v3774, %v3772
    %v6751 = vpack.c.b16 %v3777, %v3775
    %v6752 = vpack.c.b16 %v3778, %v3776
    %v6753 = vpack.c.b16 %v3781, %v3779
    %v6754 = vpack.c.b16 %v3782, %v3780
    %v6755 = vpack.c.b16 %v3785, %v3783
    %v6756 = vpack.c.b16 %v3786, %v3784
    %v6757 = vpack.c.b16 %v3789, %v3787
    %v6758 = vpack.c.b16 %v3790, %v3788
    %v6759 = vpack.c.b16 %v3793, %v3791
    %v6760 = vpack.c.b16 %v3794, %v3792
    %v6761 = vpack.c.b16 %v3797, %v3795
    %v6762 = vpack.c.b16 %v3798, %v3796
    %v6763 = vpack.c.b16 %v3801, %v3799
    %v6764 = vpack.c.b16 %v3802, %v3800
    %v6765 = vpack.c.b16 %v3805, %v3803
    %v6766 = vpack.c.b16 %v3806, %v3804
    %v6767 = vpack.c.b16 %v3809, %v3807
    %v6768 = vpack.c.b16 %v3810, %v3808
    %v6769 = vpack.c.b16 %v3813, %v3811
    %v6770 = vpack.c.b16 %v3814, %v3812
    %v6771 = vpack.c.b16 %v3817, %v3815
    %v6772 = vpack.c.b16 %v3818, %v3816
    %v6773 = vpack.c.b16 %v3821, %v3819
    %v6774 = vpack.c.b16 %v3822, %v3820
    %v6775 = vpack.c.b16 %v3825, %v3823
    %v6776 = vpack.c.b16 %v3826, %v3824
    %v6777 = vpack.c.b16 %v3829, %v3827
    %v6778 = vpack.c.b16 %v3830, %v3828
    %v6779 = vpack.c.b16 %v3833, %v3831
    %v6780 = vpack.c.b16 %v3834, %v3832
    %v6781 = vpack.c.b16 %v3837, %v3835
    %v6782 = vpack.c.b16 %v3838, %v3836
    %v6783 = vpack.c.b16 %v3841, %v3839
    %v6784 = vpack.c.b16 %v3842, %v3840
    %v6785 = vpack.c.b16 %v3845, %v3843
    %v6786 = vpack.c.b16 %v3846, %v3844
    %v6787 = vpack.c.b16 %v3849, %v3847
    %v6788 = vpack.c.b16 %v3850, %v3848
    %v6789 = vpack.c.b16 %v3853, %v3851
    %v6790 = vpack.c.b16 %v3854, %v3852
    %v6791 = vpack.c.b16 %v3857, %v3855
    %v6792 = vpack.c.b16 %v3858, %v3856
    %v6793 = vpack.c.b16 %v3861, %v3859
    %v6794 = vpack.c.b16 %v3862, %v3860
    %v6795 = vpack.c.b16 %v3865, %v3863
    %v6796 = vpack.c.b16 %v3866, %v3864
    %v6797 = vpack.c.b16 %v3869, %v3867
    %v6798 = vpack.c.b16 %v3870, %v3868
    %v6799 = vpack.c.b16 %v3873, %v3871
    %v6800 = vpack.c.b16 %v3874, %v3872
    %v6801 = vpack.c.b16 %v3877, %v3875
    %v6802 = vpack.c.b16 %v3878, %v3876
    %v6803 = vpack.c.b16 %v3881, %v3879
    %v6804 = vpack.c.b16 %v3882, %v3880
    %v6805 = vpack.c.b16 %v3885, %v3883
    %v6806 = vpack.c.b16 %v3886, %v3884
    %v6807 = vpack.c.b16 %v3889, %v3887
    %v6808 = vpack.c.b16 %v3890, %v3888
    %v6809 = vpack.c.b16 %v3893, %v3891
    %v6810 = vpack.c.b16 %v3894, %v3892
    %v6811 = vpack.c.b16 %v3897, %v3895
    %v6812 = vpack.c.b16 %v3898, %v3896
    %v6813 = vpack.c.b16 %v3901, %v3899
    %v6814 = vpack.c.b16 %v3902, %v3900
    %v6815 = vpack.c.b16 %v3905, %v3903
    %v6816 = vpack.c.b16 %v3906, %v3904
    %v6817 = vpack.c.b16 %v3909, %v3907
    %v6818 = vpack.c.b16 %v3910, %v3908
    %v6819 = vpack.c.b16 %v3913, %v3911
    %v6820 = vpack.c.b16 %v3914, %v3912
    %v6821 = vpack.c.b16 %v3917, %v3915
    %v6822 = vpack.c.b16 %v3918, %v3916
    %v6823 = vpack.c.b16 %v3921, %v3919
    %v6824 = vpack.c.b16 %v3922, %v3920
    %v6825 = vpack.c.b16 %v3925, %v3923
    %v6826 = vpack.c.b16 %v3926, %v3924
    %v6827 = vpack.c.b16 %v3929, %v3927
    %v6828 = vpack.c.b16 %v3930, %v3928
    %v6829 = vpack.c.b16 %v3933, %v3931
    %v6830 = vpack.c.b16 %v3934, %v3932
    %v6831 = vpack.c.b16 %v3937, %v3935
    %v6832 = vpack.c.b16 %v3938, %v3936
    %v6833 = vpack.c.b16 %v3941, %v3939
    %v6834 = vpack.c.b16 %v3942, %v3940
    %v6835 = vpack.c.b16 %v3945, %v3943
    %v6836 = vpack.c.b16 %v3946, %v3944
    %v6837 = vpack.c.b16 %v3949, %v3947
    %v6838 = vpack.c.b16 %v3950, %v3948
    %v6839 = vpack.c.b16 %v3953, %v3951
    %v6840 = vpack.c.b16 %v3954, %v3952
    %v6841 = vpack.c.b16 %v3957, %v3955
    %v6842 = vpack.c.b16 %v3958, %v3956
    %v6843 = vpack.c.b16 %v3961, %v3959
    %v6844 = vpack.c.b16 %v3962, %v3960
    %v6845 = vpack.c.b16 %v3965, %v3963
    %v6846 = vpack.c.b16 %v3966, %v3964
    %v6847 = vpack.c.b16 %v3969, %v3967
    %v6848 = vpack.c.b16 %v3970, %v3968
    %v6849 = vpack.c.b16 %v3973, %v3971
    %v6850 = vpack.c.b16 %v3974, %v3972
    %v6851 = vpack.c.b16 %v3977, %v3975
    %v6852 = vpack.c.b16 %v3978, %v3976
    %v6853 = vpack.c.b16 %v3981, %v3979
    %v6854 = vpack.c.b16 %v3982, %v3980
    %v6855 = vpack.c.b16 %v3985, %v3983
    %v6856 = vpack.c.b16 %v3986, %v3984
    %v6857 = vpack.c.b16 %v3989, %v3987
    %v6858 = vpack.c.b16 %v3990, %v3988
    %v6859 = vpack.c.b16 %v3993, %v3991
    %v6860 = vpack.c.b16 %v3994, %v3992
    %v6861 = vpack.c.b16 %v3997, %v3995
    %v6862 = vpack.c.b16 %v3998, %v3996
    %v6863 = vpack.c.b16 %v4001, %v3999
    %v6864 = vpack.c.b16 %v4002, %v4000
    %v6865 = vpack.c.b16 %v4005, %v4003
    %v6866 = vpack.c.b16 %v4006, %v4004
    %v6867 = vpack.c.b16 %v4009, %v4007
    %v6868 = vpack.c.b16 %v4010, %v4008
    %v6869 = vpack.c.b16 %v4013, %v4011
    %v6870 = vpack.c.b16 %v4014, %v4012
    %v6871 = vpack.c.b16 %v4017, %v4015
    %v6872 = vpack.c.b16 %v4018, %v4016
    %v6873 = vpack.c.b16 %v4021, %v4019
    %v6874 = vpack.c.b16 %v4022, %v4020
    %v6875 = vpack.c.b16 %v4025, %v4023
    %v6876 = vpack.c.b16 %v4026, %v4024
    %v6877 = vpack.c.b16 %v4029, %v4027
    %v6878 = vpack.c.b16 %v4030, %v4028
    %v6879 = vpack.c.b16 %v4033, %v4031
    %v6880 = vpack.c.b16 %v4034, %v4032
    %v6881 = vpack.c.b16 %v4037, %v4035
    %v6882 = vpack.c.b16 %v4038, %v4036
    %v6883 = vpack.c.b16 %v4041, %v4039
    %v6884 = vpack.c.b16 %v4042, %v4040
    %v6885 = vpack.c.b16 %v4045, %v4043
    %v6886 = vpack.c.b16 %v4046, %v4044
    %v6887 = vpack.c.b16 %v4049, %v4047
    %v6888 = vpack.c.b16 %v4050, %v4048
    %v6889 = vpack.c.b16 %v4053, %v4051
    %v6890 = vpack.c.b16 %v4054, %v4052
    %v6891 = vpack.c.b16 %v4057, %v4055
    %v6892 = vpack.c.b16 %v4058, %v4056
    %v6893 = vpack.c.b16 %v4061, %v4059
    %v6894 = vpack.c.b16 %v4062, %v4060
    %v6895 = vpack.c.b16 %v4065, %v4063
    %v6896 = vpack.c.b16 %v4066, %v4064
    %v6897 = vpack.c.b16 %v4069, %v4067
    %v6898 = vpack.c.b16 %v4070, %v4068
    %v6899 = vpack.c.b16 %v4073, %v4071
    %v6900 = vpack.c.b16 %v4074, %v4072
    %v6901 = vpack.c.b16 %v4077, %v4075
    %v6902 = vpack.c.b16 %v4078, %v4076
    %v6903 = vpack.c.b16 %v4081, %v4079
    %v6904 = vpack.c.b16 %v4082, %v4080
    %v6905 = vpack.c.b16 %v4085, %v4083
    %v6906 = vpack.c.b16 %v4086, %v4084
    %v6907 = vpack.c.b16 %v4089, %v4087
    %v6908 = vpack.c.b16 %v4090, %v4088
    %v6909 = vpack.c.b16 %v4093, %v4091
    %v6910 = vpack.c.b16 %v4094, %v4092
    %v6911 = vpack.c.b16 %v4097, %v4095
    %v6912 = vpack.c.b16 %v4098, %v4096
    %v6913 = vpack.c.b16 %v4101, %v4099
    %v6914 = vpack.c.b16 %v4102, %v4100
    %v6915 = vpack.c.b16 %v4105, %v4103
    %v6916 = vpack.c.b16 %v4106, %v4104
    %v6917 = vpack.c.b16 %v4109, %v4107
    %v6918 = vpack.c.b16 %v4110, %v4108
    %v6919 = vpack.c.b16 %v4113, %v4111
    %v6920 = vpack.c.b16 %v4114, %v4112
    %v6921 = vpack.c.b16 %v4117, %v4115
    %v6922 = vpack.c.b16 %v4118, %v4116
    %v6923 = vpack.c.b16 %v4121, %v4119
    %v6924 = vpack.c.b16 %v4122, %v4120
    %v6925 = vpack.c.b16 %v4125, %v4123
    %v6926 = vpack.c.b16 %v4126, %v4124
    %v6927 = vpack.c.b16 %v4129, %v4127
    %v6928 = vpack.c.b16 %v4130, %v4128
    %v6929 = vpack.c.b16 %v4133, %v4131
    %v6930 = vpack.c.b16 %v4134, %v4132
    %v6931 = vpack.c.b16 %v4137, %v4135
    %v6932 = vpack.c.b16 %v4138, %v4136
    %v6933 = vpack.c.b16 %v4141, %v4139
    %v6934 = vpack.c.b16 %v4142, %v4140
    %v6935 = vpack.c.b16 %v4145, %v4143
    %v6936 = vpack.c.b16 %v4146, %v4144
    %v6937 = vpack.c.b16 %v4149, %v4147
    %v6938 = vpack.c.b16 %v4150, %v4148
    %v6939 = vpack.c.b16 %v4153, %v4151
    %v6940 = vpack.c.b16 %v4154, %v4152
    %v6941 = vpack.c.b16 %v4157, %v4155
    %v6942 = vpack.c.b16 %v4158, %v4156
    %v6943 = vpack.c.b16 %v4161, %v4159
    %v6944 = vpack.c.b16 %v4162, %v4160
    %v6945 = vpack.c.b16 %v4165, %v4163
    %v6946 = vpack.c.b16 %v4166, %v4164
    %v6947 = vpack.c.b16 %v4169, %v4167
    %v6948 = vpack.c.b16 %v4170, %v4168
    %v6949 = vpack.c.b16 %v4173, %v4171
    %v6950 = vpack.c.b16 %v4174, %v4172
    %v6951 = vpack.c.b16 %v4177, %v4175
    %v6952 = vpack.c.b16 %v4178, %v4176
    %v6953 = vpack.c.b16 %v4181, %v4179
    %v6954 = vpack.c.b16 %v4182, %v4180
    %v6955 = vpack.c.b16 %v4185, %v4183
    %v6956 = vpack.c.b16 %v4186, %v4184
    %v6957 = vpack.c.b16 %v4189, %v4187
    %v6958 = vpack.c.b16 %v4190, %v4188
    %v6959 = vpack.c.b16 %v4193, %v4191
    %v6960 = vpack.c.b16 %v4194, %v4192
    %v6961 = vpack.c.b16 %v4197, %v4195
    %v6962 = vpack.c.b16 %v4198, %v4196
    %v6963 = vpack.c.b16 %v4201, %v4199
    %v6964 = vpack.c.b16 %v4202, %v4200
    %v6965 = vpack.c.b16 %v4205, %v4203
    %v6966 = vpack.c.b16 %v4206, %v4204
    %v6967 = vpack.c.b16 %v4209, %v4207
    %v6968 = vpack.c.b16 %v4210, %v4208
    %v6969 = vpack.c.b16 %v4213, %v4211
    %v6970 = vpack.c.b16 %v4214, %v4212
    %v6971 = vpack.c.b16 %v4217, %v4215
    %v6972 = vpack.c.b16 %v4218, %v4216
    %v6973 = vpack.c.b16 %v4221, %v4219
    %v6974 = vpack.c.b16 %v4222, %v4220
    %v6975 = vpack.c.b16 %v4225, %v4223
    %v6976 = vpack.c.b16 %v4226, %v4224
    %v6977 = vpack.c.b16 %v4229, %v4227
    %v6978 = vpack.c.b16 %v4230, %v4228
    %v6979 = vpack.c.b16 %v4233, %v4231
    %v6980 = vpack.c.b16 %v4234, %v4232
    %v6981 = vpack.c.b16 %v4237, %v4235
    %v6982 = vpack.c.b16 %v4238, %v4236
    %v6983 = vpack.c.b16 %v4241, %v4239
    %v6984 = vpack.c.b16 %v4242, %v4240
    %v6985 = vpack.c.b16 %v4245, %v4243
    %v6986 = vpack.c.b16 %v4246, %v4244
    %v6987 = vpack.c.b16 %v4249, %v4247
    %v6988 = vpack.c.b16 %v4250, %v4248
    %v6989 = vpack.c.b16 %v4253, %v4251
    %v6990 = vpack.c.b16 %v4254, %v4252
    %v6991 = vpack.c.b16 %v4257, %v4255
    %v6992 = vpack.c.b16 %v4258, %v4256
    %v6993 = vpack.c.b16 %v4261, %v4259
    %v6994 = vpack.c.b16 %v4262, %v4260
    %v6995 = vpack.c.b16 %v4265, %v4263
    %v6996 = vpack.c.b16 %v4266, %v4264
    %v6997 = vpack.c.b16 %v4269, %v4267
    %v6998 = vpack.c.b16 %v4270, %v4268
    %v6999 = vpack.c.b16 %v4273, %v4271
    %v7000 = vpack.c.b16 %v4274, %v4272
    %v7001 = vpack.c.b16 %v4277, %v4275
    %v7002 = vpack.c.b16 %v4278, %v4276
    %v7003 = vpack.c.b16 %v4281, %v4279
    %v7004 = vpack.c.b16 %v4282, %v4280
    %v7005 = vpack.c.b16 %v4285, %v4283
    %v7006 = vpack.c.b16 %v4286, %v4284
    %v7007 = vpack.c.b16 %v4289, %v4287
    %v7008 = vpack.c.b16 %v4290, %v4288
    %v7009 = vpack.c.b16 %v4293, %v4291
    %v7010 = vpack.c.b16 %v4294, %v4292
    %v7011 = vpack.c.b16 %v4297, %v4295
    %v7012 = vpack.c.b16 %v4298, %v4296
    %v7013 = vpack.c.b16 %v4301, %v4299
    %v7014 = vpack.c.b16 %v4302, %v4300
    %v7015 = vpack.c.b16 %v4305, %v4303
    %v7016 = vpack.c.b16 %v4306, %v4304
    %v7017 = vpack.c.b16 %v4309, %v4307
    %v7018 = vpack.c.b16 %v4310, %v4308
    %v7019 = vpack.c.b16 %v4313, %v4311
    %v7020 = vpack.c.b16 %v4314, %v4312
    %v7021 = vpack.c.b16 %v4317, %v4315
    %v7022 = vpack.c.b16 %v4318, %v4316
    %v7023 = vpack.c.b16 %v4321, %v4319
    %v7024 = vpack.c.b16 %v4322, %v4320
    %v7025 = vpack.c.b16 %v4325, %v4323
    %v7026 = vpack.c.b16 %v4326, %v4324
    %v7027 = vpack.c.b16 %v4329, %v4327
    %v7028 = vpack.c.b16 %v4330, %v4328
    %v7029 = vpack.c.b16 %v4333, %v4331
    %v7030 = vpack.c.b16 %v4334, %v4332
    %v7031 = vpack.c.b16 %v4337, %v4335
    %v7032 = vpack.c.b16 %v4338, %v4336
    %v7033 = vpack.c.b16 %v4341, %v4339
    %v7034 = vpack.c.b16 %v4342, %v4340
    %v7035 = vpack.c.b16 %v4345, %v4343
    %v7036 = vpack.c.b16 %v4346, %v4344
    %v7037 = vpack.c.b16 %v4349, %v4347
    %v7038 = vpack.c.b16 %v4350, %v4348
    %v7039 = vpack.c.b16 %v4353, %v4351
    %v7040 = vpack.c.b16 %v4354, %v4352
    %v7041 = vpack.c.b16 %v4357, %v4355
    %v7042 = vpack.c.b16 %v4358, %v4356
    %v7043 = vpack.c.b16 %v4361, %v4359
    %v7044 = vpack.c.b16 %v4362, %v4360
    %v7045 = vpack.c.b16 %v4365, %v4363
    %v7046 = vpack.c.b16 %v4366, %v4364
    %v7047 = vpack.c.b16 %v4369, %v4367
    %v7048 = vpack.c.b16 %v4370, %v4368
    %v7049 = vpack.c.b16 %v4373, %v4371
    %v7050 = vpack.c.b16 %v4374, %v4372
    %v7051 = vpack.c.b16 %v4377, %v4375
    %v7052 = vpack.c.b16 %v4378, %v4376
    %v7053 = vpack.c.b16 %v4381, %v4379
    %v7054 = vpack.c.b16 %v4382, %v4380
    %v7055 = vpack.c.b16 %v4385, %v4383
    %v7056 = vpack.c.b16 %v4386, %v4384
    %v7057 = vpack.c.b16 %v4389, %v4387
    %v7058 = vpack.c.b16 %v4390, %v4388
    %v7059 = vpack.c.b16 %v4393, %v4391
    %v7060 = vpack.c.b16 %v4394, %v4392
    %v7061 = vpack.c.b16 %v4397, %v4395
    %v7062 = vpack.c.b16 %v4398, %v4396
    %v7063 = vpack.c.b16 %v4401, %v4399
    %v7064 = vpack.c.b16 %v4402, %v4400
    %v7065 = vpack.c.b16 %v4405, %v4403
    %v7066 = vpack.c.b16 %v4406, %v4404
    %v7067 = vpack.c.b16 %v4409, %v4407
    %v7068 = vpack.c.b16 %v4410, %v4408
    %v7069 = vpack.c.b16 %v4413, %v4411
    %v7070 = vpack.c.b16 %v4414, %v4412
    %v7071 = vpack.c.b16 %v4417, %v4415
    %v7072 = vpack.c.b16 %v4418, %v4416
    %v7073 = vpack.c.b16 %v4421, %v4419
    %v7074 = vpack.c.b16 %v4422, %v4420
    %v7075 = vpack.c.b16 %v4425, %v4423
    %v7076 = vpack.c.b16 %v4426, %v4424
    %v7077 = vpack.c.b16 %v4429, %v4427
    %v7078 = vpack.c.b16 %v4430, %v4428
    %v7079 = vpack.c.b16 %v4433, %v4431
    %v7080 = vpack.c.b16 %v4434, %v4432
    %v7081 = vpack.c.b16 %v4437, %v4435
    %v7082 = vpack.c.b16 %v4438, %v4436
    %v7083 = vpack.c.b16 %v4441, %v4439
    %v7084 = vpack.c.b16 %v4442, %v4440
    %v7085 = vpack.c.b16 %v4445, %v4443
    %v7086 = vpack.c.b16 %v4446, %v4444
    %v7087 = vpack.c.b16 %v4449, %v4447
    %v7088 = vpack.c.b16 %v4450, %v4448
    %v7089 = vpack.c.b16 %v4453, %v4451
    %v7090 = vpack.c.b16 %v4454, %v4452
    %v7091 = vpack.c.b16 %v4457, %v4455
    %v7092 = vpack.c.b16 %v4458, %v4456
    %v7093 = vpack.c.b16 %v4461, %v4459
    %v7094 = vpack.c.b16 %v4462, %v4460
    %v7095 = vpack.c.b16 %v4465, %v4463
    %v7096 = vpack.c.b16 %v4466, %v4464
    %v7097 = vpack.c.b16 %v4469, %v4467
    %v7098 = vpack.c.b16 %v4470, %v4468
    %v7099 = vpack.c.b16 %v4473, %v4471
    %v7100 = vpack.c.b16 %v4474, %v4472
    %v7101 = vpack.c.b16 %v4477, %v4475
    %v7102 = vpack.c.b16 %v4478, %v4476
    %v7103 = vpack.c.b16 %v4481, %v4479
    %v7104 = vpack.c.b16 %v4482, %v4480
    %v7105 = vpack.c.b16 %v4485, %v4483
    %v7106 = vpack.c.b16 %v4486, %v4484
    %v7107 = vpack.c.b16 %v4489, %v4487
    %v7108 = vpack.c.b16 %v4490, %v4488
    %v7109 = vpack.c.b16 %v4493, %v4491
    %v7110 = vpack.c.b16 %v4494, %v4492
    %v7111 = vpack.c.b16 %v4497, %v4495
    %v7112 = vpack.c.b16 %v4498, %v4496
    %v7113 = vpack.c.b16 %v4501, %v4499
    %v7114 = vpack.c.b16 %v4502, %v4500
    %v7115 = vpack.c.b16 %v4505, %v4503
    %v7116 = vpack.c.b16 %v4506, %v4504
    %v7117 = vpack.c.b16 %v4509, %v4507
    %v7118 = vpack.c.b16 %v4510, %v4508
    %v7119 = vpack.c.b16 %v4513, %v4511
    %v7120 = vpack.c.b16 %v4514, %v4512
    %v7121 = vpack.c.b16 %v4517, %v4515
    %v7122 = vpack.c.b16 %v4518, %v4516
    %v7123 = vpack.c.b16 %v4521, %v4519
    %v7124 = vpack.c.b16 %v4522, %v4520
    %v7125 = vpack.c.b16 %v4525, %v4523
    %v7126 = vpack.c.b16 %v4526, %v4524
    %v7127 = vpack.c.b16 %v4529, %v4527
    %v7128 = vpack.c.b16 %v4530, %v4528
    %v7129 = vpack.c.b16 %v4533, %v4531
    %v7130 = vpack.c.b16 %v4534, %v4532
    %v7131 = vpack.c.b16 %v4537, %v4535
    %v7132 = vpack.c.b16 %v4538, %v4536
    %v7133 = vpack.c.b16 %v4541, %v4539
    %v7134 = vpack.c.b16 %v4542, %v4540
    %v7135 = vpack.c.b16 %v4545, %v4543
    %v7136 = vpack.c.b16 %v4546, %v4544
    %v7137 = vpack.c.b16 %v4549, %v4547
    %v7138 = vpack.c.b16 %v4550, %v4548
    %v7139 = vpack.c.b16 %v4553, %v4551
    %v7140 = vpack.c.b16 %v4554, %v4552
    %v7141 = vpack.c.b16 %v4557, %v4555
    %v7142 = vpack.c.b16 %v4558, %v4556
    %v7143 = vpack.c.b16 %v4561, %v4559
    %v7144 = vpack.c.b16 %v4562, %v4560
    %v7145 = vpack.c.b16 %v4565, %v4563
    %v7146 = vpack.c.b16 %v4566, %v4564
    %v7147 = vpack.c.b16 %v4569, %v4567
    %v7148 = vpack.c.b16 %v4570, %v4568
    %v7149 = vpack.c.b16 %v4573, %v4571
    %v7150 = vpack.c.b16 %v4574, %v4572
    %v7151 = vpack.c.b16 %v4577, %v4575
    %v7152 = vpack.c.b16 %v4578, %v4576
    %v7153 = vpack.c.b16 %v4581, %v4579
    %v7154 = vpack.c.b16 %v4582, %v4580
    %v7155 = vpack.c.b16 %v4585, %v4583
    %v7156 = vpack.c.b16 %v4586, %v4584
    %v7157 = vpack.c.b16 %v4589, %v4587
    %v7158 = vpack.c.b16 %v4590, %v4588
    %v7159 = vpack.c.b16 %v4593, %v4591
    %v7160 = vpack.c.b16 %v4594, %v4592
    %v7161 = vpack.c.b16 %v4597, %v4595
    %v7162 = vpack.c.b16 %v4598, %v4596
    %v7163 = vpack.c.b16 %v4601, %v4599
    %v7164 = vpack.c.b16 %v4602, %v4600
    %v7165 = vpack.c.b16 %v4605, %v4603
    %v7166 = vpack.c.b16 %v4606, %v4604
    %v7167 = vpack.c.b16 %v4609, %v4607
    %v7168 = vpack.c.b16 %v4610, %v4608
    %v7169 = vpack.c.b16 %v4613, %v4611
    %v7170 = vpack.c.b16 %v4614, %v4612
    %v7171 = vpack.c.b16 %v4617, %v4615
    %v7172 = vpack.c.b16 %v4618, %v4616
    %v7173 = vpack.c.b16 %v4621, %v4619
    %v7174 = vpack.c.b16 %v4622, %v4620
    %v7175 = vpack.c.b16 %v4625, %v4623
    %v7176 = vpack.c.b16 %v4626, %v4624
    %v7177 = vpack.c.b16 %v4629, %v4627
    %v7178 = vpack.c.b16 %v4630, %v4628
    %v7179 = vpack.c.b16 %v4633, %v4631
    %v7180 = vpack.c.b16 %v4634, %v4632
    %v7181 = vpack.c.b16 %v4637, %v4635
    %v7182 = vpack.c.b16 %v4638, %v4636
    %v7183 = vpack.c.b16 %v4641, %v4639
    %v7184 = vpack.c.b16 %v4642, %v4640
    %v7185 = vpack.c.b16 %v4645, %v4643
    %v7186 = vpack.c.b16 %v4646, %v4644
    %v7187 = vpack.c.b16 %v4649, %v4647
    %v7188 = vpack.c.b16 %v4650, %v4648
    %v7189 = vpack.c.b16 %v4653, %v4651
    %v7190 = vpack.c.b16 %v4654, %v4652
    %v7191 = vpack.c.b16 %v4657, %v4655
    %v7192 = vpack.c.b16 %v4658, %v4656
    %v7193 = vpack.c.b16 %v4661, %v4659
    %v7194 = vpack.c.b16 %v4662, %v4660
    %v7195 = vpack.c.b16 %v4665, %v4663
    %v7196 = vpack.c.b16 %v4666, %v4664
    %v7197 = vpack.c.b16 %v4669, %v4667
    %v7198 = vpack.c.b16 %v4670, %v4668
    %v7199 = vpack.c.b16 %v4673, %v4671
    %v7200 = vpack.c.b16 %v4674, %v4672
    %v7201 = vpack.c.b16 %v4677, %v4675
    %v7202 = vpack.c.b16 %v4678, %v4676
    %v7203 = vpack.c.b16 %v4681, %v4679
    %v7204 = vpack.c.b16 %v4682, %v4680
    %v7205 = vpack.c.b16 %v4685, %v4683
    %v7206 = vpack.c.b16 %v4686, %v4684
    %v7207 = vpack.c.b16 %v4689, %v4687
    %v7208 = vpack.c.b16 %v4690, %v4688
    %v7209 = vpack.c.b16 %v4693, %v4691
    %v7210 = vpack.c.b16 %v4694, %v4692
    %v7211 = vpack.c.b16 %v4697, %v4695
    %v7212 = vpack.c.b16 %v4698, %v4696
    %v7213 = vpack.c.b16 %v4701, %v4699
    %v7214 = vpack.c.b16 %v4702, %v4700
    %v7215 = vpack.c.b16 %v4705, %v4703
    %v7216 = vpack.c.b16 %v4706, %v4704
    %v7217 = vpack.c.b16 %v4709, %v4707
    %v7218 = vpack.c.b16 %v4710, %v4708
    %v7219 = vpack.c.b16 %v4713, %v4711
    %v7220 = vpack.c.b16 %v4714, %v4712
    %v7221 = vpack.c.b16 %v4717, %v4715
    %v7222 = vpack.c.b16 %v4718, %v4716
    %v7223 = vpack.c.b16 %v4721, %v4719
    %v7224 = vpack.c.b16 %v4722, %v4720
    %v7225 = vpack.c.b16 %v4725, %v4723
    %v7226 = vpack.c.b16 %v4726, %v4724
    %v7227 = vpack.c.b16 %v4729, %v4727
    %v7228 = vpack.c.b16 %v4730, %v4728
    %v7229 = vpack.c.b16 %v4733, %v4731
    %v7230 = vpack.c.b16 %v4734, %v4732
    %v7231 = vpack.c.b16 %v4737, %v4735
    %v7232 = vpack.c.b16 %v4738, %v4736
    %v7233 = vpack.c.b16 %v4741, %v4739
    %v7234 = vpack.c.b16 %v4742, %v4740
    %v7235 = vpack.c.b16 %v4745, %v4743
    %v7236 = vpack.c.b16 %v4746, %v4744
    %v7237 = vpack.c.b16 %v4749, %v4747
    %v7238 = vpack.c.b16 %v4750, %v4748
    %v7239 = vpack.c.b16 %v4753, %v4751
    %v7240 = vpack.c.b16 %v4754, %v4752
    %v7241 = vpack.c.b16 %v4757, %v4755
    %v7242 = vpack.c.b16 %v4758, %v4756
    %v7243 = vpack.c.b16 %v4761, %v4759
    %v7244 = vpack.c.b16 %v4762, %v4760
    %v7245 = vpack.c.b16 %v4765, %v4763
    %v7246 = vpack.c.b16 %v4766, %v4764
    %v7247 = vpack.c.b16 %v4769, %v4767
    %v7248 = vpack.c.b16 %v4770, %v4768
    %v7249 = vpack.c.b16 %v4773, %v4771
    %v7250 = vpack.c.b16 %v4774, %v4772
    %v7251 = vpack.c.b16 %v4777, %v4775
    %v7252 = vpack.c.b16 %v4778, %v4776
    %v7253 = vpack.c.b16 %v4781, %v4779
    %v7254 = vpack.c.b16 %v4782, %v4780
    %v7255 = vpack.c.b16 %v4785, %v4783
    %v7256 = vpack.c.b16 %v4786, %v4784
    %v7257 = vpack.c.b16 %v4789, %v4787
    %v7258 = vpack.c.b16 %v4790, %v4788
    %v7259 = vpack.c.b16 %v4793, %v4791
    %v7260 = vpack.c.b16 %v4794, %v4792
    %v7261 = vpack.c.b16 %v4797, %v4795
    %v7262 = vpack.c.b16 %v4798, %v4796
    %v7263 = vpack.c.b16 %v4801, %v4799
    %v7264 = vpack.c.b16 %v4802, %v4800
    %v7265 = vpack.c.b16 %v4805, %v4803
    %v7266 = vpack.c.b16 %v4806, %v4804
    %v7267 = vpack.c.b16 %v4809, %v4807
    %v7268 = vpack.c.b16 %v4810, %v4808
    %v7269 = vpack.c.b16 %v4813, %v4811
    %v7270 = vpack.c.b16 %v4814, %v4812
    %v7271 = vpack.c.b16 %v4817, %v4815
    %v7272 = vpack.c.b16 %v4818, %v4816
    %v7273 = vpack.c.b16 %v4821, %v4819
    %v7274 = vpack.c.b16 %v4822, %v4820
    %v7275 = vpack.c.b16 %v4825, %v4823
    %v7276 = vpack.c.b16 %v4826, %v4824
    %v7277 = vpack.c.b16 %v4829, %v4827
    %v7278 = vpack.c.b16 %v4830, %v4828
    %v7279 = vpack.c.b16 %v4833, %v4831
    %v7280 = vpack.c.b16 %v4834, %v4832
    %v7281 = vpack.c.b16 %v4837, %v4835
    %v7282 = vpack.c.b16 %v4838, %v4836
    %v7283 = vpack.c.b16 %v4841, %v4839
    %v7284 = vpack.c.b16 %v4842, %v4840
    %v7285 = vpack.c.b16 %v4845, %v4843
    %v7286 = vpack.c.b16 %v4846, %v4844
    %v7287 = vpack.c.b16 %v4849, %v4847
    %v7288 = vpack.c.b16 %v4850, %v4848
    %v7289 = vpack.c.b16 %v4853, %v4851
    %v7290 = vpack.c.b16 %v4854, %v4852
    %v7291 = vpack.c.b16 %v4857, %v4855
    %v7292 = vpack.c.b16 %v4858, %v4856
    %v7293 = vpack.c.b16 %v4861, %v4859
    %v7294 = vpack.c.b16 %v4862, %v4860
    %v7295 = vpack.c.b16 %v4865, %v4863
    %v7296 = vpack.c.b16 %v4866, %v4864
    %v7297 = vpack.c.b16 %v4869, %v4867
    %v7298 = vpack.c.b16 %v4870, %v4868
    %v7299 = vpack.c.b16 %v4873, %v4871
    %v7300 = vpack.c.b16 %v4874, %v4872
    %v7301 = vpack.c.b16 %v4877, %v4875
    %v7302 = vpack.c.b16 %v4878, %v4876
    %v7303 = vpack.c.b16 %v4881, %v4879
    %v7304 = vpack.c.b16 %v4882, %v4880
    %v7305 = vpack.c.b16 %v4885, %v4883
    %v7306 = vpack.c.b16 %v4886, %v4884
    %v7307 = vpack.c.b16 %v4889, %v4887
    %v7308 = vpack.c.b16 %v4890, %v4888
    %v7309 = vpack.c.b16 %v4893, %v4891
    %v7310 = vpack.c.b16 %v4894, %v4892
    %v7311 = vpack.c.b16 %v4897, %v4895
    %v7312 = vpack.c.b16 %v4898, %v4896
    %v7313 = vpack.c.b16 %v4901, %v4899
    %v7314 = vpack.c.b16 %v4902, %v4900
    %v7315 = vpack.c.b16 %v4905, %v4903
    %v7316 = vpack.c.b16 %v4906, %v4904
    %v7317 = vpack.c.b16 %v4909, %v4907
    %v7318 = vpack.c.b16 %v4910, %v4908
    %v7319 = vpack.c.b16 %v4913, %v4911
    %v7320 = vpack.c.b16 %v4914, %v4912
    %v7321 = vpack.c.b16 %v4917, %v4915
    %v7322 = vpack.c.b16 %v4918, %v4916
    %v7323 = vpack.c.b16 %v4921, %v4919
    %v7324 = vpack.c.b16 %v4922, %v4920
    %v7325 = vpack.c.b16 %v4925, %v4923
    %v7326 = vpack.c.b16 %v4926, %v4924
    %v7327 = vpack.c.b16 %v4929, %v4927
    %v7328 = vpack.c.b16 %v4930, %v4928
    %v7329 = vpack.c.b16 %v4933, %v4931
    %v7330 = vpack.c.b16 %v4934, %v4932
    %v7331 = vpack.c.b16 %v4937, %v4935
    %v7332 = vpack.c.b16 %v4938, %v4936
    %v7333 = vpack.c.b16 %v4941, %v4939
    %v7334 = vpack.c.b16 %v4942, %v4940
    %v7335 = vpack.c.b16 %v4945, %v4943
    %v7336 = vpack.c.b16 %v4946, %v4944
    %v7337 = vpack.c.b16 %v4949, %v4947
    %v7338 = vpack.c.b16 %v4950, %v4948
    %v7339 = vpack.c.b16 %v4953, %v4951
    %v7340 = vpack.c.b16 %v4954, %v4952
    %v7341 = vpack.c.b16 %v4957, %v4955
    %v7342 = vpack.c.b16 %v4958, %v4956
    %v7343 = vpack.c.b16 %v4961, %v4959
    %v7344 = vpack.c.b16 %v4962, %v4960
    %v7345 = vpack.c.b16 %v4965, %v4963
    %v7346 = vpack.c.b16 %v4966, %v4964
    %v7347 = vpack.c.b16 %v4969, %v4967
    %v7348 = vpack.c.b16 %v4970, %v4968
    %v7349 = vpack.c.b16 %v4973, %v4971
    %v7350 = vpack.c.b16 %v4974, %v4972
    %v7351 = vpack.c.b16 %v4977, %v4975
    %v7352 = vpack.c.b16 %v4978, %v4976
    %v7353 = vpack.c.b16 %v4981, %v4979
    %v7354 = vpack.c.b16 %v4982, %v4980
    %v7355 = vpack.c.b16 %v4985, %v4983
    %v7356 = vpack.c.b16 %v4986, %v4984
    %v7357 = vpack.c.b16 %v4989, %v4987
    %v7358 = vpack.c.b16 %v4990, %v4988
    %v7359 = vpack.c.b16 %v4993, %v4991
    %v7360 = vpack.c.b16 %v4994, %v4992
    %v7361 = vpack.c.b16 %v4997, %v4995
    %v7362 = vpack.c.b16 %v4998, %v4996
    %v7363 = vpack.c.b16 %v5001, %v4999
    %v7364 = vpack.c.b16 %v5002, %v5000
    %v7365 = vpack.c.b16 %v5005, %v5003
    %v7366 = vpack.c.b16 %v5006, %v5004
    %v7367 = vpack.c.b16 %v5009, %v5007
    %v7368 = vpack.c.b16 %v5010, %v5008
    %v7369 = vpack.c.b16 %v5013, %v5011
    %v7370 = vpack.c.b16 %v5014, %v5012
    %v7371 = vpack.c.b16 %v5017, %v5015
    %v7372 = vpack.c.b16 %v5018, %v5016
    %v7373 = vpack.c.b16 %v5021, %v5019
    %v7374 = vpack.c.b16 %v5022, %v5020
    %v7375 = vpack.c.b16 %v5025, %v5023
    %v7376 = vpack.c.b16 %v5026, %v5024
    %v7377 = vpack.c.b16 %v5029, %v5027
    %v7378 = vpack.c.b16 %v5030, %v5028
    %v7379 = vpack.c.b16 %v5033, %v5031
    %v7380 = vpack.c.b16 %v5034, %v5032
    %v7381 = vpack.c.b16 %v5037, %v5035
    %v7382 = vpack.c.b16 %v5038, %v5036
    %v7383 = vpack.c.b16 %v5041, %v5039
    %v7384 = vpack.c.b16 %v5042, %v5040
    %v7385 = vpack.c.b16 %v5045, %v5043
    %v7386 = vpack.c.b16 %v5046, %v5044
    %v7387 = vpack.c.b16 %v5049, %v5047
    %v7388 = vpack.c.b16 %v5050, %v5048
    %v7389 = vpack.c.b16 %v5053, %v5051
    %v7390 = vpack.c.b16 %v5054, %v5052
    %v7391 = vpack.c.b16 %v5057, %v5055
    %v7392 = vpack.c.b16 %v5058, %v5056
    %v7393 = vpack.c.b16 %v5061, %v5059
    %v7394 = vpack.c.b16 %v5062, %v5060
    %v7395 = vpack.c.b16 %v5065, %v5063
    %v7396 = vpack.c.b16 %v5066, %v5064
    %v7397 = vpack.c.b16 %v5069, %v5067
    %v7398 = vpack.c.b16 %v5070, %v5068
    %v7399 = vpack.c.b16 %v5073, %v5071
    %v7400 = vpack.c.b16 %v5074, %v5072
    %v7401 = vpack.c.b16 %v5077, %v5075
    %v7402 = vpack.c.b16 %v5078, %v5076
    %v7403 = vpack.c.b16 %v5081, %v5079
    %v7404 = vpack.c.b16 %v5082, %v5080
    %v7405 = vpack.c.b16 %v5085, %v5083
    %v7406 = vpack.c.b16 %v5086, %v5084
    %v7407 = vpack.c.b16 %v5089, %v5087
    %v7408 = vpack.c.b16 %v5090, %v5088
    %v7409 = vpack.c.b16 %v5093, %v5091
    %v7410 = vpack.c.b16 %v5094, %v5092
    %v7411 = vpack.c.b16 %v5097, %v5095
    %v7412 = vpack.c.b16 %v5098, %v5096
    %v7413 = vpack.c.b16 %v5101, %v5099
    %v7414 = vpack.c.b16 %v5102, %v5100
    %v7415 = vpack.c.b16 %v5105, %v5103
    %v7416 = vpack.c.b16 %v5106, %v5104
    %v7417 = vpack.c.b16 %v5109, %v5107
    %v7418 = vpack.c.b16 %v5110, %v5108
    %v7419 = vpack.c.b16 %v5113, %v5111
    %v7420 = vpack.c.b16 %v5114, %v5112
    %v7421 = vpack.c.b16 %v5117, %v5115
    %v7422 = vpack.c.b16 %v5118, %v5116
    %v7423 = vpack.c.b16 %v5121, %v5119
    %v7424 = vpack.c.b16 %v5122, %v5120
    %v7425 = vpack.c.b16 %v5125, %v5123
    %v7426 = vpack.c.b16 %v5126, %v5124
    %v7427 = vpack.c.b16 %v5129, %v5127
    %v7428 = vpack.c.b16 %v5130, %v5128
    %v7429 = vpack.c.b16 %v5133, %v5131
    %v7430 = vpack.c.b16 %v5134, %v5132
    %v7431 = vpack.c.b16 %v5137, %v5135
    %v7432 = vpack.c.b16 %v5138, %v5136
    %v7433 = vpack.c.b16 %v5141, %v5139
    %v7434 = vpack.c.b16 %v5142, %v5140
    %v7435 = vpack.c.b16 %v5145, %v5143
    %v7436 = vpack.c.b16 %v5146, %v5144
    %v7437 = vpack.c.b16 %v5149, %v5147
    %v7438 = vpack.c.b16 %v5150, %v5148
    %v7439 = vpack.c.b16 %v5153, %v5151
    %v7440 = vpack.c.b16 %v5154, %v5152
    %v7441 = vpack.c.b16 %v5157, %v5155
    %v7442 = vpack.c.b16 %v5158, %v5156
    %v7443 = vpack.c.b16 %v5161, %v5159
    %v7444 = vpack.c.b16 %v5162, %v5160
    %v7445 = vpack.c.b16 %v5165, %v5163
    %v7446 = vpack.c.b16 %v5166, %v5164
    %v7447 = vpack.c.b16 %v5169, %v5167
    %v7448 = vpack.c.b16 %v5170, %v5168
    %v7449 = vpack.c.b16 %v5173, %v5171
    %v7450 = vpack.c.b16 %v5174, %v5172
    %v7451 = vpack.c.b16 %v5177, %v5175
    %v7452 = vpack.c.b16 %v5178, %v5176
    %v7453 = vpack.c.b16 %v5181, %v5179
    %v7454 = vpack.c.b16 %v5182, %v5180
    %v7455 = vpack.c.b16 %v5185, %v5183
    %v7456 = vpack.c.b16 %v5186, %v5184
    %v7457 = vpack.c.b16 %v5189, %v5187
    %v7458 = vpack.c.b16 %v5190, %v5188
    %v7459 = vpack.c.b16 %v5193, %v5191
    %v7460 = vpack.c.b16 %v5194, %v5192
    %v7461 = vpack.c.b16 %v5197, %v5195
    %v7462 = vpack.c.b16 %v5198, %v5196
    %v7463 = vpack.c.b16 %v5201, %v5199
    %v7464 = vpack.c.b16 %v5202, %v5200
    %v7465 = vpack.c.b16 %v5205, %v5203
    %v7466 = vpack.c.b16 %v5206, %v5204
    %v7467 = vpack.c.b16 %v5209, %v5207
    %v7468 = vpack.c.b16 %v5210, %v5208
    %v7469 = vpack.c.b16 %v5213, %v5211
    %v7470 = vpack.c.b16 %v5214, %v5212
    %v7471 = vpack.c.b16 %v5217, %v5215
    %v7472 = vpack.c.b16 %v5218, %v5216
    %v7473 = vpack.c.b16 %v5221, %v5219
    %v7474 = vpack.c.b16 %v5222, %v5220
    %v7475 = vpack.c.b16 %v5225, %v5223
    %v7476 = vpack.c.b16 %v5226, %v5224
    %v7477 = vpack.c.b16 %v5229, %v5227
    %v7478 = vpack.c.b16 %v5230, %v5228
    %v7479 = vpack.c.b16 %v5233, %v5231
    %v7480 = vpack.c.b16 %v5234, %v5232
    %v7481 = vpack.c.b16 %v5237, %v5235
    %v7482 = vpack.c.b16 %v5238, %v5236
    %v7483 = vpack.c.b16 %v5241, %v5239
    %v7484 = vpack.c.b16 %v5242, %v5240
    %v7485 = vpack.c.b16 %v5245, %v5243
    %v7486 = vpack.c.b16 %v5246, %v5244
    %v7487 = vpack.c.b16 %v5249, %v5247
    %v7488 = vpack.c.b16 %v5250, %v5248
    %v7489 = vpack.c.b16 %v5253, %v5251
    %v7490 = vpack.c.b16 %v5254, %v5252
    %v7491 = vpack.c.b16 %v5257, %v5255
    %v7492 = vpack.c.b16 %v5258, %v5256
    %v7493 = vpack.c.b16 %v5261, %v5259
    %v7494 = vpack.c.b16 %v5262, %v5260
    %v7495 = vpack.c.b16 %v5265, %v5263
    %v7496 = vpack.c.b16 %v5266, %v5264
    %v7497 = vpack.c.b16 %v5269, %v5267
    %v7498 = vpack.c.b16 %v5270, %v5268
    %v7499 = vpack.c.b16 %v5273, %v5271
    %v7500 = vpack.c.b16 %v5274, %v5272
    %v7501 = vpack.c.b16 %v5277, %v5275
    %v7502 = vpack.c.b16 %v5278, %v5276
    %v7503 = vpack.c.b16 %v5281, %v5279
    %v7504 = vpack.c.b16 %v5282, %v5280
    %v7505 = vpack.c.b16 %v5285, %v5283
    %v7506 = vpack.c.b16 %v5286, %v5284
    %v7507 = vpack.c.b16 %v5289, %v5287
    %v7508 = vpack.c.b16 %v5290, %v5288
    %v7509 = vpack.c.b16 %v5293, %v5291
    %v7510 = vpack.c.b16 %v5294, %v5292
    %v7511 = vpack.c.b16 %v5297, %v5295
    %v7512 = vpack.c.b16 %v5298, %v5296
    %v7513 = vpack.c.b16 %v5301, %v5299
    %v7514 = vpack.c.b16 %v5302, %v5300
    %v7515 = vpack.c.b16 %v5305, %v5303
    %v7516 = vpack.c.b16 %v5306, %v5304
    %v7517 = vpack.c.b16 %v5309, %v5307
    %v7518 = vpack.c.b16 %v5310, %v5308
    %v7519 = vpack.c.b16 %v5313, %v5311
    %v7520 = vpack.c.b16 %v5314, %v5312
    %v7521 = vpack.c.b16 %v5317, %v5315
    %v7522 = vpack.c.b16 %v5318, %v5316
    %v7523 = vpack.c.b16 %v5321, %v5319
    %v7524 = vpack.c.b16 %v5322, %v5320
    %v7525 = vpack.c.b16 %v5325, %v5323
    %v7526 = vpack.c.b16 %v5326, %v5324
    %v7527 = vpack.c.b16 %v5329, %v5327
    %v7528 = vpack.c.b16 %v5330, %v5328
    %v7529 = vpack.c.b16 %v5333, %v5331
    %v7530 = vpack.c.b16 %v5334, %v5332
    %v7531 = vpack.c.b16 %v5337, %v5335
    %v7532 = vpack.c.b16 %v5338, %v5336
    %v7533 = vpack.c.b16 %v5341, %v5339
    %v7534 = vpack.c.b16 %v5342, %v5340
    %v7535 = vpack.c.b16 %v5345, %v5343
    %v7536 = vpack.c.b16 %v5346, %v5344
    %v7537 = vpack.c.b16 %v5349, %v5347
    %v7538 = vpack.c.b16 %v5350, %v5348
    %v7539 = vpack.c.b16 %v5353, %v5351
    %v7540 = vpack.c.b16 %v5354, %v5352
    %v7541 = vpack.c.b16 %v5357, %v5355
    %v7542 = vpack.c.b16 %v5358, %v5356
    %v7543 = vpack.c.b16 %v5361, %v5359
    %v7544 = vpack.c.b16 %v5362, %v5360
    %v7545 = vpack.c.b16 %v5365, %v5363
    %v7546 = vpack.c.b16 %v5366, %v5364
    %v7547 = vpack.c.b16 %v5369, %v5367
    %v7548 = vpack.c.b16 %v5370, %v5368
    %v7549 = vpack.c.b16 %v5373, %v5371
    %v7550 = vpack.c.b16 %v5374, %v5372
    %v7551 = vpack.c.b16 %v5377, %v5375
    %v7552 = vpack.c.b16 %v5378, %v5376
    %v7553 = vpack.c.b16 %v5381, %v5379
    %v7554 = vpack.c.b16 %v5382, %v5380
    %v7555 = vpack.c.b16 %v5385, %v5383
    %v7556 = vpack.c.b16 %v5386, %v5384
    %v7557 = vpack.c.b16 %v5389, %v5387
    %v7558 = vpack.c.b16 %v5390, %v5388
    %v7559 = vpack.c.b16 %v5393, %v5391
    %v7560 = vpack.c.b16 %v5394, %v5392
    %v7561 = vpack.c.b16 %v5397, %v5395
    %v7562 = vpack.c.b16 %v5398, %v5396
    %v7563 = vpack.c.b16 %v5401, %v5399
    %v7564 = vpack.c.b16 %v5402, %v5400
    %v7565 = vpack.c.b16 %v5405, %v5403
    %v7566 = vpack.c.b16 %v5406, %v5404
    %v7567 = vpack.c.b16 %v5409, %v5407
    %v7568 = vpack.c.b16 %v5410, %v5408
    %v7569 = vpack.c.b16 %v5413, %v5411
    %v7570 = vpack.c.b16 %v5414, %v5412
    %v7571 = vpack.c.b16 %v5417, %v5415
    %v7572 = vpack.c.b16 %v5418, %v5416
    %v7573 = vpack.c.b16 %v5421, %v5419
    %v7574 = vpack.c.b16 %v5422, %v5420
    %v7575 = vpack.c.b16 %v5425, %v5423
    %v7576 = vpack.c.b16 %v5426, %v5424
    %v7577 = vpack.c.b16 %v5429, %v5427
    %v7578 = vpack.c.b16 %v5430, %v5428
    %v7579 = vpack.c.b16 %v5433, %v5431
    %v7580 = vpack.c.b16 %v5434, %v5432
    %v7581 = vpack.c.b16 %v5437, %v5435
    %v7582 = vpack.c.b16 %v5438, %v5436
    %v7583 = vpack.c.b16 %v5441, %v5439
    %v7584 = vpack.c.b16 %v5442, %v5440
    %v7585 = vpack.c.b16 %v5445, %v5443
    %v7586 = vpack.c.b16 %v5446, %v5444
    %v7587 = vpack.c.b16 %v5449, %v5447
    %v7588 = vpack.c.b16 %v5450, %v5448
    %v7589 = vpack.c.b16 %v5453, %v5451
    %v7590 = vpack.c.b16 %v5454, %v5452
    %v7591 = vpack.c.b16 %v5457, %v5455
    %v7592 = vpack.c.b16 %v5458, %v5456
    %v7593 = vpack.c.b16 %v5461, %v5459
    %v7594 = vpack.c.b16 %v5462, %v5460
    %v7595 = vpack.c.b16 %v5465, %v5463
    %v7596 = vpack.c.b16 %v5466, %v5464
    %v7597 = vpack.c.b16 %v5469, %v5467
    %v7598 = vpack.c.b16 %v5470, %v5468
    %v7599 = vpack.c.b16 %v5473, %v5471
    %v7600 = vpack.c.b16 %v5474, %v5472
    %v7601 = vpack.c.b16 %v5477, %v5475
    %v7602 = vpack.c.b16 %v5478, %v5476
    %v7603 = vpack.c.b16 %v5481, %v5479
    %v7604 = vpack.c.b16 %v5482, %v5480
    %v7605 = vpack.c.b16 %v5485, %v5483
    %v7606 = vpack.c.b16 %v5486, %v5484
    %v7607 = vpack.c.b16 %v5489, %v5487
    %v7608 = vpack.c.b16 %v5490, %v5488
    %v7609 = vpack.c.b16 %v5493, %v5491
    %v7610 = vpack.c.b16 %v5494, %v5492
    %v7611 = vpack.c.b16 %v5497, %v5495
    %v7612 = vpack.c.b16 %v5498, %v5496
    %v7613 = vpack.c.b16 %v5501, %v5499
    %v7614 = vpack.c.b16 %v5502, %v5500
    %v7615 = vpack.c.b16 %v5505, %v5503
    %v7616 = vpack.c.b16 %v5506, %v5504
    %v7617 = vpack.c.b16 %v5509, %v5507
    %v7618 = vpack.c.b16 %v5510, %v5508
    %v7619 = vpack.c.b16 %v5513, %v5511
    %v7620 = vpack.c.b16 %v5514, %v5512
    %v7621 = vpack.c.b16 %v5517, %v5515
    %v7622 = vpack.c.b16 %v5518, %v5516
    %v7623 = vpack.c.b16 %v5521, %v5519
    %v7624 = vpack.c.b16 %v5522, %v5520
    %v7625 = vpack.c.b16 %v5525, %v5523
    %v7626 = vpack.c.b16 %v5526, %v5524
    %v7627 = vpack.c.b16 %v5529, %v5527
    %v7628 = vpack.c.b16 %v5530, %v5528
    %v7629 = vpack.c.b16 %v5533, %v5531
    %v7630 = vpack.c.b16 %v5534, %v5532
    %v7631 = vpack.c.b16 %v5537, %v5535
    %v7632 = vpack.c.b16 %v5538, %v5536
    %v7633 = vpack.c.b16 %v5541, %v5539
    %v7634 = vpack.c.b16 %v5542, %v5540
    %v7635 = vpack.c.b16 %v5545, %v5543
    %v7636 = vpack.c.b16 %v5546, %v5544
    %v7637 = vpack.c.b16 %v5549, %v5547
    %v7638 = vpack.c.b16 %v5550, %v5548
    %v7639 = vpack.c.b16 %v5553, %v5551
    %v7640 = vpack.c.b16 %v5554, %v5552
    %v7641 = vpack.c.b16 %v5557, %v5555
    %v7642 = vpack.c.b16 %v5558, %v5556
    %v7643 = vpack.c.b16 %v5561, %v5559
    %v7644 = vpack.c.b16 %v5562, %v5560
    %v7645 = vpack.c.b16 %v5565, %v5563
    %v7646 = vpack.c.b16 %v5566, %v5564
    %v7647 = vpack.c.b16 %v5569, %v5567
    %v7648 = vpack.c.b16 %v5570, %v5568
    %v7649 = vpack.c.b16 %v5573, %v5571
    %v7650 = vpack.c.b16 %v5574, %v5572
    %v7651 = vpack.c.b16 %v5577, %v5575
    %v7652 = vpack.c.b16 %v5578, %v5576
    %v7653 = vpack.c.b16 %v5581, %v5579
    %v7654 = vpack.c.b16 %v5582, %v5580
    %v7655 = vpack.c.b16 %v5585, %v5583
    %v7656 = vpack.c.b16 %v5586, %v5584
    %v7657 = vpack.c.b16 %v5589, %v5587
    %v7658 = vpack.c.b16 %v5590, %v5588
    %v7659 = vpack.c.b16 %v5593, %v5591
    %v7660 = vpack.c.b16 %v5594, %v5592
    %v7661 = vpack.c.b16 %v5597, %v5595
    %v7662 = vpack.c.b16 %v5598, %v5596
    %v7663 = vpack.c.b16 %v5601, %v5599
    %v7664 = vpack.c.b16 %v5602, %v5600
    %v7665 = vpack.c.b16 %v5605, %v5603
    %v7666 = vpack.c.b16 %v5606, %v5604
    %v7667 = vpack.c.b16 %v5609, %v5607
    %v7668 = vpack.c.b16 %v5610, %v5608
    %v7669 = vpack.c.b16 %v5613, %v5611
    %v7670 = vpack.c.b16 %v5614, %v5612
    %v7671 = vpack.c.b16 %v5617, %v5615
    %v7672 = vpack.c.b16 %v5618, %v5616
    %v7673 = vpack.c.b16 %v5621, %v5619
    %v7674 = vpack.c.b16 %v5622, %v5620
    %v7675 = vpack.c.b16 %v5625, %v5623
    %v7676 = vpack.c.b16 %v5626, %v5624
    %v7677 = vpack.c.b16 %v5629, %v5627
    %v7678 = vpack.c.b16 %v5630, %v5628
    %v7679 = vpack.c.b16 %v5633, %v5631
    %v7680 = vpack.c.b16 %v5634, %v5632
    %v7681 = vpack.c.b16 %v5637, %v5635
    %v7682 = vpack.c.b16 %v5638, %v5636
    %v7683 = vpack.c.b16 %v5641, %v5639
    %v7684 = vpack.c.b16 %v5642, %v5640
    %v7685 = vpack.c.b16 %v5645, %v5643
    %v7686 = vpack.c.b16 %v5646, %v5644
    %v7687 = vpack.c.b16 %v5649, %v5647
    %v7688 = vpack.c.b16 %v5650, %v5648
    %v7689 = vpack.c.b16 %v5653, %v5651
    %v7690 = vpack.c.b16 %v5654, %v5652
    %v7691 = vpack.c.b16 %v5657, %v5655
    %v7692 = vpack.c.b16 %v5658, %v5656
    %v7693 = vpack.c.b16 %v5661, %v5659
    %v7694 = vpack.c.b16 %v5662, %v5660
    %v7695 = vpack.c.b16 %v5665, %v5663
    %v7696 = vpack.c.b16 %v5666, %v5664
    %v7697 = vpack.c.b16 %v5669, %v5667
    %v7698 = vpack.c.b16 %v5670, %v5668
    %v7699 = vpack.c.b16 %v5673, %v5671
    %v7700 = vpack.c.b16 %v5674, %v5672
    %v7701 = vpack.c.b16 %v5677, %v5675
    %v7702 = vpack.c.b16 %v5678, %v5676
    %v7703 = vpack.c.b16 %v5681, %v5679
    %v7704 = vpack.c.b16 %v5682, %v5680
    %v7705 = vpack.c.b16 %v5685, %v5683
    %v7706 = vpack.c.b16 %v5686, %v5684
    %v7707 = vpack.c.b16 %v5689, %v5687
    %v7708 = vpack.c.b16 %v5690, %v5688
    %v7709 = vpack.c.b16 %v5693, %v5691
    %v7710 = vpack.c.b16 %v5694, %v5692
    %v7711 = vpack.c.b16 %v5697, %v5695
    %v7712 = vpack.c.b16 %v5698, %v5696
    %v7713 = vpack.c.b16 %v5701, %v5699
    %v7714 = vpack.c.b16 %v5702, %v5700
    %v7715 = vpack.c.b16 %v5705, %v5703
    %v7716 = vpack.c.b16 %v5706, %v5704
    %v7717 = vpack.c.b16 %v5709, %v5707
    %v7718 = vpack.c.b16 %v5710, %v5708
    %v7719 = vpack.c.b16 %v5713, %v5711
    %v7720 = vpack.c.b16 %v5714, %v5712
    %v7721 = vpack.c.b16 %v5717, %v5715
    %v7722 = vpack.c.b16 %v5718, %v5716
    %v7723 = vpack.c.b16 %v5721, %v5719
    %v7724 = vpack.c.b16 %v5722, %v5720
    %v7725 = vpack.c.b16 %v5725, %v5723
    %v7726 = vpack.c.b16 %v5726, %v5724
    %v7727 = vpack.c.b16 %v5729, %v5727
    %v7728 = vpack.c.b16 %v5730, %v5728
    %v7729 = vpack.c.b16 %v5733, %v5731
    %v7730 = vpack.c.b16 %v5734, %v5732
    %v7731 = vpack.c.b16 %v5737, %v5735
    %v7732 = vpack.c.b16 %v5738, %v5736
    %v7733 = vpack.c.b16 %v5741, %v5739
    %v7734 = vpack.c.b16 %v5742, %v5740
    %v7735 = vpack.c.b16 %v5745, %v5743
    %v7736 = vpack.c.b16 %v5746, %v5744
    %v7737 = vpack.c.b16 %v5749, %v5747
    %v7738 = vpack.c.b16 %v5750, %v5748
    %v7739 = vpack.c.b16 %v5753, %v5751
    %v7740 = vpack.c.b16 %v5754, %v5752
    %v7741 = vpack.c.b16 %v5757, %v5755
    %v7742 = vpack.c.b16 %v5758, %v5756
    %v7743 = vpack.c.b16 %v5761, %v5759
    %v7744 = vpack.c.b16 %v5762, %v5760
    %v7745 = vpack.c.b16 %v5765, %v5763
    %v7746 = vpack.c.b16 %v5766, %v5764
    %v7747 = vpack.c.b16 %v5769, %v5767
    %v7748 = vpack.c.b16 %v5770, %v5768
    %v7749 = vpack.c.b16 %v5773, %v5771
    %v7750 = vpack.c.b16 %v5774, %v5772
    %v7751 = vpack.c.b16 %v5777, %v5775
    %v7752 = vpack.c.b16 %v5778, %v5776
    %v7753 = vpack.c.b16 %v5781, %v5779
    %v7754 = vpack.c.b16 %v5782, %v5780
    %v7755 = vpack.c.b16 %v5785, %v5783
    %v7756 = vpack.c.b16 %v5786, %v5784
    %v7757 = vpack.c.b16 %v5789, %v5787
    %v7758 = vpack.c.b16 %v5790, %v5788
    %v7759 = vpack.c.b16 %v5793, %v5791
    %v7760 = vpack.c.b16 %v5794, %v5792
    %v7761 = vpack.c.b16 %v5797, %v5795
    %v7762 = vpack.c.b16 %v5798, %v5796
    %v7763 = vpack.c.b16 %v5801, %v5799
    %v7764 = vpack.c.b16 %v5802, %v5800
    %v7765 = vpack.c.b16 %v5805, %v5803
    %v7766 = vpack.c.b16 %v5806, %v5804
    %v7767 = vpack.c.b16 %v5809, %v5807
    %v7768 = vpack.c.b16 %v5810, %v5808
    %v7769 = vpack.c.b16 %v5813, %v5811
    %v7770 = vpack.c.b16 %v5814, %v5812
    %v7771 = vpack.c.b16 %v5817, %v5815
    %v7772 = vpack.c.b16 %v5818, %v5816
    %v7773 = vpack.c.b16 %v5821, %v5819
    %v7774 = vpack.c.b16 %v5822, %v5820
    %v7775 = vpack.c.b16 %v5825, %v5823
    %v7776 = vpack.c.b16 %v5826, %v5824
    %v7777 = vpack.c.b16 %v5829, %v5827
    %v7778 = vpack.c.b16 %v5830, %v5828
    %v7779 = vpack.c.b16 %v5833, %v5831
    %v7780 = vpack.c.b16 %v5834, %v5832
    %v7781 = vpack.c.b16 %v5837, %v5835
    %v7782 = vpack.c.b16 %v5838, %v5836
    %v7783 = vpack.c.b16 %v5841, %v5839
    %v7784 = vpack.c.b16 %v5842, %v5840
    %v7785 = vpack.c.b16 %v5845, %v5843
    %v7786 = vpack.c.b16 %v5846, %v5844
    %v7787 = vpack.c.b16 %v5849, %v5847
    %v7788 = vpack.c.b16 %v5850, %v5848
    %v7789 = vpack.c.b16 %v5853, %v5851
    %v7790 = vpack.c.b16 %v5854, %v5852
    %v7791 = vpack.c.b16 %v5857, %v5855
    %v7792 = vpack.c.b16 %v5858, %v5856
    %v7793 = vpack.c.b16 %v5861, %v5859
    %v7794 = vpack.c.b16 %v5862, %v5860
    %v7795 = vpack.c.b16 %v5865, %v5863
    %v7796 = vpack.c.b16 %v5866, %v5864
    %v7797 = vpack.c.b16 %v5869, %v5867
    %v7798 = vpack.c.b16 %v5870, %v5868
    %v7799 = vpack.c.b16 %v5873, %v5871
    %v7800 = vpack.c.b16 %v5874, %v5872
    %v7801 = vpack.c.b16 %v5877, %v5875
    %v7802 = vpack.c.b16 %v5878, %v5876
    %v7803 = vpack.c.b16 %v5881, %v5879
    %v7804 = vpack.c.b16 %v5882, %v5880
    %v7805 = vpack.c.b16 %v5885, %v5883
    %v7806 = vpack.c.b16 %v5886, %v5884
    %v7807 = vpack.c.b16 %v5889, %v5887
    %v7808 = vpack.c.b16 %v5890, %v5888
    %v7809 = vpack.c.b16 %v5893, %v5891
    %v7810 = vpack.c.b16 %v5894, %v5892
    %v7811 = vpack.c.b16 %v5897, %v5895
    %v7812 = vpack.c.b16 %v5898, %v5896
    %v7813 = vpack.c.b16 %v5901, %v5899
    %v7814 = vpack.c.b16 %v5902, %v5900
    %v7815 = vpack.c.b16 %v5905, %v5903
    %v7816 = vpack.c.b16 %v5906, %v5904
    %v7817 = vpack.c.b16 %v5909, %v5907
    %v7818 = vpack.c.b16 %v5910, %v5908
    %v7819 = vpack.c.b16 %v5913, %v5911
    %v7820 = vpack.c.b16 %v5914, %v5912
    %v7821 = vpack.c.b16 %v5917, %v5915
    %v7822 = vpack.c.b16 %v5918, %v5916
    %v7823 = vpack.c.b16 %v5921, %v5919
    %v7824 = vpack.c.b16 %v5922, %v5920
    %v7825 = vpack.c.b16 %v5925, %v5923
    %v7826 = vpack.c.b16 %v5926, %v5924
    %v7827 = vpack.c.b16 %v5929, %v5927
    %v7828 = vpack.c.b16 %v5930, %v5928
    %v7829 = vpack.c.b16 %v5933, %v5931
    %v7830 = vpack.c.b16 %v5934, %v5932
    %v7831 = vpack.c.b16 %v5937, %v5935
    %v7832 = vpack.c.b16 %v5938, %v5936
    %v7833 = vpack.c.b16 %v5941, %v5939
    %v7834 = vpack.c.b16 %v5942, %v5940
    %v7835 = vpack.c.b16 %v5945, %v5943
    %v7836 = vpack.c.b16 %v5946, %v5944
    %v7837 = vpack.c.b16 %v5949, %v5947
    %v7838 = vpack.c.b16 %v5950, %v5948
    %v7839 = vpack.c.b16 %v5953, %v5951
    %v7840 = vpack.c.b16 %v5954, %v5952
    %v7841 = vpack.c.b16 %v5957, %v5955
    %v7842 = vpack.c.b16 %v5958, %v5956
    %v7843 = vpack.c.b16 %v5961, %v5959
    %v7844 = vpack.c.b16 %v5962, %v5960
    %v7845 = vpack.c.b16 %v5965, %v5963
    %v7846 = vpack.c.b16 %v5966, %v5964
    %v7847 = vpack.c.b16 %v5969, %v5967
    %v7848 = vpack.c.b16 %v5970, %v5968
    %v7849 = vpack.c.b16 %v5973, %v5971
    %v7850 = vpack.c.b16 %v5974, %v5972
    %v7851 = vpack.c.b16 %v5977, %v5975
    %v7852 = vpack.c.b16 %v5978, %v5976
    %v7853 = vpack.c.b16 %v5981, %v5979
    %v7854 = vpack.c.b16 %v5982, %v5980
    %v7855 = vpack.c.b16 %v5985, %v5983
    %v7856 = vpack.c.b16 %v5986, %v5984
    %v7857 = vpack.c.b16 %v5989, %v5987
    %v7858 = vpack.c.b16 %v5990, %v5988
    %v7859 = vpack.c.b16 %v5993, %v5991
    %v7860 = vpack.c.b16 %v5994, %v5992
    %v7861 = vpack.c.b16 %v5997, %v5995
    %v7862 = vpack.c.b16 %v5998, %v5996
    %v7863 = vpack.c.b16 %v6001, %v5999
    %v7864 = vpack.c.b16 %v6002, %v6000
    %v7865 = vpack.c.b16 %v6005, %v6003
    %v7866 = vpack.c.b16 %v6006, %v6004
    %v7867 = vpack.c.b16 %v6009, %v6007
    %v7868 = vpack.c.b16 %v6010, %v6008
    %v7869 = vpack.c.b16 %v6013, %v6011
    %v7870 = vpack.c.b16 %v6014, %v6012
    %v7871 = vpack.c.b16 %v6017, %v6015
    %v7872 = vpack.c.b16 %v6018, %v6016
    %v7873 = vpack.c.b16 %v6021, %v6019
    %v7874 = vpack.c.b16 %v6022, %v6020
    %v7875 = vpack.c.b16 %v6025, %v6023
    %v7876 = vpack.c.b16 %v6026, %v6024
    %v7877 = vpack.c.b16 %v6029, %v6027
    %v7878 = vpack.c.b16 %v6030, %v6028
    %v7879 = vpack.c.b16 %v6033, %v6031
    %v7880 = vpack.c.b16 %v6034, %v6032
    %v7881 = vpack.c.b16 %v6037, %v6035
    %v7882 = vpack.c.b16 %v6038, %v6036
    %v7883 = vpack.c.b16 %v6041, %v6039
    %v7884 = vpack.c.b16 %v6042, %v6040
    %v7885 = vpack.c.b16 %v6045, %v6043
    %v7886 = vpack.c.b16 %v6046, %v6044
    %v7887 = vpack.c.b16 %v6049, %v6047
    %v7888 = vpack.c.b16 %v6050, %v6048
    %v7889 = vpack.c.b16 %v6053, %v6051
    %v7890 = vpack.c.b16 %v6054, %v6052
    %v7891 = vpack.c.b16 %v6057, %v6055
    %v7892 = vpack.c.b16 %v6058, %v6056
    %v7893 = vpack.c.b16 %v6061, %v6059
    %v7894 = vpack.c.b16 %v6062, %v6060
    %v7895 = vpack.c.b16 %v6065, %v6063
    %v7896 = vpack.c.b16 %v6066, %v6064
    %v7897 = vpack.c.b16 %v6069, %v6067
    %v7898 = vpack.c.b16 %v6070, %v6068
    %v7899 = vpack.c.b16 %v6073, %v6071
    %v7900 = vpack.c.b16 %v6074, %v6072
    %v7901 = vpack.c.b16 %v6077, %v6075
    %v7902 = vpack.c.b16 %v6078, %v6076
    %v7903 = vpack.c.b16 %v6081, %v6079
    %v7904 = vpack.c.b16 %v6082, %v6080
    %v7905 = vpack.c.b16 %v6085, %v6083
    %v7906 = vpack.c.b16 %v6086, %v6084
    %v7907 = vpack.c.b16 %v6089, %v6087
    %v7908 = vpack.c.b16 %v6090, %v6088
    %v7909 = vpack.c.b16 %v6093, %v6091
    %v7910 = vpack.c.b16 %v6094, %v6092
    %v7911 = vpack.c.b16 %v6097, %v6095
    %v7912 = vpack.c.b16 %v6098, %v6096
    %v7913 = vpack.c.b16 %v6101, %v6099
    %v7914 = vpack.c.b16 %v6102, %v6100
    %v7915 = vpack.c.b16 %v6105, %v6103
    %v7916 = vpack.c.b16 %v6106, %v6104
    %v7917 = vpack.c.b16 %v6109, %v6107
    %v7918 = vpack.c.b16 %v6110, %v6108
    %v7919 = vpack.c.b16 %v6113, %v6111
    %v7920 = vpack.c.b16 %v6114, %v6112
    %v7921 = vpack.c.b16 %v6117, %v6115
    %v7922 = vpack.c.b16 %v6118, %v6116
    %v7923 = vpack.c.b16 %v6121, %v6119
    %v7924 = vpack.c.b16 %v6122, %v6120
    %v7925 = vpack.c.b16 %v6125, %v6123
    %v7926 = vpack.c.b16 %v6126, %v6124
    %v7927 = vpack.c.b16 %v6129, %v6127
    %v7928 = vpack.c.b16 %v6130, %v6128
    %v7929 = vpack.c.b16 %v6133, %v6131
    %v7930 = vpack.c.b16 %v6134, %v6132
    %v7931 = vpack.c.b16 %v6137, %v6135
    %v7932 = vpack.c.b16 %v6138, %v6136
    %v7933 = vpack.c.b16 %v6141, %v6139
    %v7934 = vpack.c.b16 %v6142, %v6140
    %v7935 = vpack.c.b16 %v6145, %v6143
    %v7936 = vpack.c.b16 %v6146, %v6144
    %v7937 = vpack.c.b16 %v6149, %v6147
    %v7938 = vpack.c.b16 %v6150, %v6148
    %v7939 = vpack.c.b16 %v6153, %v6151
    %v7940 = vpack.c.b16 %v6154, %v6152
    %v7941 = vpack.c.b16 %v6157, %v6155
    %v7942 = vpack.c.b16 %v6158, %v6156
    %v7943 = vpack.c.b16 %v6161, %v6159
    %v7944 = vpack.c.b16 %v6162, %v6160
    %v7945 = vpack.c.b16 %v6165, %v6163
    %v7946 = vpack.c.b16 %v6166, %v6164
    %v7947 = vpack.c.b16 %v6169, %v6167
    %v7948 = vpack.c.b16 %v6170, %v6168
    %v7949 = vpack.c.b16 %v6173, %v6171
    %v7950 = vpack.c.b16 %v6174, %v6172
    %v7951 = vpack.c.b16 %v6177, %v6175
    %v7952 = vpack.c.b16 %v6178, %v6176
    %v7953 = vpack.c.b16 %v6181, %v6179
    %v7954 = vpack.c.b16 %v6182, %v6180
    %v7955 = vpack.c.b16 %v6185, %v6183
    %v7956 = vpack.c.b16 %v6186, %v6184
    %v7957 = vpack.c.b16 %v6189, %v6187
    %v7958 = vpack.c.b16 %v6190, %v6188
    %v7959 = vpack.c.b16 %v6193, %v6191
    %v7960 = vpack.c.b16 %v6194, %v6192
    %v7961 = vpack.c.b16 %v6197, %v6195
    %v7962 = vpack.c.b16 %v6198, %v6196
    %v7963 = vpack.c.b16 %v6201, %v6199
    %v7964 = vpack.c.b16 %v6202, %v6200
    %v7965 = vpack.c.b16 %v6205, %v6203
    %v7966 = vpack.c.b16 %v6206, %v6204
    %v7967 = vpack.c.b16 %v6209, %v6207
    %v7968 = vpack.c.b16 %v6210, %v6208
    %v7969 = vpack.c.b16 %v6213, %v6211
    %v7970 = vpack.c.b16 %v6214, %v6212
    %v7971 = vpack.c.b16 %v6217, %v6215
    %v7972 = vpack.c.b16 %v6218, %v6216
    %v7973 = vpack.c.b16 %v6221, %v6219
    %v7974 = vpack.c.b16 %v6222, %v6220
    %v7975 = vpack.c.b16 %v6225, %v6223
    %v7976 = vpack.c.b16 %v6226, %v6224
    %v7977 = vpack.c.b16 %v6229, %v6227
    %v7978 = vpack.c.b16 %v6230, %v6228
    %v7979 = vpack.c.b16 %v6233, %v6231
    %v7980 = vpack.c.b16 %v6234, %v6232
    %v7981 = vpack.c.b16 %v6237, %v6235
    %v7982 = vpack.c.b16 %v6238, %v6236
    %v7983 = vpack.c.b16 %v6241, %v6239
    %v7984 = vpack.c.b16 %v6242, %v6240
    %v7985 = vpack.c.b16 %v6245, %v6243
    %v7986 = vpack.c.b16 %v6246, %v6244
    %v7987 = vpack.c.b16 %v6249, %v6247
    %v7988 = vpack.c.b16 %v6250, %v6248
    %v7989 = vpack.c.b16 %v6253, %v6251
    %v7990 = vpack.c.b16 %v6254, %v6252
    %v7991 = vpack.c.b16 %v6257, %v6255
    %v7992 = vpack.c.b16 %v6258, %v6256
    %v7993 = vpack.c.b16 %v6261, %v6259
    %v7994 = vpack.c.b16 %v6262, %v6260
    %v7995 = vpack.c.b16 %v6265, %v6263
    %v7996 = vpack.c.b16 %v6266, %v6264
    %v7997 = vpack.c.b16 %v6269, %v6267
    %v7998 = vpack.c.b16 %v6270, %v6268
    %v7999 = vpack.c.b16 %v6273, %v6271
    %v8000 = vpack.c.b16 %v6274, %v6272
    %v8001 = vpack.c.b16 %v6277, %v6275
    %v8002 = vpack.c.b16 %v6278, %v6276
    %v8003 = vpack.c.b16 %v6281, %v6279
    %v8004 = vpack.c.b16 %v6282, %v6280
    %v8005 = vpack.c.b16 %v6285, %v6283
    %v8006 = vpack.c.b16 %v6286, %v6284
    %v8007 = vpack.c.b16 %v6289, %v6287
    %v8008 = vpack.c.b16 %v6290, %v6288
    %v8009 = vpack.c.b16 %v6293, %v6291
    %v8010 = vpack.c.b16 %v6294, %v6292
    %v8011 = vpack.c.b16 %v6297, %v6295
    %v8012 = vpack.c.b16 %v6298, %v6296
    %v8013 = vpack.c.b16 %v6301, %v6299
    %v8014 = vpack.c.b16 %v6302, %v6300
    %v8015 = vpack.c.b16 %v6305, %v6303
    %v8016 = vpack.c.b16 %v6306, %v6304
    %v8017 = vpack.c.b16 %v6309, %v6307
    %v8018 = vpack.c.b16 %v6310, %v6308
    %v8019 = vpack.c.b16 %v6313, %v6311
    %v8020 = vpack.c.b16 %v6314, %v6312
    %v8021 = vpack.c.b16 %v6317, %v6315
    %v8022 = vpack.c.b16 %v6318, %v6316
    %v8023 = vpack.c.b16 %v6321, %v6319
    %v8024 = vpack.c.b16 %v6322, %v6320
    %v8025 = vpack.c.b16 %v6325, %v6323
    %v8026 = vpack.c.b16 %v6326, %v6324
    %v8027 = vpack.c.b16 %v6329, %v6327
    %v8028 = vpack.c.b16 %v6330, %v6328
    %v8029 = vpack.c.b16 %v6333, %v6331
    %v8030 = vpack.c.b16 %v6334, %v6332
    %v8031 = vpack.c.b16 %v6337, %v6335
    %v8032 = vpack.c.b16 %v6338, %v6336
    %v8033 = vpack.c.b16 %v6341, %v6339
    %v8034 = vpack.c.b16 %v6342, %v6340
    %v8035 = vpack.c.b16 %v6345, %v6343
    %v8036 = vpack.c.b16 %v6346, %v6344
    %v8037 = vpack.c.b16 %v6349, %v6347
    %v8038 = vpack.c.b16 %v6350, %v6348
    %v8039 = vpack.c.b16 %v6353, %v6351
    %v8040 = vpack.c.b16 %v6354, %v6352
    %v8041 = vpack.c.b16 %v6357, %v6355
    %v8042 = vpack.c.b16 %v6358, %v6356
    %v8043 = vpack.c.b16 %v6361, %v6359
    %v8044 = vpack.c.b16 %v6362, %v6360
    %v8045 = vpack.c.b16 %v6365, %v6363
    %v8046 = vpack.c.b16 %v6366, %v6364
    %v8047 = vpack.c.b16 %v6369, %v6367
    %v8048 = vpack.c.b16 %v6370, %v6368
    %v8049 = vpack.c.b16 %v6373, %v6371
    %v8050 = vpack.c.b16 %v6374, %v6372
    %v8051 = vpack.c.b16 %v6377, %v6375
    %v8052 = vpack.c.b16 %v6378, %v6376
    %v8053 = vpack.c.b16 %v6381, %v6379
    %v8054 = vpack.c.b16 %v6382, %v6380
    %v8055 = vpack.c.b16 %v6385, %v6383
    %v8056 = vpack.c.b16 %v6386, %v6384
    %v8057 = vpack.c.b16 %v6389, %v6387
    %v8058 = vpack.c.b16 %v6390, %v6388
    %v8059 = vpack.c.b16 %v6393, %v6391
    %v8060 = vpack.c.b16 %v6394, %v6392
    %v8061 = vpack.c.b16 %v6397, %v6395
    %v8062 = vpack.c.b16 %v6398, %v6396
    %v8063 = vpack.c.b16 %v6401, %v6399
    %v8064 = vpack.c.b16 %v6402, %v6400
    %v8065 = vpack.c.b16 %v6405, %v6403
    %v8066 = vpack.c.b16 %v6406, %v6404
    %v8067 = vpack.c.b16 %v6409, %v6407
    %v8068 = vpack.c.b16 %v6410, %v6408
    %v8069 = vpack.c.b16 %v6413, %v6411
    %v8070 = vpack.c.b16 %v6414, %v6412
    %v8071 = vpack.c.b16 %v6417, %v6415
    %v8072 = vpack.c.b16 %v6418, %v6416
    %v8073 = vpack.c.b16 %v6421, %v6419
    %v8074 = vpack.c.b16 %v6422, %v6420
    %v8075 = vpack.c.b16 %v6425, %v6423
    %v8076 = vpack.c.b16 %v6426, %v6424
    %v8077 = vpack.c.b16 %v6429, %v6427
    %v8078 = vpack.c.b16 %v6430, %v6428
    %v8079 = vpack.c.b16 %v6433, %v6431
    %v8080 = vpack.c.b16 %v6434, %v6432
    %v8081 = vpack.c.b16 %v6437, %v6435
    %v8082 = vpack.c.b16 %v6438, %v6436
    %v8083 = vpack.c.b16 %v6441, %v6439
    %v8084 = vpack.c.b16 %v6442, %v6440
    %v8085 = vpack.c.b16 %v6445, %v6443
    %v8086 = vpack.c.b16 %v6446, %v6444
    %v8087 = vpack.c.b16 %v6449, %v6447
    %v8088 = vpack.c.b16 %v6450, %v6448
    %v8089 = vpack.c.b16 %v6453, %v6451
    %v8090 = vpack.c.b16 %v6454, %v6452
    %v8091 = vpack.c.b16 %v6457, %v6455
    %v8092 = vpack.c.b16 %v6458, %v6456
    %v8093 = vpack.c.b16 %v6461, %v6459
    %v8094 = vpack.c.b16 %v6462, %v6460
    %v8095 = vpack.c.b16 %v6465, %v6463
    %v8096 = vpack.c.b16 %v6466, %v6464
    %v8097 = vpack.c.b16 %v6469, %v6467
    %v8098 = vpack.c.b16 %v6470, %v6468
    %v8099 = vpack.c.b16 %v6473, %v6471
    %v8100 = vpack.c.b16 %v6474, %v6472
    %v8101 = vpack.c.b16 %v6477, %v6475
    %v8102 = vpack.c.b16 %v6478, %v6476
    %v8103 = vpack.c.b16 %v6481, %v6479
    %v8104 = vpack.c.b16 %v6482, %v6480
    %v8105 = vpack.c.b16 %v6485, %v6483
    %v8106 = vpack.c.b16 %v6486, %v6484
    %v8107 = vpack.c.b16 %v6489, %v6487
    %v8108 = vpack.c.b16 %v6490, %v6488
    %v8109 = vpack.c.b16 %v6493, %v6491
    %v8110 = vpack.c.b16 %v6494, %v6492
    %v8111 = vpack.c.b16 %v6497, %v6495
    %v8112 = vpack.c.b16 %v6498, %v6496
    %v8113 = vpack.c.b16 %v6501, %v6499
    %v8114 = vpack.c.b16 %v6502, %v6500
    %v8115 = vpack.c.b16 %v6505, %v6503
    %v8116 = vpack.c.b16 %v6506, %v6504
    %v8117 = vpack.c.b16 %v6509, %v6507
    %v8118 = vpack.c.b16 %v6510, %v6508
    %v8119 = vpack.c.b16 %v6513, %v6511
    %v8120 = vpack.c.b16 %v6514, %v6512
    %v8121 = vpack.c.b16 %v6517, %v6515
    %v8122 = vpack.c.b16 %v6518, %v6516
    %v8123 = vpack.c.b16 %v6521, %v6519
    %v8124 = vpack.c.b16 %v6522, %v6520
    %v8125 = vpack.c.b16 %v6525, %v6523
    %v8126 = vpack.c.b16 %v6526, %v6524
    %v8127 = vpack.c.b16 %v6529, %v6527
    %v8128 = vpack.c.b16 %v6530, %v6528
    %v8129 = vpack.c.b16 %v6533, %v6531
    %v8130 = vpack.c.b16 %v6534, %v6532
    %v8131 = vpack.c.b16 %v6537, %v6535
    %v8132 = vpack.c.b16 %v6538, %v6536
    %v8133 = vpack.c.b16 %v6541, %v6539
    %v8134 = vpack.c.b16 %v6542, %v6540
    %v8135 = vpack.c.b16 %v6545, %v6543
    %v8136 = vpack.c.b16 %v6546, %v6544
    %v8137 = vpack.c.b16 %v6549, %v6547
    %v8138 = vpack.c.b16 %v6550, %v6548
    %v8139 = vpack.c.b16 %v6553, %v6551
    %v8140 = vpack.c.b16 %v6554, %v6552
    %v8141 = vpack.c.b16 %v6557, %v6555
    %v8142 = vpack.c.b16 %v6558, %v6556
    %v8143 = vpack.c.b16 %v6561, %v6559
    %v8144 = vpack.c.b16 %v6562, %v6560
    %v8145 = vpack.c.b16 %v6565, %v6563
    %v8146 = vpack.c.b16 %v6566, %v6564
    %v8147 = vpack.c.b16 %v6569, %v6567
    %v8148 = vpack.c.b16 %v6570, %v6568
    %v8149 = vpack.c.b16 %v6573, %v6571
    %v8150 = vpack.c.b16 %v6574, %v6572
    %v8151 = vpack.c.b16 %v6577, %v6575
    %v8152 = vpack.c.b16 %v6578, %v6576
    %v8153 = vpack.c.b16 %v6581, %v6579
    %v8154 = vpack.c.b16 %v6582, %v6580
    %v8155 = vpack.c.b16 %v6585, %v6583
    %v8156 = vpack.c.b16 %v6586, %v6584
    %v8157 = vpack.c.b16 %v6589, %v6587
    %v8158 = vpack.c.b16 %v6590, %v6588
    %v8159 = vpack.c.b16 %v6593, %v6591
    %v8160 = vpack.c.b16 %v6594, %v6592
    %v8161 = vpack.c.b16 %v6597, %v6595
    %v8162 = vpack.c.b16 %v6598, %v6596
    %v8163 = vpack.c.b16 %v6601, %v6599
    %v8164 = vpack.c.b16 %v6602, %v6600
    %v8165 = vpack.c.b16 %v6605, %v6603
    %v8166 = vpack.c.b16 %v6606, %v6604
    %v8167 = vpack.c.b16 %v6609, %v6607
    %v8168 = vpack.c.b16 %v6610, %v6608
    %v8169 = vpack.c.b16 %v6613, %v6611
    %v8170 = vpack.c.b16 %v6614, %v6612
    %v8171 = vpack.c.b16 %v6617, %v6615
    %v8172 = vpack.c.b16 %v6618, %v6616
    %v8173 = vpack.c.b16 %v6621, %v6619
    %v8174 = vpack.c.b16 %v6622, %v6620
    %v8175 = vpack.c.b16 %v6625, %v6623
    %v8176 = vpack.c.b16 %v6626, %v6624
    %v8177 = vpack.c.b16 %v6629, %v6627
    %v8178 = vpack.c.b16 %v6630, %v6628
    %v8179 = vpack.c.b16 %v6633, %v6631
    %v8180 = vpack.c.b16 %v6634, %v6632
    %v8181 = vpack.c.b16 %v6637, %v6635
    %v8182 = vpack.c.b16 %v6638, %v6636
    %v8183 = vpack.c.b16 %v6641, %v6639
    %v8184 = vpack.c.b16 %v6642, %v6640
    %v8185 = vpack.c.b16 %v6645, %v6643
    %v8186 = vpack.c.b16 %v6646, %v6644
    %v8187 = vpack.c.b16 %v6649, %v6647
    %v8188 = vpack.c.b16 %v6650, %v6648
    %v8189 = vpack.c.b16 %v6653, %v6651
    %v8190 = vpack.c.b16 %v6654, %v6652
    %9727 = vmatprep.subr.bf16.mxu0 %v6656
    %9728 = vmatpush1.bf16.msra.mxu0 %v6655
    %9729 = vmatprep.subr.bf16.mxu0 %v6658
    %9730 = vmatpush1.bf16.msra.mxu0 %v6657
    %9731 = vmatprep.subr.bf16.mxu0 %v6660
    %9732 = vmatpush1.bf16.msra.mxu0 %v6659
    %9733 = vmatprep.subr.bf16.mxu0 %v6662
    %9734 = vmatpush1.bf16.msra.mxu0 %v6661
    %9735 = vmatprep.subr.bf16.mxu0 %v6664
    %9736 = vmatpush1.bf16.msra.mxu0 %v6663
    %9737 = vmatprep.subr.bf16.mxu0 %v6666
    %9738 = vmatpush1.bf16.msra.mxu0 %v6665
    %9739 = vmatprep.subr.bf16.mxu0 %v6668
    %9740 = vmatpush1.bf16.msra.mxu0 %v6667
    %9741 = vmatprep.subr.bf16.mxu0 %v6670
    %9742 = vmatpush1.bf16.msra.mxu0 %v6669
    %9743 = vmatprep.subr.bf16.mxu0 %v6672
    %9744 = vmatpush1.bf16.msra.mxu0 %v6671
    %9745 = vmatprep.subr.bf16.mxu0 %v6674
    %9746 = vmatpush1.bf16.msra.mxu0 %v6673
    %9747 = vmatprep.subr.bf16.mxu0 %v6676
    %9748 = vmatpush1.bf16.msra.mxu0 %v6675
    %9749 = vmatprep.subr.bf16.mxu0 %v6678
    %9750 = vmatpush1.bf16.msra.mxu0 %v6677
    %9751 = vmatprep.subr.bf16.mxu0 %v6680
    %9752 = vmatpush1.bf16.msra.mxu0 %v6679
    %9753 = vmatprep.subr.bf16.mxu0 %v6682
    %9754 = vmatpush1.bf16.msra.mxu0 %v6681
    %9755 = vmatprep.subr.bf16.mxu0 %v6684
    %9756 = vmatpush1.bf16.msra.mxu0 %v6683
    %9757 = vmatprep.subr.bf16.mxu0 %v6686
    %9758 = vmatpush1.bf16.msra.mxu0 %v6685
    %9759 = vmatprep.mubr.bf16.mxu0 %v1856
    %9760 = vmatmul.mubr.bf16.gmra.mrb[0].mxu0 %v1855
    %v9761 = vpop.f32.mrb[0].mxu0
    %v9762 = vadd.f32 %v1704, %v9761
    %v9763 = vpop.f32.mrb[0].mxu0
    %v9764 = vadd.f32 %v1708, %v9763
    %v9765 = vpop.f32.mrb[0].mxu0
    %v9766 = vpop.f32.mrb[0].mxu0
    %9767 = vdwg.mxu0
    %9768 = vmatprep.subr.bf16.mxu0 %v6688
    %9769 = vmatpush1.bf16.msra.mxu0 %v6687
    %9770 = vmatprep.subr.bf16.mxu0 %v6690
    %9771 = vmatpush1.bf16.msra.mxu0 %v6689
    %9772 = vmatprep.subr.bf16.mxu0 %v6692
    %9773 = vmatpush1.bf16.msra.mxu0 %v6691
    %9774 = vmatprep.subr.bf16.mxu0 %v6694
    %9775 = vmatpush1.bf16.msra.mxu0 %v6693
    %9776 = vmatprep.subr.bf16.mxu0 %v6696
    %9777 = vmatpush1.bf16.msra.mxu0 %v6695
    %9778 = vmatprep.subr.bf16.mxu0 %v6698
    %9779 = vmatpush1.bf16.msra.mxu0 %v6697
    %9780 = vmatprep.subr.bf16.mxu0 %v6700
    %9781 = vmatpush1.bf16.msra.mxu0 %v6699
    %9782 = vmatprep.subr.bf16.mxu0 %v6702
    %9783 = vmatpush1.bf16.msra.mxu0 %v6701
    %9784 = vmatprep.subr.bf16.mxu0 %v6704
    %9785 = vmatpush1.bf16.msra.mxu0 %v6703
    %9786 = vmatprep.subr.bf16.mxu0 %v6706
    %9787 = vmatpush1.bf16.msra.mxu0 %v6705
    %9788 = vmatprep.subr.bf16.mxu0 %v6708
    %9789 = vmatpush1.bf16.msra.mxu0 %v6707
    %9790 = vmatprep.subr.bf16.mxu0 %v6710
    %9791 = vmatpush1.bf16.msra.mxu0 %v6709
    %9792 = vmatprep.subr.bf16.mxu0 %v6712
    %9793 = vmatpush1.bf16.msra.mxu0 %v6711
    %9794 = vmatprep.subr.bf16.mxu0 %v6714
    %9795 = vmatpush1.bf16.msra.mxu0 %v6713
    %9796 = vmatprep.subr.bf16.mxu0 %v6716
    %9797 = vmatpush1.bf16.msra.mxu0 %v6715
    %9798 = vmatprep.subr.bf16.mxu0 %v6718
    %9799 = vmatpush1.bf16.msra.mxu0 %v6717
    %9800 = vmatprep.mubr.bf16.mxu0 %v1858
    %9801 = vmatmul.mubr.bf16.gmra.mrb[0].mxu0 %v1857
    %v9802 = vpop.f32.mrb[0].mxu0
    %v9803 = vadd.f32 %v9762, %v9802
    %v9804 = vpop.f32.mrb[0].mxu0
    %v9805 = vadd.f32 %v9764, %v9804
    %v9806 = vpop.f32.mrb[0].mxu0
    %v9807 = vpop.f32.mrb[0].mxu0
    %9808 = vdwg.mxu0
    %9809 = vmatprep.subr.bf16.mxu0 %v6720
    %9810 = vmatpush1.bf16.msra.mxu0 %v6719
    %9811 = vmatprep.subr.bf16.mxu0 %v6722
    %9812 = vmatpush1.bf16.msra.mxu0 %v6721
    %9813 = vmatprep.subr.bf16.mxu0 %v6724
    %9814 = vmatpush1.bf16.msra.mxu0 %v6723
    %9815 = vmatprep.subr.bf16.mxu0 %v6726
    %9816 = vmatpush1.bf16.msra.mxu0 %v6725
    %9817 = vmatprep.subr.bf16.mxu0 %v6728
    %9818 = vmatpush1.bf16.msra.mxu0 %v6727
    %9819 = vmatprep.subr.bf16.mxu0 %v6730
    %9820 = vmatpush1.bf16.msra.mxu0 %v6729
    %9821 = vmatprep.subr.bf16.mxu0 %v6732
    %9822 = vmatpush1.bf16.msra.mxu0 %v6731
    %9823 = vmatprep.subr.bf16.mxu0 %v6734
    %9824 = vmatpush1.bf16.msra.mxu0 %v6733
    %9825 = vmatprep.subr.bf16.mxu0 %v6736
    %9826 = vmatpush1.bf16.msra.mxu0 %v6735
    %9827 = vmatprep.subr.bf16.mxu0 %v6738
    %9828 = vmatpush1.bf16.msra.mxu0 %v6737
    %9829 = vmatprep.subr.bf16.mxu0 %v6740
    %9830 = vmatpush1.bf16.msra.mxu0 %v6739
    %9831 = vmatprep.subr.bf16.mxu0 %v6742
    %9832 = vmatpush1.bf16.msra.mxu0 %v6741
    %9833 = vmatprep.subr.bf16.mxu0 %v6744
    %9834 = vmatpush1.bf16.msra.mxu0 %v6743
    %9835 = vmatprep.subr.bf16.mxu0 %v6746
    %9836 = vmatpush1.bf16.msra.mxu0 %v6745
    %9837 = vmatprep.subr.bf16.mxu0 %v6748
    %9838 = vmatpush1.bf16.msra.mxu0 %v6747
    %9839 = vmatprep.subr.bf16.mxu0 %v6750
    %9840 = vmatpush1.bf16.msra.mxu0 %v6749
    %9841 = vmatprep.mubr.bf16.mxu0 %v1860
    %9842 = vmatmul.mubr.bf16.gmra.mrb[0].mxu0 %v1859
    %v9843 = vpop.f32.mrb[0].mxu0
    %v9844 = vadd.f32 %v9803, %v9843
    %v9845 = vpop.f32.mrb[0].mxu0
    %v9846 = vadd.f32 %v9805, %v9845
    %v9847 = vpop.f32.mrb[0].mxu0
    %v9848 = vpop.f32.mrb[0].mxu0
    %9849 = vdwg.mxu0
    %9850 = vmatprep.subr.bf16.mxu0 %v6752
    %9851 = vmatpush1.bf16.msra.mxu0 %v6751
    %9852 = vmatprep.subr.bf16.mxu0 %v6754
    %9853 = vmatpush1.bf16.msra.mxu0 %v6753
    %9854 = vmatprep.subr.bf16.mxu0 %v6756
    %9855 = vmatpush1.bf16.msra.mxu0 %v6755
    %9856 = vmatprep.subr.bf16.mxu0 %v6758
    %9857 = vmatpush1.bf16.msra.mxu0 %v6757
    %9858 = vmatprep.subr.bf16.mxu0 %v6760
    %9859 = vmatpush1.bf16.msra.mxu0 %v6759
    %9860 = vmatprep.subr.bf16.mxu0 %v6762
    %9861 = vmatpush1.bf16.msra.mxu0 %v6761
    %9862 = vmatprep.subr.bf16.mxu0 %v6764
    %9863 = vmatpush1.bf16.msra.mxu0 %v6763
    %9864 = vmatprep.subr.bf16.mxu0 %v6766
    %9865 = vmatpush1.bf16.msra.mxu0 %v6765
    %9866 = vmatprep.subr.bf16.mxu0 %v6768
    %9867 = vmatpush1.bf16.msra.mxu0 %v6767
    %9868 = vmatprep.subr.bf16.mxu0 %v6770
    %9869 = vmatpush1.bf16.msra.mxu0 %v6769
    %9870 = vmatprep.subr.bf16.mxu0 %v6772
    %9871 = vmatpush1.bf16.msra.mxu0 %v6771
    %9872 = vmatprep.subr.bf16.mxu0 %v6774
    %9873 = vmatpush1.bf16.msra.mxu0 %v6773
    %9874 = vmatprep.subr.bf16.mxu0 %v6776
    %9875 = vmatpush1.bf16.msra.mxu0 %v6775
    %9876 = vmatprep.subr.bf16.mxu0 %v6778
    %9877 = vmatpush1.bf16.msra.mxu0 %v6777
    %9878 = vmatprep.subr.bf16.mxu0 %v6780
    %9879 = vmatpush1.bf16.msra.mxu0 %v6779
    %9880 = vmatprep.subr.bf16.mxu0 %v6782
    %9881 = vmatpush1.bf16.msra.mxu0 %v6781
    %9882 = vmatprep.mubr.bf16.mxu0 %v1862
    %9883 = vmatmul.mubr.bf16.gmra.mrb[0].mxu0 %v1861
    %v9884 = vpop.f32.mrb[0].mxu0
    %v9885 = vadd.f32 %v9844, %v9884
    %v9886 = vpop.f32.mrb[0].mxu0
    %v9887 = vadd.f32 %v9846, %v9886
    %v9888 = vpop.f32.mrb[0].mxu0
    %v9889 = vpop.f32.mrb[0].mxu0
    %9890 = vdwg.mxu0
    %9891 = vmatprep.subr.bf16.mxu0 %v6784
    %9892 = vmatpush1.bf16.msra.mxu0 %v6783
    %9893 = vmatprep.subr.bf16.mxu0 %v6786
    %9894 = vmatpush1.bf16.msra.mxu0 %v6785
    %9895 = vmatprep.subr.bf16.mxu0 %v6788
    %9896 = vmatpush1.bf16.msra.mxu0 %v6787
    %9897 = vmatprep.subr.bf16.mxu0 %v6790
    %9898 = vmatpush1.bf16.msra.mxu0 %v6789
    %9899 = vmatprep.subr.bf16.mxu0 %v6792
    %9900 = vmatpush1.bf16.msra.mxu0 %v6791
    %9901 = vmatprep.subr.bf16.mxu0 %v6794
    %9902 = vmatpush1.bf16.msra.mxu0 %v6793
    %9903 = vmatprep.subr.bf16.mxu0 %v6796
    %9904 = vmatpush1.bf16.msra.mxu0 %v6795
    %9905 = vmatprep.subr.bf16.mxu0 %v6798
    %9906 = vmatpush1.bf16.msra.mxu0 %v6797
    %9907 = vmatprep.subr.bf16.mxu0 %v6800
    %9908 = vmatpush1.bf16.msra.mxu0 %v6799
    %9909 = vmatprep.subr.bf16.mxu0 %v6802
    %9910 = vmatpush1.bf16.msra.mxu0 %v6801
    %9911 = vmatprep.subr.bf16.mxu0 %v6804
    %9912 = vmatpush1.bf16.msra.mxu0 %v6803
    %9913 = vmatprep.subr.bf16.mxu0 %v6806
    %9914 = vmatpush1.bf16.msra.mxu0 %v6805
    %9915 = vmatprep.subr.bf16.mxu0 %v6808
    %9916 = vmatpush1.bf16.msra.mxu0 %v6807
    %9917 = vmatprep.subr.bf16.mxu0 %v6810
    %9918 = vmatpush1.bf16.msra.mxu0 %v6809
    %9919 = vmatprep.subr.bf16.mxu0 %v6812
    %9920 = vmatpush1.bf16.msra.mxu0 %v6811
    %9921 = vmatprep.subr.bf16.mxu0 %v6814
    %9922 = vmatpush1.bf16.msra.mxu0 %v6813
    %9923 = vmatprep.mubr.bf16.mxu0 %v1864
    %9924 = vmatmul.mubr.bf16.gmra.mrb[0].mxu0 %v1863
    %v9925 = vpop.f32.mrb[0].mxu0
    %v9926 = vadd.f32 %v9885, %v9925
    %v9927 = vpop.f32.mrb[0].mxu0
    %v9928 = vadd.f32 %v9887, %v9927
    %v9929 = vpop.f32.mrb[0].mxu0
    %v9930 = vpop.f32.mrb[0].mxu0
    %9931 = vdwg.mxu0
    %9932 = vmatprep.subr.bf16.mxu0 %v6816
    %9933 = vmatpush1.bf16.msra.mxu0 %v6815
    %9934 = vmatprep.subr.bf16.mxu0 %v6818
    %9935 = vmatpush1.bf16.msra.mxu0 %v6817
    %9936 = vmatprep.subr.bf16.mxu0 %v6820
    %9937 = vmatpush1.bf16.msra.mxu0 %v6819
    %9938 = vmatprep.subr.bf16.mxu0 %v6822
    %9939 = vmatpush1.bf16.msra.mxu0 %v6821
    %9940 = vmatprep.subr.bf16.mxu0 %v6824
    %9941 = vmatpush1.bf16.msra.mxu0 %v6823
    %9942 = vmatprep.subr.bf16.mxu0 %v6826
    %9943 = vmatpush1.bf16.msra.mxu0 %v6825
    %9944 = vmatprep.subr.bf16.mxu0 %v6828
    %9945 = vmatpush1.bf16.msra.mxu0 %v6827
    %9946 = vmatprep.subr.bf16.mxu0 %v6830
    %9947 = vmatpush1.bf16.msra.mxu0 %v6829
    %9948 = vmatprep.subr.bf16.mxu0 %v6832
    %9949 = vmatpush1.bf16.msra.mxu0 %v6831
    %9950 = vmatprep.subr.bf16.mxu0 %v6834
    %9951 = vmatpush1.bf16.msra.mxu0 %v6833
    %9952 = vmatprep.subr.bf16.mxu0 %v6836
    %9953 = vmatpush1.bf16.msra.mxu0 %v6835
    %9954 = vmatprep.subr.bf16.mxu0 %v6838
    %9955 = vmatpush1.bf16.msra.mxu0 %v6837
    %9956 = vmatprep.subr.bf16.mxu0 %v6840
    %9957 = vmatpush1.bf16.msra.mxu0 %v6839
    %9958 = vmatprep.subr.bf16.mxu0 %v6842
    %9959 = vmatpush1.bf16.msra.mxu0 %v6841
    %9960 = vmatprep.subr.bf16.mxu0 %v6844
    %9961 = vmatpush1.bf16.msra.mxu0 %v6843
    %9962 = vmatprep.subr.bf16.mxu0 %v6846
    %9963 = vmatpush1.bf16.msra.mxu0 %v6845
    %9964 = vmatprep.mubr.bf16.mxu0 %v1866
    %9965 = vmatmul.mubr.bf16.gmra.mrb[0].mxu0 %v1865
    %v9966 = vpop.f32.mrb[0].mxu0
    %v9967 = vadd.f32 %v9926, %v9966
    %v9968 = vpop.f32.mrb[0].mxu0
    %v9969 = vadd.f32 %v9928, %v9968
    %v9970 = vpop.f32.mrb[0].mxu0
    %v9971 = vpop.f32.mrb[0].mxu0
    %9972 = vdwg.mxu0
    %9973 = vmatprep.subr.bf16.mxu0 %v6848
    %9974 = vmatpush1.bf16.msra.mxu0 %v6847
    %9975 = vmatprep.subr.bf16.mxu0 %v6850
    %9976 = vmatpush1.bf16.msra.mxu0 %v6849
    %9977 = vmatprep.subr.bf16.mxu0 %v6852
    %9978 = vmatpush1.bf16.msra.mxu0 %v6851
    %9979 = vmatprep.subr.bf16.mxu0 %v6854
    %9980 = vmatpush1.bf16.msra.mxu0 %v6853
    %9981 = vmatprep.subr.bf16.mxu0 %v6856
    %9982 = vmatpush1.bf16.msra.mxu0 %v6855
    %9983 = vmatprep.subr.bf16.mxu0 %v6858
    %9984 = vmatpush1.bf16.msra.mxu0 %v6857
    %9985 = vmatprep.subr.bf16.mxu0 %v6860
    %9986 = vmatpush1.bf16.msra.mxu0 %v6859
    %9987 = vmatprep.subr.bf16.mxu0 %v6862
    %9988 = vmatpush1.bf16.msra.mxu0 %v6861
    %9989 = vmatprep.subr.bf16.mxu0 %v6864
    %9990 = vmatpush1.bf16.msra.mxu0 %v6863
    %9991 = vmatprep.subr.bf16.mxu0 %v6866
    %9992 = vmatpush1.bf16.msra.mxu0 %v6865
    %9993 = vmatprep.subr.bf16.mxu0 %v6868
    %9994 = vmatpush1.bf16.msra.mxu0 %v6867
    %9995 = vmatprep.subr.bf16.mxu0 %v6870
    %9996 = vmatpush1.bf16.msra.mxu0 %v6869
    %9997 = vmatprep.subr.bf16.mxu0 %v6872
    %9998 = vmatpush1.bf16.msra.mxu0 %v6871
    %9999 = vmatprep.subr.bf16.mxu0 %v6874
    %10000 = vmatpush1.bf16.msra.mxu0 %v6873
    %10001 = vmatprep.subr.bf16.mxu0 %v6876
    %10002 = vmatpush1.bf16.msra.mxu0 %v6875
    %10003 = vmatprep.subr.bf16.mxu0 %v6878
    %10004 = vmatpush1.bf16.msra.mxu0 %v6877
    %10005 = vmatprep.mubr.bf16.mxu0 %v1868
    %10006 = vmatmul.mubr.bf16.gmra.mrb[0].mxu0 %v1867
    %v10007 = vpop.f32.mrb[0].mxu0
    %v10008 = vadd.f32 %v9967, %v10007
    %v10009 = vpop.f32.mrb[0].mxu0
    %v10010 = vadd.f32 %v9969, %v10009
    %v10011 = vpop.f32.mrb[0].mxu0
    %v10012 = vpop.f32.mrb[0].mxu0
    %10013 = vdwg.mxu0
    %10014 = vmatprep.subr.bf16.mxu0 %v6880
    %10015 = vmatpush1.bf16.msra.mxu0 %v6879
    %10016 = vmatprep.subr.bf16.mxu0 %v6882
    %10017 = vmatpush1.bf16.msra.mxu0 %v6881
    %10018 = vmatprep.subr.bf16.mxu0 %v6884
    %10019 = vmatpush1.bf16.msra.mxu0 %v6883
    %10020 = vmatprep.subr.bf16.mxu0 %v6886
    %10021 = vmatpush1.bf16.msra.mxu0 %v6885
    %10022 = vmatprep.subr.bf16.mxu0 %v6888
    %10023 = vmatpush1.bf16.msra.mxu0 %v6887
    %10024 = vmatprep.subr.bf16.mxu0 %v6890
    %10025 = vmatpush1.bf16.msra.mxu0 %v6889
    %10026 = vmatprep.subr.bf16.mxu0 %v6892
    %10027 = vmatpush1.bf16.msra.mxu0 %v6891
    %10028 = vmatprep.subr.bf16.mxu0 %v6894
    %10029 = vmatpush1.bf16.msra.mxu0 %v6893
    %10030 = vmatprep.subr.bf16.mxu0 %v6896
    %10031 = vmatpush1.bf16.msra.mxu0 %v6895
    %10032 = vmatprep.subr.bf16.mxu0 %v6898
    %10033 = vmatpush1.bf16.msra.mxu0 %v6897
    %10034 = vmatprep.subr.bf16.mxu0 %v6900
    %10035 = vmatpush1.bf16.msra.mxu0 %v6899
    %10036 = vmatprep.subr.bf16.mxu0 %v6902
    %10037 = vmatpush1.bf16.msra.mxu0 %v6901
    %10038 = vmatprep.subr.bf16.mxu0 %v6904
    %10039 = vmatpush1.bf16.msra.mxu0 %v6903
    %10040 = vmatprep.subr.bf16.mxu0 %v6906
    %10041 = vmatpush1.bf16.msra.mxu0 %v6905
    %10042 = vmatprep.subr.bf16.mxu0 %v6908
    %10043 = vmatpush1.bf16.msra.mxu0 %v6907
    %10044 = vmatprep.subr.bf16.mxu0 %v6910
    %10045 = vmatpush1.bf16.msra.mxu0 %v6909
    %10046 = vmatprep.mubr.bf16.mxu0 %v1870
    %10047 = vmatmul.mubr.bf16.gmra.mrb[0].mxu0 %v1869
    %v10048 = vpop.f32.mrb[0].mxu0
    %v10049 = vadd.f32 %v10008, %v10048
    %v10050 = vpop.f32.mrb[0].mxu0
    %v10051 = vadd.f32 %v10010, %v10050
    %v10052 = vpop.f32.mrb[0].mxu0
    %v10053 = vpop.f32.mrb[0].mxu0
    %10054 = vdwg.mxu0
    %10055 = vmatprep.subr.bf16.mxu0 %v6912
    %10056 = vmatpush1.bf16.msra.mxu0 %v6911
    %10057 = vmatprep.subr.bf16.mxu0 %v6914
    %10058 = vmatpush1.bf16.msra.mxu0 %v6913
    %10059 = vmatprep.subr.bf16.mxu0 %v6916
    %10060 = vmatpush1.bf16.msra.mxu0 %v6915
    %10061 = vmatprep.subr.bf16.mxu0 %v6918
    %10062 = vmatpush1.bf16.msra.mxu0 %v6917
    %10063 = vmatprep.subr.bf16.mxu0 %v6920
    %10064 = vmatpush1.bf16.msra.mxu0 %v6919
    %10065 = vmatprep.subr.bf16.mxu0 %v6922
    %10066 = vmatpush1.bf16.msra.mxu0 %v6921
    %10067 = vmatprep.subr.bf16.mxu0 %v6924
    %10068 = vmatpush1.bf16.msra.mxu0 %v6923
    %10069 = vmatprep.subr.bf16.mxu0 %v6926
    %10070 = vmatpush1.bf16.msra.mxu0 %v6925
    %10071 = vmatprep.subr.bf16.mxu0 %v6928
    %10072 = vmatpush1.bf16.msra.mxu0 %v6927
    %10073 = vmatprep.subr.bf16.mxu0 %v6930
    %10074 = vmatpush1.bf16.msra.mxu0 %v6929
    %10075 = vmatprep.subr.bf16.mxu0 %v6932
    %10076 = vmatpush1.bf16.msra.mxu0 %v6931
    %10077 = vmatprep.subr.bf16.mxu0 %v6934
    %10078 = vmatpush1.bf16.msra.mxu0 %v6933
    %10079 = vmatprep.subr.bf16.mxu0 %v6936
    %10080 = vmatpush1.bf16.msra.mxu0 %v6935
    %10081 = vmatprep.subr.bf16.mxu0 %v6938
    %10082 = vmatpush1.bf16.msra.mxu0 %v6937
    %10083 = vmatprep.subr.bf16.mxu0 %v6940
    %10084 = vmatpush1.bf16.msra.mxu0 %v6939
    %10085 = vmatprep.subr.bf16.mxu0 %v6942
    %10086 = vmatpush1.bf16.msra.mxu0 %v6941
    %10087 = vmatprep.mubr.bf16.mxu0 %v1872
    %10088 = vmatmul.mubr.bf16.gmra.mrb[0].mxu0 %v1871
    %v10089 = vpop.f32.mrb[0].mxu0
    %v10090 = vadd.f32 %v10049, %v10089
    %v10091 = vpop.f32.mrb[0].mxu0
    %v10092 = vadd.f32 %v10051, %v10091
    %v10093 = vpop.f32.mrb[0].mxu0
    %v10094 = vpop.f32.mrb[0].mxu0
    %10095 = vdwg.mxu0
    %10096 = vmatprep.subr.bf16.mxu0 %v6944
    %10097 = vmatpush1.bf16.msra.mxu0 %v6943
    %10098 = vmatprep.subr.bf16.mxu0 %v6946
    %10099 = vmatpush1.bf16.msra.mxu0 %v6945
    %10100 = vmatprep.subr.bf16.mxu0 %v6948
    %10101 = vmatpush1.bf16.msra.mxu0 %v6947
    %10102 = vmatprep.subr.bf16.mxu0 %v6950
    %10103 = vmatpush1.bf16.msra.mxu0 %v6949
    %10104 = vmatprep.subr.bf16.mxu0 %v6952
    %10105 = vmatpush1.bf16.msra.mxu0 %v6951
    %10106 = vmatprep.subr.bf16.mxu0 %v6954
    %10107 = vmatpush1.bf16.msra.mxu0 %v6953
    %10108 = vmatprep.subr.bf16.mxu0 %v6956
    %10109 = vmatpush1.bf16.msra.mxu0 %v6955
    %10110 = vmatprep.subr.bf16.mxu0 %v6958
    %10111 = vmatpush1.bf16.msra.mxu0 %v6957
    %10112 = vmatprep.subr.bf16.mxu0 %v6960
    %10113 = vmatpush1.bf16.msra.mxu0 %v6959
    %10114 = vmatprep.subr.bf16.mxu0 %v6962
    %10115 = vmatpush1.bf16.msra.mxu0 %v6961
    %10116 = vmatprep.subr.bf16.mxu0 %v6964
    %10117 = vmatpush1.bf16.msra.mxu0 %v6963
    %10118 = vmatprep.subr.bf16.mxu0 %v6966
    %10119 = vmatpush1.bf16.msra.mxu0 %v6965
    %10120 = vmatprep.subr.bf16.mxu0 %v6968
    %10121 = vmatpush1.bf16.msra.mxu0 %v6967
    %10122 = vmatprep.subr.bf16.mxu0 %v6970
    %10123 = vmatpush1.bf16.msra.mxu0 %v6969
    %10124 = vmatprep.subr.bf16.mxu0 %v6972
    %10125 = vmatpush1.bf16.msra.mxu0 %v6971
    %10126 = vmatprep.subr.bf16.mxu0 %v6974
    %10127 = vmatpush1.bf16.msra.mxu0 %v6973
    %10128 = vmatprep.mubr.bf16.mxu0 %v1874
    %10129 = vmatmul.mubr.bf16.gmra.mrb[0].mxu0 %v1873
    %v10130 = vpop.f32.mrb[0].mxu0
    %v10131 = vadd.f32 %v10090, %v10130
    %v10132 = vpop.f32.mrb[0].mxu0
    %v10133 = vadd.f32 %v10092, %v10132
    %v10134 = vpop.f32.mrb[0].mxu0
    %v10135 = vpop.f32.mrb[0].mxu0
    %10136 = vdwg.mxu0
    %10137 = vmatprep.subr.bf16.mxu0 %v6976
    %10138 = vmatpush1.bf16.msra.mxu0 %v6975
    %10139 = vmatprep.subr.bf16.mxu0 %v6978
    %10140 = vmatpush1.bf16.msra.mxu0 %v6977
    %10141 = vmatprep.subr.bf16.mxu0 %v6980
    %10142 = vmatpush1.bf16.msra.mxu0 %v6979
    %10143 = vmatprep.subr.bf16.mxu0 %v6982
    %10144 = vmatpush1.bf16.msra.mxu0 %v6981
    %10145 = vmatprep.subr.bf16.mxu0 %v6984
    %10146 = vmatpush1.bf16.msra.mxu0 %v6983
    %10147 = vmatprep.subr.bf16.mxu0 %v6986
    %10148 = vmatpush1.bf16.msra.mxu0 %v6985
    %10149 = vmatprep.subr.bf16.mxu0 %v6988
    %10150 = vmatpush1.bf16.msra.mxu0 %v6987
    %10151 = vmatprep.subr.bf16.mxu0 %v6990
    %10152 = vmatpush1.bf16.msra.mxu0 %v6989
    %10153 = vmatprep.subr.bf16.mxu0 %v6992
    %10154 = vmatpush1.bf16.msra.mxu0 %v6991
    %10155 = vmatprep.subr.bf16.mxu0 %v6994
    %10156 = vmatpush1.bf16.msra.mxu0 %v6993
    %10157 = vmatprep.subr.bf16.mxu0 %v6996
    %10158 = vmatpush1.bf16.msra.mxu0 %v6995
    %10159 = vmatprep.subr.bf16.mxu0 %v6998
    %10160 = vmatpush1.bf16.msra.mxu0 %v6997
    %10161 = vmatprep.subr.bf16.mxu0 %v7000
    %10162 = vmatpush1.bf16.msra.mxu0 %v6999
    %10163 = vmatprep.subr.bf16.mxu0 %v7002
    %10164 = vmatpush1.bf16.msra.mxu0 %v7001
    %10165 = vmatprep.subr.bf16.mxu0 %v7004
    %10166 = vmatpush1.bf16.msra.mxu0 %v7003
    %10167 = vmatprep.subr.bf16.mxu0 %v7006
    %10168 = vmatpush1.bf16.msra.mxu0 %v7005
    %10169 = vmatprep.mubr.bf16.mxu0 %v1876
    %10170 = vmatmul.mubr.bf16.gmra.mrb[0].mxu0 %v1875
    %v10171 = vpop.f32.mrb[0].mxu0
    %v10172 = vadd.f32 %v10131, %v10171
    %v10173 = vpop.f32.mrb[0].mxu0
    %v10174 = vadd.f32 %v10133, %v10173
    %v10175 = vpop.f32.mrb[0].mxu0
    %v10176 = vpop.f32.mrb[0].mxu0
    %10177 = vdwg.mxu0
    %10178 = vmatprep.subr.bf16.mxu0 %v7008
    %10179 = vmatpush1.bf16.msra.mxu0 %v7007
    %10180 = vmatprep.subr.bf16.mxu0 %v7010
    %10181 = vmatpush1.bf16.msra.mxu0 %v7009
    %10182 = vmatprep.subr.bf16.mxu0 %v7012
    %10183 = vmatpush1.bf16.msra.mxu0 %v7011
    %10184 = vmatprep.subr.bf16.mxu0 %v7014
    %10185 = vmatpush1.bf16.msra.mxu0 %v7013
    %10186 = vmatprep.subr.bf16.mxu0 %v7016
    %10187 = vmatpush1.bf16.msra.mxu0 %v7015
    %10188 = vmatprep.subr.bf16.mxu0 %v7018
    %10189 = vmatpush1.bf16.msra.mxu0 %v7017
    %10190 = vmatprep.subr.bf16.mxu0 %v7020
    %10191 = vmatpush1.bf16.msra.mxu0 %v7019
    %10192 = vmatprep.subr.bf16.mxu0 %v7022
    %10193 = vmatpush1.bf16.msra.mxu0 %v7021
    %10194 = vmatprep.subr.bf16.mxu0 %v7024
    %10195 = vmatpush1.bf16.msra.mxu0 %v7023
    %10196 = vmatprep.subr.bf16.mxu0 %v7026
    %10197 = vmatpush1.bf16.msra.mxu0 %v7025
    %10198 = vmatprep.subr.bf16.mxu0 %v7028
    %10199 = vmatpush1.bf16.msra.mxu0 %v7027
    %10200 = vmatprep.subr.bf16.mxu0 %v7030
    %10201 = vmatpush1.bf16.msra.mxu0 %v7029
    %10202 = vmatprep.subr.bf16.mxu0 %v7032
    %10203 = vmatpush1.bf16.msra.mxu0 %v7031
    %10204 = vmatprep.subr.bf16.mxu0 %v7034
    %10205 = vmatpush1.bf16.msra.mxu0 %v7033
    %10206 = vmatprep.subr.bf16.mxu0 %v7036
    %10207 = vmatpush1.bf16.msra.mxu0 %v7035
    %10208 = vmatprep.subr.bf16.mxu0 %v7038
    %10209 = vmatpush1.bf16.msra.mxu0 %v7037
    %10210 = vmatprep.mubr.bf16.mxu0 %v1878
    %10211 = vmatmul.mubr.bf16.gmra.mrb[0].mxu0 %v1877
    %v10212 = vpop.f32.mrb[0].mxu0
    %v10213 = vadd.f32 %v10172, %v10212
    %v10214 = vpop.f32.mrb[0].mxu0
    %v10215 = vadd.f32 %v10174, %v10214
    %v10216 = vpop.f32.mrb[0].mxu0
    %v10217 = vpop.f32.mrb[0].mxu0
    %10218 = vdwg.mxu0
    %10219 = vmatprep.subr.bf16.mxu0 %v7040
    %10220 = vmatpush1.bf16.msra.mxu0 %v7039
    %10221 = vmatprep.subr.bf16.mxu0 %v7042
    %10222 = vmatpush1.bf16.msra.mxu0 %v7041
    %10223 = vmatprep.subr.bf16.mxu0 %v7044
    %10224 = vmatpush1.bf16.msra.mxu0 %v7043
    %10225 = vmatprep.subr.bf16.mxu0 %v7046
    %10226 = vmatpush1.bf16.msra.mxu0 %v7045
    %10227 = vmatprep.subr.bf16.mxu0 %v7048
    %10228 = vmatpush1.bf16.msra.mxu0 %v7047
    %10229 = vmatprep.subr.bf16.mxu0 %v7050
    %10230 = vmatpush1.bf16.msra.mxu0 %v7049
    %10231 = vmatprep.subr.bf16.mxu0 %v7052
    %10232 = vmatpush1.bf16.msra.mxu0 %v7051
    %10233 = vmatprep.subr.bf16.mxu0 %v7054
    %10234 = vmatpush1.bf16.msra.mxu0 %v7053
    %10235 = vmatprep.subr.bf16.mxu0 %v7056
    %10236 = vmatpush1.bf16.msra.mxu0 %v7055
    %10237 = vmatprep.subr.bf16.mxu0 %v7058
    %10238 = vmatpush1.bf16.msra.mxu0 %v7057
    %10239 = vmatprep.subr.bf16.mxu0 %v7060
    %10240 = vmatpush1.bf16.msra.mxu0 %v7059
    %10241 = vmatprep.subr.bf16.mxu0 %v7062
    %10242 = vmatpush1.bf16.msra.mxu0 %v7061
    %10243 = vmatprep.subr.bf16.mxu0 %v7064
    %10244 = vmatpush1.bf16.msra.mxu0 %v7063
    %10245 = vmatprep.subr.bf16.mxu0 %v7066
    %10246 = vmatpush1.bf16.msra.mxu0 %v7065
    %10247 = vmatprep.subr.bf16.mxu0 %v7068
    %10248 = vmatpush1.bf16.msra.mxu0 %v7067
    %10249 = vmatprep.subr.bf16.mxu0 %v7070
    %10250 = vmatpush1.bf16.msra.mxu0 %v7069
    %10251 = vmatprep.mubr.bf16.mxu0 %v1880
    %10252 = vmatmul.mubr.bf16.gmra.mrb[0].mxu0 %v1879
    %v10253 = vpop.f32.mrb[0].mxu0
    %v10254 = vadd.f32 %v10213, %v10253
    %v10255 = vpop.f32.mrb[0].mxu0
    %v10256 = vadd.f32 %v10215, %v10255
    %v10257 = vpop.f32.mrb[0].mxu0
    %v10258 = vpop.f32.mrb[0].mxu0
    %10259 = vdwg.mxu0
    %10260 = vmatprep.subr.bf16.mxu0 %v7072
    %10261 = vmatpush1.bf16.msra.mxu0 %v7071
    %10262 = vmatprep.subr.bf16.mxu0 %v7074
    %10263 = vmatpush1.bf16.msra.mxu0 %v7073
    %10264 = vmatprep.subr.bf16.mxu0 %v7076
    %10265 = vmatpush1.bf16.msra.mxu0 %v7075
    %10266 = vmatprep.subr.bf16.mxu0 %v7078
    %10267 = vmatpush1.bf16.msra.mxu0 %v7077
    %10268 = vmatprep.subr.bf16.mxu0 %v7080
    %10269 = vmatpush1.bf16.msra.mxu0 %v7079
    %10270 = vmatprep.subr.bf16.mxu0 %v7082
    %10271 = vmatpush1.bf16.msra.mxu0 %v7081
    %10272 = vmatprep.subr.bf16.mxu0 %v7084
    %10273 = vmatpush1.bf16.msra.mxu0 %v7083
    %10274 = vmatprep.subr.bf16.mxu0 %v7086
    %10275 = vmatpush1.bf16.msra.mxu0 %v7085
    %10276 = vmatprep.subr.bf16.mxu0 %v7088
    %10277 = vmatpush1.bf16.msra.mxu0 %v7087
    %10278 = vmatprep.subr.bf16.mxu0 %v7090
    %10279 = vmatpush1.bf16.msra.mxu0 %v7089
    %10280 = vmatprep.subr.bf16.mxu0 %v7092
    %10281 = vmatpush1.bf16.msra.mxu0 %v7091
    %10282 = vmatprep.subr.bf16.mxu0 %v7094
    %10283 = vmatpush1.bf16.msra.mxu0 %v7093
    %10284 = vmatprep.subr.bf16.mxu0 %v7096
    %10285 = vmatpush1.bf16.msra.mxu0 %v7095
    %10286 = vmatprep.subr.bf16.mxu0 %v7098
    %10287 = vmatpush1.bf16.msra.mxu0 %v7097
    %10288 = vmatprep.subr.bf16.mxu0 %v7100
    %10289 = vmatpush1.bf16.msra.mxu0 %v7099
    %10290 = vmatprep.subr.bf16.mxu0 %v7102
    %10291 = vmatpush1.bf16.msra.mxu0 %v7101
    %10292 = vmatprep.mubr.bf16.mxu0 %v1882
    %10293 = vmatmul.mubr.bf16.gmra.mrb[0].mxu0 %v1881
    %v10294 = vpop.f32.mrb[0].mxu0
    %v10295 = vadd.f32 %v10254, %v10294
    %v10296 = vpop.f32.mrb[0].mxu0
    %v10297 = vadd.f32 %v10256, %v10296
    %v10298 = vpop.f32.mrb[0].mxu0
    %v10299 = vpop.f32.mrb[0].mxu0
    %10300 = vdwg.mxu0
    %10301 = vmatprep.subr.bf16.mxu0 %v7104
    %10302 = vmatpush1.bf16.msra.mxu0 %v7103
    %10303 = vmatprep.subr.bf16.mxu0 %v7106
    %10304 = vmatpush1.bf16.msra.mxu0 %v7105
    %10305 = vmatprep.subr.bf16.mxu0 %v7108
    %10306 = vmatpush1.bf16.msra.mxu0 %v7107
    %10307 = vmatprep.subr.bf16.mxu0 %v7110
    %10308 = vmatpush1.bf16.msra.mxu0 %v7109
    %10309 = vmatprep.subr.bf16.mxu0 %v7112
    %10310 = vmatpush1.bf16.msra.mxu0 %v7111
    %10311 = vmatprep.subr.bf16.mxu0 %v7114
    %10312 = vmatpush1.bf16.msra.mxu0 %v7113
    %10313 = vmatprep.subr.bf16.mxu0 %v7116
    %10314 = vmatpush1.bf16.msra.mxu0 %v7115
    %10315 = vmatprep.subr.bf16.mxu0 %v7118
    %10316 = vmatpush1.bf16.msra.mxu0 %v7117
    %10317 = vmatprep.subr.bf16.mxu0 %v7120
    %10318 = vmatpush1.bf16.msra.mxu0 %v7119
    %10319 = vmatprep.subr.bf16.mxu0 %v7122
    %10320 = vmatpush1.bf16.msra.mxu0 %v7121
    %10321 = vmatprep.subr.bf16.mxu0 %v7124
    %10322 = vmatpush1.bf16.msra.mxu0 %v7123
    %10323 = vmatprep.subr.bf16.mxu0 %v7126
    %10324 = vmatpush1.bf16.msra.mxu0 %v7125
    %10325 = vmatprep.subr.bf16.mxu0 %v7128
    %10326 = vmatpush1.bf16.msra.mxu0 %v7127
    %10327 = vmatprep.subr.bf16.mxu0 %v7130
    %10328 = vmatpush1.bf16.msra.mxu0 %v7129
    %10329 = vmatprep.subr.bf16.mxu0 %v7132
    %10330 = vmatpush1.bf16.msra.mxu0 %v7131
    %10331 = vmatprep.subr.bf16.mxu0 %v7134
    %10332 = vmatpush1.bf16.msra.mxu0 %v7133
    %10333 = vmatprep.mubr.bf16.mxu0 %v1884
    %10334 = vmatmul.mubr.bf16.gmra.mrb[0].mxu0 %v1883
    %v10335 = vpop.f32.mrb[0].mxu0
    %v10336 = vadd.f32 %v10295, %v10335
    %v10337 = vpop.f32.mrb[0].mxu0
    %v10338 = vadd.f32 %v10297, %v10337
    %v10339 = vpop.f32.mrb[0].mxu0
    %v10340 = vpop.f32.mrb[0].mxu0
    %10341 = vdwg.mxu0
    %10342 = vmatprep.subr.bf16.mxu0 %v7136
    %10343 = vmatpush1.bf16.msra.mxu0 %v7135
    %10344 = vmatprep.subr.bf16.mxu0 %v7138
    %10345 = vmatpush1.bf16.msra.mxu0 %v7137
    %10346 = vmatprep.subr.bf16.mxu0 %v7140
    %10347 = vmatpush1.bf16.msra.mxu0 %v7139
    %10348 = vmatprep.subr.bf16.mxu0 %v7142
    %10349 = vmatpush1.bf16.msra.mxu0 %v7141
    %10350 = vmatprep.subr.bf16.mxu0 %v7144
    %10351 = vmatpush1.bf16.msra.mxu0 %v7143
    %10352 = vmatprep.subr.bf16.mxu0 %v7146
    %10353 = vmatpush1.bf16.msra.mxu0 %v7145
    %10354 = vmatprep.subr.bf16.mxu0 %v7148
    %10355 = vmatpush1.bf16.msra.mxu0 %v7147
    %10356 = vmatprep.subr.bf16.mxu0 %v7150
    %10357 = vmatpush1.bf16.msra.mxu0 %v7149
    %10358 = vmatprep.subr.bf16.mxu0 %v7152
    %10359 = vmatpush1.bf16.msra.mxu0 %v7151
    %10360 = vmatprep.subr.bf16.mxu0 %v7154
    %10361 = vmatpush1.bf16.msra.mxu0 %v7153
    %10362 = vmatprep.subr.bf16.mxu0 %v7156
    %10363 = vmatpush1.bf16.msra.mxu0 %v7155
    %10364 = vmatprep.subr.bf16.mxu0 %v7158
    %10365 = vmatpush1.bf16.msra.mxu0 %v7157
    %10366 = vmatprep.subr.bf16.mxu0 %v7160
    %10367 = vmatpush1.bf16.msra.mxu0 %v7159
    %10368 = vmatprep.subr.bf16.mxu0 %v7162
    %10369 = vmatpush1.bf16.msra.mxu0 %v7161
    %10370 = vmatprep.subr.bf16.mxu0 %v7164
    %10371 = vmatpush1.bf16.msra.mxu0 %v7163
    %10372 = vmatprep.subr.bf16.mxu0 %v7166
    %10373 = vmatpush1.bf16.msra.mxu0 %v7165
    %10374 = vmatprep.mubr.bf16.mxu0 %v1886
    %10375 = vmatmul.mubr.bf16.gmra.mrb[0].mxu0 %v1885
    %v10376 = vpop.f32.mrb[0].mxu0
    %v10377 = vadd.f32 %v10336, %v10376
    %v10378 = vpop.f32.mrb[0].mxu0
    %v10379 = vadd.f32 %v10338, %v10378
    %v10380 = vpop.f32.mrb[0].mxu0
    %v10381 = vpop.f32.mrb[0].mxu0
    %10382 = vdwg.mxu0
    %10383 = vmatprep.subr.bf16.mxu0 %v7168
    %10384 = vmatpush1.bf16.msra.mxu0 %v7167
    %10385 = vmatprep.subr.bf16.mxu0 %v7170
    %10386 = vmatpush1.bf16.msra.mxu0 %v7169
    %10387 = vmatprep.subr.bf16.mxu0 %v7172
    %10388 = vmatpush1.bf16.msra.mxu0 %v7171
    %10389 = vmatprep.subr.bf16.mxu0 %v7174
    %10390 = vmatpush1.bf16.msra.mxu0 %v7173
    %10391 = vmatprep.subr.bf16.mxu0 %v7176
    %10392 = vmatpush1.bf16.msra.mxu0 %v7175
    %10393 = vmatprep.subr.bf16.mxu0 %v7178
    %10394 = vmatpush1.bf16.msra.mxu0 %v7177
    %10395 = vmatprep.subr.bf16.mxu0 %v7180
    %10396 = vmatpush1.bf16.msra.mxu0 %v7179
    %10397 = vmatprep.subr.bf16.mxu0 %v7182
    %10398 = vmatpush1.bf16.msra.mxu0 %v7181
    %10399 = vmatprep.subr.bf16.mxu0 %v7184
    %10400 = vmatpush1.bf16.msra.mxu0 %v7183
    %10401 = vmatprep.subr.bf16.mxu0 %v7186
    %10402 = vmatpush1.bf16.msra.mxu0 %v7185
    %10403 = vmatprep.subr.bf16.mxu0 %v7188
    %10404 = vmatpush1.bf16.msra.mxu0 %v7187
    %10405 = vmatprep.subr.bf16.mxu0 %v7190
    %10406 = vmatpush1.bf16.msra.mxu0 %v7189
    %10407 = vmatprep.subr.bf16.mxu0 %v7192
    %10408 = vmatpush1.bf16.msra.mxu0 %v7191
    %10409 = vmatprep.subr.bf16.mxu0 %v7194
    %10410 = vmatpush1.bf16.msra.mxu0 %v7193
    %10411 = vmatprep.subr.bf16.mxu0 %v7196
    %10412 = vmatpush1.bf16.msra.mxu0 %v7195
    %10413 = vmatprep.subr.bf16.mxu0 %v7198
    %10414 = vmatpush1.bf16.msra.mxu0 %v7197
    %10415 = vmatprep.mubr.bf16.mxu0 %v1888
    %10416 = vmatmul.mubr.bf16.gmra.mrb[0].mxu0 %v1887
    %v10417 = vpop.f32.mrb[0].mxu0
    %v10418 = vadd.f32 %v10377, %v10417
    %v10419 = vpop.f32.mrb[0].mxu0
    %v10420 = vadd.f32 %v10379, %v10419
    %v10421 = vpop.f32.mrb[0].mxu0
    %v10422 = vpop.f32.mrb[0].mxu0
    %10423 = vdwg.mxu0
    %10424 = vmatprep.subr.bf16.mxu0 %v7200
    %10425 = vmatpush1.bf16.msra.mxu0 %v7199
    %10426 = vmatprep.subr.bf16.mxu0 %v7202
    %10427 = vmatpush1.bf16.msra.mxu0 %v7201
    %10428 = vmatprep.subr.bf16.mxu0 %v7204
    %10429 = vmatpush1.bf16.msra.mxu0 %v7203
    %10430 = vmatprep.subr.bf16.mxu0 %v7206
    %10431 = vmatpush1.bf16.msra.mxu0 %v7205
    %10432 = vmatprep.subr.bf16.mxu0 %v7208
    %10433 = vmatpush1.bf16.msra.mxu0 %v7207
    %10434 = vmatprep.subr.bf16.mxu0 %v7210
    %10435 = vmatpush1.bf16.msra.mxu0 %v7209
    %10436 = vmatprep.subr.bf16.mxu0 %v7212
    %10437 = vmatpush1.bf16.msra.mxu0 %v7211
    %10438 = vmatprep.subr.bf16.mxu0 %v7214
    %10439 = vmatpush1.bf16.msra.mxu0 %v7213
    %10440 = vmatprep.subr.bf16.mxu0 %v7216
    %10441 = vmatpush1.bf16.msra.mxu0 %v7215
    %10442 = vmatprep.subr.bf16.mxu0 %v7218
    %10443 = vmatpush1.bf16.msra.mxu0 %v7217
    %10444 = vmatprep.subr.bf16.mxu0 %v7220
    %10445 = vmatpush1.bf16.msra.mxu0 %v7219
    %10446 = vmatprep.subr.bf16.mxu0 %v7222
    %10447 = vmatpush1.bf16.msra.mxu0 %v7221
    %10448 = vmatprep.subr.bf16.mxu0 %v7224
    %10449 = vmatpush1.bf16.msra.mxu0 %v7223
    %10450 = vmatprep.subr.bf16.mxu0 %v7226
    %10451 = vmatpush1.bf16.msra.mxu0 %v7225
    %10452 = vmatprep.subr.bf16.mxu0 %v7228
    %10453 = vmatpush1.bf16.msra.mxu0 %v7227
    %10454 = vmatprep.subr.bf16.mxu0 %v7230
    %10455 = vmatpush1.bf16.msra.mxu0 %v7229
    %10456 = vmatprep.mubr.bf16.mxu0 %v1890
    %10457 = vmatmul.mubr.bf16.gmra.mrb[0].mxu0 %v1889
    %v10458 = vpop.f32.mrb[0].mxu0
    %v10459 = vadd.f32 %v10418, %v10458
    %v10460 = vpop.f32.mrb[0].mxu0
    %v10461 = vadd.f32 %v10420, %v10460
    %v10462 = vpop.f32.mrb[0].mxu0
    %v10463 = vpop.f32.mrb[0].mxu0
    %10464 = vdwg.mxu0
    %10465 = vmatprep.subr.bf16.mxu0 %v7232
    %10466 = vmatpush1.bf16.msra.mxu0 %v7231
    %10467 = vmatprep.subr.bf16.mxu0 %v7234
    %10468 = vmatpush1.bf16.msra.mxu0 %v7233
    %10469 = vmatprep.subr.bf16.mxu0 %v7236
    %10470 = vmatpush1.bf16.msra.mxu0 %v7235
    %10471 = vmatprep.subr.bf16.mxu0 %v7238
    %10472 = vmatpush1.bf16.msra.mxu0 %v7237
    %10473 = vmatprep.subr.bf16.mxu0 %v7240
    %10474 = vmatpush1.bf16.msra.mxu0 %v7239
    %10475 = vmatprep.subr.bf16.mxu0 %v7242
    %10476 = vmatpush1.bf16.msra.mxu0 %v7241
    %10477 = vmatprep.subr.bf16.mxu0 %v7244
    %10478 = vmatpush1.bf16.msra.mxu0 %v7243
    %10479 = vmatprep.subr.bf16.mxu0 %v7246
    %10480 = vmatpush1.bf16.msra.mxu0 %v7245
    %10481 = vmatprep.subr.bf16.mxu0 %v7248
    %10482 = vmatpush1.bf16.msra.mxu0 %v7247
    %10483 = vmatprep.subr.bf16.mxu0 %v7250
    %10484 = vmatpush1.bf16.msra.mxu0 %v7249
    %10485 = vmatprep.subr.bf16.mxu0 %v7252
    %10486 = vmatpush1.bf16.msra.mxu0 %v7251
    %10487 = vmatprep.subr.bf16.mxu0 %v7254
    %10488 = vmatpush1.bf16.msra.mxu0 %v7253
    %10489 = vmatprep.subr.bf16.mxu0 %v7256
    %10490 = vmatpush1.bf16.msra.mxu0 %v7255
    %10491 = vmatprep.subr.bf16.mxu0 %v7258
    %10492 = vmatpush1.bf16.msra.mxu0 %v7257
    %10493 = vmatprep.subr.bf16.mxu0 %v7260
    %10494 = vmatpush1.bf16.msra.mxu0 %v7259
    %10495 = vmatprep.subr.bf16.mxu0 %v7262
    %10496 = vmatpush1.bf16.msra.mxu0 %v7261
    %10497 = vmatprep.mubr.bf16.mxu0 %v1892
    %10498 = vmatmul.mubr.bf16.gmra.mrb[0].mxu0 %v1891
    %v10499 = vpop.f32.mrb[0].mxu0
    %v10500 = vadd.f32 %v10459, %v10499
    %v10501 = vpop.f32.mrb[0].mxu0
    %v10502 = vadd.f32 %v10461, %v10501
    %v10503 = vpop.f32.mrb[0].mxu0
    %v10504 = vpop.f32.mrb[0].mxu0
    %10505 = vdwg.mxu0
    %10506 = vmatprep.subr.bf16.mxu0 %v7264
    %10507 = vmatpush1.bf16.msra.mxu0 %v7263
    %10508 = vmatprep.subr.bf16.mxu0 %v7266
    %10509 = vmatpush1.bf16.msra.mxu0 %v7265
    %10510 = vmatprep.subr.bf16.mxu0 %v7268
    %10511 = vmatpush1.bf16.msra.mxu0 %v7267
    %10512 = vmatprep.subr.bf16.mxu0 %v7270
    %10513 = vmatpush1.bf16.msra.mxu0 %v7269
    %10514 = vmatprep.subr.bf16.mxu0 %v7272
    %10515 = vmatpush1.bf16.msra.mxu0 %v7271
    %10516 = vmatprep.subr.bf16.mxu0 %v7274
    %10517 = vmatpush1.bf16.msra.mxu0 %v7273
    %10518 = vmatprep.subr.bf16.mxu0 %v7276
    %10519 = vmatpush1.bf16.msra.mxu0 %v7275
    %10520 = vmatprep.subr.bf16.mxu0 %v7278
    %10521 = vmatpush1.bf16.msra.mxu0 %v7277
    %10522 = vmatprep.subr.bf16.mxu0 %v7280
    %10523 = vmatpush1.bf16.msra.mxu0 %v7279
    %10524 = vmatprep.subr.bf16.mxu0 %v7282
    %10525 = vmatpush1.bf16.msra.mxu0 %v7281
    %10526 = vmatprep.subr.bf16.mxu0 %v7284
    %10527 = vmatpush1.bf16.msra.mxu0 %v7283
    %10528 = vmatprep.subr.bf16.mxu0 %v7286
    %10529 = vmatpush1.bf16.msra.mxu0 %v7285
    %10530 = vmatprep.subr.bf16.mxu0 %v7288
    %10531 = vmatpush1.bf16.msra.mxu0 %v7287
    %10532 = vmatprep.subr.bf16.mxu0 %v7290
    %10533 = vmatpush1.bf16.msra.mxu0 %v7289
    %10534 = vmatprep.subr.bf16.mxu0 %v7292
    %10535 = vmatpush1.bf16.msra.mxu0 %v7291
    %10536 = vmatprep.subr.bf16.mxu0 %v7294
    %10537 = vmatpush1.bf16.msra.mxu0 %v7293
    %10538 = vmatprep.mubr.bf16.mxu0 %v1894
    %10539 = vmatmul.mubr.bf16.gmra.mrb[0].mxu0 %v1893
    %v10540 = vpop.f32.mrb[0].mxu0
    %v10541 = vadd.f32 %v10500, %v10540
    %v10542 = vpop.f32.mrb[0].mxu0
    %v10543 = vadd.f32 %v10502, %v10542
    %v10544 = vpop.f32.mrb[0].mxu0
    %v10545 = vpop.f32.mrb[0].mxu0
    %10546 = vdwg.mxu0
    %10547 = vmatprep.subr.bf16.mxu0 %v7296
    %10548 = vmatpush1.bf16.msra.mxu0 %v7295
    %10549 = vmatprep.subr.bf16.mxu0 %v7298
    %10550 = vmatpush1.bf16.msra.mxu0 %v7297
    %10551 = vmatprep.subr.bf16.mxu0 %v7300
    %10552 = vmatpush1.bf16.msra.mxu0 %v7299
    %10553 = vmatprep.subr.bf16.mxu0 %v7302
    %10554 = vmatpush1.bf16.msra.mxu0 %v7301
    %10555 = vmatprep.subr.bf16.mxu0 %v7304
    %10556 = vmatpush1.bf16.msra.mxu0 %v7303
    %10557 = vmatprep.subr.bf16.mxu0 %v7306
    %10558 = vmatpush1.bf16.msra.mxu0 %v7305
    %10559 = vmatprep.subr.bf16.mxu0 %v7308
    %10560 = vmatpush1.bf16.msra.mxu0 %v7307
    %10561 = vmatprep.subr.bf16.mxu0 %v7310
    %10562 = vmatpush1.bf16.msra.mxu0 %v7309
    %10563 = vmatprep.subr.bf16.mxu0 %v7312
    %10564 = vmatpush1.bf16.msra.mxu0 %v7311
    %10565 = vmatprep.subr.bf16.mxu0 %v7314
    %10566 = vmatpush1.bf16.msra.mxu0 %v7313
    %10567 = vmatprep.subr.bf16.mxu0 %v7316
    %10568 = vmatpush1.bf16.msra.mxu0 %v7315
    %10569 = vmatprep.subr.bf16.mxu0 %v7318
    %10570 = vmatpush1.bf16.msra.mxu0 %v7317
    %10571 = vmatprep.subr.bf16.mxu0 %v7320
    %10572 = vmatpush1.bf16.msra.mxu0 %v7319
    %10573 = vmatprep.subr.bf16.mxu0 %v7322
    %10574 = vmatpush1.bf16.msra.mxu0 %v7321
    %10575 = vmatprep.subr.bf16.mxu0 %v7324
    %10576 = vmatpush1.bf16.msra.mxu0 %v7323
    %10577 = vmatprep.subr.bf16.mxu0 %v7326
    %10578 = vmatpush1.bf16.msra.mxu0 %v7325
    %10579 = vmatprep.mubr.bf16.mxu0 %v1896
    %10580 = vmatmul.mubr.bf16.gmra.mrb[0].mxu0 %v1895
    %v10581 = vpop.f32.mrb[0].mxu0
    %v10582 = vadd.f32 %v10541, %v10581
    %v10583 = vpop.f32.mrb[0].mxu0
    %v10584 = vadd.f32 %v10543, %v10583
    %v10585 = vpop.f32.mrb[0].mxu0
    %v10586 = vpop.f32.mrb[0].mxu0
    %10587 = vdwg.mxu0
    %10588 = vmatprep.subr.bf16.mxu0 %v7328
    %10589 = vmatpush1.bf16.msra.mxu0 %v7327
    %10590 = vmatprep.subr.bf16.mxu0 %v7330
    %10591 = vmatpush1.bf16.msra.mxu0 %v7329
    %10592 = vmatprep.subr.bf16.mxu0 %v7332
    %10593 = vmatpush1.bf16.msra.mxu0 %v7331
    %10594 = vmatprep.subr.bf16.mxu0 %v7334
    %10595 = vmatpush1.bf16.msra.mxu0 %v7333
    %10596 = vmatprep.subr.bf16.mxu0 %v7336
    %10597 = vmatpush1.bf16.msra.mxu0 %v7335
    %10598 = vmatprep.subr.bf16.mxu0 %v7338
    %10599 = vmatpush1.bf16.msra.mxu0 %v7337
    %10600 = vmatprep.subr.bf16.mxu0 %v7340
    %10601 = vmatpush1.bf16.msra.mxu0 %v7339
    %10602 = vmatprep.subr.bf16.mxu0 %v7342
    %10603 = vmatpush1.bf16.msra.mxu0 %v7341
    %10604 = vmatprep.subr.bf16.mxu0 %v7344
    %10605 = vmatpush1.bf16.msra.mxu0 %v7343
    %10606 = vmatprep.subr.bf16.mxu0 %v7346
    %10607 = vmatpush1.bf16.msra.mxu0 %v7345
    %10608 = vmatprep.subr.bf16.mxu0 %v7348
    %10609 = vmatpush1.bf16.msra.mxu0 %v7347
    %10610 = vmatprep.subr.bf16.mxu0 %v7350
    %10611 = vmatpush1.bf16.msra.mxu0 %v7349
    %10612 = vmatprep.subr.bf16.mxu0 %v7352
    %10613 = vmatpush1.bf16.msra.mxu0 %v7351
    %10614 = vmatprep.subr.bf16.mxu0 %v7354
    %10615 = vmatpush1.bf16.msra.mxu0 %v7353
    %10616 = vmatprep.subr.bf16.mxu0 %v7356
    %10617 = vmatpush1.bf16.msra.mxu0 %v7355
    %10618 = vmatprep.subr.bf16.mxu0 %v7358
    %10619 = vmatpush1.bf16.msra.mxu0 %v7357
    %10620 = vmatprep.mubr.bf16.mxu0 %v1898
    %10621 = vmatmul.mubr.bf16.gmra.mrb[0].mxu0 %v1897
    %v10622 = vpop.f32.mrb[0].mxu0
    %v10623 = vadd.f32 %v10582, %v10622
    %v10624 = vpop.f32.mrb[0].mxu0
    %v10625 = vadd.f32 %v10584, %v10624
    %v10626 = vpop.f32.mrb[0].mxu0
    %v10627 = vpop.f32.mrb[0].mxu0
    %10628 = vdwg.mxu0
    %10629 = vmatprep.subr.bf16.mxu0 %v7360
    %10630 = vmatpush1.bf16.msra.mxu0 %v7359
    %10631 = vmatprep.subr.bf16.mxu0 %v7362
    %10632 = vmatpush1.bf16.msra.mxu0 %v7361
    %10633 = vmatprep.subr.bf16.mxu0 %v7364
    %10634 = vmatpush1.bf16.msra.mxu0 %v7363
    %10635 = vmatprep.subr.bf16.mxu0 %v7366
    %10636 = vmatpush1.bf16.msra.mxu0 %v7365
    %10637 = vmatprep.subr.bf16.mxu0 %v7368
    %10638 = vmatpush1.bf16.msra.mxu0 %v7367
    %10639 = vmatprep.subr.bf16.mxu0 %v7370
    %10640 = vmatpush1.bf16.msra.mxu0 %v7369
    %10641 = vmatprep.subr.bf16.mxu0 %v7372
    %10642 = vmatpush1.bf16.msra.mxu0 %v7371
    %10643 = vmatprep.subr.bf16.mxu0 %v7374
    %10644 = vmatpush1.bf16.msra.mxu0 %v7373
    %10645 = vmatprep.subr.bf16.mxu0 %v7376
    %10646 = vmatpush1.bf16.msra.mxu0 %v7375
    %10647 = vmatprep.subr.bf16.mxu0 %v7378
    %10648 = vmatpush1.bf16.msra.mxu0 %v7377
    %10649 = vmatprep.subr.bf16.mxu0 %v7380
    %10650 = vmatpush1.bf16.msra.mxu0 %v7379
    %10651 = vmatprep.subr.bf16.mxu0 %v7382
    %10652 = vmatpush1.bf16.msra.mxu0 %v7381
    %10653 = vmatprep.subr.bf16.mxu0 %v7384
    %10654 = vmatpush1.bf16.msra.mxu0 %v7383
    %10655 = vmatprep.subr.bf16.mxu0 %v7386
    %10656 = vmatpush1.bf16.msra.mxu0 %v7385
    %10657 = vmatprep.subr.bf16.mxu0 %v7388
    %10658 = vmatpush1.bf16.msra.mxu0 %v7387
    %10659 = vmatprep.subr.bf16.mxu0 %v7390
    %10660 = vmatpush1.bf16.msra.mxu0 %v7389
    %10661 = vmatprep.mubr.bf16.mxu0 %v1900
    %10662 = vmatmul.mubr.bf16.gmra.mrb[0].mxu0 %v1899
    %v10663 = vpop.f32.mrb[0].mxu0
    %v10664 = vadd.f32 %v10623, %v10663
    %v10665 = vpop.f32.mrb[0].mxu0
    %v10666 = vadd.f32 %v10625, %v10665
    %v10667 = vpop.f32.mrb[0].mxu0
    %v10668 = vpop.f32.mrb[0].mxu0
    %10669 = vdwg.mxu0
    %10670 = vmatprep.subr.bf16.mxu0 %v7392
    %10671 = vmatpush1.bf16.msra.mxu0 %v7391
    %10672 = vmatprep.subr.bf16.mxu0 %v7394
    %10673 = vmatpush1.bf16.msra.mxu0 %v7393
    %10674 = vmatprep.subr.bf16.mxu0 %v7396
    %10675 = vmatpush1.bf16.msra.mxu0 %v7395
    %10676 = vmatprep.subr.bf16.mxu0 %v7398
    %10677 = vmatpush1.bf16.msra.mxu0 %v7397
    %10678 = vmatprep.subr.bf16.mxu0 %v7400
    %10679 = vmatpush1.bf16.msra.mxu0 %v7399
    %10680 = vmatprep.subr.bf16.mxu0 %v7402
    %10681 = vmatpush1.bf16.msra.mxu0 %v7401
    %10682 = vmatprep.subr.bf16.mxu0 %v7404
    %10683 = vmatpush1.bf16.msra.mxu0 %v7403
    %10684 = vmatprep.subr.bf16.mxu0 %v7406
    %10685 = vmatpush1.bf16.msra.mxu0 %v7405
    %10686 = vmatprep.subr.bf16.mxu0 %v7408
    %10687 = vmatpush1.bf16.msra.mxu0 %v7407
    %10688 = vmatprep.subr.bf16.mxu0 %v7410
    %10689 = vmatpush1.bf16.msra.mxu0 %v7409
    %10690 = vmatprep.subr.bf16.mxu0 %v7412
    %10691 = vmatpush1.bf16.msra.mxu0 %v7411
    %10692 = vmatprep.subr.bf16.mxu0 %v7414
    %10693 = vmatpush1.bf16.msra.mxu0 %v7413
    %10694 = vmatprep.subr.bf16.mxu0 %v7416
    %10695 = vmatpush1.bf16.msra.mxu0 %v7415
    %10696 = vmatprep.subr.bf16.mxu0 %v7418
    %10697 = vmatpush1.bf16.msra.mxu0 %v7417
    %10698 = vmatprep.subr.bf16.mxu0 %v7420
    %10699 = vmatpush1.bf16.msra.mxu0 %v7419
    %10700 = vmatprep.subr.bf16.mxu0 %v7422
    %10701 = vmatpush1.bf16.msra.mxu0 %v7421
    %10702 = vmatprep.mubr.bf16.mxu0 %v1902
    %10703 = vmatmul.mubr.bf16.gmra.mrb[0].mxu0 %v1901
    %v10704 = vpop.f32.mrb[0].mxu0
    %v10705 = vadd.f32 %v10664, %v10704
    %v10706 = vpop.f32.mrb[0].mxu0
    %v10707 = vadd.f32 %v10666, %v10706
    %v10708 = vpop.f32.mrb[0].mxu0
    %v10709 = vpop.f32.mrb[0].mxu0
    %10710 = vdwg.mxu0
    %10711 = vmatprep.subr.bf16.mxu0 %v7424
    %10712 = vmatpush1.bf16.msra.mxu0 %v7423
    %10713 = vmatprep.subr.bf16.mxu0 %v7426
    %10714 = vmatpush1.bf16.msra.mxu0 %v7425
    %10715 = vmatprep.subr.bf16.mxu0 %v7428
    %10716 = vmatpush1.bf16.msra.mxu0 %v7427
    %10717 = vmatprep.subr.bf16.mxu0 %v7430
    %10718 = vmatpush1.bf16.msra.mxu0 %v7429
    %10719 = vmatprep.subr.bf16.mxu0 %v7432
    %10720 = vmatpush1.bf16.msra.mxu0 %v7431
    %10721 = vmatprep.subr.bf16.mxu0 %v7434
    %10722 = vmatpush1.bf16.msra.mxu0 %v7433
    %10723 = vmatprep.subr.bf16.mxu0 %v7436
    %10724 = vmatpush1.bf16.msra.mxu0 %v7435
    %10725 = vmatprep.subr.bf16.mxu0 %v7438
    %10726 = vmatpush1.bf16.msra.mxu0 %v7437
    %10727 = vmatprep.subr.bf16.mxu0 %v7440
    %10728 = vmatpush1.bf16.msra.mxu0 %v7439
    %10729 = vmatprep.subr.bf16.mxu0 %v7442
    %10730 = vmatpush1.bf16.msra.mxu0 %v7441
    %10731 = vmatprep.subr.bf16.mxu0 %v7444
    %10732 = vmatpush1.bf16.msra.mxu0 %v7443
    %10733 = vmatprep.subr.bf16.mxu0 %v7446
    %10734 = vmatpush1.bf16.msra.mxu0 %v7445
    %10735 = vmatprep.subr.bf16.mxu0 %v7448
    %10736 = vmatpush1.bf16.msra.mxu0 %v7447
    %10737 = vmatprep.subr.bf16.mxu0 %v7450
    %10738 = vmatpush1.bf16.msra.mxu0 %v7449
    %10739 = vmatprep.subr.bf16.mxu0 %v7452
    %10740 = vmatpush1.bf16.msra.mxu0 %v7451
    %10741 = vmatprep.subr.bf16.mxu0 %v7454
    %10742 = vmatpush1.bf16.msra.mxu0 %v7453
    %10743 = vmatprep.mubr.bf16.mxu0 %v1904
    %10744 = vmatmul.mubr.bf16.gmra.mrb[0].mxu0 %v1903
    %v10745 = vpop.f32.mrb[0].mxu0
    %v10746 = vadd.f32 %v10705, %v10745
    %v10747 = vpop.f32.mrb[0].mxu0
    %v10748 = vadd.f32 %v10707, %v10747
    %v10749 = vpop.f32.mrb[0].mxu0
    %v10750 = vpop.f32.mrb[0].mxu0
    %10751 = vdwg.mxu0
    %10752 = vmatprep.subr.bf16.mxu0 %v7456
    %10753 = vmatpush1.bf16.msra.mxu0 %v7455
    %10754 = vmatprep.subr.bf16.mxu0 %v7458
    %10755 = vmatpush1.bf16.msra.mxu0 %v7457
    %10756 = vmatprep.subr.bf16.mxu0 %v7460
    %10757 = vmatpush1.bf16.msra.mxu0 %v7459
    %10758 = vmatprep.subr.bf16.mxu0 %v7462
    %10759 = vmatpush1.bf16.msra.mxu0 %v7461
    %10760 = vmatprep.subr.bf16.mxu0 %v7464
    %10761 = vmatpush1.bf16.msra.mxu0 %v7463
    %10762 = vmatprep.subr.bf16.mxu0 %v7466
    %10763 = vmatpush1.bf16.msra.mxu0 %v7465
    %10764 = vmatprep.subr.bf16.mxu0 %v7468
    %10765 = vmatpush1.bf16.msra.mxu0 %v7467
    %10766 = vmatprep.subr.bf16.mxu0 %v7470
    %10767 = vmatpush1.bf16.msra.mxu0 %v7469
    %10768 = vmatprep.subr.bf16.mxu0 %v7472
    %10769 = vmatpush1.bf16.msra.mxu0 %v7471
    %10770 = vmatprep.subr.bf16.mxu0 %v7474
    %10771 = vmatpush1.bf16.msra.mxu0 %v7473
    %10772 = vmatprep.subr.bf16.mxu0 %v7476
    %10773 = vmatpush1.bf16.msra.mxu0 %v7475
    %10774 = vmatprep.subr.bf16.mxu0 %v7478
    %10775 = vmatpush1.bf16.msra.mxu0 %v7477
    %10776 = vmatprep.subr.bf16.mxu0 %v7480
    %10777 = vmatpush1.bf16.msra.mxu0 %v7479
    %10778 = vmatprep.subr.bf16.mxu0 %v7482
    %10779 = vmatpush1.bf16.msra.mxu0 %v7481
    %10780 = vmatprep.subr.bf16.mxu0 %v7484
    %10781 = vmatpush1.bf16.msra.mxu0 %v7483
    %10782 = vmatprep.subr.bf16.mxu0 %v7486
    %10783 = vmatpush1.bf16.msra.mxu0 %v7485
    %10784 = vmatprep.mubr.bf16.mxu0 %v1906
    %10785 = vmatmul.mubr.bf16.gmra.mrb[0].mxu0 %v1905
    %v10786 = vpop.f32.mrb[0].mxu0
    %v10787 = vadd.f32 %v10746, %v10786
    %v10788 = vpop.f32.mrb[0].mxu0
    %v10789 = vadd.f32 %v10748, %v10788
    %v10790 = vpop.f32.mrb[0].mxu0
    %v10791 = vpop.f32.mrb[0].mxu0
    %10792 = vdwg.mxu0
    %10793 = vmatprep.subr.bf16.mxu0 %v7488
    %10794 = vmatpush1.bf16.msra.mxu0 %v7487
    %10795 = vmatprep.subr.bf16.mxu0 %v7490
    %10796 = vmatpush1.bf16.msra.mxu0 %v7489
    %10797 = vmatprep.subr.bf16.mxu0 %v7492
    %10798 = vmatpush1.bf16.msra.mxu0 %v7491
    %10799 = vmatprep.subr.bf16.mxu0 %v7494
    %10800 = vmatpush1.bf16.msra.mxu0 %v7493
    %10801 = vmatprep.subr.bf16.mxu0 %v7496
    %10802 = vmatpush1.bf16.msra.mxu0 %v7495
    %10803 = vmatprep.subr.bf16.mxu0 %v7498
    %10804 = vmatpush1.bf16.msra.mxu0 %v7497
    %10805 = vmatprep.subr.bf16.mxu0 %v7500
    %10806 = vmatpush1.bf16.msra.mxu0 %v7499
    %10807 = vmatprep.subr.bf16.mxu0 %v7502
    %10808 = vmatpush1.bf16.msra.mxu0 %v7501
    %10809 = vmatprep.subr.bf16.mxu0 %v7504
    %10810 = vmatpush1.bf16.msra.mxu0 %v7503
    %10811 = vmatprep.subr.bf16.mxu0 %v7506
    %10812 = vmatpush1.bf16.msra.mxu0 %v7505
    %10813 = vmatprep.subr.bf16.mxu0 %v7508
    %10814 = vmatpush1.bf16.msra.mxu0 %v7507
    %10815 = vmatprep.subr.bf16.mxu0 %v7510
    %10816 = vmatpush1.bf16.msra.mxu0 %v7509
    %10817 = vmatprep.subr.bf16.mxu0 %v7512
    %10818 = vmatpush1.bf16.msra.mxu0 %v7511
    %10819 = vmatprep.subr.bf16.mxu0 %v7514
    %10820 = vmatpush1.bf16.msra.mxu0 %v7513
    %10821 = vmatprep.subr.bf16.mxu0 %v7516
    %10822 = vmatpush1.bf16.msra.mxu0 %v7515
    %10823 = vmatprep.subr.bf16.mxu0 %v7518
    %10824 = vmatpush1.bf16.msra.mxu0 %v7517
    %10825 = vmatprep.mubr.bf16.mxu0 %v1908
    %10826 = vmatmul.mubr.bf16.gmra.mrb[0].mxu0 %v1907
    %v10827 = vpop.f32.mrb[0].mxu0
    %v10828 = vadd.f32 %v10787, %v10827
    %v10829 = vpop.f32.mrb[0].mxu0
    %v10830 = vadd.f32 %v10789, %v10829
    %v10831 = vpop.f32.mrb[0].mxu0
    %v10832 = vpop.f32.mrb[0].mxu0
    %10833 = vdwg.mxu0
    %10834 = vmatprep.subr.bf16.mxu0 %v7520
    %10835 = vmatpush1.bf16.msra.mxu0 %v7519
    %10836 = vmatprep.subr.bf16.mxu0 %v7522
    %10837 = vmatpush1.bf16.msra.mxu0 %v7521
    %10838 = vmatprep.subr.bf16.mxu0 %v7524
    %10839 = vmatpush1.bf16.msra.mxu0 %v7523
    %10840 = vmatprep.subr.bf16.mxu0 %v7526
    %10841 = vmatpush1.bf16.msra.mxu0 %v7525
    %10842 = vmatprep.subr.bf16.mxu0 %v7528
    %10843 = vmatpush1.bf16.msra.mxu0 %v7527
    %10844 = vmatprep.subr.bf16.mxu0 %v7530
    %10845 = vmatpush1.bf16.msra.mxu0 %v7529
    %10846 = vmatprep.subr.bf16.mxu0 %v7532
    %10847 = vmatpush1.bf16.msra.mxu0 %v7531
    %10848 = vmatprep.subr.bf16.mxu0 %v7534
    %10849 = vmatpush1.bf16.msra.mxu0 %v7533
    %10850 = vmatprep.subr.bf16.mxu0 %v7536
    %10851 = vmatpush1.bf16.msra.mxu0 %v7535
    %10852 = vmatprep.subr.bf16.mxu0 %v7538
    %10853 = vmatpush1.bf16.msra.mxu0 %v7537
    %10854 = vmatprep.subr.bf16.mxu0 %v7540
    %10855 = vmatpush1.bf16.msra.mxu0 %v7539
    %10856 = vmatprep.subr.bf16.mxu0 %v7542
    %10857 = vmatpush1.bf16.msra.mxu0 %v7541
    %10858 = vmatprep.subr.bf16.mxu0 %v7544
    %10859 = vmatpush1.bf16.msra.mxu0 %v7543
    %10860 = vmatprep.subr.bf16.mxu0 %v7546
    %10861 = vmatpush1.bf16.msra.mxu0 %v7545
    %10862 = vmatprep.subr.bf16.mxu0 %v7548
    %10863 = vmatpush1.bf16.msra.mxu0 %v7547
    %10864 = vmatprep.subr.bf16.mxu0 %v7550
    %10865 = vmatpush1.bf16.msra.mxu0 %v7549
    %10866 = vmatprep.mubr.bf16.mxu0 %v1910
    %10867 = vmatmul.mubr.bf16.gmra.mrb[0].mxu0 %v1909
    %v10868 = vpop.f32.mrb[0].mxu0
    %v10869 = vadd.f32 %v10828, %v10868
    %v10870 = vpop.f32.mrb[0].mxu0
    %v10871 = vadd.f32 %v10830, %v10870
    %v10872 = vpop.f32.mrb[0].mxu0
    %v10873 = vpop.f32.mrb[0].mxu0
    %10874 = vdwg.mxu0
    %10875 = vmatprep.subr.bf16.mxu0 %v7552
    %10876 = vmatpush1.bf16.msra.mxu0 %v7551
    %10877 = vmatprep.subr.bf16.mxu0 %v7554
    %10878 = vmatpush1.bf16.msra.mxu0 %v7553
    %10879 = vmatprep.subr.bf16.mxu0 %v7556
    %10880 = vmatpush1.bf16.msra.mxu0 %v7555
    %10881 = vmatprep.subr.bf16.mxu0 %v7558
    %10882 = vmatpush1.bf16.msra.mxu0 %v7557
    %10883 = vmatprep.subr.bf16.mxu0 %v7560
    %10884 = vmatpush1.bf16.msra.mxu0 %v7559
    %10885 = vmatprep.subr.bf16.mxu0 %v7562
    %10886 = vmatpush1.bf16.msra.mxu0 %v7561
    %10887 = vmatprep.subr.bf16.mxu0 %v7564
    %10888 = vmatpush1.bf16.msra.mxu0 %v7563
    %10889 = vmatprep.subr.bf16.mxu0 %v7566
    %10890 = vmatpush1.bf16.msra.mxu0 %v7565
    %10891 = vmatprep.subr.bf16.mxu0 %v7568
    %10892 = vmatpush1.bf16.msra.mxu0 %v7567
    %10893 = vmatprep.subr.bf16.mxu0 %v7570
    %10894 = vmatpush1.bf16.msra.mxu0 %v7569
    %10895 = vmatprep.subr.bf16.mxu0 %v7572
    %10896 = vmatpush1.bf16.msra.mxu0 %v7571
    %10897 = vmatprep.subr.bf16.mxu0 %v7574
    %10898 = vmatpush1.bf16.msra.mxu0 %v7573
    %10899 = vmatprep.subr.bf16.mxu0 %v7576
    %10900 = vmatpush1.bf16.msra.mxu0 %v7575
    %10901 = vmatprep.subr.bf16.mxu0 %v7578
    %10902 = vmatpush1.bf16.msra.mxu0 %v7577
    %10903 = vmatprep.subr.bf16.mxu0 %v7580
    %10904 = vmatpush1.bf16.msra.mxu0 %v7579
    %10905 = vmatprep.subr.bf16.mxu0 %v7582
    %10906 = vmatpush1.bf16.msra.mxu0 %v7581
    %10907 = vmatprep.mubr.bf16.mxu0 %v1912
    %10908 = vmatmul.mubr.bf16.gmra.mrb[0].mxu0 %v1911
    %v10909 = vpop.f32.mrb[0].mxu0
    %v10910 = vadd.f32 %v10869, %v10909
    %v10911 = vpop.f32.mrb[0].mxu0
    %v10912 = vadd.f32 %v10871, %v10911
    %v10913 = vpop.f32.mrb[0].mxu0
    %v10914 = vpop.f32.mrb[0].mxu0
    %10915 = vdwg.mxu0
    %10916 = vmatprep.subr.bf16.mxu0 %v7584
    %10917 = vmatpush1.bf16.msra.mxu0 %v7583
    %10918 = vmatprep.subr.bf16.mxu0 %v7586
    %10919 = vmatpush1.bf16.msra.mxu0 %v7585
    %10920 = vmatprep.subr.bf16.mxu0 %v7588
    %10921 = vmatpush1.bf16.msra.mxu0 %v7587
    %10922 = vmatprep.subr.bf16.mxu0 %v7590
    %10923 = vmatpush1.bf16.msra.mxu0 %v7589
    %10924 = vmatprep.subr.bf16.mxu0 %v7592
    %10925 = vmatpush1.bf16.msra.mxu0 %v7591
    %10926 = vmatprep.subr.bf16.mxu0 %v7594
    %10927 = vmatpush1.bf16.msra.mxu0 %v7593
    %10928 = vmatprep.subr.bf16.mxu0 %v7596
    %10929 = vmatpush1.bf16.msra.mxu0 %v7595
    %10930 = vmatprep.subr.bf16.mxu0 %v7598
    %10931 = vmatpush1.bf16.msra.mxu0 %v7597
    %10932 = vmatprep.subr.bf16.mxu0 %v7600
    %10933 = vmatpush1.bf16.msra.mxu0 %v7599
    %10934 = vmatprep.subr.bf16.mxu0 %v7602
    %10935 = vmatpush1.bf16.msra.mxu0 %v7601
    %10936 = vmatprep.subr.bf16.mxu0 %v7604
    %10937 = vmatpush1.bf16.msra.mxu0 %v7603
    %10938 = vmatprep.subr.bf16.mxu0 %v7606
    %10939 = vmatpush1.bf16.msra.mxu0 %v7605
    %10940 = vmatprep.subr.bf16.mxu0 %v7608
    %10941 = vmatpush1.bf16.msra.mxu0 %v7607
    %10942 = vmatprep.subr.bf16.mxu0 %v7610
    %10943 = vmatpush1.bf16.msra.mxu0 %v7609
    %10944 = vmatprep.subr.bf16.mxu0 %v7612
    %10945 = vmatpush1.bf16.msra.mxu0 %v7611
    %10946 = vmatprep.subr.bf16.mxu0 %v7614
    %10947 = vmatpush1.bf16.msra.mxu0 %v7613
    %10948 = vmatprep.mubr.bf16.mxu0 %v1914
    %10949 = vmatmul.mubr.bf16.gmra.mrb[0].mxu0 %v1913
    %v10950 = vpop.f32.mrb[0].mxu0
    %v10951 = vadd.f32 %v10910, %v10950
    %v10952 = vpop.f32.mrb[0].mxu0
    %v10953 = vadd.f32 %v10912, %v10952
    %v10954 = vpop.f32.mrb[0].mxu0
    %v10955 = vpop.f32.mrb[0].mxu0
    %10956 = vdwg.mxu0
    %10957 = vmatprep.subr.bf16.mxu0 %v7616
    %10958 = vmatpush1.bf16.msra.mxu0 %v7615
    %10959 = vmatprep.subr.bf16.mxu0 %v7618
    %10960 = vmatpush1.bf16.msra.mxu0 %v7617
    %10961 = vmatprep.subr.bf16.mxu0 %v7620
    %10962 = vmatpush1.bf16.msra.mxu0 %v7619
    %10963 = vmatprep.subr.bf16.mxu0 %v7622
    %10964 = vmatpush1.bf16.msra.mxu0 %v7621
    %10965 = vmatprep.subr.bf16.mxu0 %v7624
    %10966 = vmatpush1.bf16.msra.mxu0 %v7623
    %10967 = vmatprep.subr.bf16.mxu0 %v7626
    %10968 = vmatpush1.bf16.msra.mxu0 %v7625
    %10969 = vmatprep.subr.bf16.mxu0 %v7628
    %10970 = vmatpush1.bf16.msra.mxu0 %v7627
    %10971 = vmatprep.subr.bf16.mxu0 %v7630
    %10972 = vmatpush1.bf16.msra.mxu0 %v7629
    %10973 = vmatprep.subr.bf16.mxu0 %v7632
    %10974 = vmatpush1.bf16.msra.mxu0 %v7631
    %10975 = vmatprep.subr.bf16.mxu0 %v7634
    %10976 = vmatpush1.bf16.msra.mxu0 %v7633
    %10977 = vmatprep.subr.bf16.mxu0 %v7636
    %10978 = vmatpush1.bf16.msra.mxu0 %v7635
    %10979 = vmatprep.subr.bf16.mxu0 %v7638
    %10980 = vmatpush1.bf16.msra.mxu0 %v7637
    %10981 = vmatprep.subr.bf16.mxu0 %v7640
    %10982 = vmatpush1.bf16.msra.mxu0 %v7639
    %10983 = vmatprep.subr.bf16.mxu0 %v7642
    %10984 = vmatpush1.bf16.msra.mxu0 %v7641
    %10985 = vmatprep.subr.bf16.mxu0 %v7644
    %10986 = vmatpush1.bf16.msra.mxu0 %v7643
    %10987 = vmatprep.subr.bf16.mxu0 %v7646
    %10988 = vmatpush1.bf16.msra.mxu0 %v7645
    %10989 = vmatprep.mubr.bf16.mxu0 %v1916
    %10990 = vmatmul.mubr.bf16.gmra.mrb[0].mxu0 %v1915
    %v10991 = vpop.f32.mrb[0].mxu0
    %v10992 = vadd.f32 %v10951, %v10991
    %v10993 = vpop.f32.mrb[0].mxu0
    %v10994 = vadd.f32 %v10953, %v10993
    %v10995 = vpop.f32.mrb[0].mxu0
    %v10996 = vpop.f32.mrb[0].mxu0
    %10997 = vdwg.mxu0
    %10998 = vmatprep.subr.bf16.mxu0 %v7648
    %10999 = vmatpush1.bf16.msra.mxu0 %v7647
    %11000 = vmatprep.subr.bf16.mxu0 %v7650
    %11001 = vmatpush1.bf16.msra.mxu0 %v7649
    %11002 = vmatprep.subr.bf16.mxu0 %v7652
    %11003 = vmatpush1.bf16.msra.mxu0 %v7651
    %11004 = vmatprep.subr.bf16.mxu0 %v7654
    %11005 = vmatpush1.bf16.msra.mxu0 %v7653
    %11006 = vmatprep.subr.bf16.mxu0 %v7656
    %11007 = vmatpush1.bf16.msra.mxu0 %v7655
    %11008 = vmatprep.subr.bf16.mxu0 %v7658
    %11009 = vmatpush1.bf16.msra.mxu0 %v7657
    %11010 = vmatprep.subr.bf16.mxu0 %v7660
    %11011 = vmatpush1.bf16.msra.mxu0 %v7659
    %11012 = vmatprep.subr.bf16.mxu0 %v7662
    %11013 = vmatpush1.bf16.msra.mxu0 %v7661
    %11014 = vmatprep.subr.bf16.mxu0 %v7664
    %11015 = vmatpush1.bf16.msra.mxu0 %v7663
    %11016 = vmatprep.subr.bf16.mxu0 %v7666
    %11017 = vmatpush1.bf16.msra.mxu0 %v7665
    %11018 = vmatprep.subr.bf16.mxu0 %v7668
    %11019 = vmatpush1.bf16.msra.mxu0 %v7667
    %11020 = vmatprep.subr.bf16.mxu0 %v7670
    %11021 = vmatpush1.bf16.msra.mxu0 %v7669
    %11022 = vmatprep.subr.bf16.mxu0 %v7672
    %11023 = vmatpush1.bf16.msra.mxu0 %v7671
    %11024 = vmatprep.subr.bf16.mxu0 %v7674
    %11025 = vmatpush1.bf16.msra.mxu0 %v7673
    %11026 = vmatprep.subr.bf16.mxu0 %v7676
    %11027 = vmatpush1.bf16.msra.mxu0 %v7675
    %11028 = vmatprep.subr.bf16.mxu0 %v7678
    %11029 = vmatpush1.bf16.msra.mxu0 %v7677
    %11030 = vmatprep.mubr.bf16.mxu0 %v1918
    %11031 = vmatmul.mubr.bf16.gmra.mrb[0].mxu0 %v1917
    %v11032 = vpop.f32.mrb[0].mxu0
    %v11033 = vadd.f32 %v10992, %v11032
    %v11034 = vpop.f32.mrb[0].mxu0
    %v11035 = vadd.f32 %v10994, %v11034
    %v11036 = vpop.f32.mrb[0].mxu0
    %v11037 = vpop.f32.mrb[0].mxu0
    %11038 = vdwg.mxu0
    %11039 = vmatprep.subr.bf16.mxu0 %v7680
    %11040 = vmatpush1.bf16.msra.mxu0 %v7679
    %11041 = vmatprep.subr.bf16.mxu0 %v7682
    %11042 = vmatpush1.bf16.msra.mxu0 %v7681
    %11043 = vmatprep.subr.bf16.mxu0 %v7684
    %11044 = vmatpush1.bf16.msra.mxu0 %v7683
    %11045 = vmatprep.subr.bf16.mxu0 %v7686
    %11046 = vmatpush1.bf16.msra.mxu0 %v7685
    %11047 = vmatprep.subr.bf16.mxu0 %v7688
    %11048 = vmatpush1.bf16.msra.mxu0 %v7687
    %11049 = vmatprep.subr.bf16.mxu0 %v7690
    %11050 = vmatpush1.bf16.msra.mxu0 %v7689
    %11051 = vmatprep.subr.bf16.mxu0 %v7692
    %11052 = vmatpush1.bf16.msra.mxu0 %v7691
    %11053 = vmatprep.subr.bf16.mxu0 %v7694
    %11054 = vmatpush1.bf16.msra.mxu0 %v7693
    %11055 = vmatprep.subr.bf16.mxu0 %v7696
    %11056 = vmatpush1.bf16.msra.mxu0 %v7695
    %11057 = vmatprep.subr.bf16.mxu0 %v7698
    %11058 = vmatpush1.bf16.msra.mxu0 %v7697
    %11059 = vmatprep.subr.bf16.mxu0 %v7700
    %11060 = vmatpush1.bf16.msra.mxu0 %v7699
    %11061 = vmatprep.subr.bf16.mxu0 %v7702
    %11062 = vmatpush1.bf16.msra.mxu0 %v7701
    %11063 = vmatprep.subr.bf16.mxu0 %v7704
    %11064 = vmatpush1.bf16.msra.mxu0 %v7703
    %11065 = vmatprep.subr.bf16.mxu0 %v7706
    %11066 = vmatpush1.bf16.msra.mxu0 %v7705
    %11067 = vmatprep.subr.bf16.mxu0 %v7708
    %11068 = vmatpush1.bf16.msra.mxu0 %v7707
    %11069 = vmatprep.subr.bf16.mxu0 %v7710
    %11070 = vmatpush1.bf16.msra.mxu0 %v7709
    %11071 = vmatprep.mubr.bf16.mxu0 %v1920
    %11072 = vmatmul.mubr.bf16.gmra.mrb[0].mxu0 %v1919
    %v11073 = vpop.f32.mrb[0].mxu0
    %v11074 = vadd.f32 %v11033, %v11073
    %v11075 = vpop.f32.mrb[0].mxu0
    %v11076 = vadd.f32 %v11035, %v11075
    %v11077 = vpop.f32.mrb[0].mxu0
    %v11078 = vpop.f32.mrb[0].mxu0
    %11079 = vdwg.mxu0
    %11080 = vmatprep.subr.bf16.mxu0 %v7712
    %11081 = vmatpush1.bf16.msra.mxu0 %v7711
    %11082 = vmatprep.subr.bf16.mxu0 %v7714
    %11083 = vmatpush1.bf16.msra.mxu0 %v7713
    %11084 = vmatprep.subr.bf16.mxu0 %v7716
    %11085 = vmatpush1.bf16.msra.mxu0 %v7715
    %11086 = vmatprep.subr.bf16.mxu0 %v7718
    %11087 = vmatpush1.bf16.msra.mxu0 %v7717
    %11088 = vmatprep.subr.bf16.mxu0 %v7720
    %11089 = vmatpush1.bf16.msra.mxu0 %v7719
    %11090 = vmatprep.subr.bf16.mxu0 %v7722
    %11091 = vmatpush1.bf16.msra.mxu0 %v7721
    %11092 = vmatprep.subr.bf16.mxu0 %v7724
    %11093 = vmatpush1.bf16.msra.mxu0 %v7723
    %11094 = vmatprep.subr.bf16.mxu0 %v7726
    %11095 = vmatpush1.bf16.msra.mxu0 %v7725
    %11096 = vmatprep.subr.bf16.mxu0 %v7728
    %11097 = vmatpush1.bf16.msra.mxu0 %v7727
    %11098 = vmatprep.subr.bf16.mxu0 %v7730
    %11099 = vmatpush1.bf16.msra.mxu0 %v7729
    %11100 = vmatprep.subr.bf16.mxu0 %v7732
    %11101 = vmatpush1.bf16.msra.mxu0 %v7731
    %11102 = vmatprep.subr.bf16.mxu0 %v7734
    %11103 = vmatpush1.bf16.msra.mxu0 %v7733
    %11104 = vmatprep.subr.bf16.mxu0 %v7736
    %11105 = vmatpush1.bf16.msra.mxu0 %v7735
    %11106 = vmatprep.subr.bf16.mxu0 %v7738
    %11107 = vmatpush1.bf16.msra.mxu0 %v7737
    %11108 = vmatprep.subr.bf16.mxu0 %v7740
    %11109 = vmatpush1.bf16.msra.mxu0 %v7739
    %11110 = vmatprep.subr.bf16.mxu0 %v7742
    %11111 = vmatpush1.bf16.msra.mxu0 %v7741
    %11112 = vmatprep.mubr.bf16.mxu0 %v1922
    %11113 = vmatmul.mubr.bf16.gmra.mrb[0].mxu0 %v1921
    %v11114 = vpop.f32.mrb[0].mxu0
    %v11115 = vadd.f32 %v11074, %v11114
    %v11116 = vpop.f32.mrb[0].mxu0
    %v11117 = vadd.f32 %v11076, %v11116
    %v11118 = vpop.f32.mrb[0].mxu0
    %v11119 = vpop.f32.mrb[0].mxu0
    %11120 = vdwg.mxu0
    %11121 = vmatprep.subr.bf16.mxu0 %v7744
    %11122 = vmatpush1.bf16.msra.mxu0 %v7743
    %11123 = vmatprep.subr.bf16.mxu0 %v7746
    %11124 = vmatpush1.bf16.msra.mxu0 %v7745
    %11125 = vmatprep.subr.bf16.mxu0 %v7748
    %11126 = vmatpush1.bf16.msra.mxu0 %v7747
    %11127 = vmatprep.subr.bf16.mxu0 %v7750
    %11128 = vmatpush1.bf16.msra.mxu0 %v7749
    %11129 = vmatprep.subr.bf16.mxu0 %v7752
    %11130 = vmatpush1.bf16.msra.mxu0 %v7751
    %11131 = vmatprep.subr.bf16.mxu0 %v7754
    %11132 = vmatpush1.bf16.msra.mxu0 %v7753
    %11133 = vmatprep.subr.bf16.mxu0 %v7756
    %11134 = vmatpush1.bf16.msra.mxu0 %v7755
    %11135 = vmatprep.subr.bf16.mxu0 %v7758
    %11136 = vmatpush1.bf16.msra.mxu0 %v7757
    %11137 = vmatprep.subr.bf16.mxu0 %v7760
    %11138 = vmatpush1.bf16.msra.mxu0 %v7759
    %11139 = vmatprep.subr.bf16.mxu0 %v7762
    %11140 = vmatpush1.bf16.msra.mxu0 %v7761
    %11141 = vmatprep.subr.bf16.mxu0 %v7764
    %11142 = vmatpush1.bf16.msra.mxu0 %v7763
    %11143 = vmatprep.subr.bf16.mxu0 %v7766
    %11144 = vmatpush1.bf16.msra.mxu0 %v7765
    %11145 = vmatprep.subr.bf16.mxu0 %v7768
    %11146 = vmatpush1.bf16.msra.mxu0 %v7767
    %11147 = vmatprep.subr.bf16.mxu0 %v7770
    %11148 = vmatpush1.bf16.msra.mxu0 %v7769
    %11149 = vmatprep.subr.bf16.mxu0 %v7772
    %11150 = vmatpush1.bf16.msra.mxu0 %v7771
    %11151 = vmatprep.subr.bf16.mxu0 %v7774
    %11152 = vmatpush1.bf16.msra.mxu0 %v7773
    %11153 = vmatprep.mubr.bf16.mxu0 %v1924
    %11154 = vmatmul.mubr.bf16.gmra.mrb[0].mxu0 %v1923
    %v11155 = vpop.f32.mrb[0].mxu0
    %v11156 = vadd.f32 %v11115, %v11155
    %v11157 = vpop.f32.mrb[0].mxu0
    %v11158 = vadd.f32 %v11117, %v11157
    %v11159 = vpop.f32.mrb[0].mxu0
    %v11160 = vpop.f32.mrb[0].mxu0
    %11161 = vdwg.mxu0
    %11162 = vmatprep.subr.bf16.mxu0 %v7776
    %11163 = vmatpush1.bf16.msra.mxu0 %v7775
    %11164 = vmatprep.subr.bf16.mxu0 %v7778
    %11165 = vmatpush1.bf16.msra.mxu0 %v7777
    %11166 = vmatprep.subr.bf16.mxu0 %v7780
    %11167 = vmatpush1.bf16.msra.mxu0 %v7779
    %11168 = vmatprep.subr.bf16.mxu0 %v7782
    %11169 = vmatpush1.bf16.msra.mxu0 %v7781
    %11170 = vmatprep.subr.bf16.mxu0 %v7784
    %11171 = vmatpush1.bf16.msra.mxu0 %v7783
    %11172 = vmatprep.subr.bf16.mxu0 %v7786
    %11173 = vmatpush1.bf16.msra.mxu0 %v7785
    %11174 = vmatprep.subr.bf16.mxu0 %v7788
    %11175 = vmatpush1.bf16.msra.mxu0 %v7787
    %11176 = vmatprep.subr.bf16.mxu0 %v7790
    %11177 = vmatpush1.bf16.msra.mxu0 %v7789
    %11178 = vmatprep.subr.bf16.mxu0 %v7792
    %11179 = vmatpush1.bf16.msra.mxu0 %v7791
    %11180 = vmatprep.subr.bf16.mxu0 %v7794
    %11181 = vmatpush1.bf16.msra.mxu0 %v7793
    %11182 = vmatprep.subr.bf16.mxu0 %v7796
    %11183 = vmatpush1.bf16.msra.mxu0 %v7795
    %11184 = vmatprep.subr.bf16.mxu0 %v7798
    %11185 = vmatpush1.bf16.msra.mxu0 %v7797
    %11186 = vmatprep.subr.bf16.mxu0 %v7800
    %11187 = vmatpush1.bf16.msra.mxu0 %v7799
    %11188 = vmatprep.subr.bf16.mxu0 %v7802
    %11189 = vmatpush1.bf16.msra.mxu0 %v7801
    %11190 = vmatprep.subr.bf16.mxu0 %v7804
    %11191 = vmatpush1.bf16.msra.mxu0 %v7803
    %11192 = vmatprep.subr.bf16.mxu0 %v7806
    %11193 = vmatpush1.bf16.msra.mxu0 %v7805
    %11194 = vmatprep.mubr.bf16.mxu0 %v1926
    %11195 = vmatmul.mubr.bf16.gmra.mrb[0].mxu0 %v1925
    %v11196 = vpop.f32.mrb[0].mxu0
    %v11197 = vadd.f32 %v11156, %v11196
    %v11198 = vpop.f32.mrb[0].mxu0
    %v11199 = vadd.f32 %v11158, %v11198
    %v11200 = vpop.f32.mrb[0].mxu0
    %v11201 = vpop.f32.mrb[0].mxu0
    %11202 = vdwg.mxu0
    %11203 = vmatprep.subr.bf16.mxu0 %v7808
    %11204 = vmatpush1.bf16.msra.mxu0 %v7807
    %11205 = vmatprep.subr.bf16.mxu0 %v7810
    %11206 = vmatpush1.bf16.msra.mxu0 %v7809
    %11207 = vmatprep.subr.bf16.mxu0 %v7812
    %11208 = vmatpush1.bf16.msra.mxu0 %v7811
    %11209 = vmatprep.subr.bf16.mxu0 %v7814
    %11210 = vmatpush1.bf16.msra.mxu0 %v7813
    %11211 = vmatprep.subr.bf16.mxu0 %v7816
    %11212 = vmatpush1.bf16.msra.mxu0 %v7815
    %11213 = vmatprep.subr.bf16.mxu0 %v7818
    %11214 = vmatpush1.bf16.msra.mxu0 %v7817
    %11215 = vmatprep.subr.bf16.mxu0 %v7820
    %11216 = vmatpush1.bf16.msra.mxu0 %v7819
    %11217 = vmatprep.subr.bf16.mxu0 %v7822
    %11218 = vmatpush1.bf16.msra.mxu0 %v7821
    %11219 = vmatprep.subr.bf16.mxu0 %v7824
    %11220 = vmatpush1.bf16.msra.mxu0 %v7823
    %11221 = vmatprep.subr.bf16.mxu0 %v7826
    %11222 = vmatpush1.bf16.msra.mxu0 %v7825
    %11223 = vmatprep.subr.bf16.mxu0 %v7828
    %11224 = vmatpush1.bf16.msra.mxu0 %v7827
    %11225 = vmatprep.subr.bf16.mxu0 %v7830
    %11226 = vmatpush1.bf16.msra.mxu0 %v7829
    %11227 = vmatprep.subr.bf16.mxu0 %v7832
    %11228 = vmatpush1.bf16.msra.mxu0 %v7831
    %11229 = vmatprep.subr.bf16.mxu0 %v7834
    %11230 = vmatpush1.bf16.msra.mxu0 %v7833
    %11231 = vmatprep.subr.bf16.mxu0 %v7836
    %11232 = vmatpush1.bf16.msra.mxu0 %v7835
    %11233 = vmatprep.subr.bf16.mxu0 %v7838
    %11234 = vmatpush1.bf16.msra.mxu0 %v7837
    %11235 = vmatprep.mubr.bf16.mxu0 %v1928
    %11236 = vmatmul.mubr.bf16.gmra.mrb[0].mxu0 %v1927
    %v11237 = vpop.f32.mrb[0].mxu0
    %v11238 = vadd.f32 %v11197, %v11237
    %v11239 = vpop.f32.mrb[0].mxu0
    %v11240 = vadd.f32 %v11199, %v11239
    %v11241 = vpop.f32.mrb[0].mxu0
    %v11242 = vpop.f32.mrb[0].mxu0
    %11243 = vdwg.mxu0
    %11244 = vmatprep.subr.bf16.mxu0 %v7840
    %11245 = vmatpush1.bf16.msra.mxu0 %v7839
    %11246 = vmatprep.subr.bf16.mxu0 %v7842
    %11247 = vmatpush1.bf16.msra.mxu0 %v7841
    %11248 = vmatprep.subr.bf16.mxu0 %v7844
    %11249 = vmatpush1.bf16.msra.mxu0 %v7843
    %11250 = vmatprep.subr.bf16.mxu0 %v7846
    %11251 = vmatpush1.bf16.msra.mxu0 %v7845
    %11252 = vmatprep.subr.bf16.mxu0 %v7848
    %11253 = vmatpush1.bf16.msra.mxu0 %v7847
    %11254 = vmatprep.subr.bf16.mxu0 %v7850
    %11255 = vmatpush1.bf16.msra.mxu0 %v7849
    %11256 = vmatprep.subr.bf16.mxu0 %v7852
    %11257 = vmatpush1.bf16.msra.mxu0 %v7851
    %11258 = vmatprep.subr.bf16.mxu0 %v7854
    %11259 = vmatpush1.bf16.msra.mxu0 %v7853
    %11260 = vmatprep.subr.bf16.mxu0 %v7856
    %11261 = vmatpush1.bf16.msra.mxu0 %v7855
    %11262 = vmatprep.subr.bf16.mxu0 %v7858
    %11263 = vmatpush1.bf16.msra.mxu0 %v7857
    %11264 = vmatprep.subr.bf16.mxu0 %v7860
    %11265 = vmatpush1.bf16.msra.mxu0 %v7859
    %11266 = vmatprep.subr.bf16.mxu0 %v7862
    %11267 = vmatpush1.bf16.msra.mxu0 %v7861
    %11268 = vmatprep.subr.bf16.mxu0 %v7864
    %11269 = vmatpush1.bf16.msra.mxu0 %v7863
    %11270 = vmatprep.subr.bf16.mxu0 %v7866
    %11271 = vmatpush1.bf16.msra.mxu0 %v7865
    %11272 = vmatprep.subr.bf16.mxu0 %v7868
    %11273 = vmatpush1.bf16.msra.mxu0 %v7867
    %11274 = vmatprep.subr.bf16.mxu0 %v7870
    %11275 = vmatpush1.bf16.msra.mxu0 %v7869
    %11276 = vmatprep.mubr.bf16.mxu0 %v1930
    %11277 = vmatmul.mubr.bf16.gmra.mrb[0].mxu0 %v1929
    %v11278 = vpop.f32.mrb[0].mxu0
    %v11279 = vadd.f32 %v11238, %v11278
    %v11280 = vpop.f32.mrb[0].mxu0
    %v11281 = vadd.f32 %v11240, %v11280
    %v11282 = vpop.f32.mrb[0].mxu0
    %v11283 = vpop.f32.mrb[0].mxu0
    %11284 = vdwg.mxu0
    %11285 = vmatprep.subr.bf16.mxu0 %v7872
    %11286 = vmatpush1.bf16.msra.mxu0 %v7871
    %11287 = vmatprep.subr.bf16.mxu0 %v7874
    %11288 = vmatpush1.bf16.msra.mxu0 %v7873
    %11289 = vmatprep.subr.bf16.mxu0 %v7876
    %11290 = vmatpush1.bf16.msra.mxu0 %v7875
    %11291 = vmatprep.subr.bf16.mxu0 %v7878
    %11292 = vmatpush1.bf16.msra.mxu0 %v7877
    %11293 = vmatprep.subr.bf16.mxu0 %v7880
    %11294 = vmatpush1.bf16.msra.mxu0 %v7879
    %11295 = vmatprep.subr.bf16.mxu0 %v7882
    %11296 = vmatpush1.bf16.msra.mxu0 %v7881
    %11297 = vmatprep.subr.bf16.mxu0 %v7884
    %11298 = vmatpush1.bf16.msra.mxu0 %v7883
    %11299 = vmatprep.subr.bf16.mxu0 %v7886
    %11300 = vmatpush1.bf16.msra.mxu0 %v7885
    %11301 = vmatprep.subr.bf16.mxu0 %v7888
    %11302 = vmatpush1.bf16.msra.mxu0 %v7887
    %11303 = vmatprep.subr.bf16.mxu0 %v7890
    %11304 = vmatpush1.bf16.msra.mxu0 %v7889
    %11305 = vmatprep.subr.bf16.mxu0 %v7892
    %11306 = vmatpush1.bf16.msra.mxu0 %v7891
    %11307 = vmatprep.subr.bf16.mxu0 %v7894
    %11308 = vmatpush1.bf16.msra.mxu0 %v7893
    %11309 = vmatprep.subr.bf16.mxu0 %v7896
    %11310 = vmatpush1.bf16.msra.mxu0 %v7895
    %11311 = vmatprep.subr.bf16.mxu0 %v7898
    %11312 = vmatpush1.bf16.msra.mxu0 %v7897
    %11313 = vmatprep.subr.bf16.mxu0 %v7900
    %11314 = vmatpush1.bf16.msra.mxu0 %v7899
    %11315 = vmatprep.subr.bf16.mxu0 %v7902
    %11316 = vmatpush1.bf16.msra.mxu0 %v7901
    %11317 = vmatprep.mubr.bf16.mxu0 %v1932
    %11318 = vmatmul.mubr.bf16.gmra.mrb[0].mxu0 %v1931
    %v11319 = vpop.f32.mrb[0].mxu0
    %v11320 = vadd.f32 %v11279, %v11319
    %v11321 = vpop.f32.mrb[0].mxu0
    %v11322 = vadd.f32 %v11281, %v11321
    %v11323 = vpop.f32.mrb[0].mxu0
    %v11324 = vpop.f32.mrb[0].mxu0
    %11325 = vdwg.mxu0
    %11326 = vmatprep.subr.bf16.mxu0 %v7904
    %11327 = vmatpush1.bf16.msra.mxu0 %v7903
    %11328 = vmatprep.subr.bf16.mxu0 %v7906
    %11329 = vmatpush1.bf16.msra.mxu0 %v7905
    %11330 = vmatprep.subr.bf16.mxu0 %v7908
    %11331 = vmatpush1.bf16.msra.mxu0 %v7907
    %11332 = vmatprep.subr.bf16.mxu0 %v7910
    %11333 = vmatpush1.bf16.msra.mxu0 %v7909
    %11334 = vmatprep.subr.bf16.mxu0 %v7912
    %11335 = vmatpush1.bf16.msra.mxu0 %v7911
    %11336 = vmatprep.subr.bf16.mxu0 %v7914
    %11337 = vmatpush1.bf16.msra.mxu0 %v7913
    %11338 = vmatprep.subr.bf16.mxu0 %v7916
    %11339 = vmatpush1.bf16.msra.mxu0 %v7915
    %11340 = vmatprep.subr.bf16.mxu0 %v7918
    %11341 = vmatpush1.bf16.msra.mxu0 %v7917
    %11342 = vmatprep.subr.bf16.mxu0 %v7920
    %11343 = vmatpush1.bf16.msra.mxu0 %v7919
    %11344 = vmatprep.subr.bf16.mxu0 %v7922
    %11345 = vmatpush1.bf16.msra.mxu0 %v7921
    %11346 = vmatprep.subr.bf16.mxu0 %v7924
    %11347 = vmatpush1.bf16.msra.mxu0 %v7923
    %11348 = vmatprep.subr.bf16.mxu0 %v7926
    %11349 = vmatpush1.bf16.msra.mxu0 %v7925
    %11350 = vmatprep.subr.bf16.mxu0 %v7928
    %11351 = vmatpush1.bf16.msra.mxu0 %v7927
    %11352 = vmatprep.subr.bf16.mxu0 %v7930
    %11353 = vmatpush1.bf16.msra.mxu0 %v7929
    %11354 = vmatprep.subr.bf16.mxu0 %v7932
    %11355 = vmatpush1.bf16.msra.mxu0 %v7931
    %11356 = vmatprep.subr.bf16.mxu0 %v7934
    %11357 = vmatpush1.bf16.msra.mxu0 %v7933
    %11358 = vmatprep.mubr.bf16.mxu0 %v1934
    %11359 = vmatmul.mubr.bf16.gmra.mrb[0].mxu0 %v1933
    %v11360 = vpop.f32.mrb[0].mxu0
    %v11361 = vadd.f32 %v11320, %v11360
    %v11362 = vpop.f32.mrb[0].mxu0
    %v11363 = vadd.f32 %v11322, %v11362
    %v11364 = vpop.f32.mrb[0].mxu0
    %v11365 = vpop.f32.mrb[0].mxu0
    %11366 = vdwg.mxu0
    %11367 = vmatprep.subr.bf16.mxu0 %v7936
    %11368 = vmatpush1.bf16.msra.mxu0 %v7935
    %11369 = vmatprep.subr.bf16.mxu0 %v7938
    %11370 = vmatpush1.bf16.msra.mxu0 %v7937
    %11371 = vmatprep.subr.bf16.mxu0 %v7940
    %11372 = vmatpush1.bf16.msra.mxu0 %v7939
    %11373 = vmatprep.subr.bf16.mxu0 %v7942
    %11374 = vmatpush1.bf16.msra.mxu0 %v7941
    %11375 = vmatprep.subr.bf16.mxu0 %v7944
    %11376 = vmatpush1.bf16.msra.mxu0 %v7943
    %11377 = vmatprep.subr.bf16.mxu0 %v7946
    %11378 = vmatpush1.bf16.msra.mxu0 %v7945
    %11379 = vmatprep.subr.bf16.mxu0 %v7948
    %11380 = vmatpush1.bf16.msra.mxu0 %v7947
    %11381 = vmatprep.subr.bf16.mxu0 %v7950
    %11382 = vmatpush1.bf16.msra.mxu0 %v7949
    %11383 = vmatprep.subr.bf16.mxu0 %v7952
    %11384 = vmatpush1.bf16.msra.mxu0 %v7951
    %11385 = vmatprep.subr.bf16.mxu0 %v7954
    %11386 = vmatpush1.bf16.msra.mxu0 %v7953
    %11387 = vmatprep.subr.bf16.mxu0 %v7956
    %11388 = vmatpush1.bf16.msra.mxu0 %v7955
    %11389 = vmatprep.subr.bf16.mxu0 %v7958
    %11390 = vmatpush1.bf16.msra.mxu0 %v7957
    %11391 = vmatprep.subr.bf16.mxu0 %v7960
    %11392 = vmatpush1.bf16.msra.mxu0 %v7959
    %11393 = vmatprep.subr.bf16.mxu0 %v7962
    %11394 = vmatpush1.bf16.msra.mxu0 %v7961
    %11395 = vmatprep.subr.bf16.mxu0 %v7964
    %11396 = vmatpush1.bf16.msra.mxu0 %v7963
    %11397 = vmatprep.subr.bf16.mxu0 %v7966
    %11398 = vmatpush1.bf16.msra.mxu0 %v7965
    %11399 = vmatprep.mubr.bf16.mxu0 %v1936
    %11400 = vmatmul.mubr.bf16.gmra.mrb[0].mxu0 %v1935
    %v11401 = vpop.f32.mrb[0].mxu0
    %v11402 = vadd.f32 %v11361, %v11401
    %v11403 = vpop.f32.mrb[0].mxu0
    %v11404 = vadd.f32 %v11363, %v11403
    %v11405 = vpop.f32.mrb[0].mxu0
    %v11406 = vpop.f32.mrb[0].mxu0
    %11407 = vdwg.mxu0
    %11408 = vmatprep.subr.bf16.mxu0 %v7968
    %11409 = vmatpush1.bf16.msra.mxu0 %v7967
    %11410 = vmatprep.subr.bf16.mxu0 %v7970
    %11411 = vmatpush1.bf16.msra.mxu0 %v7969
    %11412 = vmatprep.subr.bf16.mxu0 %v7972
    %11413 = vmatpush1.bf16.msra.mxu0 %v7971
    %11414 = vmatprep.subr.bf16.mxu0 %v7974
    %11415 = vmatpush1.bf16.msra.mxu0 %v7973
    %11416 = vmatprep.subr.bf16.mxu0 %v7976
    %11417 = vmatpush1.bf16.msra.mxu0 %v7975
    %11418 = vmatprep.subr.bf16.mxu0 %v7978
    %11419 = vmatpush1.bf16.msra.mxu0 %v7977
    %11420 = vmatprep.subr.bf16.mxu0 %v7980
    %11421 = vmatpush1.bf16.msra.mxu0 %v7979
    %11422 = vmatprep.subr.bf16.mxu0 %v7982
    %11423 = vmatpush1.bf16.msra.mxu0 %v7981
    %11424 = vmatprep.subr.bf16.mxu0 %v7984
    %11425 = vmatpush1.bf16.msra.mxu0 %v7983
    %11426 = vmatprep.subr.bf16.mxu0 %v7986
    %11427 = vmatpush1.bf16.msra.mxu0 %v7985
    %11428 = vmatprep.subr.bf16.mxu0 %v7988
    %11429 = vmatpush1.bf16.msra.mxu0 %v7987
    %11430 = vmatprep.subr.bf16.mxu0 %v7990
    %11431 = vmatpush1.bf16.msra.mxu0 %v7989
    %11432 = vmatprep.subr.bf16.mxu0 %v7992
    %11433 = vmatpush1.bf16.msra.mxu0 %v7991
    %11434 = vmatprep.subr.bf16.mxu0 %v7994
    %11435 = vmatpush1.bf16.msra.mxu0 %v7993
    %11436 = vmatprep.subr.bf16.mxu0 %v7996
    %11437 = vmatpush1.bf16.msra.mxu0 %v7995
    %11438 = vmatprep.subr.bf16.mxu0 %v7998
    %11439 = vmatpush1.bf16.msra.mxu0 %v7997
    %11440 = vmatprep.mubr.bf16.mxu0 %v1938
    %11441 = vmatmul.mubr.bf16.gmra.mrb[0].mxu0 %v1937
    %v11442 = vpop.f32.mrb[0].mxu0
    %v11443 = vadd.f32 %v11402, %v11442
    %v11444 = vpop.f32.mrb[0].mxu0
    %v11445 = vadd.f32 %v11404, %v11444
    %v11446 = vpop.f32.mrb[0].mxu0
    %v11447 = vpop.f32.mrb[0].mxu0
    %11448 = vdwg.mxu0
    %11449 = vmatprep.subr.bf16.mxu0 %v8000
    %11450 = vmatpush1.bf16.msra.mxu0 %v7999
    %11451 = vmatprep.subr.bf16.mxu0 %v8002
    %11452 = vmatpush1.bf16.msra.mxu0 %v8001
    %11453 = vmatprep.subr.bf16.mxu0 %v8004
    %11454 = vmatpush1.bf16.msra.mxu0 %v8003
    %11455 = vmatprep.subr.bf16.mxu0 %v8006
    %11456 = vmatpush1.bf16.msra.mxu0 %v8005
    %11457 = vmatprep.subr.bf16.mxu0 %v8008
    %11458 = vmatpush1.bf16.msra.mxu0 %v8007
    %11459 = vmatprep.subr.bf16.mxu0 %v8010
    %11460 = vmatpush1.bf16.msra.mxu0 %v8009
    %11461 = vmatprep.subr.bf16.mxu0 %v8012
    %11462 = vmatpush1.bf16.msra.mxu0 %v8011
    %11463 = vmatprep.subr.bf16.mxu0 %v8014
    %11464 = vmatpush1.bf16.msra.mxu0 %v8013
    %11465 = vmatprep.subr.bf16.mxu0 %v8016
    %11466 = vmatpush1.bf16.msra.mxu0 %v8015
    %11467 = vmatprep.subr.bf16.mxu0 %v8018
    %11468 = vmatpush1.bf16.msra.mxu0 %v8017
    %11469 = vmatprep.subr.bf16.mxu0 %v8020
    %11470 = vmatpush1.bf16.msra.mxu0 %v8019
    %11471 = vmatprep.subr.bf16.mxu0 %v8022
    %11472 = vmatpush1.bf16.msra.mxu0 %v8021
    %11473 = vmatprep.subr.bf16.mxu0 %v8024
    %11474 = vmatpush1.bf16.msra.mxu0 %v8023
    %11475 = vmatprep.subr.bf16.mxu0 %v8026
    %11476 = vmatpush1.bf16.msra.mxu0 %v8025
    %11477 = vmatprep.subr.bf16.mxu0 %v8028
    %11478 = vmatpush1.bf16.msra.mxu0 %v8027
    %11479 = vmatprep.subr.bf16.mxu0 %v8030
    %11480 = vmatpush1.bf16.msra.mxu0 %v8029
    %11481 = vmatprep.mubr.bf16.mxu0 %v1940
    %11482 = vmatmul.mubr.bf16.gmra.mrb[0].mxu0 %v1939
    %v11483 = vpop.f32.mrb[0].mxu0
    %v11484 = vadd.f32 %v11443, %v11483
    %v11485 = vpop.f32.mrb[0].mxu0
    %v11486 = vadd.f32 %v11445, %v11485
    %v11487 = vpop.f32.mrb[0].mxu0
    %v11488 = vpop.f32.mrb[0].mxu0
    %11489 = vdwg.mxu0
    %11490 = vmatprep.subr.bf16.mxu0 %v8032
    %11491 = vmatpush1.bf16.msra.mxu0 %v8031
    %11492 = vmatprep.subr.bf16.mxu0 %v8034
    %11493 = vmatpush1.bf16.msra.mxu0 %v8033
    %11494 = vmatprep.subr.bf16.mxu0 %v8036
    %11495 = vmatpush1.bf16.msra.mxu0 %v8035
    %11496 = vmatprep.subr.bf16.mxu0 %v8038
    %11497 = vmatpush1.bf16.msra.mxu0 %v8037
    %11498 = vmatprep.subr.bf16.mxu0 %v8040
    %11499 = vmatpush1.bf16.msra.mxu0 %v8039
    %11500 = vmatprep.subr.bf16.mxu0 %v8042
    %11501 = vmatpush1.bf16.msra.mxu0 %v8041
    %11502 = vmatprep.subr.bf16.mxu0 %v8044
    %11503 = vmatpush1.bf16.msra.mxu0 %v8043
    %11504 = vmatprep.subr.bf16.mxu0 %v8046
    %11505 = vmatpush1.bf16.msra.mxu0 %v8045
    %11506 = vmatprep.subr.bf16.mxu0 %v8048
    %11507 = vmatpush1.bf16.msra.mxu0 %v8047
    %11508 = vmatprep.subr.bf16.mxu0 %v8050
    %11509 = vmatpush1.bf16.msra.mxu0 %v8049
    %11510 = vmatprep.subr.bf16.mxu0 %v8052
    %11511 = vmatpush1.bf16.msra.mxu0 %v8051
    %11512 = vmatprep.subr.bf16.mxu0 %v8054
    %11513 = vmatpush1.bf16.msra.mxu0 %v8053
    %11514 = vmatprep.subr.bf16.mxu0 %v8056
    %11515 = vmatpush1.bf16.msra.mxu0 %v8055
    %11516 = vmatprep.subr.bf16.mxu0 %v8058
    %11517 = vmatpush1.bf16.msra.mxu0 %v8057
    %11518 = vmatprep.subr.bf16.mxu0 %v8060
    %11519 = vmatpush1.bf16.msra.mxu0 %v8059
    %11520 = vmatprep.subr.bf16.mxu0 %v8062
    %11521 = vmatpush1.bf16.msra.mxu0 %v8061
    %11522 = vmatprep.mubr.bf16.mxu0 %v1942
    %11523 = vmatmul.mubr.bf16.gmra.mrb[0].mxu0 %v1941
    %v11524 = vpop.f32.mrb[0].mxu0
    %v11525 = vadd.f32 %v11484, %v11524
    %v11526 = vpop.f32.mrb[0].mxu0
    %v11527 = vadd.f32 %v11486, %v11526
    %v11528 = vpop.f32.mrb[0].mxu0
    %v11529 = vpop.f32.mrb[0].mxu0
    %11530 = vdwg.mxu0
    %11531 = vmatprep.subr.bf16.mxu0 %v8064
    %11532 = vmatpush1.bf16.msra.mxu0 %v8063
    %11533 = vmatprep.subr.bf16.mxu0 %v8066
    %11534 = vmatpush1.bf16.msra.mxu0 %v8065
    %11535 = vmatprep.subr.bf16.mxu0 %v8068
    %11536 = vmatpush1.bf16.msra.mxu0 %v8067
    %11537 = vmatprep.subr.bf16.mxu0 %v8070
    %11538 = vmatpush1.bf16.msra.mxu0 %v8069
    %11539 = vmatprep.subr.bf16.mxu0 %v8072
    %11540 = vmatpush1.bf16.msra.mxu0 %v8071
    %11541 = vmatprep.subr.bf16.mxu0 %v8074
    %11542 = vmatpush1.bf16.msra.mxu0 %v8073
    %11543 = vmatprep.subr.bf16.mxu0 %v8076
    %11544 = vmatpush1.bf16.msra.mxu0 %v8075
    %11545 = vmatprep.subr.bf16.mxu0 %v8078
    %11546 = vmatpush1.bf16.msra.mxu0 %v8077
    %11547 = vmatprep.subr.bf16.mxu0 %v8080
    %11548 = vmatpush1.bf16.msra.mxu0 %v8079
    %11549 = vmatprep.subr.bf16.mxu0 %v8082
    %11550 = vmatpush1.bf16.msra.mxu0 %v8081
    %11551 = vmatprep.subr.bf16.mxu0 %v8084
    %11552 = vmatpush1.bf16.msra.mxu0 %v8083
    %11553 = vmatprep.subr.bf16.mxu0 %v8086
    %11554 = vmatpush1.bf16.msra.mxu0 %v8085
    %11555 = vmatprep.subr.bf16.mxu0 %v8088
    %11556 = vmatpush1.bf16.msra.mxu0 %v8087
    %11557 = vmatprep.subr.bf16.mxu0 %v8090
    %11558 = vmatpush1.bf16.msra.mxu0 %v8089
    %11559 = vmatprep.subr.bf16.mxu0 %v8092
    %11560 = vmatpush1.bf16.msra.mxu0 %v8091
    %11561 = vmatprep.subr.bf16.mxu0 %v8094
    %11562 = vmatpush1.bf16.msra.mxu0 %v8093
    %11563 = vmatprep.mubr.bf16.mxu0 %v1944
    %11564 = vmatmul.mubr.bf16.gmra.mrb[0].mxu0 %v1943
    %v11565 = vpop.f32.mrb[0].mxu0
    %v11566 = vadd.f32 %v11525, %v11565
    %v11567 = vpop.f32.mrb[0].mxu0
    %v11568 = vadd.f32 %v11527, %v11567
    %v11569 = vpop.f32.mrb[0].mxu0
    %v11570 = vpop.f32.mrb[0].mxu0
    %11571 = vdwg.mxu0
    %11572 = vmatprep.subr.bf16.mxu0 %v8096
    %11573 = vmatpush1.bf16.msra.mxu0 %v8095
    %11574 = vmatprep.subr.bf16.mxu0 %v8098
    %11575 = vmatpush1.bf16.msra.mxu0 %v8097
    %11576 = vmatprep.subr.bf16.mxu0 %v8100
    %11577 = vmatpush1.bf16.msra.mxu0 %v8099
    %11578 = vmatprep.subr.bf16.mxu0 %v8102
    %11579 = vmatpush1.bf16.msra.mxu0 %v8101
    %11580 = vmatprep.subr.bf16.mxu0 %v8104
    %11581 = vmatpush1.bf16.msra.mxu0 %v8103
    %11582 = vmatprep.subr.bf16.mxu0 %v8106
    %11583 = vmatpush1.bf16.msra.mxu0 %v8105
    %11584 = vmatprep.subr.bf16.mxu0 %v8108
    %11585 = vmatpush1.bf16.msra.mxu0 %v8107
    %11586 = vmatprep.subr.bf16.mxu0 %v8110
    %11587 = vmatpush1.bf16.msra.mxu0 %v8109
    %11588 = vmatprep.subr.bf16.mxu0 %v8112
    %11589 = vmatpush1.bf16.msra.mxu0 %v8111
    %11590 = vmatprep.subr.bf16.mxu0 %v8114
    %11591 = vmatpush1.bf16.msra.mxu0 %v8113
    %11592 = vmatprep.subr.bf16.mxu0 %v8116
    %11593 = vmatpush1.bf16.msra.mxu0 %v8115
    %11594 = vmatprep.subr.bf16.mxu0 %v8118
    %11595 = vmatpush1.bf16.msra.mxu0 %v8117
    %11596 = vmatprep.subr.bf16.mxu0 %v8120
    %11597 = vmatpush1.bf16.msra.mxu0 %v8119
    %11598 = vmatprep.subr.bf16.mxu0 %v8122
    %11599 = vmatpush1.bf16.msra.mxu0 %v8121
    %11600 = vmatprep.subr.bf16.mxu0 %v8124
    %11601 = vmatpush1.bf16.msra.mxu0 %v8123
    %11602 = vmatprep.subr.bf16.mxu0 %v8126
    %11603 = vmatpush1.bf16.msra.mxu0 %v8125
    %11604 = vmatprep.mubr.bf16.mxu0 %v1946
    %11605 = vmatmul.mubr.bf16.gmra.mrb[0].mxu0 %v1945
    %v11606 = vpop.f32.mrb[0].mxu0
    %v11607 = vadd.f32 %v11566, %v11606
    %v11608 = vpop.f32.mrb[0].mxu0
    %v11609 = vadd.f32 %v11568, %v11608
    %v11610 = vpop.f32.mrb[0].mxu0
    %v11611 = vpop.f32.mrb[0].mxu0
    %11612 = vdwg.mxu0
    %11613 = vmatprep.subr.bf16.mxu0 %v8128
    %11614 = vmatpush1.bf16.msra.mxu0 %v8127
    %11615 = vmatprep.subr.bf16.mxu0 %v8130
    %11616 = vmatpush1.bf16.msra.mxu0 %v8129
    %11617 = vmatprep.subr.bf16.mxu0 %v8132
    %11618 = vmatpush1.bf16.msra.mxu0 %v8131
    %11619 = vmatprep.subr.bf16.mxu0 %v8134
    %11620 = vmatpush1.bf16.msra.mxu0 %v8133
    %11621 = vmatprep.subr.bf16.mxu0 %v8136
    %11622 = vmatpush1.bf16.msra.mxu0 %v8135
    %11623 = vmatprep.subr.bf16.mxu0 %v8138
    %11624 = vmatpush1.bf16.msra.mxu0 %v8137
    %11625 = vmatprep.subr.bf16.mxu0 %v8140
    %11626 = vmatpush1.bf16.msra.mxu0 %v8139
    %11627 = vmatprep.subr.bf16.mxu0 %v8142
    %11628 = vmatpush1.bf16.msra.mxu0 %v8141
    %11629 = vmatprep.subr.bf16.mxu0 %v8144
    %11630 = vmatpush1.bf16.msra.mxu0 %v8143
    %11631 = vmatprep.subr.bf16.mxu0 %v8146
    %11632 = vmatpush1.bf16.msra.mxu0 %v8145
    %11633 = vmatprep.subr.bf16.mxu0 %v8148
    %11634 = vmatpush1.bf16.msra.mxu0 %v8147
    %11635 = vmatprep.subr.bf16.mxu0 %v8150
    %11636 = vmatpush1.bf16.msra.mxu0 %v8149
    %11637 = vmatprep.subr.bf16.mxu0 %v8152
    %11638 = vmatpush1.bf16.msra.mxu0 %v8151
    %11639 = vmatprep.subr.bf16.mxu0 %v8154
    %11640 = vmatpush1.bf16.msra.mxu0 %v8153
    %11641 = vmatprep.subr.bf16.mxu0 %v8156
    %11642 = vmatpush1.bf16.msra.mxu0 %v8155
    %11643 = vmatprep.subr.bf16.mxu0 %v8158
    %11644 = vmatpush1.bf16.msra.mxu0 %v8157
    %11645 = vmatprep.mubr.bf16.mxu0 %v1948
    %11646 = vmatmul.mubr.bf16.gmra.mrb[0].mxu0 %v1947
    %v11647 = vpop.f32.mrb[0].mxu0
    %v11648 = vadd.f32 %v11607, %v11647
    %v11649 = vpop.f32.mrb[0].mxu0
    %v11650 = vadd.f32 %v11609, %v11649
    %v11651 = vpop.f32.mrb[0].mxu0
    %v11652 = vpop.f32.mrb[0].mxu0
    %11653 = vdwg.mxu0
    %11654 = vmatprep.subr.bf16.mxu0 %v8160
    %11655 = vmatpush1.bf16.msra.mxu0 %v8159
    %11656 = vmatprep.subr.bf16.mxu0 %v8162
    %11657 = vmatpush1.bf16.msra.mxu0 %v8161
    %11658 = vmatprep.subr.bf16.mxu0 %v8164
    %11659 = vmatpush1.bf16.msra.mxu0 %v8163
    %11660 = vmatprep.subr.bf16.mxu0 %v8166
    %11661 = vmatpush1.bf16.msra.mxu0 %v8165
    %11662 = vmatprep.subr.bf16.mxu0 %v8168
    %11663 = vmatpush1.bf16.msra.mxu0 %v8167
    %11664 = vmatprep.subr.bf16.mxu0 %v8170
    %11665 = vmatpush1.bf16.msra.mxu0 %v8169
    %11666 = vmatprep.subr.bf16.mxu0 %v8172
    %11667 = vmatpush1.bf16.msra.mxu0 %v8171
    %11668 = vmatprep.subr.bf16.mxu0 %v8174
    %11669 = vmatpush1.bf16.msra.mxu0 %v8173
    %11670 = vmatprep.subr.bf16.mxu0 %v8176
    %11671 = vmatpush1.bf16.msra.mxu0 %v8175
    %11672 = vmatprep.subr.bf16.mxu0 %v8178
    %11673 = vmatpush1.bf16.msra.mxu0 %v8177
    %11674 = vmatprep.subr.bf16.mxu0 %v8180
    %11675 = vmatpush1.bf16.msra.mxu0 %v8179
    %11676 = vmatprep.subr.bf16.mxu0 %v8182
    %11677 = vmatpush1.bf16.msra.mxu0 %v8181
    %11678 = vmatprep.subr.bf16.mxu0 %v8184
    %11679 = vmatpush1.bf16.msra.mxu0 %v8183
    %11680 = vmatprep.subr.bf16.mxu0 %v8186
    %11681 = vmatpush1.bf16.msra.mxu0 %v8185
    %11682 = vmatprep.subr.bf16.mxu0 %v8188
    %11683 = vmatpush1.bf16.msra.mxu0 %v8187
    %11684 = vmatprep.subr.bf16.mxu0 %v8190
    %11685 = vmatpush1.bf16.msra.mxu0 %v8189
    %11686 = vmatprep.mubr.bf16.mxu0 %v1950
    %11687 = vmatmul.mubr.bf16.gmra.mrb[0].mxu0 %v1949
    %v11688 = vpop.f32.mrb[0].mxu0
    %v11689 = vadd.f32 %v11648, %v11688
    %v11690 = vpop.f32.mrb[0].mxu0
    %v11691 = vadd.f32 %v11650, %v11690
    %v11692 = vpop.f32.mrb[0].mxu0
    %v11693 = vpop.f32.mrb[0].mxu0
    %11694 = vdwg.mxu0
    %v11695 = vmax.f32 %v11689, 0.0
    %v11696 = vmax.f32 %v11691, 0.0
    %v11697 = vpack.c.bf16 %v11695, %v11695
    %v11698 = vpack.c.bf16 %v11696, %v11696
    %v11699 = vld [vmem:[#allocation8] sm:$0xf]
    %v11700 = vld [vmem:[#allocation8 + $0x4] sm:$0xf]
    %v11701 = vld [vmem:[#allocation8 + $0x8] sm:$0xf]
    %v11702 = vld [vmem:[#allocation8 + $0xc] sm:$0xf]
    %v11703 = vld [vmem:[#allocation8 + $0x10] sm:$0xf]
    %v11704 = vld [vmem:[#allocation8 + $0x14] sm:$0xf]
    %v11705 = vld [vmem:[#allocation8 + $0x18] sm:$0xf]
    %v11706 = vld [vmem:[#allocation8 + $0x1c] sm:$0xf]
    %v11707 = vld [vmem:[#allocation8 + $0x20] sm:$0xf]
    %v11708 = vld [vmem:[#allocation8 + $0x24] sm:$0xf]
    %v11709 = vld [vmem:[#allocation8 + $0x28] sm:$0xf]
    %v11710 = vld [vmem:[#allocation8 + $0x2c] sm:$0xf]
    %v11711 = vld [vmem:[#allocation8 + $0x30] sm:$0xf]
    %v11712 = vld [vmem:[#allocation8 + $0x34] sm:$0xf]
    %v11713 = vld [vmem:[#allocation8 + $0x38] sm:$0xf]
    %v11714 = vld [vmem:[#allocation8 + $0x3c] sm:$0xf]
    %v11715 = vld [vmem:[#allocation8 + $0x40] sm:$0xf]
    %v11716 = vld [vmem:[#allocation8 + $0x44] sm:$0xf]
    %v11717 = vld [vmem:[#allocation8 + $0x48] sm:$0xf]
    %v11718 = vld [vmem:[#allocation8 + $0x4c] sm:$0xf]
    %v11719 = vld [vmem:[#allocation8 + $0x50] sm:$0xf]
    %v11720 = vld [vmem:[#allocation8 + $0x54] sm:$0xf]
    %v11721 = vld [vmem:[#allocation8 + $0x58] sm:$0xf]
    %v11722 = vld [vmem:[#allocation8 + $0x5c] sm:$0xf]
    %v11723 = vld [vmem:[#allocation8 + $0x60] sm:$0xf]
    %v11724 = vld [vmem:[#allocation8 + $0x64] sm:$0xf]
    %v11725 = vld [vmem:[#allocation8 + $0x68] sm:$0xf]
    %v11726 = vld [vmem:[#allocation8 + $0x6c] sm:$0xf]
    %v11727 = vld [vmem:[#allocation8 + $0x70] sm:$0xf]
    %v11728 = vld [vmem:[#allocation8 + $0x74] sm:$0xf]
    %v11729 = vld [vmem:[#allocation8 + $0x78] sm:$0xf]
    %v11730 = vld [vmem:[#allocation8 + $0x7c] sm:$0xf]
    %v11731 = vld [vmem:[#allocation10] sm:$0x1]
    %v11733 = vlaneseq
    %v11734 = vshrl.u32 %v11733, 7
    %v11735 = vsub.s32 0, %v11734
    %v11736 = vrot.slane %v11731, %v11735
    %v11770 = vunpack.c.l.b16 %v11699
    %v11771 = vunpack.c.l.b16 %v11700
    %v11772 = vunpack.c.l.b16 %v11701
    %v11773 = vunpack.c.l.b16 %v11702
    %v11774 = vunpack.c.l.b16 %v11703
    %v11775 = vunpack.c.l.b16 %v11704
    %v11776 = vunpack.c.l.b16 %v11705
    %v11777 = vunpack.c.l.b16 %v11706
    %v11778 = vunpack.c.l.b16 %v11707
    %v11779 = vunpack.c.l.b16 %v11708
    %v11780 = vunpack.c.l.b16 %v11709
    %v11781 = vunpack.c.l.b16 %v11710
    %v11782 = vunpack.c.l.b16 %v11711
    %v11783 = vunpack.c.l.b16 %v11712
    %v11784 = vunpack.c.l.b16 %v11713
    %v11785 = vunpack.c.l.b16 %v11714
    %v11786 = vunpack.c.l.b16 %v11715
    %v11787 = vunpack.c.l.b16 %v11716
    %v11788 = vunpack.c.l.b16 %v11717
    %v11789 = vunpack.c.l.b16 %v11718
    %v11790 = vunpack.c.l.b16 %v11719
    %v11791 = vunpack.c.l.b16 %v11720
    %v11792 = vunpack.c.l.b16 %v11721
    %v11793 = vunpack.c.l.b16 %v11722
    %v11794 = vunpack.c.l.b16 %v11723
    %v11795 = vunpack.c.l.b16 %v11724
    %v11796 = vunpack.c.l.b16 %v11725
    %v11797 = vunpack.c.l.b16 %v11726
    %v11798 = vunpack.c.l.b16 %v11727
    %v11799 = vunpack.c.l.b16 %v11728
    %v11800 = vunpack.c.l.b16 %v11729
    %v11801 = vunpack.c.l.b16 %v11730
    %v11802 = vpack.c.b16 %v11771, %v11770
    %v11803 = vpack.c.b16 %v11773, %v11772
    %v11804 = vpack.c.b16 %v11775, %v11774
    %v11805 = vpack.c.b16 %v11777, %v11776
    %v11806 = vpack.c.b16 %v11779, %v11778
    %v11807 = vpack.c.b16 %v11781, %v11780
    %v11808 = vpack.c.b16 %v11783, %v11782
    %v11809 = vpack.c.b16 %v11785, %v11784
    %v11810 = vpack.c.b16 %v11787, %v11786
    %v11811 = vpack.c.b16 %v11789, %v11788
    %v11812 = vpack.c.b16 %v11791, %v11790
    %v11813 = vpack.c.b16 %v11793, %v11792
    %v11814 = vpack.c.b16 %v11795, %v11794
    %v11815 = vpack.c.b16 %v11797, %v11796
    %v11816 = vpack.c.b16 %v11799, %v11798
    %v11817 = vpack.c.b16 %v11801, %v11800
    %11834 = vmatprep.subr.bf16.mxu0 0
    %11835 = vmatpush1.bf16.msra.mxu0 %v11802
    %11836 = vmatprep.subr.bf16.mxu0 0
    %11837 = vmatpush1.bf16.msra.mxu0 %v11803
    %11838 = vmatprep.subr.bf16.mxu0 0
    %11839 = vmatpush1.bf16.msra.mxu0 %v11804
    %11840 = vmatprep.subr.bf16.mxu0 0
    %11841 = vmatpush1.bf16.msra.mxu0 %v11805
    %11842 = vmatprep.subr.bf16.mxu0 0
    %11843 = vmatpush1.bf16.msra.mxu0 %v11806
    %11844 = vmatprep.subr.bf16.mxu0 0
    %11845 = vmatpush1.bf16.msra.mxu0 %v11807
    %11846 = vmatprep.subr.bf16.mxu0 0
    %11847 = vmatpush1.bf16.msra.mxu0 %v11808
    %11848 = vmatprep.subr.bf16.mxu0 0
    %11849 = vmatpush1.bf16.msra.mxu0 %v11809
    %11850 = vmatprep.subr.bf16.mxu0 0
    %11851 = vmatpush1.bf16.msra.mxu0 %v11810
    %11852 = vmatprep.subr.bf16.mxu0 0
    %11853 = vmatpush1.bf16.msra.mxu0 %v11811
    %11854 = vmatprep.subr.bf16.mxu0 0
    %11855 = vmatpush1.bf16.msra.mxu0 %v11812
    %11856 = vmatprep.subr.bf16.mxu0 0
    %11857 = vmatpush1.bf16.msra.mxu0 %v11813
    %11858 = vmatprep.subr.bf16.mxu0 0
    %11859 = vmatpush1.bf16.msra.mxu0 %v11814
    %11860 = vmatprep.subr.bf16.mxu0 0
    %11861 = vmatpush1.bf16.msra.mxu0 %v11815
    %11862 = vmatprep.subr.bf16.mxu0 0
    %11863 = vmatpush1.bf16.msra.mxu0 %v11816
    %11864 = vmatprep.subr.bf16.mxu0 0
    %11865 = vmatpush1.bf16.msra.mxu0 %v11817
    %11866 = vmatprep.mubr.bf16.mxu0 %v11698
    %11867 = vmatmul.mubr.bf16.gmra.mrb[0].mxu0 %v11697
    %v11868 = vpop.f32.mrb[0].mxu0
    %v11869 = vadd.f32 %v11736, %v11868
    %v11870 = vpop.f32.mrb[0].mxu0
    %v11871 = vpop.f32.mrb[0].mxu0
    %v11872 = vpop.f32.mrb[0].mxu0
    %11873 = vdwg.mxu0
    %v11874 = vmax.f32 %v11869, 0.0
    %v11875 = vpack.c.bf16 %v11874, %v11874
    %v11876 = vld [vmem:[#allocation11] sm:$0xf]
    %v11877 = vld [vmem:[#allocation11 + $0x4] sm:$0xf]
    %v11878 = vld [vmem:[#allocation11 + $0x8] sm:$0xf]
    %v11879 = vld [vmem:[#allocation11 + $0xc] sm:$0xf]
    %v11880 = vld [vmem:[#allocation11 + $0x10] sm:$0xf]
    %v11881 = vld [vmem:[#allocation11 + $0x14] sm:$0xf]
    %v11882 = vld [vmem:[#allocation11 + $0x18] sm:$0xf]
    %v11883 = vld [vmem:[#allocation11 + $0x1c] sm:$0xf]
    %v11884 = vld [vmem:[#allocation11 + $0x20] sm:$0xf]
    %v11885 = vld [vmem:[#allocation11 + $0x24] sm:$0xf]
    %v11886 = vld [vmem:[#allocation11 + $0x28] sm:$0xf]
    %v11887 = vld [vmem:[#allocation11 + $0x2c] sm:$0xf]
    %v11888 = vld [vmem:[#allocation11 + $0x30] sm:$0xf]
    %v11889 = vld [vmem:[#allocation11 + $0x34] sm:$0xf]
    %v11890 = vld [vmem:[#allocation11 + $0x38] sm:$0xf]
    %v11891 = vld [vmem:[#allocation11 + $0x3c] sm:$0xf]
    %v11892 = vld [vmem:[#allocation13] sm:$0x1]
    %v11894 = vlaneseq
    %v11895 = vshrl.u32 %v11894, 7
    %v11896 = vsub.s32 0, %v11895
    %v11897 = vrot.slane %v11892, %v11896
    %v11915 = vunpack.c.l.b16 %v11876
    %v11916 = vunpack.c.l.b16 %v11877
    %v11917 = vunpack.c.l.b16 %v11878
    %v11918 = vunpack.c.l.b16 %v11879
    %v11919 = vunpack.c.l.b16 %v11880
    %v11920 = vunpack.c.l.b16 %v11881
    %v11921 = vunpack.c.l.b16 %v11882
    %v11922 = vunpack.c.l.b16 %v11883
    %v11923 = vunpack.c.l.b16 %v11884
    %v11924 = vunpack.c.l.b16 %v11885
    %v11925 = vunpack.c.l.b16 %v11886
    %v11926 = vunpack.c.l.b16 %v11887
    %v11927 = vunpack.c.l.b16 %v11888
    %v11928 = vunpack.c.l.b16 %v11889
    %v11929 = vunpack.c.l.b16 %v11890
    %v11930 = vunpack.c.l.b16 %v11891
    %v11931 = vpack.c.b16 %v11916, %v11915
    %v11932 = vpack.c.b16 %v11918, %v11917
    %v11933 = vpack.c.b16 %v11920, %v11919
    %v11934 = vpack.c.b16 %v11922, %v11921
    %v11935 = vpack.c.b16 %v11924, %v11923
    %v11936 = vpack.c.b16 %v11926, %v11925
    %v11937 = vpack.c.b16 %v11928, %v11927
    %v11938 = vpack.c.b16 %v11930, %v11929
    %11947 = vmatprep.subr.bf16.mxu0 0
    %11948 = vmatpush1.bf16.msra.mxu0 %v11931
    %11949 = vmatprep.subr.bf16.mxu0 0
    %11950 = vmatpush1.bf16.msra.mxu0 %v11932
    %11951 = vmatprep.subr.bf16.mxu0 0
    %11952 = vmatpush1.bf16.msra.mxu0 %v11933
    %11953 = vmatprep.subr.bf16.mxu0 0
    %11954 = vmatpush1.bf16.msra.mxu0 %v11934
    %11955 = vmatprep.subr.bf16.mxu0 0
    %11956 = vmatpush1.bf16.msra.mxu0 %v11935
    %11957 = vmatprep.subr.bf16.mxu0 0
    %11958 = vmatpush1.bf16.msra.mxu0 %v11936
    %11959 = vmatprep.subr.bf16.mxu0 0
    %11960 = vmatpush1.bf16.msra.mxu0 %v11937
    %11961 = vmatprep.subr.bf16.mxu0 0
    %11962 = vmatpush1.bf16.msra.mxu0 %v11938
    %11963 = vmatprep.subr.bf16.mxu0 0
    %11964 = vmatpush1.bf16.msra.mxu0 0
    %11965 = vmatprep.subr.bf16.mxu0 0
    %11966 = vmatpush1.bf16.msra.mxu0 0
    %11967 = vmatprep.subr.bf16.mxu0 0
    %11968 = vmatpush1.bf16.msra.mxu0 0
    %11969 = vmatprep.subr.bf16.mxu0 0
    %11970 = vmatpush1.bf16.msra.mxu0 0
    %11971 = vmatprep.subr.bf16.mxu0 0
    %11972 = vmatpush1.bf16.msra.mxu0 0
    %11973 = vmatprep.subr.bf16.mxu0 0
    %11974 = vmatpush1.bf16.msra.mxu0 0
    %11975 = vmatprep.subr.bf16.mxu0 0
    %11976 = vmatpush1.bf16.msra.mxu0 0
    %11977 = vmatprep.subr.bf16.mxu0 0
    %11978 = vmatpush1.bf16.msra.mxu0 0
    %11979 = vmatprep.mubr.bf16.mxu0 0
    %11980 = vmatmul.mubr.bf16.gmra.mrb[0].mxu0 %v11875
    %v11981 = vpop.f32.mrb[0].mxu0
    %v11982 = vadd.f32 %v11897, %v11981
    %v11983 = vpop.f32.mrb[0].mxu0
    %v11984 = vpop.f32.mrb[0].mxu0
    %v11985 = vpop.f32.mrb[0].mxu0
    %11986 = vdwg.mxu0
    %11987 = vst [vmem:[#allocation14] sm:$0xff] %v11982
    // Predicated region
    $region58: #{tpu_custom_call.1} parent=1 // pred_check
      _
    $region59: #{tpu_custom_call.1} parent=1 // pred_check_branch
      %11989 = sbr.rel (0) target = $region61
    $region60: #{tpu_custom_call.1} parent=1 // pred_region
      %s11991 = ssub.s32 128, 128
      %11992 = vsyncadd [#allocation4], %s11991
      %s11994 = sshll.u32 [#allocation14], 4
      %s11995 = int_to_ptr.vmem [resolvable:$true] %s11994
      %11997 = dma.vmem_to_hbm [thread:$0]  %s11995, 128, %s7, [#allocation4]
    $region61: #{tpu_custom_call.1} parent=1 // pred_fallthru
      _
    // Predicated region
    $region62: #{tpu_custom_call.1} parent=1 // pred_check
      _
    $region63: #{tpu_custom_call.1} parent=1 // pred_check_branch
      %11999 = sbr.rel (0) target = $region65
    $region64: #{tpu_custom_call.1} parent=1 // pred_region
      %12000 = dma.done [#allocation4], 128
    $region65: #{tpu_custom_call.1} parent=1 // pred_fallthru
      _
    %12001 = vsyncpa [#allocation3], 1
    %12002 = vsyncpa [#allocation6], 1
    %12003 = vsyncpa [#allocation9], 1
    %12004 = vsyncpa [#allocation12], 1
    %12005 = vsyncpa [#allocation4], 1

</llo_original>
